<compile_context>
chip_gen: v5e
topology: v5e:2x2
jax: 0.10.0
libtpu: 0.0.40
codegen_flags: <defaults>
</compile_context>

<pallas_src>
import jax
import jax.numpy as jnp
import numpy as np
from jax import lax
from jax.experimental import pallas as pl
from jax.experimental.pallas import tpu as pltpu

EPS = 1e-5

_FUSED_MAX_BATCH = 16                     # keeps the static stats loop small
_FUSED_VMEM_BUDGET = 20 * 1024 * 1024     # conservative; limit is set to 32 MiB


# ---------------------------------------------------------------------------
# Fused path: x fits VMEM -> ONE pallas_call, x is read from HBM exactly once.
# ---------------------------------------------------------------------------
def _make_fused_kernel(inv_m, n_batches):
    def fused_kernel(x_ref, w_ref, g_ref, b_ref, o_ref,
                     sx_ref, cxx_ref, ws_ref, shift_ref):
        # x_ref:   (N, Cin, HW) whole input (constant index_map -> fetched once)
        # w_ref:   (Cout, Cin); g_ref/b_ref: (Cout, 1)
        # o_ref:   (Cout, HW) output tile for batch i = pl.program_id(0)
        # scratch: sx (Cin,1), cxx (Cin,Cin), ws (Cout,Cin), shift (Cout,1)
        i = pl.program_id(0)

        @pl.when(i == 0)
        def _():
            # ---- batch statistics: two passes over the VMEM-resident x ----
            sx_ref[...] = jnp.zeros_like(sx_ref)
            for b in range(n_batches):          # static, bounded by VMEM check
                xb = x_ref[b].astype(jnp.float32)                  # (Cin, HW)
                sx_ref[...] += jnp.sum(xb, axis=1, keepdims=True)
            mean_x = sx_ref[...] * inv_m                            # (Cin, 1)

            # centered Gram matrix -> numerically stable variance
            cxx_ref[...] = jnp.zeros_like(cxx_ref)
            for b in range(n_batches):
                xc = x_ref[b].astype(jnp.float32) - mean_x          # (Cin, HW)
                cxx_ref[...] += lax.dot_general(
                    xc, xc, dimension_numbers=(((1,), (1,)), ((), ())),
                    preferred_element_type=jnp.float32)             # (Cin, Cin)

            # ---- fold conv weight + BN affine into (W*scale, shift) ----
            w = w_ref[...].astype(jnp.float32)                      # (Cout, Cin)
            mean_y = jnp.dot(w, mean_x, preferred_element_type=jnp.float32)
            cov = cxx_ref[...] * inv_m
            t = jnp.dot(w, cov, preferred_element_type=jnp.float32)  # (Cout,Cin)
            var = jnp.maximum(jnp.sum(t * w, axis=1, keepdims=True), 0.0)
            scale = g_ref[...] * lax.rsqrt(var + EPS)                # (Cout, 1)
            ws_ref[...] = w * scale
            shift_ref[...] = b_ref[...] - mean_y * scale

        # ---- conv on MXU (scale pre-folded into W) + shift epilogue ----
        y = jnp.dot(ws_ref[...], x_ref[i], preferred_element_type=jnp.float32)
        o_ref[...] = (y + shift_ref[...]).astype(o_ref.dtype)

    return fused_kernel


def _fused_call(x3d, w2, g2, b2):
    n, cin, hw = x3d.shape
    cout = w2.shape[0]
    return pl.pallas_call(
        _make_fused_kernel(1.0 / (n * hw), n),
        out_shape=jax.ShapeDtypeStruct((n, cout, hw), x3d.dtype),
        grid_spec=pltpu.PrefetchScalarGridSpec(
            num_scalar_prefetch=0,
            grid=(n,),
            in_specs=[
                pl.BlockSpec((n, cin, hw), lambda i: (0, 0, 0)),  # whole x, once
                pl.BlockSpec((cout, cin), lambda i: (0, 0)),       # conv weight
                pl.BlockSpec((cout, 1), lambda i: (0, 0)),         # gamma
                pl.BlockSpec((cout, 1), lambda i: (0, 0)),         # beta
            ],
            out_specs=pl.BlockSpec((None, cout, hw), lambda i: (i, 0, 0)),
            scratch_shapes=[pltpu.VMEM((cin, 1), jnp.float32),
                            pltpu.VMEM((cin, cin), jnp.float32),
                            pltpu.VMEM((cout, cin), jnp.float32),
                            pltpu.VMEM((cout, 1), jnp.float32)],
        ),
        compiler_params=pltpu.CompilerParams(
            dimension_semantics=("arbitrary",),
            vmem_limit_bytes=32 * 1024 * 1024),
    )(x3d, w2, g2, b2)


# ---------------------------------------------------------------------------
# Two-phase fallback for inputs too large to keep x resident in VMEM.
# ---------------------------------------------------------------------------
def _make_stats_fold_kernel(inv_m):
    """Phase 1: accumulate x stats over batches, fold into (W*scale, shift)."""

    def stats_fold_kernel(x_ref, w_ref, g_ref, b_ref,
                          ws_ref, shift_ref, sx_ref, xxt_ref):
        n = pl.program_id(0)

        @pl.when(n == 0)
        def _():
            sx_ref[...] = jnp.zeros_like(sx_ref)
            xxt_ref[...] = jnp.zeros_like(xxt_ref)

        x = x_ref[...].astype(jnp.float32)
        xxt_ref[...] += lax.dot_general(
            x, x, dimension_numbers=(((1,), (1,)), ((), ())),
            preferred_element_type=jnp.float32)
        sx_ref[...] += jnp.sum(x, axis=1, keepdims=True)

        @pl.when(n == pl.num_programs(0) - 1)
        def _():
            w = w_ref[...].astype(jnp.float32)               # (Cout, Cin)
            mean_x = sx_ref[...] * inv_m                     # (Cin, 1)
            exx = xxt_ref[...] * inv_m                       # (Cin, Cin)
            mean_y = jnp.dot(w, mean_x, preferred_element_type=jnp.float32)
            t = jnp.dot(w, exx, preferred_element_type=jnp.float32)
            ey2 = jnp.sum(t * w, axis=1, keepdims=True)
            var = jnp.maximum(ey2 - mean_y * mean_y, 0.0)    # biased variance
            scale = g_ref[...] * lax.rsqrt(var + EPS)
            ws_ref[...] = w * scale                          # fold scale into W
            shift_ref[...] = b_ref[...] - mean_y * scale

    return stats_fold_kernel


def conv_apply_kernel(x_ref, ws_ref, shift_ref, o_ref):
    # x_ref: (Cin, HW); ws_ref: (tn, Cin); shift_ref: (tn, 1); o_ref: (tn, HW)
    y = jnp.dot(ws_ref[...], x_ref[...], preferred_element_type=jnp.float32)
    o_ref[...] = (y + shift_ref[...]).astype(o_ref.dtype)


def _pick_tn(cout, hw, out_itemsize, budget=8 * 1024 * 1024):
    """Largest tn (dividing cout) whose double-buffered output tile fits."""
    tn = cout
    while (tn > 128 and tn % 2 == 0
           and 2 * tn * hw * out_itemsize + 2 * tn * 128 * 4 > budget):
        tn //= 2
    assert cout % tn == 0
    return tn


def _two_phase_call(x3d, w2, g2, b2):
    n, cin, hw = x3d.shape
    cout = w2.shape[0]
    m = n * hw

    # ---- Phase 1: fold batch statistics into (W*scale, shift) ----
    ws, shift = pl.pallas_call(
        _make_stats_fold_kernel(1.0 / m),
        out_shape=(jax.ShapeDtypeStruct((cout, cin), jnp.float32),
                   jax.ShapeDtypeStruct((cout, 1), jnp.float32)),
        grid_spec=pltpu.PrefetchScalarGridSpec(
            num_scalar_prefetch=0,
            grid=(n,),
            in_specs=[
                pl.BlockSpec((None, cin, hw), lambda i: (i, 0, 0)),  # x batch
                pl.BlockSpec((cout, cin), lambda i: (0, 0)),          # weight
                pl.BlockSpec((cout, 1), lambda i: (0, 0)),            # gamma
                pl.BlockSpec((cout, 1), lambda i: (0, 0)),            # beta
            ],
            out_specs=(pl.BlockSpec((cout, cin), lambda i: (0, 0)),
                       pl.BlockSpec((cout, 1), lambda i: (0, 0))),
            scratch_shapes=[pltpu.VMEM((cin, 1), jnp.float32),
                            pltpu.VMEM((cin, cin), jnp.float32)],
        ),
        compiler_params=pltpu.CompilerParams(
            dimension_semantics=("arbitrary",)),
    )(x3d, w2, g2, b2)

    # ---- Phase 2: conv (MXU) + shift epilogue, NCHW layout ----
    tn = _pick_tn(cout, hw, jnp.dtype(x3d.dtype).itemsize)
    out3d = pl.pallas_call(
        conv_apply_kernel,
        out_shape=jax.ShapeDtypeStruct((n, cout, hw), x3d.dtype),
        grid_spec=pltpu.PrefetchScalarGridSpec(
            num_scalar_prefetch=0,
            grid=(n, cout // tn),
            in_specs=[
                pl.BlockSpec((None, cin, hw), lambda i, j: (i, 0, 0)),  # x batch
                pl.BlockSpec((tn, cin), lambda i, j: (j, 0)),            # W*scale
                pl.BlockSpec((tn, 1), lambda i, j: (j, 0)),              # shift
            ],
            out_specs=pl.BlockSpec((None, tn, hw), lambda i, j: (i, j, 0)),
        ),
        compiler_params=pltpu.CompilerParams(
            dimension_semantics=("parallel", "parallel"),
            vmem_limit_bytes=32 * 1024 * 1024),
    )(x3d, ws, shift)
    return out3d


# ---------------------------------------------------------------------------
# Wrapper
# ---------------------------------------------------------------------------
def conv1x1_batchnorm(x_nchw, weight_oihw, gamma, beta, *, force_two_phase=False):
    """x_nchw: (N, Cin, H, W); weight_oihw: (Cout, Cin, 1, 1); gamma/beta: (Cout,)."""
    n, cin, h, w = x_nchw.shape
    cout = weight_oihw.shape[0]
    hw = h * w

    # Free reshapes only — no layout transposes.
    x3d = x_nchw.reshape(n, cin, hw)
    w2 = weight_oihw.reshape(cout, cin)
    g2 = gamma.reshape(cout, 1).astype(jnp.float32)
    b2 = beta.reshape(cout, 1).astype(jnp.float32)

    itemsize = jnp.dtype(x_nchw.dtype).itemsize
    fused_bytes = (
        2 * n * cin * hw * itemsize          # resident x (double-buffer alloc)
        + 2 * cout * hw * itemsize           # output tile, double-buffered
        + 2 * cout * cin * 4                 # conv weight
        + 4 * cout * 128 * 4                 # gamma/beta (lane padded)
        + cin * cin * 4 + cin * 128 * 4      # Gram + sum scratch
        + cout * cin * 4 + cout * 128 * 4)   # folded weight + shift scratch
    use_fused = (not force_two_phase
                 and n <= _FUSED_MAX_BATCH
                 and fused_bytes <= _FUSED_VMEM_BUDGET)

    out3d = _fused_call(x3d, w2, g2, b2) if use_fused \
        else _two_phase_call(x3d, w2, g2, b2)
    return out3d.reshape(n, cout, h, w)


# ---------------------------------------------------------------------------
# Test
# ---------------------------------------------------------------------------
def _reference(x, conv_w, gamma, beta):
    cout = conv_w.shape[0]
    w2 = conv_w.reshape(cout, -1)
    y = jnp.einsum("oc,nchw->nohw", w2, x, precision=lax.Precision.HIGHEST)
    mean = jnp.mean(y, axis=(0, 2, 3), keepdims=True)
    var = jnp.var(y, axis=(0, 2, 3), keepdims=True)   # biased, BN training mode
    return ((y - mean) * lax.rsqrt(var + EPS)
            * gamma.reshape(1, cout, 1, 1) + beta.reshape(1, cout, 1, 1))


if __name__ == "__main__":
    key = jax.random.PRNGKey(0)
    k_x, k_w, k_g, k_b = jax.random.split(key, 4)

    # Module-consistent shapes: Conv2d(128 -> 512, 1x1), 28x28 spatial, batch 2.
    N, CIN, H, W = 2, 128, 28, 28
    COUT = 512

    x = jax.random.normal(k_x, (N, CIN, H, W), dtype=jnp.float32)
    conv_w = jax.random.normal(k_w, (COUT, CIN, 1, 1), dtype=jnp.float32) * 0.05
    gamma = 1.0 + 0.1 * jax.random.normal(k_g, (COUT,), dtype=jnp.float32)
    beta = 0.1 * jax.random.normal(k_b, (COUT,), dtype=jnp.float32)

    ref = _reference(x, conv_w, gamma, beta)

    # Fused single-call path (x resident in VMEM, read from HBM once).
    out = jax.block_until_ready(conv1x1_batchnorm(x, conv_w, gamma, beta))
    assert out.shape == (N, COUT, H, W)
    np.testing.assert_allclose(np.asarray(out), np.asarray(ref),
                               rtol=1e-2, atol=1e-2)

    # Two-phase fallback path (used when x does not fit VMEM).
    out2 = jax.block_until_ready(
        conv1x1_batchnorm(x, conv_w, gamma, beta, force_two_phase=True))
    np.testing.assert_allclose(np.asarray(out2), np.asarray(ref),
                               rtol=1e-2, atol=1e-2)

    print("KERNEL_OK")
</pallas_src>

<mosaic_0001>
module attributes {stable_mosaic.version = 11 : i64} {
  func.func @fused_kernel(%arg0: i32, %arg1: memref<2x128x784xf32, #tpu.memory_space<vmem>>, %arg2: memref<512x128xf32, #tpu.memory_space<vmem>>, %arg3: memref<512x1xf32, #tpu.memory_space<vmem>>, %arg4: memref<512x1xf32, #tpu.memory_space<vmem>>, %arg5: memref<1x512x784xf32, #tpu.memory_space<vmem>>, %arg6: memref<128x1xf32, #tpu.memory_space<vmem>>, %arg7: memref<128x128xf32, #tpu.memory_space<vmem>>, %arg8: memref<512x128xf32, #tpu.memory_space<vmem>>, %arg9: memref<512x1xf32, #tpu.memory_space<vmem>>) attributes {dimension_semantics = [#tpu.dimension_semantics<arbitrary>], iteration_bounds = array<i64: 2>, scalar_prefetch = 0 : i64, scratch_operands = 4 : i64, tpu.core_type = #tpu.core_type<tc>, window_params = [{pipeline_mode = #tpu.pipeline_mode<synchronous>, transform_indices = @transform_0, window_bounds = array<i64: 2, 128, 784>}, {pipeline_mode = #tpu.pipeline_mode<synchronous>, transform_indices = @transform_1, window_bounds = array<i64: 512, 128>}, {pipeline_mode = #tpu.pipeline_mode<synchronous>, transform_indices = @transform_2, window_bounds = array<i64: 512, 1>}, {pipeline_mode = #tpu.pipeline_mode<synchronous>, transform_indices = @transform_3, window_bounds = array<i64: 512, 1>}, {transform_indices = @transform_4, window_bounds = array<i64: 1, 512, 784>}]} {
    %c0_i32 = arith.constant 0 : i32
    %0 = arith.cmpi eq, %arg0, %c0_i32 : i32
    %1 = arith.extui %0 : i1 to i32
    %c0_i32_0 = arith.constant 0 : i32
    %2 = arith.cmpi ne, %1, %c0_i32_0 : i32
    scf.if %2 {
      %cst_9 = arith.constant 0.000000e+00 : f32
      %14 = vector.broadcast %cst_9 : f32 to vector<128x1xf32>
      %c0_10 = arith.constant 0 : index
      %c0_11 = arith.constant 0 : index
      %15 = vector.load %arg6[%c0_10, %c0_11] : memref<128x1xf32, #tpu.memory_space<vmem>>, vector<128x1xf32>
      tpu.vector_store %arg6[%c0_10, %c0_11], %14 {strides = array<i32>} : memref<128x1xf32, #tpu.memory_space<vmem>>, vector<128x1xf32>,
      %c0_12 = arith.constant 0 : index
      %c0_13 = arith.constant 0 : index
      %c0_14 = arith.constant 0 : index
      %16 = vector.load %arg1[%c0_12, %c0_13, %c0_14] : memref<2x128x784xf32, #tpu.memory_space<vmem>>, vector<1x128x784xf32>
      %17 = vector.shape_cast %16 : vector<1x128x784xf32> to vector<128x784xf32>
      %c0_15 = arith.constant 0 : index
      %c0_16 = arith.constant 0 : index
      %18 = vector.load %arg6[%c0_15, %c0_16] : memref<128x1xf32, #tpu.memory_space<vmem>>, vector<128x1xf32>
      %cst_17 = arith.constant dense<0.000000e+00> : vector<128xf32>
      %19 = vector.multi_reduction <add>, %17, %cst_17 [1] : vector<128x784xf32> to vector<128xf32>
      %20 = vector.shape_cast %19 : vector<128xf32> to vector<128x1xf32>
      %21 = arith.addf %18, %20 : vector<128x1xf32>
      %c0_18 = arith.constant 0 : index
      %c0_19 = arith.constant 0 : index
      %22 = vector.load %arg6[%c0_18, %c0_19] : memref<128x1xf32, #tpu.memory_space<vmem>>, vector<128x1xf32>
      tpu.vector_store %arg6[%c0_18, %c0_19], %21 {strides = array<i32>} : memref<128x1xf32, #tpu.memory_space<vmem>>, vector<128x1xf32>,
      %c1 = arith.constant 1 : index
      %c0_20 = arith.constant 0 : index
      %c0_21 = arith.constant 0 : index
      %23 = vector.load %arg1[%c1, %c0_20, %c0_21] : memref<2x128x784xf32, #tpu.memory_space<vmem>>, vector<1x128x784xf32>
      %24 = vector.shape_cast %23 : vector<1x128x784xf32> to vector<128x784xf32>
      %c0_22 = arith.constant 0 : index
      %c0_23 = arith.constant 0 : index
      %25 = vector.load %arg6[%c0_22, %c0_23] : memref<128x1xf32, #tpu.memory_space<vmem>>, vector<128x1xf32>
      %cst_24 = arith.constant dense<0.000000e+00> : vector<128xf32>
      %26 = vector.multi_reduction <add>, %24, %cst_24 [1] : vector<128x784xf32> to vector<128xf32>
      %27 = vector.shape_cast %26 : vector<128xf32> to vector<128x1xf32>
      %28 = arith.addf %25, %27 : vector<128x1xf32>
      %c0_25 = arith.constant 0 : index
      %c0_26 = arith.constant 0 : index
      %29 = vector.load %arg6[%c0_25, %c0_26] : memref<128x1xf32, #tpu.memory_space<vmem>>, vector<128x1xf32>
      tpu.vector_store %arg6[%c0_25, %c0_26], %28 {strides = array<i32>} : memref<128x1xf32, #tpu.memory_space<vmem>>, vector<128x1xf32>,
      %c0_27 = arith.constant 0 : index
      %c0_28 = arith.constant 0 : index
      %30 = vector.load %arg6[%c0_27, %c0_28] : memref<128x1xf32, #tpu.memory_space<vmem>>, vector<128x1xf32>
      %cst_29 = arith.constant 6.37755089E-4 : f32
      %31 = vector.broadcast %cst_29 : f32 to vector<128x1xf32>
      %32 = arith.mulf %30, %31 : vector<128x1xf32>
      %cst_30 = arith.constant 0.000000e+00 : f32
      %33 = vector.broadcast %cst_30 : f32 to vector<128x128xf32>
      %c0_31 = arith.constant 0 : index
      %c0_32 = arith.constant 0 : index
      %34 = vector.load %arg7[%c0_31, %c0_32] : memref<128x128xf32, #tpu.memory_space<vmem>>, vector<128x128xf32>
      tpu.vector_store %arg7[%c0_31, %c0_32], %33 {strides = array<i32>} : memref<128x128xf32, #tpu.memory_space<vmem>>, vector<128x128xf32>,
      %c0_33 = arith.constant 0 : index
      %c0_34 = arith.constant 0 : index
      %c0_35 = arith.constant 0 : index
      %35 = vector.load %arg1[%c0_33, %c0_34, %c0_35] : memref<2x128x784xf32, #tpu.memory_space<vmem>>, vector<1x128x784xf32>
      %36 = vector.shape_cast %35 : vector<1x128x784xf32> to vector<128x784xf32>
      %37 = vector.broadcast %32 : vector<128x1xf32> to vector<128x784xf32>
      %38 = arith.subf %36, %37 : vector<128x784xf32>
      %c0_36 = arith.constant 0 : index
      %c0_37 = arith.constant 0 : index
      %39 = vector.load %arg7[%c0_36, %c0_37] : memref<128x128xf32, #tpu.memory_space<vmem>>, vector<128x128xf32>
      %cst_38 = arith.constant dense<0.000000e+00> : vector<128x128xf32>
      %40 = tpu.matmul %38, %38, %cst_38 {dimension_numbers = #tpu.dot_dimension_numbers<[1], [1], [0], [0], [0, 0, 1, 0], [], []>} : vector<128x784xf32>, vector<128x784xf32>, vector<128x128xf32> -> vector<128x128xf32>
      %41 = arith.addf %39, %40 : vector<128x128xf32>
      %c0_39 = arith.constant 0 : index
      %c0_40 = arith.constant 0 : index
      %42 = vector.load %arg7[%c0_39, %c0_40] : memref<128x128xf32, #tpu.memory_space<vmem>>, vector<128x128xf32>
      tpu.vector_store %arg7[%c0_39, %c0_40], %41 {strides = array<i32>} : memref<128x128xf32, #tpu.memory_space<vmem>>, vector<128x128xf32>,
      %c1_41 = arith.constant 1 : index
      %c0_42 = arith.constant 0 : index
      %c0_43 = arith.constant 0 : index
      %43 = vector.load %arg1[%c1_41, %c0_42, %c0_43] : memref<2x128x784xf32, #tpu.memory_space<vmem>>, vector<1x128x784xf32>
      %44 = vector.shape_cast %43 : vector<1x128x784xf32> to vector<128x784xf32>
      %45 = vector.broadcast %32 : vector<128x1xf32> to vector<128x784xf32>
      %46 = arith.subf %44, %45 : vector<128x784xf32>
      %c0_44 = arith.constant 0 : index
      %c0_45 = arith.constant 0 : index
      %47 = vector.load %arg7[%c0_44, %c0_45] : memref<128x128xf32, #tpu.memory_space<vmem>>, vector<128x128xf32>
      %cst_46 = arith.constant dense<0.000000e+00> : vector<128x128xf32>
      %48 = tpu.matmul %46, %46, %cst_46 {dimension_numbers = #tpu.dot_dimension_numbers<[1], [1], [0], [0], [0, 0, 1, 0], [], []>} : vector<128x784xf32>, vector<128x784xf32>, vector<128x128xf32> -> vector<128x128xf32>
      %49 = arith.addf %47, %48 : vector<128x128xf32>
      %c0_47 = arith.constant 0 : index
      %c0_48 = arith.constant 0 : index
      %50 = vector.load %arg7[%c0_47, %c0_48] : memref<128x128xf32, #tpu.memory_space<vmem>>, vector<128x128xf32>
      tpu.vector_store %arg7[%c0_47, %c0_48], %49 {strides = array<i32>} : memref<128x128xf32, #tpu.memory_space<vmem>>, vector<128x128xf32>,
      %c0_49 = arith.constant 0 : index
      %c0_50 = arith.constant 0 : index
      %51 = vector.load %arg2[%c0_49, %c0_50] : memref<512x128xf32, #tpu.memory_space<vmem>>, vector<512x128xf32>
      %cst_51 = arith.constant dense<0.000000e+00> : vector<512x1xf32>
      %52 = tpu.matmul %51, %32, %cst_51 {dimension_numbers = #tpu.dot_dimension_numbers<[1], [0], [0], [1], [0, 0, 1, 1], [], []>} : vector<512x128xf32>, vector<128x1xf32>, vector<512x1xf32> -> vector<512x1xf32>
      %c0_52 = arith.constant 0 : index
      %c0_53 = arith.constant 0 : index
      %53 = vector.load %arg7[%c0_52, %c0_53] : memref<128x128xf32, #tpu.memory_space<vmem>>, vector<128x128xf32>
      %cst_54 = arith.constant 6.37755089E-4 : f32
      %54 = vector.broadcast %cst_54 : f32 to vector<128x128xf32>
      %55 = arith.mulf %53, %54 : vector<128x128xf32>
      %cst_55 = arith.constant dense<0.000000e+00> : vector<512x128xf32>
      %56 = tpu.matmul %51, %55, %cst_55 {dimension_numbers = #tpu.dot_dimension_numbers<[1], [0], [0], [1], [0, 0, 1, 1], [], []>} : vector<512x128xf32>, vector<128x128xf32>, vector<512x128xf32> -> vector<512x128xf32>
      %57 = arith.mulf %56, %51 : vector<512x128xf32>
      %cst_56 = arith.constant dense<0.000000e+00> : vector<512xf32>
      %58 = vector.multi_reduction <add>, %57, %cst_56 [1] : vector<512x128xf32> to vector<512xf32>
      %59 = vector.shape_cast %58 : vector<512xf32> to vector<512x1xf32>
      %cst_57 = arith.constant 0.000000e+00 : f32
      %60 = vector.broadcast %cst_57 : f32 to vector<512x1xf32>
      %61 = arith.maximumf %59, %60 : vector<512x1xf32>
      %c0_58 = arith.constant 0 : index
      %c0_59 = arith.constant 0 : index
      %62 = vector.load %arg3[%c0_58, %c0_59] : memref<512x1xf32, #tpu.memory_space<vmem>>, vector<512x1xf32>
      %cst_60 = arith.constant 9.99999974E-6 : f32
      %63 = vector.broadcast %cst_60 : f32 to vector<512x1xf32>
      %64 = arith.addf %61, %63 : vector<512x1xf32>
      %65 = math.rsqrt %64 : vector<512x1xf32>
      %66 = arith.mulf %62, %65 : vector<512x1xf32>
      %67 = vector.broadcast %66 : vector<512x1xf32> to vector<512x128xf32>
      %68 = arith.mulf %51, %67 : vector<512x128xf32>
      %c0_61 = arith.constant 0 : index
      %c0_62 = arith.constant 0 : index
      %69 = vector.load %arg8[%c0_61, %c0_62] : memref<512x128xf32, #tpu.memory_space<vmem>>, vector<512x128xf32>
      tpu.vector_store %arg8[%c0_61, %c0_62], %68 {strides = array<i32>} : memref<512x128xf32, #tpu.memory_space<vmem>>, vector<512x128xf32>,
      %c0_63 = arith.constant 0 : index
      %c0_64 = arith.constant 0 : index
      %70 = vector.load %arg4[%c0_63, %c0_64] : memref<512x1xf32, #tpu.memory_space<vmem>>, vector<512x1xf32>
      %71 = arith.mulf %52, %66 : vector<512x1xf32>
      %72 = arith.subf %70, %71 : vector<512x1xf32>
      %c0_65 = arith.constant 0 : index
      %c0_66 = arith.constant 0 : index
      %73 = vector.load %arg9[%c0_65, %c0_66] : memref<512x1xf32, #tpu.memory_space<vmem>>, vector<512x1xf32>
      tpu.vector_store %arg9[%c0_65, %c0_66], %72 {strides = array<i32>} : memref<512x1xf32, #tpu.memory_space<vmem>>, vector<512x1xf32>,
    } else {
    }
    %c0 = arith.constant 0 : index
    %c0_1 = arith.constant 0 : index
    %3 = vector.load %arg8[%c0, %c0_1] : memref<512x128xf32, #tpu.memory_space<vmem>>, vector<512x128xf32>
    %4 = arith.index_cast %arg0 : i32 to index
    %c0_2 = arith.constant 0 : index
    %c0_3 = arith.constant 0 : index
    %5 = vector.load %arg1[%4, %c0_2, %c0_3] : memref<2x128x784xf32, #tpu.memory_space<vmem>>, vector<1x128x784xf32>
    %6 = vector.shape_cast %5 : vector<1x128x784xf32> to vector<128x784xf32>
    %cst = arith.constant dense<0.000000e+00> : vector<512x784xf32>
    %7 = tpu.matmul %3, %6, %cst {dimension_numbers = #tpu.dot_dimension_numbers<[1], [0], [0], [1], [0, 0, 1, 1], [], []>} : vector<512x128xf32>, vector<128x784xf32>, vector<512x784xf32> -> vector<512x784xf32>
    %c0_4 = arith.constant 0 : index
    %c0_5 = arith.constant 0 : index
    %8 = vector.load %arg9[%c0_4, %c0_5] : memref<512x1xf32, #tpu.memory_space<vmem>>, vector<512x1xf32>
    %9 = vector.broadcast %8 : vector<512x1xf32> to vector<512x784xf32>
    %10 = arith.addf %7, %9 : vector<512x784xf32>
    %c0_6 = arith.constant 0 : index
    %c0_7 = arith.constant 0 : index
    %c0_8 = arith.constant 0 : index
    %11 = vector.load %arg5[%c0_6, %c0_7, %c0_8] : memref<1x512x784xf32, #tpu.memory_space<vmem>>, vector<1x512x784xf32>
    %12 = vector.shape_cast %11 : vector<1x512x784xf32> to vector<512x784xf32>
    %13 = vector.shape_cast %10 : vector<512x784xf32> to vector<1x512x784xf32>
    tpu.vector_store %arg5[%c0_6, %c0_7, %c0_8], %13 {strides = array<i32>} : memref<1x512x784xf32, #tpu.memory_space<vmem>>, vector<1x512x784xf32>,
    return
  }
  func.func @transform_0(%arg0: i32) -> (i32, i32, i32) {
    %c0_i32 = arith.constant 0 : i32
    %c0_i32_0 = arith.constant 0 : i32
    %c0_i32_1 = arith.constant 0 : i32
    %c0_i32_2 = arith.constant 0 : i32
    return %c0_i32, %c0_i32_0, %c0_i32_1 : i32, i32, i32
  }
  func.func @transform_1(%arg0: i32) -> (i32, i32) {
    %c0_i32 = arith.constant 0 : i32
    %c0_i32_0 = arith.constant 0 : i32
    %c0_i32_1 = arith.constant 0 : i32
    return %c0_i32, %c0_i32_0 : i32, i32
  }
  func.func @transform_2(%arg0: i32) -> (i32, i32) {
    %c0_i32 = arith.constant 0 : i32
    %c0_i32_0 = arith.constant 0 : i32
    %c0_i32_1 = arith.constant 0 : i32
    return %c0_i32, %c0_i32_0 : i32, i32
  }
  func.func @transform_3(%arg0: i32) -> (i32, i32) {
    %c0_i32 = arith.constant 0 : i32
    %c0_i32_0 = arith.constant 0 : i32
    %c0_i32_1 = arith.constant 0 : i32
    return %c0_i32, %c0_i32_0 : i32, i32
  }
  func.func @transform_4(%arg0: i32) -> (i32, i32, i32) {
    %c0_i32 = arith.constant 0 : i32
    %c0_i32_0 = arith.constant 0 : i32
    %c0_i32_1 = arith.constant 0 : i32
    return %arg0, %c0_i32, %c0_i32_0 : i32, i32, i32
  }
}

</mosaic_0001>

<llo_original>
// kernel: tpu_custom_call.1
$region0: #{tpu_custom_call.1}
  #allocation0 [shape = 'u32[]', space=smem, size = 0x4, offset = 0x4, fixed_abs, tag = 'smem constant byte address 0x4 - core index']
  #allocation1 [shape = 'u32[72,128]{1,0:T(1,128)}', space=vmem, size = 0x9000, scoped, tag = 'internal scratch']
  #allocation2 [shape = 'f32[128,1]{1,0:T(8,128)}', space=vmem, size = 0x10000, scoped, tag = 'scratch operand']
  #allocation3 [shape = 'f32[128,128]{1,0:T(8,128)}', space=vmem, size = 0x10000, scoped, tag = 'scratch operand']
  #allocation4 [shape = 'f32[512,128]{1,0:T(8,128)}', space=vmem, size = 0x40000, scoped, tag = 'scratch operand']
  #allocation5 [shape = 'f32[512,1]{1,0:T(8,128)}', space=vmem, size = 0x40000, scoped, tag = 'scratch operand']
  %s0 = inlined_call_operand.vmem [shape: f32[2,128,784], index: 0, kind: input, shape index: {}]
  %s1 = inlined_call_operand.hbm [shape: f32[512,128], index: 1, kind: input, shape index: {}]
  %s2 = inlined_call_operand.vmem [shape: f32[512,1], index: 2, kind: input, shape index: {}]
  %s3 = inlined_call_operand.vmem [shape: f32[512,1], index: 3, kind: input, shape index: {}]
  %s4 = inlined_call_operand.vmem [shape: f32[2,512,784], index: 4, kind: output, shape index: {}]
  %s5 = sld [smem:[#allocation0]]
  $region57: #{tpu_custom_call.1} parent=0
    _
  %s7 = ssub.s32 1, %s5
  %s8 = scalar_select 0, %s7, %s5
  $region1: #{tpu_custom_call.1} parent=0
    #allocation6 [shape = 'u8[262144]{0}', space=vmem, size = 0x40000, scoped, tag = 'input window, operand 1, single buffered']
    #allocation7 [shape = 's32[2]{0}', space=sflag, size = 0x8, scoped, tag = 'scoped memory for tpu_custom_call.1']
    %9 = vsyncpa [#allocation7], 0
    loop: start=0, step=1, limit=4
    $region2: #{tpu_custom_call.1} parent=1 // loop_pre_header
      _
    $region3: #{tpu_custom_call.1} parent=1 // loop_header
      %s11 = sphi 0, %s15
      %p12 = scmp.ge.s32.totalorder %s11, 4
      %s19 = sphi 0, %s19
      %s21 = sphi 0, %s19
      %s22 = sphi 0, %s21
      %s36 = sphi 0, %s22
      %s40 = sphi 0, %s40
      %s42 = sphi 0, %s40
      %s43 = sphi 0, %s42
      %s57 = sphi 0, %s43
      %s61 = sphi 0, %s61
      %s63 = sphi 0, %s61
      %s64 = sphi 0, %s63
      %s78 = sphi 0, %s64
      %s82 = sphi 0, %s82
      %s84 = sphi 0, %s82
      %s85 = sphi 0, %s84
      %s99 = sphi 0, %s85
      %s105 = sphi 0, %s107
      %s108 = sphi 0, %s105
      %s109 = sphi 0, %s108
      %s125 = sphi 0, %s109
    $region4: #{tpu_custom_call.1} parent=1 // loop_header_branch
      %14 = sbr.rel (%p12) target = $region8
    $region5: #{tpu_custom_call.1} parent=1 // loop_body
      %s16 = ssub.s32 %s11, 1
      %s17 = ssub.s32 %s11, 2
      %s18 = sadd.s32 %s11, 1
      %s20 = sadd.s32 %s19, 1
      %p23 = scmp.eq.s32.totalorder %s11, 1
      %p24 = scmp.ne.s32.totalorder %s19, %s21
      %p25 = scmp.eq.s32.totalorder %s11, 0
      %p26 = por %p24, %p25
      %p27 = scmp.ne.s32.totalorder %s19, %s21
      %p28 = scmp.eq.s32.totalorder %s16, 1
      %p29 = por %p27, %p28
      %p30 = scmp.ne.s32.totalorder %s21, %s22
      %p31 = scmp.eq.s32.totalorder %s16, 0
      %p32 = por %p30, %p31
      %p33 = scmp.ne.s32.totalorder %s21, %s22
      %p34 = scmp.eq.s32.totalorder %s17, 1
      %p35 = por %p33, %p34
      %p37 = scmp.ne.s32.totalorder %s22, %s36
      %p38 = scmp.eq.s32.totalorder %s17, 0
      %p39 = por %p37, %p38
      %s41 = sadd.s32 %s40, 1
      %p44 = scmp.eq.s32.totalorder %s11, 1
      %p45 = scmp.ne.s32.totalorder %s40, %s42
      %p46 = scmp.eq.s32.totalorder %s11, 0
      %p47 = por %p45, %p46
      %p48 = scmp.ne.s32.totalorder %s40, %s42
      %p49 = scmp.eq.s32.totalorder %s16, 1
      %p50 = por %p48, %p49
      %p51 = scmp.ne.s32.totalorder %s42, %s43
      %p52 = scmp.eq.s32.totalorder %s16, 0
      %p53 = por %p51, %p52
      %p54 = scmp.ne.s32.totalorder %s42, %s43
      %p55 = scmp.eq.s32.totalorder %s17, 1
      %p56 = por %p54, %p55
      %p58 = scmp.ne.s32.totalorder %s43, %s57
      %p59 = scmp.eq.s32.totalorder %s17, 0
      %p60 = por %p58, %p59
      %s62 = sadd.s32 %s61, 1
      %p65 = scmp.eq.s32.totalorder %s11, 1
      %p66 = scmp.ne.s32.totalorder %s61, %s63
      %p67 = scmp.eq.s32.totalorder %s11, 0
      %p68 = por %p66, %p67
      %p69 = scmp.ne.s32.totalorder %s61, %s63
      %p70 = scmp.eq.s32.totalorder %s16, 1
      %p71 = por %p69, %p70
      %p72 = scmp.ne.s32.totalorder %s63, %s64
      %p73 = scmp.eq.s32.totalorder %s16, 0
      %p74 = por %p72, %p73
      %p75 = scmp.ne.s32.totalorder %s63, %s64
      %p76 = scmp.eq.s32.totalorder %s17, 1
      %p77 = por %p75, %p76
      %p79 = scmp.ne.s32.totalorder %s64, %s78
      %p80 = scmp.eq.s32.totalorder %s17, 0
      %p81 = por %p79, %p80
      %s83 = sadd.s32 %s82, 1
      %p86 = scmp.eq.s32.totalorder %s11, 1
      %p87 = scmp.ne.s32.totalorder %s82, %s84
      %p88 = scmp.eq.s32.totalorder %s11, 0
      %p89 = por %p87, %p88
      %p90 = scmp.ne.s32.totalorder %s82, %s84
      %p91 = scmp.eq.s32.totalorder %s16, 1
      %p92 = por %p90, %p91
      %p93 = scmp.ne.s32.totalorder %s84, %s85
      %p94 = scmp.eq.s32.totalorder %s16, 0
      %p95 = por %p93, %p94
      %p96 = scmp.ne.s32.totalorder %s84, %s85
      %p97 = scmp.eq.s32.totalorder %s17, 1
      %p98 = por %p96, %p97
      %p100 = scmp.ne.s32.totalorder %s85, %s99
      %p101 = scmp.eq.s32.totalorder %s17, 0
      %p102 = por %p100, %p101
      %s103 = ssub.s32 %s11, %s18
      %p104 = scmp.eq.s32.totalorder %s103, 0
      %s106 = sadd.s32 %s105, 1
      %s107 = scalar_select %p104, %s105, %s106
      %p110 = pneg %p104
      %p111 = scmp.eq.s32.totalorder %s11, 1
      %p112 = por %p110, %p111
      %p113 = scmp.ne.s32.totalorder %s105, %s108
      %p114 = scmp.eq.s32.totalorder %s11, 0
      %p115 = por %p113, %p114
      %p116 = scmp.ne.s32.totalorder %s105, %s108
      %p117 = scmp.eq.s32.totalorder %s16, 1
      %p118 = por %p116, %p117
      %p119 = scmp.ne.s32.totalorder %s108, %s109
      %p120 = scmp.eq.s32.totalorder %s16, 0
      %p121 = por %p119, %p120
      %p122 = scmp.ne.s32.totalorder %s108, %s109
      %p123 = scmp.eq.s32.totalorder %s17, 1
      %p124 = por %p122, %p123
      %p126 = scmp.ne.s32.totalorder %s109, %s125
      %p127 = scmp.eq.s32.totalorder %s17, 0
      %p128 = por %p126, %p127
      %p129 = scmp.le.s32.totalorder 1, %s11
      %p130 = scmp.lt.s32.totalorder %s11, 3
      %p131 = pnand %p129, %p130
      %p132 = pneg %p131
      // Predicated region
      $region9: #{tpu_custom_call.1} parent=5 // pred_check
        _
      $region10: #{tpu_custom_call.1} parent=5 // pred_check_branch
        %134 = sbr.rel (%p131) target = $region12
      $region11: #{tpu_custom_call.1} parent=5 // pred_region
        %s135 = ssub.s32 %s11, 1
        // Predicated region
        $region13: #{tpu_custom_call.1} parent=11 // pred_check
          %p136 = pneg %p32
        $region14: #{tpu_custom_call.1} parent=11 // pred_check_branch
          %138 = sbr.rel (%p136) target = $region16
        $region15: #{tpu_custom_call.1} parent=11 // pred_region
          _
        $region16: #{tpu_custom_call.1} parent=11 // pred_fallthru
          _
        // Predicated region
        $region17: #{tpu_custom_call.1} parent=11 // pred_check
          %p139 = pneg %p53
        $region18: #{tpu_custom_call.1} parent=11 // pred_check_branch
          %141 = sbr.rel (%p139) target = $region20
        $region19: #{tpu_custom_call.1} parent=11 // pred_region
          %143 = vsyncadd [#allocation7], 0
          %s144 = sshll.u32 %s1, 4
          %s145 = int_to_ptr.hbm [resolvable:$true] %s144
          %s146 = sshll.u32 [#allocation6], 4
          %s147 = int_to_ptr.vmem [resolvable:$true] %s146
          %152 = dma.hbm_to_vmem [thread:$0]  %s145, 8192, %s147, [#allocation7], 128, 128, 8
        $region20: #{tpu_custom_call.1} parent=11 // pred_fallthru
          _
        // Predicated region
        $region21: #{tpu_custom_call.1} parent=11 // pred_check
          %p153 = pneg %p74
        $region22: #{tpu_custom_call.1} parent=11 // pred_check_branch
          %155 = sbr.rel (%p153) target = $region24
        $region23: #{tpu_custom_call.1} parent=11 // pred_region
          _
        $region24: #{tpu_custom_call.1} parent=11 // pred_fallthru
          _
        // Predicated region
        $region25: #{tpu_custom_call.1} parent=11 // pred_check
          %p156 = pneg %p95
        $region26: #{tpu_custom_call.1} parent=11 // pred_check_branch
          %158 = sbr.rel (%p156) target = $region28
        $region27: #{tpu_custom_call.1} parent=11 // pred_region
          _
        $region28: #{tpu_custom_call.1} parent=11 // pred_fallthru
          _
      $region12: #{tpu_custom_call.1} parent=5 // pred_fallthru
        _
      %p159 = scmp.lt.s32.totalorder %s11, 2
      // Predicated region
      $region29: #{tpu_custom_call.1} parent=5 // pred_check
        %p160 = pneg %p159
      $region30: #{tpu_custom_call.1} parent=5 // pred_check_branch
        %162 = sbr.rel (%p160) target = $region32
      $region31: #{tpu_custom_call.1} parent=5 // pred_region
        _
      $region32: #{tpu_custom_call.1} parent=5 // pred_fallthru
        _
      %p163 = scmp.le.s32.totalorder 1, %s11
      %p164 = scmp.lt.s32.totalorder %s11, 3
      %p165 = pnand %p163, %p164
      %p166 = pneg %p165
      // Predicated region
      $region33: #{tpu_custom_call.1} parent=5 // pred_check
        _
      $region34: #{tpu_custom_call.1} parent=5 // pred_check_branch
        %168 = sbr.rel (%p165) target = $region36
      $region35: #{tpu_custom_call.1} parent=5 // pred_region
        %s169 = ssub.s32 %s11, 1
        // Predicated region
        $region37: #{tpu_custom_call.1} parent=35 // pred_check
          %p170 = pneg %p53
        $region38: #{tpu_custom_call.1} parent=35 // pred_check_branch
          %172 = sbr.rel (%p170) target = $region40
        $region39: #{tpu_custom_call.1} parent=35 // pred_region
          %174 = dma.done [#allocation7], 8192
        $region40: #{tpu_custom_call.1} parent=35 // pred_fallthru
          _
        %p175 = pneg %p32
        %p176 = pneg %p29
        %p177 = pneg %p53
        %p178 = pneg %p50
        %p179 = pneg %p74
        %p180 = pneg %p71
        %p181 = pneg %p95
        %p182 = pneg %p92
        %p183 = pneg %p121
        %p184 = pneg %p118
        %p185 = scmp.lt.s32.totalorder %s16, 1
        %s186 = scalar_select %p185, %s16, 1
        %s187 = smul.addr %s186, 448
        %s188 = smul.addr %s187, 8
        %s189 = scalar_lea.vmem %s4, %s188
        %p190 = scmp.lt.s32.totalorder %s16, 1
        %s191 = scalar_select %p190, %s16, 1
        %s192 = smul.addr %s191, 448
        %s193 = smul.addr %s192, 8
        %s194 = scalar_lea.vmem %s4, %s193
        %p195 = scmp.eq.s32.totalorder %s16, 0
        // Predicated region
        $region41: #{tpu_custom_call.1} parent=35 // pred_check
          %p196 = pneg %p195
        $region42: #{tpu_custom_call.1} parent=35 // pred_check_branch
          %198 = sbr.rel (%p196) target = $region44
        $region43: #{tpu_custom_call.1} parent=35 // pred_region
          %vm199 = vcmask 7168
          %200 = vst.msk [vmem:[#allocation2] sm:$0xff] %vm199, 0.0
          %201 = vst.msk [vmem:[#allocation2 + $0x8] sm:$0xff] %vm199, 0.0
          %202 = vst.msk [vmem:[#allocation2 + $0x10] sm:$0xff] %vm199, 0.0
          %203 = vst.msk [vmem:[#allocation2 + $0x18] sm:$0xff] %vm199, 0.0
          %204 = vst.msk [vmem:[#allocation2 + $0x20] sm:$0xff] %vm199, 0.0
          %205 = vst.msk [vmem:[#allocation2 + $0x28] sm:$0xff] %vm199, 0.0
          %206 = vst.msk [vmem:[#allocation2 + $0x30] sm:$0xff] %vm199, 0.0
          %207 = vst.msk [vmem:[#allocation2 + $0x38] sm:$0xff] %vm199, 0.0
          %208 = vst.msk [vmem:[#allocation2 + $0x40] sm:$0xff] %vm199, 0.0
          %209 = vst.msk [vmem:[#allocation2 + $0x48] sm:$0xff] %vm199, 0.0
          %210 = vst.msk [vmem:[#allocation2 + $0x50] sm:$0xff] %vm199, 0.0
          %211 = vst.msk [vmem:[#allocation2 + $0x58] sm:$0xff] %vm199, 0.0
          %212 = vst.msk [vmem:[#allocation2 + $0x60] sm:$0xff] %vm199, 0.0
          %213 = vst.msk [vmem:[#allocation2 + $0x68] sm:$0xff] %vm199, 0.0
          %214 = vst.msk [vmem:[#allocation2 + $0x70] sm:$0xff] %vm199, 0.0
          %215 = vst.msk [vmem:[#allocation2 + $0x78] sm:$0xff] %vm199, 0.0
          %v216 = vld [vmem:[%s0] sm:$0xff]
          %v217 = vld [vmem:[%s0 + $0x8] sm:$0xff]
          %v218 = vld [vmem:[%s0 + $0x10] sm:$0xff]
          %v219 = vld [vmem:[%s0 + $0x18] sm:$0xff]
          %v220 = vld [vmem:[%s0 + $0x20] sm:$0xff]
          %v221 = vld [vmem:[%s0 + $0x28] sm:$0xff]
          %v222 = vld [vmem:[%s0 + $0x30] sm:$0xff]
          %v223 = vld [vmem:[%s0 + $0x38] sm:$0xff]
          %v224 = vld [vmem:[%s0 + $0x40] sm:$0xff]
          %v225 = vld [vmem:[%s0 + $0x48] sm:$0xff]
          %v226 = vld [vmem:[%s0 + $0x50] sm:$0xff]
          %v227 = vld [vmem:[%s0 + $0x58] sm:$0xff]
          %v228 = vld [vmem:[%s0 + $0x60] sm:$0xff]
          %v229 = vld [vmem:[%s0 + $0x68] sm:$0xff]
          %v230 = vld [vmem:[%s0 + $0x70] sm:$0xff]
          %v231 = vld [vmem:[%s0 + $0x78] sm:$0xff]
          %v232 = vld [vmem:[%s0 + $0x80] sm:$0xff]
          %v233 = vld [vmem:[%s0 + $0x88] sm:$0xff]
          %v234 = vld [vmem:[%s0 + $0x90] sm:$0xff]
          %v235 = vld [vmem:[%s0 + $0x98] sm:$0xff]
          %v236 = vld [vmem:[%s0 + $0xa0] sm:$0xff]
          %v237 = vld [vmem:[%s0 + $0xa8] sm:$0xff]
          %v238 = vld [vmem:[%s0 + $0xb0] sm:$0xff]
          %v239 = vld [vmem:[%s0 + $0xb8] sm:$0xff]
          %v240 = vld [vmem:[%s0 + $0xc0] sm:$0xff]
          %v241 = vld [vmem:[%s0 + $0xc8] sm:$0xff]
          %v242 = vld [vmem:[%s0 + $0xd0] sm:$0xff]
          %v243 = vld [vmem:[%s0 + $0xd8] sm:$0xff]
          %v244 = vld [vmem:[%s0 + $0xe0] sm:$0xff]
          %v245 = vld [vmem:[%s0 + $0xe8] sm:$0xff]
          %v246 = vld [vmem:[%s0 + $0xf0] sm:$0xff]
          %v247 = vld [vmem:[%s0 + $0xf8] sm:$0xff]
          %v248 = vld [vmem:[%s0 + $0x100] sm:$0xff]
          %v249 = vld [vmem:[%s0 + $0x108] sm:$0xff]
          %v250 = vld [vmem:[%s0 + $0x110] sm:$0xff]
          %v251 = vld [vmem:[%s0 + $0x118] sm:$0xff]
          %v252 = vld [vmem:[%s0 + $0x120] sm:$0xff]
          %v253 = vld [vmem:[%s0 + $0x128] sm:$0xff]
          %v254 = vld [vmem:[%s0 + $0x130] sm:$0xff]
          %v255 = vld [vmem:[%s0 + $0x138] sm:$0xff]
          %v256 = vld [vmem:[%s0 + $0x140] sm:$0xff]
          %v257 = vld [vmem:[%s0 + $0x148] sm:$0xff]
          %v258 = vld [vmem:[%s0 + $0x150] sm:$0xff]
          %v259 = vld [vmem:[%s0 + $0x158] sm:$0xff]
          %v260 = vld [vmem:[%s0 + $0x160] sm:$0xff]
          %v261 = vld [vmem:[%s0 + $0x168] sm:$0xff]
          %v262 = vld [vmem:[%s0 + $0x170] sm:$0xff]
          %v263 = vld [vmem:[%s0 + $0x178] sm:$0xff]
          %v264 = vld [vmem:[%s0 + $0x180] sm:$0xff]
          %v265 = vld [vmem:[%s0 + $0x188] sm:$0xff]
          %v266 = vld [vmem:[%s0 + $0x190] sm:$0xff]
          %v267 = vld [vmem:[%s0 + $0x198] sm:$0xff]
          %v268 = vld [vmem:[%s0 + $0x1a0] sm:$0xff]
          %v269 = vld [vmem:[%s0 + $0x1a8] sm:$0xff]
          %v270 = vld [vmem:[%s0 + $0x1b0] sm:$0xff]
          %v271 = vld [vmem:[%s0 + $0x1b8] sm:$0xff]
          %v272 = vld [vmem:[%s0 + $0x1c0] sm:$0xff]
          %v273 = vld [vmem:[%s0 + $0x1c8] sm:$0xff]
          %v274 = vld [vmem:[%s0 + $0x1d0] sm:$0xff]
          %v275 = vld [vmem:[%s0 + $0x1d8] sm:$0xff]
          %v276 = vld [vmem:[%s0 + $0x1e0] sm:$0xff]
          %v277 = vld [vmem:[%s0 + $0x1e8] sm:$0xff]
          %v278 = vld [vmem:[%s0 + $0x1f0] sm:$0xff]
          %v279 = vld [vmem:[%s0 + $0x1f8] sm:$0xff]
          %v280 = vld [vmem:[%s0 + $0x200] sm:$0xff]
          %v281 = vld [vmem:[%s0 + $0x208] sm:$0xff]
          %v282 = vld [vmem:[%s0 + $0x210] sm:$0xff]
          %v283 = vld [vmem:[%s0 + $0x218] sm:$0xff]
          %v284 = vld [vmem:[%s0 + $0x220] sm:$0xff]
          %v285 = vld [vmem:[%s0 + $0x228] sm:$0xff]
          %v286 = vld [vmem:[%s0 + $0x230] sm:$0xff]
          %v287 = vld [vmem:[%s0 + $0x238] sm:$0xff]
          %v288 = vld [vmem:[%s0 + $0x240] sm:$0xff]
          %v289 = vld [vmem:[%s0 + $0x248] sm:$0xff]
          %v290 = vld [vmem:[%s0 + $0x250] sm:$0xff]
          %v291 = vld [vmem:[%s0 + $0x258] sm:$0xff]
          %v292 = vld [vmem:[%s0 + $0x260] sm:$0xff]
          %v293 = vld [vmem:[%s0 + $0x268] sm:$0xff]
          %v294 = vld [vmem:[%s0 + $0x270] sm:$0xff]
          %v295 = vld [vmem:[%s0 + $0x278] sm:$0xff]
          %v296 = vld [vmem:[%s0 + $0x280] sm:$0xff]
          %v297 = vld [vmem:[%s0 + $0x288] sm:$0xff]
          %v298 = vld [vmem:[%s0 + $0x290] sm:$0xff]
          %v299 = vld [vmem:[%s0 + $0x298] sm:$0xff]
          %v300 = vld [vmem:[%s0 + $0x2a0] sm:$0xff]
          %v301 = vld [vmem:[%s0 + $0x2a8] sm:$0xff]
          %v302 = vld [vmem:[%s0 + $0x2b0] sm:$0xff]
          %v303 = vld [vmem:[%s0 + $0x2b8] sm:$0xff]
          %v304 = vld [vmem:[%s0 + $0x2c0] sm:$0xff]
          %v305 = vld [vmem:[%s0 + $0x2c8] sm:$0xff]
          %v306 = vld [vmem:[%s0 + $0x2d0] sm:$0xff]
          %v307 = vld [vmem:[%s0 + $0x2d8] sm:$0xff]
          %v308 = vld [vmem:[%s0 + $0x2e0] sm:$0xff]
          %v309 = vld [vmem:[%s0 + $0x2e8] sm:$0xff]
          %v310 = vld [vmem:[%s0 + $0x2f0] sm:$0xff]
          %v311 = vld [vmem:[%s0 + $0x2f8] sm:$0xff]
          %v312 = vld [vmem:[%s0 + $0x300] sm:$0xff]
          %v313 = vld [vmem:[%s0 + $0x308] sm:$0xff]
          %v314 = vld [vmem:[%s0 + $0x310] sm:$0xff]
          %v315 = vld [vmem:[%s0 + $0x318] sm:$0xff]
          %v316 = vld [vmem:[%s0 + $0x320] sm:$0xff]
          %v317 = vld [vmem:[%s0 + $0x328] sm:$0xff]
          %v318 = vld [vmem:[%s0 + $0x330] sm:$0xff]
          %v319 = vld [vmem:[%s0 + $0x338] sm:$0xff]
          %v320 = vld [vmem:[%s0 + $0x340] sm:$0xff]
          %v321 = vld [vmem:[%s0 + $0x348] sm:$0xff]
          %v322 = vld [vmem:[%s0 + $0x350] sm:$0xff]
          %v323 = vld [vmem:[%s0 + $0x358] sm:$0xff]
          %v324 = vld [vmem:[%s0 + $0x360] sm:$0xff]
          %v325 = vld [vmem:[%s0 + $0x368] sm:$0xff]
          %v326 = vld [vmem:[%s0 + $0x370] sm:$0xff]
          %v327 = vld [vmem:[%s0 + $0x378] sm:$0xff]
          %v328 = vld [vmem:[#allocation2] sm:$0xff]
          %v329 = vld [vmem:[#allocation2 + $0x8] sm:$0xff]
          %v330 = vld [vmem:[#allocation2 + $0x10] sm:$0xff]
          %v331 = vld [vmem:[#allocation2 + $0x18] sm:$0xff]
          %v332 = vld [vmem:[#allocation2 + $0x20] sm:$0xff]
          %v333 = vld [vmem:[#allocation2 + $0x28] sm:$0xff]
          %v334 = vld [vmem:[#allocation2 + $0x30] sm:$0xff]
          %v335 = vld [vmem:[#allocation2 + $0x38] sm:$0xff]
          %v336 = vld [vmem:[#allocation2 + $0x40] sm:$0xff]
          %v337 = vld [vmem:[#allocation2 + $0x48] sm:$0xff]
          %v338 = vld [vmem:[#allocation2 + $0x50] sm:$0xff]
          %v339 = vld [vmem:[#allocation2 + $0x58] sm:$0xff]
          %v340 = vld [vmem:[#allocation2 + $0x60] sm:$0xff]
          %v341 = vld [vmem:[#allocation2 + $0x68] sm:$0xff]
          %v342 = vld [vmem:[#allocation2 + $0x70] sm:$0xff]
          %v343 = vld [vmem:[#allocation2 + $0x78] sm:$0xff]
          %v344 = vadd.f32 %v216, %v217
          %v345 = vadd.f32 %v344, %v218
          %v346 = vadd.f32 %v345, %v219
          %v347 = vadd.f32 %v346, %v220
          %v348 = vadd.f32 %v347, %v221
          %vm349 = vcmask 130048
          %v350 = vsel %vm349, %v222, 0.0
          %v351 = vadd.f32 %v348, %v350
          %352 = vadd.xlane.f32.xlu0 %v351
          %v353 = vpop.xlane.xlu0 %352
          %v354 = vadd.f32 %v223, %v224
          %v355 = vadd.f32 %v354, %v225
          %v356 = vadd.f32 %v355, %v226
          %v357 = vadd.f32 %v356, %v227
          %v358 = vadd.f32 %v357, %v228
          %v359 = vsel %vm349, %v229, 0.0
          %v360 = vadd.f32 %v358, %v359
          %361 = vadd.xlane.f32.xlu0 %v360
          %v362 = vpop.xlane.xlu0 %361
          %v363 = vadd.f32 %v230, %v231
          %v364 = vadd.f32 %v363, %v232
          %v365 = vadd.f32 %v364, %v233
          %v366 = vadd.f32 %v365, %v234
          %v367 = vadd.f32 %v366, %v235
          %v368 = vsel %vm349, %v236, 0.0
          %v369 = vadd.f32 %v367, %v368
          %370 = vadd.xlane.f32.xlu0 %v369
          %v371 = vpop.xlane.xlu0 %370
          %v372 = vadd.f32 %v237, %v238
          %v373 = vadd.f32 %v372, %v239
          %v374 = vadd.f32 %v373, %v240
          %v375 = vadd.f32 %v374, %v241
          %v376 = vadd.f32 %v375, %v242
          %v377 = vsel %vm349, %v243, 0.0
          %v378 = vadd.f32 %v376, %v377
          %379 = vadd.xlane.f32.xlu0 %v378
          %v380 = vpop.xlane.xlu0 %379
          %v381 = vadd.f32 %v244, %v245
          %v382 = vadd.f32 %v381, %v246
          %v383 = vadd.f32 %v382, %v247
          %v384 = vadd.f32 %v383, %v248
          %v385 = vadd.f32 %v384, %v249
          %v386 = vsel %vm349, %v250, 0.0
          %v387 = vadd.f32 %v385, %v386
          %388 = vadd.xlane.f32.xlu0 %v387
          %v389 = vpop.xlane.xlu0 %388
          %v390 = vadd.f32 %v251, %v252
          %v391 = vadd.f32 %v390, %v253
          %v392 = vadd.f32 %v391, %v254
          %v393 = vadd.f32 %v392, %v255
          %v394 = vadd.f32 %v393, %v256
          %v395 = vsel %vm349, %v257, 0.0
          %v396 = vadd.f32 %v394, %v395
          %397 = vadd.xlane.f32.xlu0 %v396
          %v398 = vpop.xlane.xlu0 %397
          %v399 = vadd.f32 %v258, %v259
          %v400 = vadd.f32 %v399, %v260
          %v401 = vadd.f32 %v400, %v261
          %v402 = vadd.f32 %v401, %v262
          %v403 = vadd.f32 %v402, %v263
          %v404 = vsel %vm349, %v264, 0.0
          %v405 = vadd.f32 %v403, %v404
          %406 = vadd.xlane.f32.xlu0 %v405
          %v407 = vpop.xlane.xlu0 %406
          %v408 = vadd.f32 %v265, %v266
          %v409 = vadd.f32 %v408, %v267
          %v410 = vadd.f32 %v409, %v268
          %v411 = vadd.f32 %v410, %v269
          %v412 = vadd.f32 %v411, %v270
          %v413 = vsel %vm349, %v271, 0.0
          %v414 = vadd.f32 %v412, %v413
          %415 = vadd.xlane.f32.xlu0 %v414
          %v416 = vpop.xlane.xlu0 %415
          %v417 = vadd.f32 %v272, %v273
          %v418 = vadd.f32 %v417, %v274
          %v419 = vadd.f32 %v418, %v275
          %v420 = vadd.f32 %v419, %v276
          %v421 = vadd.f32 %v420, %v277
          %v422 = vsel %vm349, %v278, 0.0
          %v423 = vadd.f32 %v421, %v422
          %424 = vadd.xlane.f32.xlu0 %v423
          %v425 = vpop.xlane.xlu0 %424
          %v426 = vadd.f32 %v279, %v280
          %v427 = vadd.f32 %v426, %v281
          %v428 = vadd.f32 %v427, %v282
          %v429 = vadd.f32 %v428, %v283
          %v430 = vadd.f32 %v429, %v284
          %v431 = vsel %vm349, %v285, 0.0
          %v432 = vadd.f32 %v430, %v431
          %433 = vadd.xlane.f32.xlu0 %v432
          %v434 = vpop.xlane.xlu0 %433
          %v435 = vadd.f32 %v286, %v287
          %v436 = vadd.f32 %v435, %v288
          %v437 = vadd.f32 %v436, %v289
          %v438 = vadd.f32 %v437, %v290
          %v439 = vadd.f32 %v438, %v291
          %v440 = vsel %vm349, %v292, 0.0
          %v441 = vadd.f32 %v439, %v440
          %442 = vadd.xlane.f32.xlu0 %v441
          %v443 = vpop.xlane.xlu0 %442
          %v444 = vadd.f32 %v293, %v294
          %v445 = vadd.f32 %v444, %v295
          %v446 = vadd.f32 %v445, %v296
          %v447 = vadd.f32 %v446, %v297
          %v448 = vadd.f32 %v447, %v298
          %v449 = vsel %vm349, %v299, 0.0
          %v450 = vadd.f32 %v448, %v449
          %451 = vadd.xlane.f32.xlu0 %v450
          %v452 = vpop.xlane.xlu0 %451
          %v453 = vadd.f32 %v300, %v301
          %v454 = vadd.f32 %v453, %v302
          %v455 = vadd.f32 %v454, %v303
          %v456 = vadd.f32 %v455, %v304
          %v457 = vadd.f32 %v456, %v305
          %v458 = vsel %vm349, %v306, 0.0
          %v459 = vadd.f32 %v457, %v458
          %460 = vadd.xlane.f32.xlu0 %v459
          %v461 = vpop.xlane.xlu0 %460
          %v462 = vadd.f32 %v307, %v308
          %v463 = vadd.f32 %v462, %v309
          %v464 = vadd.f32 %v463, %v310
          %v465 = vadd.f32 %v464, %v311
          %v466 = vadd.f32 %v465, %v312
          %v467 = vsel %vm349, %v313, 0.0
          %v468 = vadd.f32 %v466, %v467
          %469 = vadd.xlane.f32.xlu0 %v468
          %v470 = vpop.xlane.xlu0 %469
          %v471 = vadd.f32 %v314, %v315
          %v472 = vadd.f32 %v471, %v316
          %v473 = vadd.f32 %v472, %v317
          %v474 = vadd.f32 %v473, %v318
          %v475 = vadd.f32 %v474, %v319
          %v476 = vsel %vm349, %v320, 0.0
          %v477 = vadd.f32 %v475, %v476
          %478 = vadd.xlane.f32.xlu0 %v477
          %v479 = vpop.xlane.xlu0 %478
          %v480 = vadd.f32 %v321, %v322
          %v481 = vadd.f32 %v480, %v323
          %v482 = vadd.f32 %v481, %v324
          %v483 = vadd.f32 %v482, %v325
          %v484 = vadd.f32 %v483, %v326
          %v485 = vsel %vm349, %v327, 0.0
          %v486 = vadd.f32 %v484, %v485
          %487 = vadd.xlane.f32.xlu0 %v486
          %v488 = vpop.xlane.xlu0 %487
          %v489 = vadd.f32 %v328, %v353
          %v490 = vadd.f32 %v329, %v362
          %v491 = vadd.f32 %v330, %v371
          %v492 = vadd.f32 %v331, %v380
          %v493 = vadd.f32 %v332, %v389
          %v494 = vadd.f32 %v333, %v398
          %v495 = vadd.f32 %v334, %v407
          %v496 = vadd.f32 %v335, %v416
          %v497 = vadd.f32 %v336, %v425
          %v498 = vadd.f32 %v337, %v434
          %v499 = vadd.f32 %v338, %v443
          %v500 = vadd.f32 %v339, %v452
          %v501 = vadd.f32 %v340, %v461
          %v502 = vadd.f32 %v341, %v470
          %v503 = vadd.f32 %v342, %v479
          %v504 = vadd.f32 %v343, %v488
          %505 = vst.msk [vmem:[#allocation2] sm:$0xff] %vm199, %v489
          %506 = vst.msk [vmem:[#allocation2 + $0x8] sm:$0xff] %vm199, %v490
          %507 = vst.msk [vmem:[#allocation2 + $0x10] sm:$0xff] %vm199, %v491
          %508 = vst.msk [vmem:[#allocation2 + $0x18] sm:$0xff] %vm199, %v492
          %509 = vst.msk [vmem:[#allocation2 + $0x20] sm:$0xff] %vm199, %v493
          %510 = vst.msk [vmem:[#allocation2 + $0x28] sm:$0xff] %vm199, %v494
          %511 = vst.msk [vmem:[#allocation2 + $0x30] sm:$0xff] %vm199, %v495
          %512 = vst.msk [vmem:[#allocation2 + $0x38] sm:$0xff] %vm199, %v496
          %513 = vst.msk [vmem:[#allocation2 + $0x40] sm:$0xff] %vm199, %v497
          %514 = vst.msk [vmem:[#allocation2 + $0x48] sm:$0xff] %vm199, %v498
          %515 = vst.msk [vmem:[#allocation2 + $0x50] sm:$0xff] %vm199, %v499
          %516 = vst.msk [vmem:[#allocation2 + $0x58] sm:$0xff] %vm199, %v500
          %517 = vst.msk [vmem:[#allocation2 + $0x60] sm:$0xff] %vm199, %v501
          %518 = vst.msk [vmem:[#allocation2 + $0x68] sm:$0xff] %vm199, %v502
          %519 = vst.msk [vmem:[#allocation2 + $0x70] sm:$0xff] %vm199, %v503
          %520 = vst.msk [vmem:[#allocation2 + $0x78] sm:$0xff] %vm199, %v504
          %s521 = scalar_lea.vmem %s0, 896
          %v522 = vld [vmem:[%s521] sm:$0xff]
          %v523 = vld [vmem:[%s521 + $0x8] sm:$0xff]
          %v524 = vld [vmem:[%s521 + $0x10] sm:$0xff]
          %v525 = vld [vmem:[%s521 + $0x18] sm:$0xff]
          %v526 = vld [vmem:[%s521 + $0x20] sm:$0xff]
          %v527 = vld [vmem:[%s521 + $0x28] sm:$0xff]
          %v528 = vld [vmem:[%s521 + $0x30] sm:$0xff]
          %v529 = vld [vmem:[%s521 + $0x38] sm:$0xff]
          %v530 = vld [vmem:[%s521 + $0x40] sm:$0xff]
          %v531 = vld [vmem:[%s521 + $0x48] sm:$0xff]
          %v532 = vld [vmem:[%s521 + $0x50] sm:$0xff]
          %v533 = vld [vmem:[%s521 + $0x58] sm:$0xff]
          %v534 = vld [vmem:[%s521 + $0x60] sm:$0xff]
          %v535 = vld [vmem:[%s521 + $0x68] sm:$0xff]
          %v536 = vld [vmem:[%s521 + $0x70] sm:$0xff]
          %v537 = vld [vmem:[%s521 + $0x78] sm:$0xff]
          %v538 = vld [vmem:[%s521 + $0x80] sm:$0xff]
          %v539 = vld [vmem:[%s521 + $0x88] sm:$0xff]
          %v540 = vld [vmem:[%s521 + $0x90] sm:$0xff]
          %v541 = vld [vmem:[%s521 + $0x98] sm:$0xff]
          %v542 = vld [vmem:[%s521 + $0xa0] sm:$0xff]
          %v543 = vld [vmem:[%s521 + $0xa8] sm:$0xff]
          %v544 = vld [vmem:[%s521 + $0xb0] sm:$0xff]
          %v545 = vld [vmem:[%s521 + $0xb8] sm:$0xff]
          %v546 = vld [vmem:[%s521 + $0xc0] sm:$0xff]
          %v547 = vld [vmem:[%s521 + $0xc8] sm:$0xff]
          %v548 = vld [vmem:[%s521 + $0xd0] sm:$0xff]
          %v549 = vld [vmem:[%s521 + $0xd8] sm:$0xff]
          %v550 = vld [vmem:[%s521 + $0xe0] sm:$0xff]
          %v551 = vld [vmem:[%s521 + $0xe8] sm:$0xff]
          %v552 = vld [vmem:[%s521 + $0xf0] sm:$0xff]
          %v553 = vld [vmem:[%s521 + $0xf8] sm:$0xff]
          %v554 = vld [vmem:[%s521 + $0x100] sm:$0xff]
          %v555 = vld [vmem:[%s521 + $0x108] sm:$0xff]
          %v556 = vld [vmem:[%s521 + $0x110] sm:$0xff]
          %v557 = vld [vmem:[%s521 + $0x118] sm:$0xff]
          %v558 = vld [vmem:[%s521 + $0x120] sm:$0xff]
          %v559 = vld [vmem:[%s521 + $0x128] sm:$0xff]
          %v560 = vld [vmem:[%s521 + $0x130] sm:$0xff]
          %v561 = vld [vmem:[%s521 + $0x138] sm:$0xff]
          %v562 = vld [vmem:[%s521 + $0x140] sm:$0xff]
          %v563 = vld [vmem:[%s521 + $0x148] sm:$0xff]
          %v564 = vld [vmem:[%s521 + $0x150] sm:$0xff]
          %v565 = vld [vmem:[%s521 + $0x158] sm:$0xff]
          %v566 = vld [vmem:[%s521 + $0x160] sm:$0xff]
          %v567 = vld [vmem:[%s521 + $0x168] sm:$0xff]
          %v568 = vld [vmem:[%s521 + $0x170] sm:$0xff]
          %v569 = vld [vmem:[%s521 + $0x178] sm:$0xff]
          %v570 = vld [vmem:[%s521 + $0x180] sm:$0xff]
          %v571 = vld [vmem:[%s521 + $0x188] sm:$0xff]
          %v572 = vld [vmem:[%s521 + $0x190] sm:$0xff]
          %v573 = vld [vmem:[%s521 + $0x198] sm:$0xff]
          %v574 = vld [vmem:[%s521 + $0x1a0] sm:$0xff]
          %v575 = vld [vmem:[%s521 + $0x1a8] sm:$0xff]
          %v576 = vld [vmem:[%s521 + $0x1b0] sm:$0xff]
          %v577 = vld [vmem:[%s521 + $0x1b8] sm:$0xff]
          %v578 = vld [vmem:[%s521 + $0x1c0] sm:$0xff]
          %v579 = vld [vmem:[%s521 + $0x1c8] sm:$0xff]
          %v580 = vld [vmem:[%s521 + $0x1d0] sm:$0xff]
          %v581 = vld [vmem:[%s521 + $0x1d8] sm:$0xff]
          %v582 = vld [vmem:[%s521 + $0x1e0] sm:$0xff]
          %v583 = vld [vmem:[%s521 + $0x1e8] sm:$0xff]
          %v584 = vld [vmem:[%s521 + $0x1f0] sm:$0xff]
          %v585 = vld [vmem:[%s521 + $0x1f8] sm:$0xff]
          %v586 = vld [vmem:[%s521 + $0x200] sm:$0xff]
          %v587 = vld [vmem:[%s521 + $0x208] sm:$0xff]
          %v588 = vld [vmem:[%s521 + $0x210] sm:$0xff]
          %v589 = vld [vmem:[%s521 + $0x218] sm:$0xff]
          %v590 = vld [vmem:[%s521 + $0x220] sm:$0xff]
          %v591 = vld [vmem:[%s521 + $0x228] sm:$0xff]
          %v592 = vld [vmem:[%s521 + $0x230] sm:$0xff]
          %v593 = vld [vmem:[%s521 + $0x238] sm:$0xff]
          %v594 = vld [vmem:[%s521 + $0x240] sm:$0xff]
          %v595 = vld [vmem:[%s521 + $0x248] sm:$0xff]
          %v596 = vld [vmem:[%s521 + $0x250] sm:$0xff]
          %v597 = vld [vmem:[%s521 + $0x258] sm:$0xff]
          %v598 = vld [vmem:[%s521 + $0x260] sm:$0xff]
          %v599 = vld [vmem:[%s521 + $0x268] sm:$0xff]
          %v600 = vld [vmem:[%s521 + $0x270] sm:$0xff]
          %v601 = vld [vmem:[%s521 + $0x278] sm:$0xff]
          %v602 = vld [vmem:[%s521 + $0x280] sm:$0xff]
          %v603 = vld [vmem:[%s521 + $0x288] sm:$0xff]
          %v604 = vld [vmem:[%s521 + $0x290] sm:$0xff]
          %v605 = vld [vmem:[%s521 + $0x298] sm:$0xff]
          %v606 = vld [vmem:[%s521 + $0x2a0] sm:$0xff]
          %v607 = vld [vmem:[%s521 + $0x2a8] sm:$0xff]
          %v608 = vld [vmem:[%s521 + $0x2b0] sm:$0xff]
          %v609 = vld [vmem:[%s521 + $0x2b8] sm:$0xff]
          %v610 = vld [vmem:[%s521 + $0x2c0] sm:$0xff]
          %v611 = vld [vmem:[%s521 + $0x2c8] sm:$0xff]
          %v612 = vld [vmem:[%s521 + $0x2d0] sm:$0xff]
          %v613 = vld [vmem:[%s521 + $0x2d8] sm:$0xff]
          %v614 = vld [vmem:[%s521 + $0x2e0] sm:$0xff]
          %v615 = vld [vmem:[%s521 + $0x2e8] sm:$0xff]
          %v616 = vld [vmem:[%s521 + $0x2f0] sm:$0xff]
          %v617 = vld [vmem:[%s521 + $0x2f8] sm:$0xff]
          %v618 = vld [vmem:[%s521 + $0x300] sm:$0xff]
          %v619 = vld [vmem:[%s521 + $0x308] sm:$0xff]
          %v620 = vld [vmem:[%s521 + $0x310] sm:$0xff]
          %v621 = vld [vmem:[%s521 + $0x318] sm:$0xff]
          %v622 = vld [vmem:[%s521 + $0x320] sm:$0xff]
          %v623 = vld [vmem:[%s521 + $0x328] sm:$0xff]
          %v624 = vld [vmem:[%s521 + $0x330] sm:$0xff]
          %v625 = vld [vmem:[%s521 + $0x338] sm:$0xff]
          %v626 = vld [vmem:[%s521 + $0x340] sm:$0xff]
          %v627 = vld [vmem:[%s521 + $0x348] sm:$0xff]
          %v628 = vld [vmem:[%s521 + $0x350] sm:$0xff]
          %v629 = vld [vmem:[%s521 + $0x358] sm:$0xff]
          %v630 = vld [vmem:[%s521 + $0x360] sm:$0xff]
          %v631 = vld [vmem:[%s521 + $0x368] sm:$0xff]
          %v632 = vld [vmem:[%s521 + $0x370] sm:$0xff]
          %v633 = vld [vmem:[%s521 + $0x378] sm:$0xff]
          %v634 = vld [vmem:[#allocation2] sm:$0xff]
          %v635 = vld [vmem:[#allocation2 + $0x8] sm:$0xff]
          %v636 = vld [vmem:[#allocation2 + $0x10] sm:$0xff]
          %v637 = vld [vmem:[#allocation2 + $0x18] sm:$0xff]
          %v638 = vld [vmem:[#allocation2 + $0x20] sm:$0xff]
          %v639 = vld [vmem:[#allocation2 + $0x28] sm:$0xff]
          %v640 = vld [vmem:[#allocation2 + $0x30] sm:$0xff]
          %v641 = vld [vmem:[#allocation2 + $0x38] sm:$0xff]
          %v642 = vld [vmem:[#allocation2 + $0x40] sm:$0xff]
          %v643 = vld [vmem:[#allocation2 + $0x48] sm:$0xff]
          %v644 = vld [vmem:[#allocation2 + $0x50] sm:$0xff]
          %v645 = vld [vmem:[#allocation2 + $0x58] sm:$0xff]
          %v646 = vld [vmem:[#allocation2 + $0x60] sm:$0xff]
          %v647 = vld [vmem:[#allocation2 + $0x68] sm:$0xff]
          %v648 = vld [vmem:[#allocation2 + $0x70] sm:$0xff]
          %v649 = vld [vmem:[#allocation2 + $0x78] sm:$0xff]
          %v650 = vadd.f32 %v522, %v523
          %v651 = vadd.f32 %v650, %v524
          %v652 = vadd.f32 %v651, %v525
          %v653 = vadd.f32 %v652, %v526
          %v654 = vadd.f32 %v653, %v527
          %v655 = vsel %vm349, %v528, 0.0
          %v656 = vadd.f32 %v654, %v655
          %657 = vadd.xlane.f32.xlu0 %v656
          %v658 = vpop.xlane.xlu0 %657
          %v659 = vadd.f32 %v529, %v530
          %v660 = vadd.f32 %v659, %v531
          %v661 = vadd.f32 %v660, %v532
          %v662 = vadd.f32 %v661, %v533
          %v663 = vadd.f32 %v662, %v534
          %v664 = vsel %vm349, %v535, 0.0
          %v665 = vadd.f32 %v663, %v664
          %666 = vadd.xlane.f32.xlu0 %v665
          %v667 = vpop.xlane.xlu0 %666
          %v668 = vadd.f32 %v536, %v537
          %v669 = vadd.f32 %v668, %v538
          %v670 = vadd.f32 %v669, %v539
          %v671 = vadd.f32 %v670, %v540
          %v672 = vadd.f32 %v671, %v541
          %v673 = vsel %vm349, %v542, 0.0
          %v674 = vadd.f32 %v672, %v673
          %675 = vadd.xlane.f32.xlu0 %v674
          %v676 = vpop.xlane.xlu0 %675
          %v677 = vadd.f32 %v543, %v544
          %v678 = vadd.f32 %v677, %v545
          %v679 = vadd.f32 %v678, %v546
          %v680 = vadd.f32 %v679, %v547
          %v681 = vadd.f32 %v680, %v548
          %v682 = vsel %vm349, %v549, 0.0
          %v683 = vadd.f32 %v681, %v682
          %684 = vadd.xlane.f32.xlu0 %v683
          %v685 = vpop.xlane.xlu0 %684
          %v686 = vadd.f32 %v550, %v551
          %v687 = vadd.f32 %v686, %v552
          %v688 = vadd.f32 %v687, %v553
          %v689 = vadd.f32 %v688, %v554
          %v690 = vadd.f32 %v689, %v555
          %v691 = vsel %vm349, %v556, 0.0
          %v692 = vadd.f32 %v690, %v691
          %693 = vadd.xlane.f32.xlu0 %v692
          %v694 = vpop.xlane.xlu0 %693
          %v695 = vadd.f32 %v557, %v558
          %v696 = vadd.f32 %v695, %v559
          %v697 = vadd.f32 %v696, %v560
          %v698 = vadd.f32 %v697, %v561
          %v699 = vadd.f32 %v698, %v562
          %v700 = vsel %vm349, %v563, 0.0
          %v701 = vadd.f32 %v699, %v700
          %702 = vadd.xlane.f32.xlu0 %v701
          %v703 = vpop.xlane.xlu0 %702
          %v704 = vadd.f32 %v564, %v565
          %v705 = vadd.f32 %v704, %v566
          %v706 = vadd.f32 %v705, %v567
          %v707 = vadd.f32 %v706, %v568
          %v708 = vadd.f32 %v707, %v569
          %v709 = vsel %vm349, %v570, 0.0
          %v710 = vadd.f32 %v708, %v709
          %711 = vadd.xlane.f32.xlu0 %v710
          %v712 = vpop.xlane.xlu0 %711
          %v713 = vadd.f32 %v571, %v572
          %v714 = vadd.f32 %v713, %v573
          %v715 = vadd.f32 %v714, %v574
          %v716 = vadd.f32 %v715, %v575
          %v717 = vadd.f32 %v716, %v576
          %v718 = vsel %vm349, %v577, 0.0
          %v719 = vadd.f32 %v717, %v718
          %720 = vadd.xlane.f32.xlu0 %v719
          %v721 = vpop.xlane.xlu0 %720
          %v722 = vadd.f32 %v578, %v579
          %v723 = vadd.f32 %v722, %v580
          %v724 = vadd.f32 %v723, %v581
          %v725 = vadd.f32 %v724, %v582
          %v726 = vadd.f32 %v725, %v583
          %v727 = vsel %vm349, %v584, 0.0
          %v728 = vadd.f32 %v726, %v727
          %729 = vadd.xlane.f32.xlu0 %v728
          %v730 = vpop.xlane.xlu0 %729
          %v731 = vadd.f32 %v585, %v586
          %v732 = vadd.f32 %v731, %v587
          %v733 = vadd.f32 %v732, %v588
          %v734 = vadd.f32 %v733, %v589
          %v735 = vadd.f32 %v734, %v590
          %v736 = vsel %vm349, %v591, 0.0
          %v737 = vadd.f32 %v735, %v736
          %738 = vadd.xlane.f32.xlu0 %v737
          %v739 = vpop.xlane.xlu0 %738
          %v740 = vadd.f32 %v592, %v593
          %v741 = vadd.f32 %v740, %v594
          %v742 = vadd.f32 %v741, %v595
          %v743 = vadd.f32 %v742, %v596
          %v744 = vadd.f32 %v743, %v597
          %v745 = vsel %vm349, %v598, 0.0
          %v746 = vadd.f32 %v744, %v745
          %747 = vadd.xlane.f32.xlu0 %v746
          %v748 = vpop.xlane.xlu0 %747
          %v749 = vadd.f32 %v599, %v600
          %v750 = vadd.f32 %v749, %v601
          %v751 = vadd.f32 %v750, %v602
          %v752 = vadd.f32 %v751, %v603
          %v753 = vadd.f32 %v752, %v604
          %v754 = vsel %vm349, %v605, 0.0
          %v755 = vadd.f32 %v753, %v754
          %756 = vadd.xlane.f32.xlu0 %v755
          %v757 = vpop.xlane.xlu0 %756
          %v758 = vadd.f32 %v606, %v607
          %v759 = vadd.f32 %v758, %v608
          %v760 = vadd.f32 %v759, %v609
          %v761 = vadd.f32 %v760, %v610
          %v762 = vadd.f32 %v761, %v611
          %v763 = vsel %vm349, %v612, 0.0
          %v764 = vadd.f32 %v762, %v763
          %765 = vadd.xlane.f32.xlu0 %v764
          %v766 = vpop.xlane.xlu0 %765
          %v767 = vadd.f32 %v613, %v614
          %v768 = vadd.f32 %v767, %v615
          %v769 = vadd.f32 %v768, %v616
          %v770 = vadd.f32 %v769, %v617
          %v771 = vadd.f32 %v770, %v618
          %v772 = vsel %vm349, %v619, 0.0
          %v773 = vadd.f32 %v771, %v772
          %774 = vadd.xlane.f32.xlu0 %v773
          %v775 = vpop.xlane.xlu0 %774
          %v776 = vadd.f32 %v620, %v621
          %v777 = vadd.f32 %v776, %v622
          %v778 = vadd.f32 %v777, %v623
          %v779 = vadd.f32 %v778, %v624
          %v780 = vadd.f32 %v779, %v625
          %v781 = vsel %vm349, %v626, 0.0
          %v782 = vadd.f32 %v780, %v781
          %783 = vadd.xlane.f32.xlu0 %v782
          %v784 = vpop.xlane.xlu0 %783
          %v785 = vadd.f32 %v627, %v628
          %v786 = vadd.f32 %v785, %v629
          %v787 = vadd.f32 %v786, %v630
          %v788 = vadd.f32 %v787, %v631
          %v789 = vadd.f32 %v788, %v632
          %v790 = vsel %vm349, %v633, 0.0
          %v791 = vadd.f32 %v789, %v790
          %792 = vadd.xlane.f32.xlu0 %v791
          %v793 = vpop.xlane.xlu0 %792
          %v794 = vadd.f32 %v634, %v658
          %v795 = vadd.f32 %v635, %v667
          %v796 = vadd.f32 %v636, %v676
          %v797 = vadd.f32 %v637, %v685
          %v798 = vadd.f32 %v638, %v694
          %v799 = vadd.f32 %v639, %v703
          %v800 = vadd.f32 %v640, %v712
          %v801 = vadd.f32 %v641, %v721
          %v802 = vadd.f32 %v642, %v730
          %v803 = vadd.f32 %v643, %v739
          %v804 = vadd.f32 %v644, %v748
          %v805 = vadd.f32 %v645, %v757
          %v806 = vadd.f32 %v646, %v766
          %v807 = vadd.f32 %v647, %v775
          %v808 = vadd.f32 %v648, %v784
          %v809 = vadd.f32 %v649, %v793
          %810 = vst.msk [vmem:[#allocation2] sm:$0xff] %vm199, %v794
          %811 = vst.msk [vmem:[#allocation2 + $0x8] sm:$0xff] %vm199, %v795
          %812 = vst.msk [vmem:[#allocation2 + $0x10] sm:$0xff] %vm199, %v796
          %813 = vst.msk [vmem:[#allocation2 + $0x18] sm:$0xff] %vm199, %v797
          %814 = vst.msk [vmem:[#allocation2 + $0x20] sm:$0xff] %vm199, %v798
          %815 = vst.msk [vmem:[#allocation2 + $0x28] sm:$0xff] %vm199, %v799
          %816 = vst.msk [vmem:[#allocation2 + $0x30] sm:$0xff] %vm199, %v800
          %817 = vst.msk [vmem:[#allocation2 + $0x38] sm:$0xff] %vm199, %v801
          %818 = vst.msk [vmem:[#allocation2 + $0x40] sm:$0xff] %vm199, %v802
          %819 = vst.msk [vmem:[#allocation2 + $0x48] sm:$0xff] %vm199, %v803
          %820 = vst.msk [vmem:[#allocation2 + $0x50] sm:$0xff] %vm199, %v804
          %821 = vst.msk [vmem:[#allocation2 + $0x58] sm:$0xff] %vm199, %v805
          %822 = vst.msk [vmem:[#allocation2 + $0x60] sm:$0xff] %vm199, %v806
          %823 = vst.msk [vmem:[#allocation2 + $0x68] sm:$0xff] %vm199, %v807
          %824 = vst.msk [vmem:[#allocation2 + $0x70] sm:$0xff] %vm199, %v808
          %825 = vst.msk [vmem:[#allocation2 + $0x78] sm:$0xff] %vm199, %v809
          %v826 = vld [vmem:[#allocation2] sm:$0xff]
          %v827 = vld [vmem:[#allocation2 + $0x8] sm:$0xff]
          %v828 = vld [vmem:[#allocation2 + $0x10] sm:$0xff]
          %v829 = vld [vmem:[#allocation2 + $0x18] sm:$0xff]
          %v830 = vld [vmem:[#allocation2 + $0x20] sm:$0xff]
          %v831 = vld [vmem:[#allocation2 + $0x28] sm:$0xff]
          %v832 = vld [vmem:[#allocation2 + $0x30] sm:$0xff]
          %v833 = vld [vmem:[#allocation2 + $0x38] sm:$0xff]
          %v834 = vld [vmem:[#allocation2 + $0x40] sm:$0xff]
          %v835 = vld [vmem:[#allocation2 + $0x48] sm:$0xff]
          %v836 = vld [vmem:[#allocation2 + $0x50] sm:$0xff]
          %v837 = vld [vmem:[#allocation2 + $0x58] sm:$0xff]
          %v838 = vld [vmem:[#allocation2 + $0x60] sm:$0xff]
          %v839 = vld [vmem:[#allocation2 + $0x68] sm:$0xff]
          %v840 = vld [vmem:[#allocation2 + $0x70] sm:$0xff]
          %v841 = vld [vmem:[#allocation2 + $0x78] sm:$0xff]
          %v842 = vmul.f32 %v826, 0.0006377551
          %v843 = vmul.f32 %v827, 0.0006377551
          %v844 = vmul.f32 %v828, 0.0006377551
          %v845 = vmul.f32 %v829, 0.0006377551
          %v846 = vmul.f32 %v830, 0.0006377551
          %v847 = vmul.f32 %v831, 0.0006377551
          %v848 = vmul.f32 %v832, 0.0006377551
          %v849 = vmul.f32 %v833, 0.0006377551
          %v850 = vmul.f32 %v834, 0.0006377551
          %v851 = vmul.f32 %v835, 0.0006377551
          %v852 = vmul.f32 %v836, 0.0006377551
          %v853 = vmul.f32 %v837, 0.0006377551
          %v854 = vmul.f32 %v838, 0.0006377551
          %v855 = vmul.f32 %v839, 0.0006377551
          %v856 = vmul.f32 %v840, 0.0006377551
          %v857 = vmul.f32 %v841, 0.0006377551
          %858 = vst [vmem:[#allocation3] sm:$0xff] 0.0
          %859 = vst [vmem:[#allocation3 + $0x8] sm:$0xff] 0.0
          %860 = vst [vmem:[#allocation3 + $0x10] sm:$0xff] 0.0
          %861 = vst [vmem:[#allocation3 + $0x18] sm:$0xff] 0.0
          %862 = vst [vmem:[#allocation3 + $0x20] sm:$0xff] 0.0
          %863 = vst [vmem:[#allocation3 + $0x28] sm:$0xff] 0.0
          %864 = vst [vmem:[#allocation3 + $0x30] sm:$0xff] 0.0
          %865 = vst [vmem:[#allocation3 + $0x38] sm:$0xff] 0.0
          %866 = vst [vmem:[#allocation3 + $0x40] sm:$0xff] 0.0
          %867 = vst [vmem:[#allocation3 + $0x48] sm:$0xff] 0.0
          %868 = vst [vmem:[#allocation3 + $0x50] sm:$0xff] 0.0
          %869 = vst [vmem:[#allocation3 + $0x58] sm:$0xff] 0.0
          %870 = vst [vmem:[#allocation3 + $0x60] sm:$0xff] 0.0
          %871 = vst [vmem:[#allocation3 + $0x68] sm:$0xff] 0.0
          %872 = vst [vmem:[#allocation3 + $0x70] sm:$0xff] 0.0
          %873 = vst [vmem:[#allocation3 + $0x78] sm:$0xff] 0.0
          %v874 = vld [vmem:[%s0] sm:$0xff]
          %v875 = vld [vmem:[%s0 + $0x8] sm:$0xff]
          %v876 = vld [vmem:[%s0 + $0x10] sm:$0xff]
          %v877 = vld [vmem:[%s0 + $0x18] sm:$0xff]
          %v878 = vld [vmem:[%s0 + $0x20] sm:$0xff]
          %v879 = vld [vmem:[%s0 + $0x28] sm:$0xff]
          %v880 = vld [vmem:[%s0 + $0x30] sm:$0xff]
          %v881 = vld [vmem:[%s0 + $0x38] sm:$0xff]
          %v882 = vld [vmem:[%s0 + $0x40] sm:$0xff]
          %v883 = vld [vmem:[%s0 + $0x48] sm:$0xff]
          %v884 = vld [vmem:[%s0 + $0x50] sm:$0xff]
          %v885 = vld [vmem:[%s0 + $0x58] sm:$0xff]
          %v886 = vld [vmem:[%s0 + $0x60] sm:$0xff]
          %v887 = vld [vmem:[%s0 + $0x68] sm:$0xff]
          %v888 = vld [vmem:[%s0 + $0x70] sm:$0xff]
          %v889 = vld [vmem:[%s0 + $0x78] sm:$0xff]
          %v890 = vld [vmem:[%s0 + $0x80] sm:$0xff]
          %v891 = vld [vmem:[%s0 + $0x88] sm:$0xff]
          %v892 = vld [vmem:[%s0 + $0x90] sm:$0xff]
          %v893 = vld [vmem:[%s0 + $0x98] sm:$0xff]
          %v894 = vld [vmem:[%s0 + $0xa0] sm:$0xff]
          %v895 = vld [vmem:[%s0 + $0xa8] sm:$0xff]
          %v896 = vld [vmem:[%s0 + $0xb0] sm:$0xff]
          %v897 = vld [vmem:[%s0 + $0xb8] sm:$0xff]
          %v898 = vld [vmem:[%s0 + $0xc0] sm:$0xff]
          %v899 = vld [vmem:[%s0 + $0xc8] sm:$0xff]
          %v900 = vld [vmem:[%s0 + $0xd0] sm:$0xff]
          %v901 = vld [vmem:[%s0 + $0xd8] sm:$0xff]
          %v902 = vld [vmem:[%s0 + $0xe0] sm:$0xff]
          %v903 = vld [vmem:[%s0 + $0xe8] sm:$0xff]
          %v904 = vld [vmem:[%s0 + $0xf0] sm:$0xff]
          %v905 = vld [vmem:[%s0 + $0xf8] sm:$0xff]
          %v906 = vld [vmem:[%s0 + $0x100] sm:$0xff]
          %v907 = vld [vmem:[%s0 + $0x108] sm:$0xff]
          %v908 = vld [vmem:[%s0 + $0x110] sm:$0xff]
          %v909 = vld [vmem:[%s0 + $0x118] sm:$0xff]
          %v910 = vld [vmem:[%s0 + $0x120] sm:$0xff]
          %v911 = vld [vmem:[%s0 + $0x128] sm:$0xff]
          %v912 = vld [vmem:[%s0 + $0x130] sm:$0xff]
          %v913 = vld [vmem:[%s0 + $0x138] sm:$0xff]
          %v914 = vld [vmem:[%s0 + $0x140] sm:$0xff]
          %v915 = vld [vmem:[%s0 + $0x148] sm:$0xff]
          %v916 = vld [vmem:[%s0 + $0x150] sm:$0xff]
          %v917 = vld [vmem:[%s0 + $0x158] sm:$0xff]
          %v918 = vld [vmem:[%s0 + $0x160] sm:$0xff]
          %v919 = vld [vmem:[%s0 + $0x168] sm:$0xff]
          %v920 = vld [vmem:[%s0 + $0x170] sm:$0xff]
          %v921 = vld [vmem:[%s0 + $0x178] sm:$0xff]
          %v922 = vld [vmem:[%s0 + $0x180] sm:$0xff]
          %v923 = vld [vmem:[%s0 + $0x188] sm:$0xff]
          %v924 = vld [vmem:[%s0 + $0x190] sm:$0xff]
          %v925 = vld [vmem:[%s0 + $0x198] sm:$0xff]
          %v926 = vld [vmem:[%s0 + $0x1a0] sm:$0xff]
          %v927 = vld [vmem:[%s0 + $0x1a8] sm:$0xff]
          %v928 = vld [vmem:[%s0 + $0x1b0] sm:$0xff]
          %v929 = vld [vmem:[%s0 + $0x1b8] sm:$0xff]
          %v930 = vld [vmem:[%s0 + $0x1c0] sm:$0xff]
          %v931 = vld [vmem:[%s0 + $0x1c8] sm:$0xff]
          %v932 = vld [vmem:[%s0 + $0x1d0] sm:$0xff]
          %v933 = vld [vmem:[%s0 + $0x1d8] sm:$0xff]
          %v934 = vld [vmem:[%s0 + $0x1e0] sm:$0xff]
          %v935 = vld [vmem:[%s0 + $0x1e8] sm:$0xff]
          %v936 = vld [vmem:[%s0 + $0x1f0] sm:$0xff]
          %v937 = vld [vmem:[%s0 + $0x1f8] sm:$0xff]
          %v938 = vld [vmem:[%s0 + $0x200] sm:$0xff]
          %v939 = vld [vmem:[%s0 + $0x208] sm:$0xff]
          %v940 = vld [vmem:[%s0 + $0x210] sm:$0xff]
          %v941 = vld [vmem:[%s0 + $0x218] sm:$0xff]
          %v942 = vld [vmem:[%s0 + $0x220] sm:$0xff]
          %v943 = vld [vmem:[%s0 + $0x228] sm:$0xff]
          %v944 = vld [vmem:[%s0 + $0x230] sm:$0xff]
          %v945 = vld [vmem:[%s0 + $0x238] sm:$0xff]
          %v946 = vld [vmem:[%s0 + $0x240] sm:$0xff]
          %v947 = vld [vmem:[%s0 + $0x248] sm:$0xff]
          %v948 = vld [vmem:[%s0 + $0x250] sm:$0xff]
          %v949 = vld [vmem:[%s0 + $0x258] sm:$0xff]
          %v950 = vld [vmem:[%s0 + $0x260] sm:$0xff]
          %v951 = vld [vmem:[%s0 + $0x268] sm:$0xff]
          %v952 = vld [vmem:[%s0 + $0x270] sm:$0xff]
          %v953 = vld [vmem:[%s0 + $0x278] sm:$0xff]
          %v954 = vld [vmem:[%s0 + $0x280] sm:$0xff]
          %v955 = vld [vmem:[%s0 + $0x288] sm:$0xff]
          %v956 = vld [vmem:[%s0 + $0x290] sm:$0xff]
          %v957 = vld [vmem:[%s0 + $0x298] sm:$0xff]
          %v958 = vld [vmem:[%s0 + $0x2a0] sm:$0xff]
          %v959 = vld [vmem:[%s0 + $0x2a8] sm:$0xff]
          %v960 = vld [vmem:[%s0 + $0x2b0] sm:$0xff]
          %v961 = vld [vmem:[%s0 + $0x2b8] sm:$0xff]
          %v962 = vld [vmem:[%s0 + $0x2c0] sm:$0xff]
          %v963 = vld [vmem:[%s0 + $0x2c8] sm:$0xff]
          %v964 = vld [vmem:[%s0 + $0x2d0] sm:$0xff]
          %v965 = vld [vmem:[%s0 + $0x2d8] sm:$0xff]
          %v966 = vld [vmem:[%s0 + $0x2e0] sm:$0xff]
          %v967 = vld [vmem:[%s0 + $0x2e8] sm:$0xff]
          %v968 = vld [vmem:[%s0 + $0x2f0] sm:$0xff]
          %v969 = vld [vmem:[%s0 + $0x2f8] sm:$0xff]
          %v970 = vld [vmem:[%s0 + $0x300] sm:$0xff]
          %v971 = vld [vmem:[%s0 + $0x308] sm:$0xff]
          %v972 = vld [vmem:[%s0 + $0x310] sm:$0xff]
          %v973 = vld [vmem:[%s0 + $0x318] sm:$0xff]
          %v974 = vld [vmem:[%s0 + $0x320] sm:$0xff]
          %v975 = vld [vmem:[%s0 + $0x328] sm:$0xff]
          %v976 = vld [vmem:[%s0 + $0x330] sm:$0xff]
          %v977 = vld [vmem:[%s0 + $0x338] sm:$0xff]
          %v978 = vld [vmem:[%s0 + $0x340] sm:$0xff]
          %v979 = vld [vmem:[%s0 + $0x348] sm:$0xff]
          %v980 = vld [vmem:[%s0 + $0x350] sm:$0xff]
          %v981 = vld [vmem:[%s0 + $0x358] sm:$0xff]
          %v982 = vld [vmem:[%s0 + $0x360] sm:$0xff]
          %v983 = vld [vmem:[%s0 + $0x368] sm:$0xff]
          %v984 = vld [vmem:[%s0 + $0x370] sm:$0xff]
          %v985 = vld [vmem:[%s0 + $0x378] sm:$0xff]
          %987 = vset.pattern.permute.xlu0 0
          %988 = vperm.xlu0 %987, %v842
          %v989 = vpop.permute.xlu0 %988
          %992 = vset.pattern.permute.xlu0 0
          %993 = vperm.xlu0 %992, %v843
          %v994 = vpop.permute.xlu0 %993
          %997 = vset.pattern.permute.xlu0 0
          %998 = vperm.xlu0 %997, %v844
          %v999 = vpop.permute.xlu0 %998
          %1002 = vset.pattern.permute.xlu0 0
          %1003 = vperm.xlu0 %1002, %v845
          %v1004 = vpop.permute.xlu0 %1003
          %1007 = vset.pattern.permute.xlu0 0
          %1008 = vperm.xlu0 %1007, %v846
          %v1009 = vpop.permute.xlu0 %1008
          %1012 = vset.pattern.permute.xlu0 0
          %1013 = vperm.xlu0 %1012, %v847
          %v1014 = vpop.permute.xlu0 %1013
          %1017 = vset.pattern.permute.xlu0 0
          %1018 = vperm.xlu0 %1017, %v848
          %v1019 = vpop.permute.xlu0 %1018
          %1022 = vset.pattern.permute.xlu0 0
          %1023 = vperm.xlu0 %1022, %v849
          %v1024 = vpop.permute.xlu0 %1023
          %1027 = vset.pattern.permute.xlu0 0
          %1028 = vperm.xlu0 %1027, %v850
          %v1029 = vpop.permute.xlu0 %1028
          %1032 = vset.pattern.permute.xlu0 0
          %1033 = vperm.xlu0 %1032, %v851
          %v1034 = vpop.permute.xlu0 %1033
          %1037 = vset.pattern.permute.xlu0 0
          %1038 = vperm.xlu0 %1037, %v852
          %v1039 = vpop.permute.xlu0 %1038
          %1042 = vset.pattern.permute.xlu0 0
          %1043 = vperm.xlu0 %1042, %v853
          %v1044 = vpop.permute.xlu0 %1043
          %1047 = vset.pattern.permute.xlu0 0
          %1048 = vperm.xlu0 %1047, %v854
          %v1049 = vpop.permute.xlu0 %1048
          %1052 = vset.pattern.permute.xlu0 0
          %1053 = vperm.xlu0 %1052, %v855
          %v1054 = vpop.permute.xlu0 %1053
          %1057 = vset.pattern.permute.xlu0 0
          %1058 = vperm.xlu0 %1057, %v856
          %v1059 = vpop.permute.xlu0 %1058
          %1062 = vset.pattern.permute.xlu0 0
          %1063 = vperm.xlu0 %1062, %v857
          %v1064 = vpop.permute.xlu0 %1063
          %v1066 = vsub.f32 %v874, %v989
          %v1067 = vsub.f32 %v875, %v989
          %v1068 = vsub.f32 %v876, %v989
          %v1069 = vsub.f32 %v877, %v989
          %v1070 = vsub.f32 %v878, %v989
          %v1071 = vsub.f32 %v879, %v989
          %v1072 = vsub.f32 %v880, %v989
          %v1073 = vsub.f32 %v881, %v994
          %v1074 = vsub.f32 %v882, %v994
          %v1075 = vsub.f32 %v883, %v994
          %v1076 = vsub.f32 %v884, %v994
          %v1077 = vsub.f32 %v885, %v994
          %v1078 = vsub.f32 %v886, %v994
          %v1079 = vsub.f32 %v887, %v994
          %v1080 = vsub.f32 %v888, %v999
          %v1081 = vsub.f32 %v889, %v999
          %v1082 = vsub.f32 %v890, %v999
          %v1083 = vsub.f32 %v891, %v999
          %v1084 = vsub.f32 %v892, %v999
          %v1085 = vsub.f32 %v893, %v999
          %v1086 = vsub.f32 %v894, %v999
          %v1087 = vsub.f32 %v895, %v1004
          %v1088 = vsub.f32 %v896, %v1004
          %v1089 = vsub.f32 %v897, %v1004
          %v1090 = vsub.f32 %v898, %v1004
          %v1091 = vsub.f32 %v899, %v1004
          %v1092 = vsub.f32 %v900, %v1004
          %v1093 = vsub.f32 %v901, %v1004
          %v1094 = vsub.f32 %v902, %v1009
          %v1095 = vsub.f32 %v903, %v1009
          %v1096 = vsub.f32 %v904, %v1009
          %v1097 = vsub.f32 %v905, %v1009
          %v1098 = vsub.f32 %v906, %v1009
          %v1099 = vsub.f32 %v907, %v1009
          %v1100 = vsub.f32 %v908, %v1009
          %v1101 = vsub.f32 %v909, %v1014
          %v1102 = vsub.f32 %v910, %v1014
          %v1103 = vsub.f32 %v911, %v1014
          %v1104 = vsub.f32 %v912, %v1014
          %v1105 = vsub.f32 %v913, %v1014
          %v1106 = vsub.f32 %v914, %v1014
          %v1107 = vsub.f32 %v915, %v1014
          %v1108 = vsub.f32 %v916, %v1019
          %v1109 = vsub.f32 %v917, %v1019
          %v1110 = vsub.f32 %v918, %v1019
          %v1111 = vsub.f32 %v919, %v1019
          %v1112 = vsub.f32 %v920, %v1019
          %v1113 = vsub.f32 %v921, %v1019
          %v1114 = vsub.f32 %v922, %v1019
          %v1115 = vsub.f32 %v923, %v1024
          %v1116 = vsub.f32 %v924, %v1024
          %v1117 = vsub.f32 %v925, %v1024
          %v1118 = vsub.f32 %v926, %v1024
          %v1119 = vsub.f32 %v927, %v1024
          %v1120 = vsub.f32 %v928, %v1024
          %v1121 = vsub.f32 %v929, %v1024
          %v1122 = vsub.f32 %v930, %v1029
          %v1123 = vsub.f32 %v931, %v1029
          %v1124 = vsub.f32 %v932, %v1029
          %v1125 = vsub.f32 %v933, %v1029
          %v1126 = vsub.f32 %v934, %v1029
          %v1127 = vsub.f32 %v935, %v1029
          %v1128 = vsub.f32 %v936, %v1029
          %v1129 = vsub.f32 %v937, %v1034
          %v1130 = vsub.f32 %v938, %v1034
          %v1131 = vsub.f32 %v939, %v1034
          %v1132 = vsub.f32 %v940, %v1034
          %v1133 = vsub.f32 %v941, %v1034
          %v1134 = vsub.f32 %v942, %v1034
          %v1135 = vsub.f32 %v943, %v1034
          %v1136 = vsub.f32 %v944, %v1039
          %v1137 = vsub.f32 %v945, %v1039
          %v1138 = vsub.f32 %v946, %v1039
          %v1139 = vsub.f32 %v947, %v1039
          %v1140 = vsub.f32 %v948, %v1039
          %v1141 = vsub.f32 %v949, %v1039
          %v1142 = vsub.f32 %v950, %v1039
          %v1143 = vsub.f32 %v951, %v1044
          %v1144 = vsub.f32 %v952, %v1044
          %v1145 = vsub.f32 %v953, %v1044
          %v1146 = vsub.f32 %v954, %v1044
          %v1147 = vsub.f32 %v955, %v1044
          %v1148 = vsub.f32 %v956, %v1044
          %v1149 = vsub.f32 %v957, %v1044
          %v1150 = vsub.f32 %v958, %v1049
          %v1151 = vsub.f32 %v959, %v1049
          %v1152 = vsub.f32 %v960, %v1049
          %v1153 = vsub.f32 %v961, %v1049
          %v1154 = vsub.f32 %v962, %v1049
          %v1155 = vsub.f32 %v963, %v1049
          %v1156 = vsub.f32 %v964, %v1049
          %v1157 = vsub.f32 %v965, %v1054
          %v1158 = vsub.f32 %v966, %v1054
          %v1159 = vsub.f32 %v967, %v1054
          %v1160 = vsub.f32 %v968, %v1054
          %v1161 = vsub.f32 %v969, %v1054
          %v1162 = vsub.f32 %v970, %v1054
          %v1163 = vsub.f32 %v971, %v1054
          %v1164 = vsub.f32 %v972, %v1059
          %v1165 = vsub.f32 %v973, %v1059
          %v1166 = vsub.f32 %v974, %v1059
          %v1167 = vsub.f32 %v975, %v1059
          %v1168 = vsub.f32 %v976, %v1059
          %v1169 = vsub.f32 %v977, %v1059
          %v1170 = vsub.f32 %v978, %v1059
          %v1171 = vsub.f32 %v979, %v1064
          %v1172 = vsub.f32 %v980, %v1064
          %v1173 = vsub.f32 %v981, %v1064
          %v1174 = vsub.f32 %v982, %v1064
          %v1175 = vsub.f32 %v983, %v1064
          %v1176 = vsub.f32 %v984, %v1064
          %v1177 = vsub.f32 %v985, %v1064
          %v1178 = vld [vmem:[#allocation3] sm:$0xff]
          %v1179 = vld [vmem:[#allocation3 + $0x8] sm:$0xff]
          %v1180 = vld [vmem:[#allocation3 + $0x10] sm:$0xff]
          %v1181 = vld [vmem:[#allocation3 + $0x18] sm:$0xff]
          %v1182 = vld [vmem:[#allocation3 + $0x20] sm:$0xff]
          %v1183 = vld [vmem:[#allocation3 + $0x28] sm:$0xff]
          %v1184 = vld [vmem:[#allocation3 + $0x30] sm:$0xff]
          %v1185 = vld [vmem:[#allocation3 + $0x38] sm:$0xff]
          %v1186 = vld [vmem:[#allocation3 + $0x40] sm:$0xff]
          %v1187 = vld [vmem:[#allocation3 + $0x48] sm:$0xff]
          %v1188 = vld [vmem:[#allocation3 + $0x50] sm:$0xff]
          %v1189 = vld [vmem:[#allocation3 + $0x58] sm:$0xff]
          %v1190 = vld [vmem:[#allocation3 + $0x60] sm:$0xff]
          %v1191 = vld [vmem:[#allocation3 + $0x68] sm:$0xff]
          %v1192 = vld [vmem:[#allocation3 + $0x70] sm:$0xff]
          %v1193 = vld [vmem:[#allocation3 + $0x78] sm:$0xff]
          %v1195 = vsel %vm349, %v1072, 0
          %v1198 = vsel %vm349, %v1079, 0
          %v1201 = vsel %vm349, %v1086, 0
          %v1204 = vsel %vm349, %v1093, 0
          %v1207 = vsel %vm349, %v1100, 0
          %v1210 = vsel %vm349, %v1107, 0
          %v1213 = vsel %vm349, %v1114, 0
          %v1216 = vsel %vm349, %v1121, 0
          %v1219 = vsel %vm349, %v1128, 0
          %v1222 = vsel %vm349, %v1135, 0
          %v1225 = vsel %vm349, %v1142, 0
          %v1228 = vsel %vm349, %v1149, 0
          %v1231 = vsel %vm349, %v1156, 0
          %v1234 = vsel %vm349, %v1163, 0
          %v1237 = vsel %vm349, %v1170, 0
          %v1240 = vsel %vm349, %v1177, 0
          %1242 = vmatpush.xpose.msra.mxu0 %v1171
          %1243 = vmatpush.xpose.msra.mxu0 %v1164
          %1244 = vmatpush.xpose.msra.mxu0 %v1157
          %1245 = vmatpush.xpose.msra.mxu0 %v1150
          %1246 = vmatpush.xpose.msra.mxu0 %v1143
          %1247 = vmatpush.xpose.msra.mxu0 %v1136
          %1248 = vmatpush.xpose.msra.mxu0 %v1129
          %1249 = vmatpush.xpose.msra.mxu0 %v1122
          %1250 = vmatpush.xpose.msra.mxu0 %v1115
          %1251 = vmatpush.xpose.msra.mxu0 %v1108
          %1252 = vmatpush.xpose.msra.mxu0 %v1101
          %1253 = vmatpush.xpose.msra.mxu0 %v1094
          %1254 = vmatpush.xpose.msra.mxu0 %v1087
          %1255 = vmatpush.xpose.msra.mxu0 %v1080
          %1256 = vmatpush.xpose.msra.mxu0 %v1073
          %1257 = vmatpush.xpose.msra.mxu0 %v1066
          %1258 = vmatmul.f32.gmra.mxu0 %v1066
          %v1259 = vpop.f32.mrf.mxu0
          %v1260 = vadd.f32 0.0, %v1259
          %1261 = vmatmul.f32.gmra.mxu0 %v1073
          %v1262 = vpop.f32.mrf.mxu0
          %v1263 = vadd.f32 0.0, %v1262
          %1264 = vmatmul.f32.gmra.mxu0 %v1080
          %v1265 = vpop.f32.mrf.mxu0
          %v1266 = vadd.f32 0.0, %v1265
          %1267 = vmatmul.f32.gmra.mxu0 %v1087
          %v1268 = vpop.f32.mrf.mxu0
          %v1269 = vadd.f32 0.0, %v1268
          %1270 = vmatmul.f32.gmra.mxu0 %v1094
          %v1271 = vpop.f32.mrf.mxu0
          %v1272 = vadd.f32 0.0, %v1271
          %1273 = vmatmul.f32.gmra.mxu0 %v1101
          %v1274 = vpop.f32.mrf.mxu0
          %v1275 = vadd.f32 0.0, %v1274
          %1276 = vmatmul.f32.gmra.mxu0 %v1108
          %v1277 = vpop.f32.mrf.mxu0
          %v1278 = vadd.f32 0.0, %v1277
          %1279 = vmatmul.f32.gmra.mxu0 %v1115
          %v1280 = vpop.f32.mrf.mxu0
          %v1281 = vadd.f32 0.0, %v1280
          %1282 = vmatmul.f32.gmra.mxu0 %v1122
          %v1283 = vpop.f32.mrf.mxu0
          %v1284 = vadd.f32 0.0, %v1283
          %1285 = vmatmul.f32.gmra.mxu0 %v1129
          %v1286 = vpop.f32.mrf.mxu0
          %v1287 = vadd.f32 0.0, %v1286
          %1288 = vmatmul.f32.gmra.mxu0 %v1136
          %v1289 = vpop.f32.mrf.mxu0
          %v1290 = vadd.f32 0.0, %v1289
          %1291 = vmatmul.f32.gmra.mxu0 %v1143
          %v1292 = vpop.f32.mrf.mxu0
          %v1293 = vadd.f32 0.0, %v1292
          %1294 = vmatmul.f32.gmra.mxu0 %v1150
          %v1295 = vpop.f32.mrf.mxu0
          %v1296 = vadd.f32 0.0, %v1295
          %1297 = vmatmul.f32.gmra.mxu0 %v1157
          %v1298 = vpop.f32.mrf.mxu0
          %v1299 = vadd.f32 0.0, %v1298
          %1300 = vmatmul.f32.gmra.mxu0 %v1164
          %v1301 = vpop.f32.mrf.mxu0
          %v1302 = vadd.f32 0.0, %v1301
          %1303 = vmatmul.f32.gmra.mxu0 %v1171
          %v1304 = vpop.f32.mrf.mxu0
          %v1305 = vadd.f32 0.0, %v1304
          %1306 = vdwg.mxu0
          %1307 = vmatpush.xpose.msra.mxu0 %v1172
          %1308 = vmatpush.xpose.msra.mxu0 %v1165
          %1309 = vmatpush.xpose.msra.mxu0 %v1158
          %1310 = vmatpush.xpose.msra.mxu0 %v1151
          %1311 = vmatpush.xpose.msra.mxu0 %v1144
          %1312 = vmatpush.xpose.msra.mxu0 %v1137
          %1313 = vmatpush.xpose.msra.mxu0 %v1130
          %1314 = vmatpush.xpose.msra.mxu0 %v1123
          %1315 = vmatpush.xpose.msra.mxu0 %v1116
          %1316 = vmatpush.xpose.msra.mxu0 %v1109
          %1317 = vmatpush.xpose.msra.mxu0 %v1102
          %1318 = vmatpush.xpose.msra.mxu0 %v1095
          %1319 = vmatpush.xpose.msra.mxu0 %v1088
          %1320 = vmatpush.xpose.msra.mxu0 %v1081
          %1321 = vmatpush.xpose.msra.mxu0 %v1074
          %1322 = vmatpush.xpose.msra.mxu0 %v1067
          %1323 = vmatmul.f32.gmra.mxu0 %v1067
          %v1324 = vpop.f32.mrf.mxu0
          %v1325 = vadd.f32 %v1260, %v1324
          %1326 = vmatmul.f32.gmra.mxu0 %v1074
          %v1327 = vpop.f32.mrf.mxu0
          %v1328 = vadd.f32 %v1263, %v1327
          %1329 = vmatmul.f32.gmra.mxu0 %v1081
          %v1330 = vpop.f32.mrf.mxu0
          %v1331 = vadd.f32 %v1266, %v1330
          %1332 = vmatmul.f32.gmra.mxu0 %v1088
          %v1333 = vpop.f32.mrf.mxu0
          %v1334 = vadd.f32 %v1269, %v1333
          %1335 = vmatmul.f32.gmra.mxu0 %v1095
          %v1336 = vpop.f32.mrf.mxu0
          %v1337 = vadd.f32 %v1272, %v1336
          %1338 = vmatmul.f32.gmra.mxu0 %v1102
          %v1339 = vpop.f32.mrf.mxu0
          %v1340 = vadd.f32 %v1275, %v1339
          %1341 = vmatmul.f32.gmra.mxu0 %v1109
          %v1342 = vpop.f32.mrf.mxu0
          %v1343 = vadd.f32 %v1278, %v1342
          %1344 = vmatmul.f32.gmra.mxu0 %v1116
          %v1345 = vpop.f32.mrf.mxu0
          %v1346 = vadd.f32 %v1281, %v1345
          %1347 = vmatmul.f32.gmra.mxu0 %v1123
          %v1348 = vpop.f32.mrf.mxu0
          %v1349 = vadd.f32 %v1284, %v1348
          %1350 = vmatmul.f32.gmra.mxu0 %v1130
          %v1351 = vpop.f32.mrf.mxu0
          %v1352 = vadd.f32 %v1287, %v1351
          %1353 = vmatmul.f32.gmra.mxu0 %v1137
          %v1354 = vpop.f32.mrf.mxu0
          %v1355 = vadd.f32 %v1290, %v1354
          %1356 = vmatmul.f32.gmra.mxu0 %v1144
          %v1357 = vpop.f32.mrf.mxu0
          %v1358 = vadd.f32 %v1293, %v1357
          %1359 = vmatmul.f32.gmra.mxu0 %v1151
          %v1360 = vpop.f32.mrf.mxu0
          %v1361 = vadd.f32 %v1296, %v1360
          %1362 = vmatmul.f32.gmra.mxu0 %v1158
          %v1363 = vpop.f32.mrf.mxu0
          %v1364 = vadd.f32 %v1299, %v1363
          %1365 = vmatmul.f32.gmra.mxu0 %v1165
          %v1366 = vpop.f32.mrf.mxu0
          %v1367 = vadd.f32 %v1302, %v1366
          %1368 = vmatmul.f32.gmra.mxu0 %v1172
          %v1369 = vpop.f32.mrf.mxu0
          %v1370 = vadd.f32 %v1305, %v1369
          %1371 = vdwg.mxu0
          %1372 = vmatpush.xpose.msra.mxu0 %v1173
          %1373 = vmatpush.xpose.msra.mxu0 %v1166
          %1374 = vmatpush.xpose.msra.mxu0 %v1159
          %1375 = vmatpush.xpose.msra.mxu0 %v1152
          %1376 = vmatpush.xpose.msra.mxu0 %v1145
          %1377 = vmatpush.xpose.msra.mxu0 %v1138
          %1378 = vmatpush.xpose.msra.mxu0 %v1131
          %1379 = vmatpush.xpose.msra.mxu0 %v1124
          %1380 = vmatpush.xpose.msra.mxu0 %v1117
          %1381 = vmatpush.xpose.msra.mxu0 %v1110
          %1382 = vmatpush.xpose.msra.mxu0 %v1103
          %1383 = vmatpush.xpose.msra.mxu0 %v1096
          %1384 = vmatpush.xpose.msra.mxu0 %v1089
          %1385 = vmatpush.xpose.msra.mxu0 %v1082
          %1386 = vmatpush.xpose.msra.mxu0 %v1075
          %1387 = vmatpush.xpose.msra.mxu0 %v1068
          %1388 = vmatmul.f32.gmra.mxu0 %v1068
          %v1389 = vpop.f32.mrf.mxu0
          %v1390 = vadd.f32 %v1325, %v1389
          %1391 = vmatmul.f32.gmra.mxu0 %v1075
          %v1392 = vpop.f32.mrf.mxu0
          %v1393 = vadd.f32 %v1328, %v1392
          %1394 = vmatmul.f32.gmra.mxu0 %v1082
          %v1395 = vpop.f32.mrf.mxu0
          %v1396 = vadd.f32 %v1331, %v1395
          %1397 = vmatmul.f32.gmra.mxu0 %v1089
          %v1398 = vpop.f32.mrf.mxu0
          %v1399 = vadd.f32 %v1334, %v1398
          %1400 = vmatmul.f32.gmra.mxu0 %v1096
          %v1401 = vpop.f32.mrf.mxu0
          %v1402 = vadd.f32 %v1337, %v1401
          %1403 = vmatmul.f32.gmra.mxu0 %v1103
          %v1404 = vpop.f32.mrf.mxu0
          %v1405 = vadd.f32 %v1340, %v1404
          %1406 = vmatmul.f32.gmra.mxu0 %v1110
          %v1407 = vpop.f32.mrf.mxu0
          %v1408 = vadd.f32 %v1343, %v1407
          %1409 = vmatmul.f32.gmra.mxu0 %v1117
          %v1410 = vpop.f32.mrf.mxu0
          %v1411 = vadd.f32 %v1346, %v1410
          %1412 = vmatmul.f32.gmra.mxu0 %v1124
          %v1413 = vpop.f32.mrf.mxu0
          %v1414 = vadd.f32 %v1349, %v1413
          %1415 = vmatmul.f32.gmra.mxu0 %v1131
          %v1416 = vpop.f32.mrf.mxu0
          %v1417 = vadd.f32 %v1352, %v1416
          %1418 = vmatmul.f32.gmra.mxu0 %v1138
          %v1419 = vpop.f32.mrf.mxu0
          %v1420 = vadd.f32 %v1355, %v1419
          %1421 = vmatmul.f32.gmra.mxu0 %v1145
          %v1422 = vpop.f32.mrf.mxu0
          %v1423 = vadd.f32 %v1358, %v1422
          %1424 = vmatmul.f32.gmra.mxu0 %v1152
          %v1425 = vpop.f32.mrf.mxu0
          %v1426 = vadd.f32 %v1361, %v1425
          %1427 = vmatmul.f32.gmra.mxu0 %v1159
          %v1428 = vpop.f32.mrf.mxu0
          %v1429 = vadd.f32 %v1364, %v1428
          %1430 = vmatmul.f32.gmra.mxu0 %v1166
          %v1431 = vpop.f32.mrf.mxu0
          %v1432 = vadd.f32 %v1367, %v1431
          %1433 = vmatmul.f32.gmra.mxu0 %v1173
          %v1434 = vpop.f32.mrf.mxu0
          %v1435 = vadd.f32 %v1370, %v1434
          %1436 = vdwg.mxu0
          %1437 = vmatpush.xpose.msra.mxu0 %v1174
          %1438 = vmatpush.xpose.msra.mxu0 %v1167
          %1439 = vmatpush.xpose.msra.mxu0 %v1160
          %1440 = vmatpush.xpose.msra.mxu0 %v1153
          %1441 = vmatpush.xpose.msra.mxu0 %v1146
          %1442 = vmatpush.xpose.msra.mxu0 %v1139
          %1443 = vmatpush.xpose.msra.mxu0 %v1132
          %1444 = vmatpush.xpose.msra.mxu0 %v1125
          %1445 = vmatpush.xpose.msra.mxu0 %v1118
          %1446 = vmatpush.xpose.msra.mxu0 %v1111
          %1447 = vmatpush.xpose.msra.mxu0 %v1104
          %1448 = vmatpush.xpose.msra.mxu0 %v1097
          %1449 = vmatpush.xpose.msra.mxu0 %v1090
          %1450 = vmatpush.xpose.msra.mxu0 %v1083
          %1451 = vmatpush.xpose.msra.mxu0 %v1076
          %1452 = vmatpush.xpose.msra.mxu0 %v1069
          %1453 = vmatmul.f32.gmra.mxu0 %v1069
          %v1454 = vpop.f32.mrf.mxu0
          %v1455 = vadd.f32 %v1390, %v1454
          %1456 = vmatmul.f32.gmra.mxu0 %v1076
          %v1457 = vpop.f32.mrf.mxu0
          %v1458 = vadd.f32 %v1393, %v1457
          %1459 = vmatmul.f32.gmra.mxu0 %v1083
          %v1460 = vpop.f32.mrf.mxu0
          %v1461 = vadd.f32 %v1396, %v1460
          %1462 = vmatmul.f32.gmra.mxu0 %v1090
          %v1463 = vpop.f32.mrf.mxu0
          %v1464 = vadd.f32 %v1399, %v1463
          %1465 = vmatmul.f32.gmra.mxu0 %v1097
          %v1466 = vpop.f32.mrf.mxu0
          %v1467 = vadd.f32 %v1402, %v1466
          %1468 = vmatmul.f32.gmra.mxu0 %v1104
          %v1469 = vpop.f32.mrf.mxu0
          %v1470 = vadd.f32 %v1405, %v1469
          %1471 = vmatmul.f32.gmra.mxu0 %v1111
          %v1472 = vpop.f32.mrf.mxu0
          %v1473 = vadd.f32 %v1408, %v1472
          %1474 = vmatmul.f32.gmra.mxu0 %v1118
          %v1475 = vpop.f32.mrf.mxu0
          %v1476 = vadd.f32 %v1411, %v1475
          %1477 = vmatmul.f32.gmra.mxu0 %v1125
          %v1478 = vpop.f32.mrf.mxu0
          %v1479 = vadd.f32 %v1414, %v1478
          %1480 = vmatmul.f32.gmra.mxu0 %v1132
          %v1481 = vpop.f32.mrf.mxu0
          %v1482 = vadd.f32 %v1417, %v1481
          %1483 = vmatmul.f32.gmra.mxu0 %v1139
          %v1484 = vpop.f32.mrf.mxu0
          %v1485 = vadd.f32 %v1420, %v1484
          %1486 = vmatmul.f32.gmra.mxu0 %v1146
          %v1487 = vpop.f32.mrf.mxu0
          %v1488 = vadd.f32 %v1423, %v1487
          %1489 = vmatmul.f32.gmra.mxu0 %v1153
          %v1490 = vpop.f32.mrf.mxu0
          %v1491 = vadd.f32 %v1426, %v1490
          %1492 = vmatmul.f32.gmra.mxu0 %v1160
          %v1493 = vpop.f32.mrf.mxu0
          %v1494 = vadd.f32 %v1429, %v1493
          %1495 = vmatmul.f32.gmra.mxu0 %v1167
          %v1496 = vpop.f32.mrf.mxu0
          %v1497 = vadd.f32 %v1432, %v1496
          %1498 = vmatmul.f32.gmra.mxu0 %v1174
          %v1499 = vpop.f32.mrf.mxu0
          %v1500 = vadd.f32 %v1435, %v1499
          %1501 = vdwg.mxu0
          %1502 = vmatpush.xpose.msra.mxu0 %v1175
          %1503 = vmatpush.xpose.msra.mxu0 %v1168
          %1504 = vmatpush.xpose.msra.mxu0 %v1161
          %1505 = vmatpush.xpose.msra.mxu0 %v1154
          %1506 = vmatpush.xpose.msra.mxu0 %v1147
          %1507 = vmatpush.xpose.msra.mxu0 %v1140
          %1508 = vmatpush.xpose.msra.mxu0 %v1133
          %1509 = vmatpush.xpose.msra.mxu0 %v1126
          %1510 = vmatpush.xpose.msra.mxu0 %v1119
          %1511 = vmatpush.xpose.msra.mxu0 %v1112
          %1512 = vmatpush.xpose.msra.mxu0 %v1105
          %1513 = vmatpush.xpose.msra.mxu0 %v1098
          %1514 = vmatpush.xpose.msra.mxu0 %v1091
          %1515 = vmatpush.xpose.msra.mxu0 %v1084
          %1516 = vmatpush.xpose.msra.mxu0 %v1077
          %1517 = vmatpush.xpose.msra.mxu0 %v1070
          %1518 = vmatmul.f32.gmra.mxu0 %v1070
          %v1519 = vpop.f32.mrf.mxu0
          %v1520 = vadd.f32 %v1455, %v1519
          %1521 = vmatmul.f32.gmra.mxu0 %v1077
          %v1522 = vpop.f32.mrf.mxu0
          %v1523 = vadd.f32 %v1458, %v1522
          %1524 = vmatmul.f32.gmra.mxu0 %v1084
          %v1525 = vpop.f32.mrf.mxu0
          %v1526 = vadd.f32 %v1461, %v1525
          %1527 = vmatmul.f32.gmra.mxu0 %v1091
          %v1528 = vpop.f32.mrf.mxu0
          %v1529 = vadd.f32 %v1464, %v1528
          %1530 = vmatmul.f32.gmra.mxu0 %v1098
          %v1531 = vpop.f32.mrf.mxu0
          %v1532 = vadd.f32 %v1467, %v1531
          %1533 = vmatmul.f32.gmra.mxu0 %v1105
          %v1534 = vpop.f32.mrf.mxu0
          %v1535 = vadd.f32 %v1470, %v1534
          %1536 = vmatmul.f32.gmra.mxu0 %v1112
          %v1537 = vpop.f32.mrf.mxu0
          %v1538 = vadd.f32 %v1473, %v1537
          %1539 = vmatmul.f32.gmra.mxu0 %v1119
          %v1540 = vpop.f32.mrf.mxu0
          %v1541 = vadd.f32 %v1476, %v1540
          %1542 = vmatmul.f32.gmra.mxu0 %v1126
          %v1543 = vpop.f32.mrf.mxu0
          %v1544 = vadd.f32 %v1479, %v1543
          %1545 = vmatmul.f32.gmra.mxu0 %v1133
          %v1546 = vpop.f32.mrf.mxu0
          %v1547 = vadd.f32 %v1482, %v1546
          %1548 = vmatmul.f32.gmra.mxu0 %v1140
          %v1549 = vpop.f32.mrf.mxu0
          %v1550 = vadd.f32 %v1485, %v1549
          %1551 = vmatmul.f32.gmra.mxu0 %v1147
          %v1552 = vpop.f32.mrf.mxu0
          %v1553 = vadd.f32 %v1488, %v1552
          %1554 = vmatmul.f32.gmra.mxu0 %v1154
          %v1555 = vpop.f32.mrf.mxu0
          %v1556 = vadd.f32 %v1491, %v1555
          %1557 = vmatmul.f32.gmra.mxu0 %v1161
          %v1558 = vpop.f32.mrf.mxu0
          %v1559 = vadd.f32 %v1494, %v1558
          %1560 = vmatmul.f32.gmra.mxu0 %v1168
          %v1561 = vpop.f32.mrf.mxu0
          %v1562 = vadd.f32 %v1497, %v1561
          %1563 = vmatmul.f32.gmra.mxu0 %v1175
          %v1564 = vpop.f32.mrf.mxu0
          %v1565 = vadd.f32 %v1500, %v1564
          %1566 = vdwg.mxu0
          %1567 = vmatpush.xpose.msra.mxu0 %v1176
          %1568 = vmatpush.xpose.msra.mxu0 %v1169
          %1569 = vmatpush.xpose.msra.mxu0 %v1162
          %1570 = vmatpush.xpose.msra.mxu0 %v1155
          %1571 = vmatpush.xpose.msra.mxu0 %v1148
          %1572 = vmatpush.xpose.msra.mxu0 %v1141
          %1573 = vmatpush.xpose.msra.mxu0 %v1134
          %1574 = vmatpush.xpose.msra.mxu0 %v1127
          %1575 = vmatpush.xpose.msra.mxu0 %v1120
          %1576 = vmatpush.xpose.msra.mxu0 %v1113
          %1577 = vmatpush.xpose.msra.mxu0 %v1106
          %1578 = vmatpush.xpose.msra.mxu0 %v1099
          %1579 = vmatpush.xpose.msra.mxu0 %v1092
          %1580 = vmatpush.xpose.msra.mxu0 %v1085
          %1581 = vmatpush.xpose.msra.mxu0 %v1078
          %1582 = vmatpush.xpose.msra.mxu0 %v1071
          %1583 = vmatmul.f32.gmra.mxu0 %v1071
          %v1584 = vpop.f32.mrf.mxu0
          %v1585 = vadd.f32 %v1520, %v1584
          %1586 = vmatmul.f32.gmra.mxu0 %v1078
          %v1587 = vpop.f32.mrf.mxu0
          %v1588 = vadd.f32 %v1523, %v1587
          %1589 = vmatmul.f32.gmra.mxu0 %v1085
          %v1590 = vpop.f32.mrf.mxu0
          %v1591 = vadd.f32 %v1526, %v1590
          %1592 = vmatmul.f32.gmra.mxu0 %v1092
          %v1593 = vpop.f32.mrf.mxu0
          %v1594 = vadd.f32 %v1529, %v1593
          %1595 = vmatmul.f32.gmra.mxu0 %v1099
          %v1596 = vpop.f32.mrf.mxu0
          %v1597 = vadd.f32 %v1532, %v1596
          %1598 = vmatmul.f32.gmra.mxu0 %v1106
          %v1599 = vpop.f32.mrf.mxu0
          %v1600 = vadd.f32 %v1535, %v1599
          %1601 = vmatmul.f32.gmra.mxu0 %v1113
          %v1602 = vpop.f32.mrf.mxu0
          %v1603 = vadd.f32 %v1538, %v1602
          %1604 = vmatmul.f32.gmra.mxu0 %v1120
          %v1605 = vpop.f32.mrf.mxu0
          %v1606 = vadd.f32 %v1541, %v1605
          %1607 = vmatmul.f32.gmra.mxu0 %v1127
          %v1608 = vpop.f32.mrf.mxu0
          %v1609 = vadd.f32 %v1544, %v1608
          %1610 = vmatmul.f32.gmra.mxu0 %v1134
          %v1611 = vpop.f32.mrf.mxu0
          %v1612 = vadd.f32 %v1547, %v1611
          %1613 = vmatmul.f32.gmra.mxu0 %v1141
          %v1614 = vpop.f32.mrf.mxu0
          %v1615 = vadd.f32 %v1550, %v1614
          %1616 = vmatmul.f32.gmra.mxu0 %v1148
          %v1617 = vpop.f32.mrf.mxu0
          %v1618 = vadd.f32 %v1553, %v1617
          %1619 = vmatmul.f32.gmra.mxu0 %v1155
          %v1620 = vpop.f32.mrf.mxu0
          %v1621 = vadd.f32 %v1556, %v1620
          %1622 = vmatmul.f32.gmra.mxu0 %v1162
          %v1623 = vpop.f32.mrf.mxu0
          %v1624 = vadd.f32 %v1559, %v1623
          %1625 = vmatmul.f32.gmra.mxu0 %v1169
          %v1626 = vpop.f32.mrf.mxu0
          %v1627 = vadd.f32 %v1562, %v1626
          %1628 = vmatmul.f32.gmra.mxu0 %v1176
          %v1629 = vpop.f32.mrf.mxu0
          %v1630 = vadd.f32 %v1565, %v1629
          %1631 = vdwg.mxu0
          %1632 = vmatpush.xpose.msra.mxu0 %v1240
          %1633 = vmatpush.xpose.msra.mxu0 %v1237
          %1634 = vmatpush.xpose.msra.mxu0 %v1234
          %1635 = vmatpush.xpose.msra.mxu0 %v1231
          %1636 = vmatpush.xpose.msra.mxu0 %v1228
          %1637 = vmatpush.xpose.msra.mxu0 %v1225
          %1638 = vmatpush.xpose.msra.mxu0 %v1222
          %1639 = vmatpush.xpose.msra.mxu0 %v1219
          %1640 = vmatpush.xpose.msra.mxu0 %v1216
          %1641 = vmatpush.xpose.msra.mxu0 %v1213
          %1642 = vmatpush.xpose.msra.mxu0 %v1210
          %1643 = vmatpush.xpose.msra.mxu0 %v1207
          %1644 = vmatpush.xpose.msra.mxu0 %v1204
          %1645 = vmatpush.xpose.msra.mxu0 %v1201
          %1646 = vmatpush.xpose.msra.mxu0 %v1198
          %1647 = vmatpush.xpose.msra.mxu0 %v1195
          %1648 = vmatmul.f32.gmra.mxu0 %v1195
          %v1649 = vpop.f32.mrf.mxu0
          %v1650 = vadd.f32 %v1585, %v1649
          %1651 = vmatmul.f32.gmra.mxu0 %v1198
          %v1652 = vpop.f32.mrf.mxu0
          %v1653 = vadd.f32 %v1588, %v1652
          %1654 = vmatmul.f32.gmra.mxu0 %v1201
          %v1655 = vpop.f32.mrf.mxu0
          %v1656 = vadd.f32 %v1591, %v1655
          %1657 = vmatmul.f32.gmra.mxu0 %v1204
          %v1658 = vpop.f32.mrf.mxu0
          %v1659 = vadd.f32 %v1594, %v1658
          %1660 = vmatmul.f32.gmra.mxu0 %v1207
          %v1661 = vpop.f32.mrf.mxu0
          %v1662 = vadd.f32 %v1597, %v1661
          %1663 = vmatmul.f32.gmra.mxu0 %v1210
          %v1664 = vpop.f32.mrf.mxu0
          %v1665 = vadd.f32 %v1600, %v1664
          %1666 = vmatmul.f32.gmra.mxu0 %v1213
          %v1667 = vpop.f32.mrf.mxu0
          %v1668 = vadd.f32 %v1603, %v1667
          %1669 = vmatmul.f32.gmra.mxu0 %v1216
          %v1670 = vpop.f32.mrf.mxu0
          %v1671 = vadd.f32 %v1606, %v1670
          %1672 = vmatmul.f32.gmra.mxu0 %v1219
          %v1673 = vpop.f32.mrf.mxu0
          %v1674 = vadd.f32 %v1609, %v1673
          %1675 = vmatmul.f32.gmra.mxu0 %v1222
          %v1676 = vpop.f32.mrf.mxu0
          %v1677 = vadd.f32 %v1612, %v1676
          %1678 = vmatmul.f32.gmra.mxu0 %v1225
          %v1679 = vpop.f32.mrf.mxu0
          %v1680 = vadd.f32 %v1615, %v1679
          %1681 = vmatmul.f32.gmra.mxu0 %v1228
          %v1682 = vpop.f32.mrf.mxu0
          %v1683 = vadd.f32 %v1618, %v1682
          %1684 = vmatmul.f32.gmra.mxu0 %v1231
          %v1685 = vpop.f32.mrf.mxu0
          %v1686 = vadd.f32 %v1621, %v1685
          %1687 = vmatmul.f32.gmra.mxu0 %v1234
          %v1688 = vpop.f32.mrf.mxu0
          %v1689 = vadd.f32 %v1624, %v1688
          %1690 = vmatmul.f32.gmra.mxu0 %v1237
          %v1691 = vpop.f32.mrf.mxu0
          %v1692 = vadd.f32 %v1627, %v1691
          %1693 = vmatmul.f32.gmra.mxu0 %v1240
          %v1694 = vpop.f32.mrf.mxu0
          %v1695 = vadd.f32 %v1630, %v1694
          %1696 = vdwg.mxu0
          %v1697 = vadd.f32 %v1178, %v1650
          %v1698 = vadd.f32 %v1179, %v1653
          %v1699 = vadd.f32 %v1180, %v1656
          %v1700 = vadd.f32 %v1181, %v1659
          %v1701 = vadd.f32 %v1182, %v1662
          %v1702 = vadd.f32 %v1183, %v1665
          %v1703 = vadd.f32 %v1184, %v1668
          %v1704 = vadd.f32 %v1185, %v1671
          %v1705 = vadd.f32 %v1186, %v1674
          %v1706 = vadd.f32 %v1187, %v1677
          %v1707 = vadd.f32 %v1188, %v1680
          %v1708 = vadd.f32 %v1189, %v1683
          %v1709 = vadd.f32 %v1190, %v1686
          %v1710 = vadd.f32 %v1191, %v1689
          %v1711 = vadd.f32 %v1192, %v1692
          %v1712 = vadd.f32 %v1193, %v1695
          %1713 = vst [vmem:[#allocation3] sm:$0xff] %v1697
          %1714 = vst [vmem:[#allocation3 + $0x8] sm:$0xff] %v1698
          %1715 = vst [vmem:[#allocation3 + $0x10] sm:$0xff] %v1699
          %1716 = vst [vmem:[#allocation3 + $0x18] sm:$0xff] %v1700
          %1717 = vst [vmem:[#allocation3 + $0x20] sm:$0xff] %v1701
          %1718 = vst [vmem:[#allocation3 + $0x28] sm:$0xff] %v1702
          %1719 = vst [vmem:[#allocation3 + $0x30] sm:$0xff] %v1703
          %1720 = vst [vmem:[#allocation3 + $0x38] sm:$0xff] %v1704
          %1721 = vst [vmem:[#allocation3 + $0x40] sm:$0xff] %v1705
          %1722 = vst [vmem:[#allocation3 + $0x48] sm:$0xff] %v1706
          %1723 = vst [vmem:[#allocation3 + $0x50] sm:$0xff] %v1707
          %1724 = vst [vmem:[#allocation3 + $0x58] sm:$0xff] %v1708
          %1725 = vst [vmem:[#allocation3 + $0x60] sm:$0xff] %v1709
          %1726 = vst [vmem:[#allocation3 + $0x68] sm:$0xff] %v1710
          %1727 = vst [vmem:[#allocation3 + $0x70] sm:$0xff] %v1711
          %1728 = vst [vmem:[#allocation3 + $0x78] sm:$0xff] %v1712
          %v1729 = vld [vmem:[%s521] sm:$0xff]
          %v1730 = vld [vmem:[%s521 + $0x8] sm:$0xff]
          %v1731 = vld [vmem:[%s521 + $0x10] sm:$0xff]
          %v1732 = vld [vmem:[%s521 + $0x18] sm:$0xff]
          %v1733 = vld [vmem:[%s521 + $0x20] sm:$0xff]
          %v1734 = vld [vmem:[%s521 + $0x28] sm:$0xff]
          %v1735 = vld [vmem:[%s521 + $0x30] sm:$0xff]
          %v1736 = vld [vmem:[%s521 + $0x38] sm:$0xff]
          %v1737 = vld [vmem:[%s521 + $0x40] sm:$0xff]
          %v1738 = vld [vmem:[%s521 + $0x48] sm:$0xff]
          %v1739 = vld [vmem:[%s521 + $0x50] sm:$0xff]
          %v1740 = vld [vmem:[%s521 + $0x58] sm:$0xff]
          %v1741 = vld [vmem:[%s521 + $0x60] sm:$0xff]
          %v1742 = vld [vmem:[%s521 + $0x68] sm:$0xff]
          %v1743 = vld [vmem:[%s521 + $0x70] sm:$0xff]
          %v1744 = vld [vmem:[%s521 + $0x78] sm:$0xff]
          %v1745 = vld [vmem:[%s521 + $0x80] sm:$0xff]
          %v1746 = vld [vmem:[%s521 + $0x88] sm:$0xff]
          %v1747 = vld [vmem:[%s521 + $0x90] sm:$0xff]
          %v1748 = vld [vmem:[%s521 + $0x98] sm:$0xff]
          %v1749 = vld [vmem:[%s521 + $0xa0] sm:$0xff]
          %v1750 = vld [vmem:[%s521 + $0xa8] sm:$0xff]
          %v1751 = vld [vmem:[%s521 + $0xb0] sm:$0xff]
          %v1752 = vld [vmem:[%s521 + $0xb8] sm:$0xff]
          %v1753 = vld [vmem:[%s521 + $0xc0] sm:$0xff]
          %v1754 = vld [vmem:[%s521 + $0xc8] sm:$0xff]
          %v1755 = vld [vmem:[%s521 + $0xd0] sm:$0xff]
          %v1756 = vld [vmem:[%s521 + $0xd8] sm:$0xff]
          %v1757 = vld [vmem:[%s521 + $0xe0] sm:$0xff]
          %v1758 = vld [vmem:[%s521 + $0xe8] sm:$0xff]
          %v1759 = vld [vmem:[%s521 + $0xf0] sm:$0xff]
          %v1760 = vld [vmem:[%s521 + $0xf8] sm:$0xff]
          %v1761 = vld [vmem:[%s521 + $0x100] sm:$0xff]
          %v1762 = vld [vmem:[%s521 + $0x108] sm:$0xff]
          %v1763 = vld [vmem:[%s521 + $0x110] sm:$0xff]
          %v1764 = vld [vmem:[%s521 + $0x118] sm:$0xff]
          %v1765 = vld [vmem:[%s521 + $0x120] sm:$0xff]
          %v1766 = vld [vmem:[%s521 + $0x128] sm:$0xff]
          %v1767 = vld [vmem:[%s521 + $0x130] sm:$0xff]
          %v1768 = vld [vmem:[%s521 + $0x138] sm:$0xff]
          %v1769 = vld [vmem:[%s521 + $0x140] sm:$0xff]
          %v1770 = vld [vmem:[%s521 + $0x148] sm:$0xff]
          %v1771 = vld [vmem:[%s521 + $0x150] sm:$0xff]
          %v1772 = vld [vmem:[%s521 + $0x158] sm:$0xff]
          %v1773 = vld [vmem:[%s521 + $0x160] sm:$0xff]
          %v1774 = vld [vmem:[%s521 + $0x168] sm:$0xff]
          %v1775 = vld [vmem:[%s521 + $0x170] sm:$0xff]
          %v1776 = vld [vmem:[%s521 + $0x178] sm:$0xff]
          %v1777 = vld [vmem:[%s521 + $0x180] sm:$0xff]
          %v1778 = vld [vmem:[%s521 + $0x188] sm:$0xff]
          %v1779 = vld [vmem:[%s521 + $0x190] sm:$0xff]
          %v1780 = vld [vmem:[%s521 + $0x198] sm:$0xff]
          %v1781 = vld [vmem:[%s521 + $0x1a0] sm:$0xff]
          %v1782 = vld [vmem:[%s521 + $0x1a8] sm:$0xff]
          %v1783 = vld [vmem:[%s521 + $0x1b0] sm:$0xff]
          %v1784 = vld [vmem:[%s521 + $0x1b8] sm:$0xff]
          %v1785 = vld [vmem:[%s521 + $0x1c0] sm:$0xff]
          %v1786 = vld [vmem:[%s521 + $0x1c8] sm:$0xff]
          %v1787 = vld [vmem:[%s521 + $0x1d0] sm:$0xff]
          %v1788 = vld [vmem:[%s521 + $0x1d8] sm:$0xff]
          %v1789 = vld [vmem:[%s521 + $0x1e0] sm:$0xff]
          %v1790 = vld [vmem:[%s521 + $0x1e8] sm:$0xff]
          %v1791 = vld [vmem:[%s521 + $0x1f0] sm:$0xff]
          %v1792 = vld [vmem:[%s521 + $0x1f8] sm:$0xff]
          %v1793 = vld [vmem:[%s521 + $0x200] sm:$0xff]
          %v1794 = vld [vmem:[%s521 + $0x208] sm:$0xff]
          %v1795 = vld [vmem:[%s521 + $0x210] sm:$0xff]
          %v1796 = vld [vmem:[%s521 + $0x218] sm:$0xff]
          %v1797 = vld [vmem:[%s521 + $0x220] sm:$0xff]
          %v1798 = vld [vmem:[%s521 + $0x228] sm:$0xff]
          %v1799 = vld [vmem:[%s521 + $0x230] sm:$0xff]
          %v1800 = vld [vmem:[%s521 + $0x238] sm:$0xff]
          %v1801 = vld [vmem:[%s521 + $0x240] sm:$0xff]
          %v1802 = vld [vmem:[%s521 + $0x248] sm:$0xff]
          %v1803 = vld [vmem:[%s521 + $0x250] sm:$0xff]
          %v1804 = vld [vmem:[%s521 + $0x258] sm:$0xff]
          %v1805 = vld [vmem:[%s521 + $0x260] sm:$0xff]
          %v1806 = vld [vmem:[%s521 + $0x268] sm:$0xff]
          %v1807 = vld [vmem:[%s521 + $0x270] sm:$0xff]
          %v1808 = vld [vmem:[%s521 + $0x278] sm:$0xff]
          %v1809 = vld [vmem:[%s521 + $0x280] sm:$0xff]
          %v1810 = vld [vmem:[%s521 + $0x288] sm:$0xff]
          %v1811 = vld [vmem:[%s521 + $0x290] sm:$0xff]
          %v1812 = vld [vmem:[%s521 + $0x298] sm:$0xff]
          %v1813 = vld [vmem:[%s521 + $0x2a0] sm:$0xff]
          %v1814 = vld [vmem:[%s521 + $0x2a8] sm:$0xff]
          %v1815 = vld [vmem:[%s521 + $0x2b0] sm:$0xff]
          %v1816 = vld [vmem:[%s521 + $0x2b8] sm:$0xff]
          %v1817 = vld [vmem:[%s521 + $0x2c0] sm:$0xff]
          %v1818 = vld [vmem:[%s521 + $0x2c8] sm:$0xff]
          %v1819 = vld [vmem:[%s521 + $0x2d0] sm:$0xff]
          %v1820 = vld [vmem:[%s521 + $0x2d8] sm:$0xff]
          %v1821 = vld [vmem:[%s521 + $0x2e0] sm:$0xff]
          %v1822 = vld [vmem:[%s521 + $0x2e8] sm:$0xff]
          %v1823 = vld [vmem:[%s521 + $0x2f0] sm:$0xff]
          %v1824 = vld [vmem:[%s521 + $0x2f8] sm:$0xff]
          %v1825 = vld [vmem:[%s521 + $0x300] sm:$0xff]
          %v1826 = vld [vmem:[%s521 + $0x308] sm:$0xff]
          %v1827 = vld [vmem:[%s521 + $0x310] sm:$0xff]
          %v1828 = vld [vmem:[%s521 + $0x318] sm:$0xff]
          %v1829 = vld [vmem:[%s521 + $0x320] sm:$0xff]
          %v1830 = vld [vmem:[%s521 + $0x328] sm:$0xff]
          %v1831 = vld [vmem:[%s521 + $0x330] sm:$0xff]
          %v1832 = vld [vmem:[%s521 + $0x338] sm:$0xff]
          %v1833 = vld [vmem:[%s521 + $0x340] sm:$0xff]
          %v1834 = vld [vmem:[%s521 + $0x348] sm:$0xff]
          %v1835 = vld [vmem:[%s521 + $0x350] sm:$0xff]
          %v1836 = vld [vmem:[%s521 + $0x358] sm:$0xff]
          %v1837 = vld [vmem:[%s521 + $0x360] sm:$0xff]
          %v1838 = vld [vmem:[%s521 + $0x368] sm:$0xff]
          %v1839 = vld [vmem:[%s521 + $0x370] sm:$0xff]
          %v1840 = vld [vmem:[%s521 + $0x378] sm:$0xff]
          %v1841 = vsub.f32 %v1729, %v989
          %v1842 = vsub.f32 %v1730, %v989
          %v1843 = vsub.f32 %v1731, %v989
          %v1844 = vsub.f32 %v1732, %v989
          %v1845 = vsub.f32 %v1733, %v989
          %v1846 = vsub.f32 %v1734, %v989
          %v1847 = vsub.f32 %v1735, %v989
          %v1848 = vsub.f32 %v1736, %v994
          %v1849 = vsub.f32 %v1737, %v994
          %v1850 = vsub.f32 %v1738, %v994
          %v1851 = vsub.f32 %v1739, %v994
          %v1852 = vsub.f32 %v1740, %v994
          %v1853 = vsub.f32 %v1741, %v994
          %v1854 = vsub.f32 %v1742, %v994
          %v1855 = vsub.f32 %v1743, %v999
          %v1856 = vsub.f32 %v1744, %v999
          %v1857 = vsub.f32 %v1745, %v999
          %v1858 = vsub.f32 %v1746, %v999
          %v1859 = vsub.f32 %v1747, %v999
          %v1860 = vsub.f32 %v1748, %v999
          %v1861 = vsub.f32 %v1749, %v999
          %v1862 = vsub.f32 %v1750, %v1004
          %v1863 = vsub.f32 %v1751, %v1004
          %v1864 = vsub.f32 %v1752, %v1004
          %v1865 = vsub.f32 %v1753, %v1004
          %v1866 = vsub.f32 %v1754, %v1004
          %v1867 = vsub.f32 %v1755, %v1004
          %v1868 = vsub.f32 %v1756, %v1004
          %v1869 = vsub.f32 %v1757, %v1009
          %v1870 = vsub.f32 %v1758, %v1009
          %v1871 = vsub.f32 %v1759, %v1009
          %v1872 = vsub.f32 %v1760, %v1009
          %v1873 = vsub.f32 %v1761, %v1009
          %v1874 = vsub.f32 %v1762, %v1009
          %v1875 = vsub.f32 %v1763, %v1009
          %v1876 = vsub.f32 %v1764, %v1014
          %v1877 = vsub.f32 %v1765, %v1014
          %v1878 = vsub.f32 %v1766, %v1014
          %v1879 = vsub.f32 %v1767, %v1014
          %v1880 = vsub.f32 %v1768, %v1014
          %v1881 = vsub.f32 %v1769, %v1014
          %v1882 = vsub.f32 %v1770, %v1014
          %v1883 = vsub.f32 %v1771, %v1019
          %v1884 = vsub.f32 %v1772, %v1019
          %v1885 = vsub.f32 %v1773, %v1019
          %v1886 = vsub.f32 %v1774, %v1019
          %v1887 = vsub.f32 %v1775, %v1019
          %v1888 = vsub.f32 %v1776, %v1019
          %v1889 = vsub.f32 %v1777, %v1019
          %v1890 = vsub.f32 %v1778, %v1024
          %v1891 = vsub.f32 %v1779, %v1024
          %v1892 = vsub.f32 %v1780, %v1024
          %v1893 = vsub.f32 %v1781, %v1024
          %v1894 = vsub.f32 %v1782, %v1024
          %v1895 = vsub.f32 %v1783, %v1024
          %v1896 = vsub.f32 %v1784, %v1024
          %v1897 = vsub.f32 %v1785, %v1029
          %v1898 = vsub.f32 %v1786, %v1029
          %v1899 = vsub.f32 %v1787, %v1029
          %v1900 = vsub.f32 %v1788, %v1029
          %v1901 = vsub.f32 %v1789, %v1029
          %v1902 = vsub.f32 %v1790, %v1029
          %v1903 = vsub.f32 %v1791, %v1029
          %v1904 = vsub.f32 %v1792, %v1034
          %v1905 = vsub.f32 %v1793, %v1034
          %v1906 = vsub.f32 %v1794, %v1034
          %v1907 = vsub.f32 %v1795, %v1034
          %v1908 = vsub.f32 %v1796, %v1034
          %v1909 = vsub.f32 %v1797, %v1034
          %v1910 = vsub.f32 %v1798, %v1034
          %v1911 = vsub.f32 %v1799, %v1039
          %v1912 = vsub.f32 %v1800, %v1039
          %v1913 = vsub.f32 %v1801, %v1039
          %v1914 = vsub.f32 %v1802, %v1039
          %v1915 = vsub.f32 %v1803, %v1039
          %v1916 = vsub.f32 %v1804, %v1039
          %v1917 = vsub.f32 %v1805, %v1039
          %v1918 = vsub.f32 %v1806, %v1044
          %v1919 = vsub.f32 %v1807, %v1044
          %v1920 = vsub.f32 %v1808, %v1044
          %v1921 = vsub.f32 %v1809, %v1044
          %v1922 = vsub.f32 %v1810, %v1044
          %v1923 = vsub.f32 %v1811, %v1044
          %v1924 = vsub.f32 %v1812, %v1044
          %v1925 = vsub.f32 %v1813, %v1049
          %v1926 = vsub.f32 %v1814, %v1049
          %v1927 = vsub.f32 %v1815, %v1049
          %v1928 = vsub.f32 %v1816, %v1049
          %v1929 = vsub.f32 %v1817, %v1049
          %v1930 = vsub.f32 %v1818, %v1049
          %v1931 = vsub.f32 %v1819, %v1049
          %v1932 = vsub.f32 %v1820, %v1054
          %v1933 = vsub.f32 %v1821, %v1054
          %v1934 = vsub.f32 %v1822, %v1054
          %v1935 = vsub.f32 %v1823, %v1054
          %v1936 = vsub.f32 %v1824, %v1054
          %v1937 = vsub.f32 %v1825, %v1054
          %v1938 = vsub.f32 %v1826, %v1054
          %v1939 = vsub.f32 %v1827, %v1059
          %v1940 = vsub.f32 %v1828, %v1059
          %v1941 = vsub.f32 %v1829, %v1059
          %v1942 = vsub.f32 %v1830, %v1059
          %v1943 = vsub.f32 %v1831, %v1059
          %v1944 = vsub.f32 %v1832, %v1059
          %v1945 = vsub.f32 %v1833, %v1059
          %v1946 = vsub.f32 %v1834, %v1064
          %v1947 = vsub.f32 %v1835, %v1064
          %v1948 = vsub.f32 %v1836, %v1064
          %v1949 = vsub.f32 %v1837, %v1064
          %v1950 = vsub.f32 %v1838, %v1064
          %v1951 = vsub.f32 %v1839, %v1064
          %v1952 = vsub.f32 %v1840, %v1064
          %v1953 = vld [vmem:[#allocation3] sm:$0xff]
          %v1954 = vld [vmem:[#allocation3 + $0x8] sm:$0xff]
          %v1955 = vld [vmem:[#allocation3 + $0x10] sm:$0xff]
          %v1956 = vld [vmem:[#allocation3 + $0x18] sm:$0xff]
          %v1957 = vld [vmem:[#allocation3 + $0x20] sm:$0xff]
          %v1958 = vld [vmem:[#allocation3 + $0x28] sm:$0xff]
          %v1959 = vld [vmem:[#allocation3 + $0x30] sm:$0xff]
          %v1960 = vld [vmem:[#allocation3 + $0x38] sm:$0xff]
          %v1961 = vld [vmem:[#allocation3 + $0x40] sm:$0xff]
          %v1962 = vld [vmem:[#allocation3 + $0x48] sm:$0xff]
          %v1963 = vld [vmem:[#allocation3 + $0x50] sm:$0xff]
          %v1964 = vld [vmem:[#allocation3 + $0x58] sm:$0xff]
          %v1965 = vld [vmem:[#allocation3 + $0x60] sm:$0xff]
          %v1966 = vld [vmem:[#allocation3 + $0x68] sm:$0xff]
          %v1967 = vld [vmem:[#allocation3 + $0x70] sm:$0xff]
          %v1968 = vld [vmem:[#allocation3 + $0x78] sm:$0xff]
          %v1970 = vsel %vm349, %v1847, 0
          %v1973 = vsel %vm349, %v1854, 0
          %v1976 = vsel %vm349, %v1861, 0
          %v1979 = vsel %vm349, %v1868, 0
          %v1982 = vsel %vm349, %v1875, 0
          %v1985 = vsel %vm349, %v1882, 0
          %v1988 = vsel %vm349, %v1889, 0
          %v1991 = vsel %vm349, %v1896, 0
          %v1994 = vsel %vm349, %v1903, 0
          %v1997 = vsel %vm349, %v1910, 0
          %v2000 = vsel %vm349, %v1917, 0
          %v2003 = vsel %vm349, %v1924, 0
          %v2006 = vsel %vm349, %v1931, 0
          %v2009 = vsel %vm349, %v1938, 0
          %v2012 = vsel %vm349, %v1945, 0
          %v2015 = vsel %vm349, %v1952, 0
          %2017 = vmatpush.xpose.msra.mxu0 %v1946
          %2018 = vmatpush.xpose.msra.mxu0 %v1939
          %2019 = vmatpush.xpose.msra.mxu0 %v1932
          %2020 = vmatpush.xpose.msra.mxu0 %v1925
          %2021 = vmatpush.xpose.msra.mxu0 %v1918
          %2022 = vmatpush.xpose.msra.mxu0 %v1911
          %2023 = vmatpush.xpose.msra.mxu0 %v1904
          %2024 = vmatpush.xpose.msra.mxu0 %v1897
          %2025 = vmatpush.xpose.msra.mxu0 %v1890
          %2026 = vmatpush.xpose.msra.mxu0 %v1883
          %2027 = vmatpush.xpose.msra.mxu0 %v1876
          %2028 = vmatpush.xpose.msra.mxu0 %v1869
          %2029 = vmatpush.xpose.msra.mxu0 %v1862
          %2030 = vmatpush.xpose.msra.mxu0 %v1855
          %2031 = vmatpush.xpose.msra.mxu0 %v1848
          %2032 = vmatpush.xpose.msra.mxu0 %v1841
          %2033 = vmatmul.f32.gmra.mxu0 %v1841
          %v2034 = vpop.f32.mrf.mxu0
          %v2035 = vadd.f32 0.0, %v2034
          %2036 = vmatmul.f32.gmra.mxu0 %v1848
          %v2037 = vpop.f32.mrf.mxu0
          %v2038 = vadd.f32 0.0, %v2037
          %2039 = vmatmul.f32.gmra.mxu0 %v1855
          %v2040 = vpop.f32.mrf.mxu0
          %v2041 = vadd.f32 0.0, %v2040
          %2042 = vmatmul.f32.gmra.mxu0 %v1862
          %v2043 = vpop.f32.mrf.mxu0
          %v2044 = vadd.f32 0.0, %v2043
          %2045 = vmatmul.f32.gmra.mxu0 %v1869
          %v2046 = vpop.f32.mrf.mxu0
          %v2047 = vadd.f32 0.0, %v2046
          %2048 = vmatmul.f32.gmra.mxu0 %v1876
          %v2049 = vpop.f32.mrf.mxu0
          %v2050 = vadd.f32 0.0, %v2049
          %2051 = vmatmul.f32.gmra.mxu0 %v1883
          %v2052 = vpop.f32.mrf.mxu0
          %v2053 = vadd.f32 0.0, %v2052
          %2054 = vmatmul.f32.gmra.mxu0 %v1890
          %v2055 = vpop.f32.mrf.mxu0
          %v2056 = vadd.f32 0.0, %v2055
          %2057 = vmatmul.f32.gmra.mxu0 %v1897
          %v2058 = vpop.f32.mrf.mxu0
          %v2059 = vadd.f32 0.0, %v2058
          %2060 = vmatmul.f32.gmra.mxu0 %v1904
          %v2061 = vpop.f32.mrf.mxu0
          %v2062 = vadd.f32 0.0, %v2061
          %2063 = vmatmul.f32.gmra.mxu0 %v1911
          %v2064 = vpop.f32.mrf.mxu0
          %v2065 = vadd.f32 0.0, %v2064
          %2066 = vmatmul.f32.gmra.mxu0 %v1918
          %v2067 = vpop.f32.mrf.mxu0
          %v2068 = vadd.f32 0.0, %v2067
          %2069 = vmatmul.f32.gmra.mxu0 %v1925
          %v2070 = vpop.f32.mrf.mxu0
          %v2071 = vadd.f32 0.0, %v2070
          %2072 = vmatmul.f32.gmra.mxu0 %v1932
          %v2073 = vpop.f32.mrf.mxu0
          %v2074 = vadd.f32 0.0, %v2073
          %2075 = vmatmul.f32.gmra.mxu0 %v1939
          %v2076 = vpop.f32.mrf.mxu0
          %v2077 = vadd.f32 0.0, %v2076
          %2078 = vmatmul.f32.gmra.mxu0 %v1946
          %v2079 = vpop.f32.mrf.mxu0
          %v2080 = vadd.f32 0.0, %v2079
          %2081 = vdwg.mxu0
          %2082 = vmatpush.xpose.msra.mxu0 %v1947
          %2083 = vmatpush.xpose.msra.mxu0 %v1940
          %2084 = vmatpush.xpose.msra.mxu0 %v1933
          %2085 = vmatpush.xpose.msra.mxu0 %v1926
          %2086 = vmatpush.xpose.msra.mxu0 %v1919
          %2087 = vmatpush.xpose.msra.mxu0 %v1912
          %2088 = vmatpush.xpose.msra.mxu0 %v1905
          %2089 = vmatpush.xpose.msra.mxu0 %v1898
          %2090 = vmatpush.xpose.msra.mxu0 %v1891
          %2091 = vmatpush.xpose.msra.mxu0 %v1884
          %2092 = vmatpush.xpose.msra.mxu0 %v1877
          %2093 = vmatpush.xpose.msra.mxu0 %v1870
          %2094 = vmatpush.xpose.msra.mxu0 %v1863
          %2095 = vmatpush.xpose.msra.mxu0 %v1856
          %2096 = vmatpush.xpose.msra.mxu0 %v1849
          %2097 = vmatpush.xpose.msra.mxu0 %v1842
          %2098 = vmatmul.f32.gmra.mxu0 %v1842
          %v2099 = vpop.f32.mrf.mxu0
          %v2100 = vadd.f32 %v2035, %v2099
          %2101 = vmatmul.f32.gmra.mxu0 %v1849
          %v2102 = vpop.f32.mrf.mxu0
          %v2103 = vadd.f32 %v2038, %v2102
          %2104 = vmatmul.f32.gmra.mxu0 %v1856
          %v2105 = vpop.f32.mrf.mxu0
          %v2106 = vadd.f32 %v2041, %v2105
          %2107 = vmatmul.f32.gmra.mxu0 %v1863
          %v2108 = vpop.f32.mrf.mxu0
          %v2109 = vadd.f32 %v2044, %v2108
          %2110 = vmatmul.f32.gmra.mxu0 %v1870
          %v2111 = vpop.f32.mrf.mxu0
          %v2112 = vadd.f32 %v2047, %v2111
          %2113 = vmatmul.f32.gmra.mxu0 %v1877
          %v2114 = vpop.f32.mrf.mxu0
          %v2115 = vadd.f32 %v2050, %v2114
          %2116 = vmatmul.f32.gmra.mxu0 %v1884
          %v2117 = vpop.f32.mrf.mxu0
          %v2118 = vadd.f32 %v2053, %v2117
          %2119 = vmatmul.f32.gmra.mxu0 %v1891
          %v2120 = vpop.f32.mrf.mxu0
          %v2121 = vadd.f32 %v2056, %v2120
          %2122 = vmatmul.f32.gmra.mxu0 %v1898
          %v2123 = vpop.f32.mrf.mxu0
          %v2124 = vadd.f32 %v2059, %v2123
          %2125 = vmatmul.f32.gmra.mxu0 %v1905
          %v2126 = vpop.f32.mrf.mxu0
          %v2127 = vadd.f32 %v2062, %v2126
          %2128 = vmatmul.f32.gmra.mxu0 %v1912
          %v2129 = vpop.f32.mrf.mxu0
          %v2130 = vadd.f32 %v2065, %v2129
          %2131 = vmatmul.f32.gmra.mxu0 %v1919
          %v2132 = vpop.f32.mrf.mxu0
          %v2133 = vadd.f32 %v2068, %v2132
          %2134 = vmatmul.f32.gmra.mxu0 %v1926
          %v2135 = vpop.f32.mrf.mxu0
          %v2136 = vadd.f32 %v2071, %v2135
          %2137 = vmatmul.f32.gmra.mxu0 %v1933
          %v2138 = vpop.f32.mrf.mxu0
          %v2139 = vadd.f32 %v2074, %v2138
          %2140 = vmatmul.f32.gmra.mxu0 %v1940
          %v2141 = vpop.f32.mrf.mxu0
          %v2142 = vadd.f32 %v2077, %v2141
          %2143 = vmatmul.f32.gmra.mxu0 %v1947
          %v2144 = vpop.f32.mrf.mxu0
          %v2145 = vadd.f32 %v2080, %v2144
          %2146 = vdwg.mxu0
          %2147 = vmatpush.xpose.msra.mxu0 %v1948
          %2148 = vmatpush.xpose.msra.mxu0 %v1941
          %2149 = vmatpush.xpose.msra.mxu0 %v1934
          %2150 = vmatpush.xpose.msra.mxu0 %v1927
          %2151 = vmatpush.xpose.msra.mxu0 %v1920
          %2152 = vmatpush.xpose.msra.mxu0 %v1913
          %2153 = vmatpush.xpose.msra.mxu0 %v1906
          %2154 = vmatpush.xpose.msra.mxu0 %v1899
          %2155 = vmatpush.xpose.msra.mxu0 %v1892
          %2156 = vmatpush.xpose.msra.mxu0 %v1885
          %2157 = vmatpush.xpose.msra.mxu0 %v1878
          %2158 = vmatpush.xpose.msra.mxu0 %v1871
          %2159 = vmatpush.xpose.msra.mxu0 %v1864
          %2160 = vmatpush.xpose.msra.mxu0 %v1857
          %2161 = vmatpush.xpose.msra.mxu0 %v1850
          %2162 = vmatpush.xpose.msra.mxu0 %v1843
          %2163 = vmatmul.f32.gmra.mxu0 %v1843
          %v2164 = vpop.f32.mrf.mxu0
          %v2165 = vadd.f32 %v2100, %v2164
          %2166 = vmatmul.f32.gmra.mxu0 %v1850
          %v2167 = vpop.f32.mrf.mxu0
          %v2168 = vadd.f32 %v2103, %v2167
          %2169 = vmatmul.f32.gmra.mxu0 %v1857
          %v2170 = vpop.f32.mrf.mxu0
          %v2171 = vadd.f32 %v2106, %v2170
          %2172 = vmatmul.f32.gmra.mxu0 %v1864
          %v2173 = vpop.f32.mrf.mxu0
          %v2174 = vadd.f32 %v2109, %v2173
          %2175 = vmatmul.f32.gmra.mxu0 %v1871
          %v2176 = vpop.f32.mrf.mxu0
          %v2177 = vadd.f32 %v2112, %v2176
          %2178 = vmatmul.f32.gmra.mxu0 %v1878
          %v2179 = vpop.f32.mrf.mxu0
          %v2180 = vadd.f32 %v2115, %v2179
          %2181 = vmatmul.f32.gmra.mxu0 %v1885
          %v2182 = vpop.f32.mrf.mxu0
          %v2183 = vadd.f32 %v2118, %v2182
          %2184 = vmatmul.f32.gmra.mxu0 %v1892
          %v2185 = vpop.f32.mrf.mxu0
          %v2186 = vadd.f32 %v2121, %v2185
          %2187 = vmatmul.f32.gmra.mxu0 %v1899
          %v2188 = vpop.f32.mrf.mxu0
          %v2189 = vadd.f32 %v2124, %v2188
          %2190 = vmatmul.f32.gmra.mxu0 %v1906
          %v2191 = vpop.f32.mrf.mxu0
          %v2192 = vadd.f32 %v2127, %v2191
          %2193 = vmatmul.f32.gmra.mxu0 %v1913
          %v2194 = vpop.f32.mrf.mxu0
          %v2195 = vadd.f32 %v2130, %v2194
          %2196 = vmatmul.f32.gmra.mxu0 %v1920
          %v2197 = vpop.f32.mrf.mxu0
          %v2198 = vadd.f32 %v2133, %v2197
          %2199 = vmatmul.f32.gmra.mxu0 %v1927
          %v2200 = vpop.f32.mrf.mxu0
          %v2201 = vadd.f32 %v2136, %v2200
          %2202 = vmatmul.f32.gmra.mxu0 %v1934
          %v2203 = vpop.f32.mrf.mxu0
          %v2204 = vadd.f32 %v2139, %v2203
          %2205 = vmatmul.f32.gmra.mxu0 %v1941
          %v2206 = vpop.f32.mrf.mxu0
          %v2207 = vadd.f32 %v2142, %v2206
          %2208 = vmatmul.f32.gmra.mxu0 %v1948
          %v2209 = vpop.f32.mrf.mxu0
          %v2210 = vadd.f32 %v2145, %v2209
          %2211 = vdwg.mxu0
          %2212 = vmatpush.xpose.msra.mxu0 %v1949
          %2213 = vmatpush.xpose.msra.mxu0 %v1942
          %2214 = vmatpush.xpose.msra.mxu0 %v1935
          %2215 = vmatpush.xpose.msra.mxu0 %v1928
          %2216 = vmatpush.xpose.msra.mxu0 %v1921
          %2217 = vmatpush.xpose.msra.mxu0 %v1914
          %2218 = vmatpush.xpose.msra.mxu0 %v1907
          %2219 = vmatpush.xpose.msra.mxu0 %v1900
          %2220 = vmatpush.xpose.msra.mxu0 %v1893
          %2221 = vmatpush.xpose.msra.mxu0 %v1886
          %2222 = vmatpush.xpose.msra.mxu0 %v1879
          %2223 = vmatpush.xpose.msra.mxu0 %v1872
          %2224 = vmatpush.xpose.msra.mxu0 %v1865
          %2225 = vmatpush.xpose.msra.mxu0 %v1858
          %2226 = vmatpush.xpose.msra.mxu0 %v1851
          %2227 = vmatpush.xpose.msra.mxu0 %v1844
          %2228 = vmatmul.f32.gmra.mxu0 %v1844
          %v2229 = vpop.f32.mrf.mxu0
          %v2230 = vadd.f32 %v2165, %v2229
          %2231 = vmatmul.f32.gmra.mxu0 %v1851
          %v2232 = vpop.f32.mrf.mxu0
          %v2233 = vadd.f32 %v2168, %v2232
          %2234 = vmatmul.f32.gmra.mxu0 %v1858
          %v2235 = vpop.f32.mrf.mxu0
          %v2236 = vadd.f32 %v2171, %v2235
          %2237 = vmatmul.f32.gmra.mxu0 %v1865
          %v2238 = vpop.f32.mrf.mxu0
          %v2239 = vadd.f32 %v2174, %v2238
          %2240 = vmatmul.f32.gmra.mxu0 %v1872
          %v2241 = vpop.f32.mrf.mxu0
          %v2242 = vadd.f32 %v2177, %v2241
          %2243 = vmatmul.f32.gmra.mxu0 %v1879
          %v2244 = vpop.f32.mrf.mxu0
          %v2245 = vadd.f32 %v2180, %v2244
          %2246 = vmatmul.f32.gmra.mxu0 %v1886
          %v2247 = vpop.f32.mrf.mxu0
          %v2248 = vadd.f32 %v2183, %v2247
          %2249 = vmatmul.f32.gmra.mxu0 %v1893
          %v2250 = vpop.f32.mrf.mxu0
          %v2251 = vadd.f32 %v2186, %v2250
          %2252 = vmatmul.f32.gmra.mxu0 %v1900
          %v2253 = vpop.f32.mrf.mxu0
          %v2254 = vadd.f32 %v2189, %v2253
          %2255 = vmatmul.f32.gmra.mxu0 %v1907
          %v2256 = vpop.f32.mrf.mxu0
          %v2257 = vadd.f32 %v2192, %v2256
          %2258 = vmatmul.f32.gmra.mxu0 %v1914
          %v2259 = vpop.f32.mrf.mxu0
          %v2260 = vadd.f32 %v2195, %v2259
          %2261 = vmatmul.f32.gmra.mxu0 %v1921
          %v2262 = vpop.f32.mrf.mxu0
          %v2263 = vadd.f32 %v2198, %v2262
          %2264 = vmatmul.f32.gmra.mxu0 %v1928
          %v2265 = vpop.f32.mrf.mxu0
          %v2266 = vadd.f32 %v2201, %v2265
          %2267 = vmatmul.f32.gmra.mxu0 %v1935
          %v2268 = vpop.f32.mrf.mxu0
          %v2269 = vadd.f32 %v2204, %v2268
          %2270 = vmatmul.f32.gmra.mxu0 %v1942
          %v2271 = vpop.f32.mrf.mxu0
          %v2272 = vadd.f32 %v2207, %v2271
          %2273 = vmatmul.f32.gmra.mxu0 %v1949
          %v2274 = vpop.f32.mrf.mxu0
          %v2275 = vadd.f32 %v2210, %v2274
          %2276 = vdwg.mxu0
          %2277 = vmatpush.xpose.msra.mxu0 %v1950
          %2278 = vmatpush.xpose.msra.mxu0 %v1943
          %2279 = vmatpush.xpose.msra.mxu0 %v1936
          %2280 = vmatpush.xpose.msra.mxu0 %v1929
          %2281 = vmatpush.xpose.msra.mxu0 %v1922
          %2282 = vmatpush.xpose.msra.mxu0 %v1915
          %2283 = vmatpush.xpose.msra.mxu0 %v1908
          %2284 = vmatpush.xpose.msra.mxu0 %v1901
          %2285 = vmatpush.xpose.msra.mxu0 %v1894
          %2286 = vmatpush.xpose.msra.mxu0 %v1887
          %2287 = vmatpush.xpose.msra.mxu0 %v1880
          %2288 = vmatpush.xpose.msra.mxu0 %v1873
          %2289 = vmatpush.xpose.msra.mxu0 %v1866
          %2290 = vmatpush.xpose.msra.mxu0 %v1859
          %2291 = vmatpush.xpose.msra.mxu0 %v1852
          %2292 = vmatpush.xpose.msra.mxu0 %v1845
          %2293 = vmatmul.f32.gmra.mxu0 %v1845
          %v2294 = vpop.f32.mrf.mxu0
          %v2295 = vadd.f32 %v2230, %v2294
          %2296 = vmatmul.f32.gmra.mxu0 %v1852
          %v2297 = vpop.f32.mrf.mxu0
          %v2298 = vadd.f32 %v2233, %v2297
          %2299 = vmatmul.f32.gmra.mxu0 %v1859
          %v2300 = vpop.f32.mrf.mxu0
          %v2301 = vadd.f32 %v2236, %v2300
          %2302 = vmatmul.f32.gmra.mxu0 %v1866
          %v2303 = vpop.f32.mrf.mxu0
          %v2304 = vadd.f32 %v2239, %v2303
          %2305 = vmatmul.f32.gmra.mxu0 %v1873
          %v2306 = vpop.f32.mrf.mxu0
          %v2307 = vadd.f32 %v2242, %v2306
          %2308 = vmatmul.f32.gmra.mxu0 %v1880
          %v2309 = vpop.f32.mrf.mxu0
          %v2310 = vadd.f32 %v2245, %v2309
          %2311 = vmatmul.f32.gmra.mxu0 %v1887
          %v2312 = vpop.f32.mrf.mxu0
          %v2313 = vadd.f32 %v2248, %v2312
          %2314 = vmatmul.f32.gmra.mxu0 %v1894
          %v2315 = vpop.f32.mrf.mxu0
          %v2316 = vadd.f32 %v2251, %v2315
          %2317 = vmatmul.f32.gmra.mxu0 %v1901
          %v2318 = vpop.f32.mrf.mxu0
          %v2319 = vadd.f32 %v2254, %v2318
          %2320 = vmatmul.f32.gmra.mxu0 %v1908
          %v2321 = vpop.f32.mrf.mxu0
          %v2322 = vadd.f32 %v2257, %v2321
          %2323 = vmatmul.f32.gmra.mxu0 %v1915
          %v2324 = vpop.f32.mrf.mxu0
          %v2325 = vadd.f32 %v2260, %v2324
          %2326 = vmatmul.f32.gmra.mxu0 %v1922
          %v2327 = vpop.f32.mrf.mxu0
          %v2328 = vadd.f32 %v2263, %v2327
          %2329 = vmatmul.f32.gmra.mxu0 %v1929
          %v2330 = vpop.f32.mrf.mxu0
          %v2331 = vadd.f32 %v2266, %v2330
          %2332 = vmatmul.f32.gmra.mxu0 %v1936
          %v2333 = vpop.f32.mrf.mxu0
          %v2334 = vadd.f32 %v2269, %v2333
          %2335 = vmatmul.f32.gmra.mxu0 %v1943
          %v2336 = vpop.f32.mrf.mxu0
          %v2337 = vadd.f32 %v2272, %v2336
          %2338 = vmatmul.f32.gmra.mxu0 %v1950
          %v2339 = vpop.f32.mrf.mxu0
          %v2340 = vadd.f32 %v2275, %v2339
          %2341 = vdwg.mxu0
          %2342 = vmatpush.xpose.msra.mxu0 %v1951
          %2343 = vmatpush.xpose.msra.mxu0 %v1944
          %2344 = vmatpush.xpose.msra.mxu0 %v1937
          %2345 = vmatpush.xpose.msra.mxu0 %v1930
          %2346 = vmatpush.xpose.msra.mxu0 %v1923
          %2347 = vmatpush.xpose.msra.mxu0 %v1916
          %2348 = vmatpush.xpose.msra.mxu0 %v1909
          %2349 = vmatpush.xpose.msra.mxu0 %v1902
          %2350 = vmatpush.xpose.msra.mxu0 %v1895
          %2351 = vmatpush.xpose.msra.mxu0 %v1888
          %2352 = vmatpush.xpose.msra.mxu0 %v1881
          %2353 = vmatpush.xpose.msra.mxu0 %v1874
          %2354 = vmatpush.xpose.msra.mxu0 %v1867
          %2355 = vmatpush.xpose.msra.mxu0 %v1860
          %2356 = vmatpush.xpose.msra.mxu0 %v1853
          %2357 = vmatpush.xpose.msra.mxu0 %v1846
          %2358 = vmatmul.f32.gmra.mxu0 %v1846
          %v2359 = vpop.f32.mrf.mxu0
          %v2360 = vadd.f32 %v2295, %v2359
          %2361 = vmatmul.f32.gmra.mxu0 %v1853
          %v2362 = vpop.f32.mrf.mxu0
          %v2363 = vadd.f32 %v2298, %v2362
          %2364 = vmatmul.f32.gmra.mxu0 %v1860
          %v2365 = vpop.f32.mrf.mxu0
          %v2366 = vadd.f32 %v2301, %v2365
          %2367 = vmatmul.f32.gmra.mxu0 %v1867
          %v2368 = vpop.f32.mrf.mxu0
          %v2369 = vadd.f32 %v2304, %v2368
          %2370 = vmatmul.f32.gmra.mxu0 %v1874
          %v2371 = vpop.f32.mrf.mxu0
          %v2372 = vadd.f32 %v2307, %v2371
          %2373 = vmatmul.f32.gmra.mxu0 %v1881
          %v2374 = vpop.f32.mrf.mxu0
          %v2375 = vadd.f32 %v2310, %v2374
          %2376 = vmatmul.f32.gmra.mxu0 %v1888
          %v2377 = vpop.f32.mrf.mxu0
          %v2378 = vadd.f32 %v2313, %v2377
          %2379 = vmatmul.f32.gmra.mxu0 %v1895
          %v2380 = vpop.f32.mrf.mxu0
          %v2381 = vadd.f32 %v2316, %v2380
          %2382 = vmatmul.f32.gmra.mxu0 %v1902
          %v2383 = vpop.f32.mrf.mxu0
          %v2384 = vadd.f32 %v2319, %v2383
          %2385 = vmatmul.f32.gmra.mxu0 %v1909
          %v2386 = vpop.f32.mrf.mxu0
          %v2387 = vadd.f32 %v2322, %v2386
          %2388 = vmatmul.f32.gmra.mxu0 %v1916
          %v2389 = vpop.f32.mrf.mxu0
          %v2390 = vadd.f32 %v2325, %v2389
          %2391 = vmatmul.f32.gmra.mxu0 %v1923
          %v2392 = vpop.f32.mrf.mxu0
          %v2393 = vadd.f32 %v2328, %v2392
          %2394 = vmatmul.f32.gmra.mxu0 %v1930
          %v2395 = vpop.f32.mrf.mxu0
          %v2396 = vadd.f32 %v2331, %v2395
          %2397 = vmatmul.f32.gmra.mxu0 %v1937
          %v2398 = vpop.f32.mrf.mxu0
          %v2399 = vadd.f32 %v2334, %v2398
          %2400 = vmatmul.f32.gmra.mxu0 %v1944
          %v2401 = vpop.f32.mrf.mxu0
          %v2402 = vadd.f32 %v2337, %v2401
          %2403 = vmatmul.f32.gmra.mxu0 %v1951
          %v2404 = vpop.f32.mrf.mxu0
          %v2405 = vadd.f32 %v2340, %v2404
          %2406 = vdwg.mxu0
          %2407 = vmatpush.xpose.msra.mxu0 %v2015
          %2408 = vmatpush.xpose.msra.mxu0 %v2012
          %2409 = vmatpush.xpose.msra.mxu0 %v2009
          %2410 = vmatpush.xpose.msra.mxu0 %v2006
          %2411 = vmatpush.xpose.msra.mxu0 %v2003
          %2412 = vmatpush.xpose.msra.mxu0 %v2000
          %2413 = vmatpush.xpose.msra.mxu0 %v1997
          %2414 = vmatpush.xpose.msra.mxu0 %v1994
          %2415 = vmatpush.xpose.msra.mxu0 %v1991
          %2416 = vmatpush.xpose.msra.mxu0 %v1988
          %2417 = vmatpush.xpose.msra.mxu0 %v1985
          %2418 = vmatpush.xpose.msra.mxu0 %v1982
          %2419 = vmatpush.xpose.msra.mxu0 %v1979
          %2420 = vmatpush.xpose.msra.mxu0 %v1976
          %2421 = vmatpush.xpose.msra.mxu0 %v1973
          %2422 = vmatpush.xpose.msra.mxu0 %v1970
          %2423 = vmatmul.f32.gmra.mxu0 %v1970
          %v2424 = vpop.f32.mrf.mxu0
          %v2425 = vadd.f32 %v2360, %v2424
          %2426 = vmatmul.f32.gmra.mxu0 %v1973
          %v2427 = vpop.f32.mrf.mxu0
          %v2428 = vadd.f32 %v2363, %v2427
          %2429 = vmatmul.f32.gmra.mxu0 %v1976
          %v2430 = vpop.f32.mrf.mxu0
          %v2431 = vadd.f32 %v2366, %v2430
          %2432 = vmatmul.f32.gmra.mxu0 %v1979
          %v2433 = vpop.f32.mrf.mxu0
          %v2434 = vadd.f32 %v2369, %v2433
          %2435 = vmatmul.f32.gmra.mxu0 %v1982
          %v2436 = vpop.f32.mrf.mxu0
          %v2437 = vadd.f32 %v2372, %v2436
          %2438 = vmatmul.f32.gmra.mxu0 %v1985
          %v2439 = vpop.f32.mrf.mxu0
          %v2440 = vadd.f32 %v2375, %v2439
          %2441 = vmatmul.f32.gmra.mxu0 %v1988
          %v2442 = vpop.f32.mrf.mxu0
          %v2443 = vadd.f32 %v2378, %v2442
          %2444 = vmatmul.f32.gmra.mxu0 %v1991
          %v2445 = vpop.f32.mrf.mxu0
          %v2446 = vadd.f32 %v2381, %v2445
          %2447 = vmatmul.f32.gmra.mxu0 %v1994
          %v2448 = vpop.f32.mrf.mxu0
          %v2449 = vadd.f32 %v2384, %v2448
          %2450 = vmatmul.f32.gmra.mxu0 %v1997
          %v2451 = vpop.f32.mrf.mxu0
          %v2452 = vadd.f32 %v2387, %v2451
          %2453 = vmatmul.f32.gmra.mxu0 %v2000
          %v2454 = vpop.f32.mrf.mxu0
          %v2455 = vadd.f32 %v2390, %v2454
          %2456 = vmatmul.f32.gmra.mxu0 %v2003
          %v2457 = vpop.f32.mrf.mxu0
          %v2458 = vadd.f32 %v2393, %v2457
          %2459 = vmatmul.f32.gmra.mxu0 %v2006
          %v2460 = vpop.f32.mrf.mxu0
          %v2461 = vadd.f32 %v2396, %v2460
          %2462 = vmatmul.f32.gmra.mxu0 %v2009
          %v2463 = vpop.f32.mrf.mxu0
          %v2464 = vadd.f32 %v2399, %v2463
          %2465 = vmatmul.f32.gmra.mxu0 %v2012
          %v2466 = vpop.f32.mrf.mxu0
          %v2467 = vadd.f32 %v2402, %v2466
          %2468 = vmatmul.f32.gmra.mxu0 %v2015
          %v2469 = vpop.f32.mrf.mxu0
          %v2470 = vadd.f32 %v2405, %v2469
          %2471 = vdwg.mxu0
          %v2472 = vadd.f32 %v1953, %v2425
          %v2473 = vadd.f32 %v1954, %v2428
          %v2474 = vadd.f32 %v1955, %v2431
          %v2475 = vadd.f32 %v1956, %v2434
          %v2476 = vadd.f32 %v1957, %v2437
          %v2477 = vadd.f32 %v1958, %v2440
          %v2478 = vadd.f32 %v1959, %v2443
          %v2479 = vadd.f32 %v1960, %v2446
          %v2480 = vadd.f32 %v1961, %v2449
          %v2481 = vadd.f32 %v1962, %v2452
          %v2482 = vadd.f32 %v1963, %v2455
          %v2483 = vadd.f32 %v1964, %v2458
          %v2484 = vadd.f32 %v1965, %v2461
          %v2485 = vadd.f32 %v1966, %v2464
          %v2486 = vadd.f32 %v1967, %v2467
          %v2487 = vadd.f32 %v1968, %v2470
          %2488 = vst [vmem:[#allocation3] sm:$0xff] %v2472
          %2489 = vst [vmem:[#allocation3 + $0x8] sm:$0xff] %v2473
          %2490 = vst [vmem:[#allocation3 + $0x10] sm:$0xff] %v2474
          %2491 = vst [vmem:[#allocation3 + $0x18] sm:$0xff] %v2475
          %2492 = vst [vmem:[#allocation3 + $0x20] sm:$0xff] %v2476
          %2493 = vst [vmem:[#allocation3 + $0x28] sm:$0xff] %v2477
          %2494 = vst [vmem:[#allocation3 + $0x30] sm:$0xff] %v2478
          %2495 = vst [vmem:[#allocation3 + $0x38] sm:$0xff] %v2479
          %2496 = vst [vmem:[#allocation3 + $0x40] sm:$0xff] %v2480
          %2497 = vst [vmem:[#allocation3 + $0x48] sm:$0xff] %v2481
          %2498 = vst [vmem:[#allocation3 + $0x50] sm:$0xff] %v2482
          %2499 = vst [vmem:[#allocation3 + $0x58] sm:$0xff] %v2483
          %2500 = vst [vmem:[#allocation3 + $0x60] sm:$0xff] %v2484
          %2501 = vst [vmem:[#allocation3 + $0x68] sm:$0xff] %v2485
          %2502 = vst [vmem:[#allocation3 + $0x70] sm:$0xff] %v2486
          %2503 = vst [vmem:[#allocation3 + $0x78] sm:$0xff] %v2487
          %v2504 = vld [vmem:[#allocation6] sm:$0xff]
          %v2505 = vld [vmem:[#allocation6 + $0x8] sm:$0xff]
          %v2506 = vld [vmem:[#allocation6 + $0x10] sm:$0xff]
          %v2507 = vld [vmem:[#allocation6 + $0x18] sm:$0xff]
          %v2508 = vld [vmem:[#allocation6 + $0x20] sm:$0xff]
          %v2509 = vld [vmem:[#allocation6 + $0x28] sm:$0xff]
          %v2510 = vld [vmem:[#allocation6 + $0x30] sm:$0xff]
          %v2511 = vld [vmem:[#allocation6 + $0x38] sm:$0xff]
          %v2512 = vld [vmem:[#allocation6 + $0x40] sm:$0xff]
          %v2513 = vld [vmem:[#allocation6 + $0x48] sm:$0xff]
          %v2514 = vld [vmem:[#allocation6 + $0x50] sm:$0xff]
          %v2515 = vld [vmem:[#allocation6 + $0x58] sm:$0xff]
          %v2516 = vld [vmem:[#allocation6 + $0x60] sm:$0xff]
          %v2517 = vld [vmem:[#allocation6 + $0x68] sm:$0xff]
          %v2518 = vld [vmem:[#allocation6 + $0x70] sm:$0xff]
          %v2519 = vld [vmem:[#allocation6 + $0x78] sm:$0xff]
          %v2520 = vld [vmem:[#allocation6 + $0x80] sm:$0xff]
          %v2521 = vld [vmem:[#allocation6 + $0x88] sm:$0xff]
          %v2522 = vld [vmem:[#allocation6 + $0x90] sm:$0xff]
          %v2523 = vld [vmem:[#allocation6 + $0x98] sm:$0xff]
          %v2524 = vld [vmem:[#allocation6 + $0xa0] sm:$0xff]
          %v2525 = vld [vmem:[#allocation6 + $0xa8] sm:$0xff]
          %v2526 = vld [vmem:[#allocation6 + $0xb0] sm:$0xff]
          %v2527 = vld [vmem:[#allocation6 + $0xb8] sm:$0xff]
          %v2528 = vld [vmem:[#allocation6 + $0xc0] sm:$0xff]
          %v2529 = vld [vmem:[#allocation6 + $0xc8] sm:$0xff]
          %v2530 = vld [vmem:[#allocation6 + $0xd0] sm:$0xff]
          %v2531 = vld [vmem:[#allocation6 + $0xd8] sm:$0xff]
          %v2532 = vld [vmem:[#allocation6 + $0xe0] sm:$0xff]
          %v2533 = vld [vmem:[#allocation6 + $0xe8] sm:$0xff]
          %v2534 = vld [vmem:[#allocation6 + $0xf0] sm:$0xff]
          %v2535 = vld [vmem:[#allocation6 + $0xf8] sm:$0xff]
          %v2536 = vld [vmem:[#allocation6 + $0x100] sm:$0xff]
          %v2537 = vld [vmem:[#allocation6 + $0x108] sm:$0xff]
          %v2538 = vld [vmem:[#allocation6 + $0x110] sm:$0xff]
          %v2539 = vld [vmem:[#allocation6 + $0x118] sm:$0xff]
          %v2540 = vld [vmem:[#allocation6 + $0x120] sm:$0xff]
          %v2541 = vld [vmem:[#allocation6 + $0x128] sm:$0xff]
          %v2542 = vld [vmem:[#allocation6 + $0x130] sm:$0xff]
          %v2543 = vld [vmem:[#allocation6 + $0x138] sm:$0xff]
          %v2544 = vld [vmem:[#allocation6 + $0x140] sm:$0xff]
          %v2545 = vld [vmem:[#allocation6 + $0x148] sm:$0xff]
          %v2546 = vld [vmem:[#allocation6 + $0x150] sm:$0xff]
          %v2547 = vld [vmem:[#allocation6 + $0x158] sm:$0xff]
          %v2548 = vld [vmem:[#allocation6 + $0x160] sm:$0xff]
          %v2549 = vld [vmem:[#allocation6 + $0x168] sm:$0xff]
          %v2550 = vld [vmem:[#allocation6 + $0x170] sm:$0xff]
          %v2551 = vld [vmem:[#allocation6 + $0x178] sm:$0xff]
          %v2552 = vld [vmem:[#allocation6 + $0x180] sm:$0xff]
          %v2553 = vld [vmem:[#allocation6 + $0x188] sm:$0xff]
          %v2554 = vld [vmem:[#allocation6 + $0x190] sm:$0xff]
          %v2555 = vld [vmem:[#allocation6 + $0x198] sm:$0xff]
          %v2556 = vld [vmem:[#allocation6 + $0x1a0] sm:$0xff]
          %v2557 = vld [vmem:[#allocation6 + $0x1a8] sm:$0xff]
          %v2558 = vld [vmem:[#allocation6 + $0x1b0] sm:$0xff]
          %v2559 = vld [vmem:[#allocation6 + $0x1b8] sm:$0xff]
          %v2560 = vld [vmem:[#allocation6 + $0x1c0] sm:$0xff]
          %v2561 = vld [vmem:[#allocation6 + $0x1c8] sm:$0xff]
          %v2562 = vld [vmem:[#allocation6 + $0x1d0] sm:$0xff]
          %v2563 = vld [vmem:[#allocation6 + $0x1d8] sm:$0xff]
          %v2564 = vld [vmem:[#allocation6 + $0x1e0] sm:$0xff]
          %v2565 = vld [vmem:[#allocation6 + $0x1e8] sm:$0xff]
          %v2566 = vld [vmem:[#allocation6 + $0x1f0] sm:$0xff]
          %v2567 = vld [vmem:[#allocation6 + $0x1f8] sm:$0xff]
          %2568 = vmatpush.msra.mxu0 %v857
          %2569 = vmatpush.msra.mxu0 %v856
          %2570 = vmatpush.msra.mxu0 %v855
          %2571 = vmatpush.msra.mxu0 %v854
          %2572 = vmatpush.msra.mxu0 %v853
          %2573 = vmatpush.msra.mxu0 %v852
          %2574 = vmatpush.msra.mxu0 %v851
          %2575 = vmatpush.msra.mxu0 %v850
          %2576 = vmatpush.msra.mxu0 %v849
          %2577 = vmatpush.msra.mxu0 %v848
          %2578 = vmatpush.msra.mxu0 %v847
          %2579 = vmatpush.msra.mxu0 %v846
          %2580 = vmatpush.msra.mxu0 %v845
          %2581 = vmatpush.msra.mxu0 %v844
          %2582 = vmatpush.msra.mxu0 %v843
          %2583 = vmatpush.msra.mxu0 %v842
          %2584 = vmatmul.f32.gmra.mxu0 %v2504
          %v2585 = vpop.f32.mrf.mxu0
          %v2586 = vadd.f32 0.0, %v2585
          %2587 = vmatmul.f32.gmra.mxu0 %v2505
          %v2588 = vpop.f32.mrf.mxu0
          %v2589 = vadd.f32 0.0, %v2588
          %2590 = vmatmul.f32.gmra.mxu0 %v2506
          %v2591 = vpop.f32.mrf.mxu0
          %v2592 = vadd.f32 0.0, %v2591
          %2593 = vmatmul.f32.gmra.mxu0 %v2507
          %v2594 = vpop.f32.mrf.mxu0
          %v2595 = vadd.f32 0.0, %v2594
          %2596 = vmatmul.f32.gmra.mxu0 %v2508
          %v2597 = vpop.f32.mrf.mxu0
          %v2598 = vadd.f32 0.0, %v2597
          %2599 = vmatmul.f32.gmra.mxu0 %v2509
          %v2600 = vpop.f32.mrf.mxu0
          %v2601 = vadd.f32 0.0, %v2600
          %2602 = vmatmul.f32.gmra.mxu0 %v2510
          %v2603 = vpop.f32.mrf.mxu0
          %v2604 = vadd.f32 0.0, %v2603
          %2605 = vmatmul.f32.gmra.mxu0 %v2511
          %v2606 = vpop.f32.mrf.mxu0
          %v2607 = vadd.f32 0.0, %v2606
          %2608 = vmatmul.f32.gmra.mxu0 %v2512
          %v2609 = vpop.f32.mrf.mxu0
          %v2610 = vadd.f32 0.0, %v2609
          %2611 = vmatmul.f32.gmra.mxu0 %v2513
          %v2612 = vpop.f32.mrf.mxu0
          %v2613 = vadd.f32 0.0, %v2612
          %2614 = vmatmul.f32.gmra.mxu0 %v2514
          %v2615 = vpop.f32.mrf.mxu0
          %v2616 = vadd.f32 0.0, %v2615
          %2617 = vmatmul.f32.gmra.mxu0 %v2515
          %v2618 = vpop.f32.mrf.mxu0
          %v2619 = vadd.f32 0.0, %v2618
          %2620 = vmatmul.f32.gmra.mxu0 %v2516
          %v2621 = vpop.f32.mrf.mxu0
          %v2622 = vadd.f32 0.0, %v2621
          %2623 = vmatmul.f32.gmra.mxu0 %v2517
          %v2624 = vpop.f32.mrf.mxu0
          %v2625 = vadd.f32 0.0, %v2624
          %2626 = vmatmul.f32.gmra.mxu0 %v2518
          %v2627 = vpop.f32.mrf.mxu0
          %v2628 = vadd.f32 0.0, %v2627
          %2629 = vmatmul.f32.gmra.mxu0 %v2519
          %v2630 = vpop.f32.mrf.mxu0
          %v2631 = vadd.f32 0.0, %v2630
          %2632 = vmatmul.f32.gmra.mxu0 %v2520
          %v2633 = vpop.f32.mrf.mxu0
          %v2634 = vadd.f32 0.0, %v2633
          %2635 = vmatmul.f32.gmra.mxu0 %v2521
          %v2636 = vpop.f32.mrf.mxu0
          %v2637 = vadd.f32 0.0, %v2636
          %2638 = vmatmul.f32.gmra.mxu0 %v2522
          %v2639 = vpop.f32.mrf.mxu0
          %v2640 = vadd.f32 0.0, %v2639
          %2641 = vmatmul.f32.gmra.mxu0 %v2523
          %v2642 = vpop.f32.mrf.mxu0
          %v2643 = vadd.f32 0.0, %v2642
          %2644 = vmatmul.f32.gmra.mxu0 %v2524
          %v2645 = vpop.f32.mrf.mxu0
          %v2646 = vadd.f32 0.0, %v2645
          %2647 = vmatmul.f32.gmra.mxu0 %v2525
          %v2648 = vpop.f32.mrf.mxu0
          %v2649 = vadd.f32 0.0, %v2648
          %2650 = vmatmul.f32.gmra.mxu0 %v2526
          %v2651 = vpop.f32.mrf.mxu0
          %v2652 = vadd.f32 0.0, %v2651
          %2653 = vmatmul.f32.gmra.mxu0 %v2527
          %v2654 = vpop.f32.mrf.mxu0
          %v2655 = vadd.f32 0.0, %v2654
          %2656 = vmatmul.f32.gmra.mxu0 %v2528
          %v2657 = vpop.f32.mrf.mxu0
          %v2658 = vadd.f32 0.0, %v2657
          %2659 = vmatmul.f32.gmra.mxu0 %v2529
          %v2660 = vpop.f32.mrf.mxu0
          %v2661 = vadd.f32 0.0, %v2660
          %2662 = vmatmul.f32.gmra.mxu0 %v2530
          %v2663 = vpop.f32.mrf.mxu0
          %v2664 = vadd.f32 0.0, %v2663
          %2665 = vmatmul.f32.gmra.mxu0 %v2531
          %v2666 = vpop.f32.mrf.mxu0
          %v2667 = vadd.f32 0.0, %v2666
          %2668 = vmatmul.f32.gmra.mxu0 %v2532
          %v2669 = vpop.f32.mrf.mxu0
          %v2670 = vadd.f32 0.0, %v2669
          %2671 = vmatmul.f32.gmra.mxu0 %v2533
          %v2672 = vpop.f32.mrf.mxu0
          %v2673 = vadd.f32 0.0, %v2672
          %2674 = vmatmul.f32.gmra.mxu0 %v2534
          %v2675 = vpop.f32.mrf.mxu0
          %v2676 = vadd.f32 0.0, %v2675
          %2677 = vmatmul.f32.gmra.mxu0 %v2535
          %v2678 = vpop.f32.mrf.mxu0
          %v2679 = vadd.f32 0.0, %v2678
          %2680 = vmatmul.f32.gmra.mxu0 %v2536
          %v2681 = vpop.f32.mrf.mxu0
          %v2682 = vadd.f32 0.0, %v2681
          %2683 = vmatmul.f32.gmra.mxu0 %v2537
          %v2684 = vpop.f32.mrf.mxu0
          %v2685 = vadd.f32 0.0, %v2684
          %2686 = vmatmul.f32.gmra.mxu0 %v2538
          %v2687 = vpop.f32.mrf.mxu0
          %v2688 = vadd.f32 0.0, %v2687
          %2689 = vmatmul.f32.gmra.mxu0 %v2539
          %v2690 = vpop.f32.mrf.mxu0
          %v2691 = vadd.f32 0.0, %v2690
          %2692 = vmatmul.f32.gmra.mxu0 %v2540
          %v2693 = vpop.f32.mrf.mxu0
          %v2694 = vadd.f32 0.0, %v2693
          %2695 = vmatmul.f32.gmra.mxu0 %v2541
          %v2696 = vpop.f32.mrf.mxu0
          %v2697 = vadd.f32 0.0, %v2696
          %2698 = vmatmul.f32.gmra.mxu0 %v2542
          %v2699 = vpop.f32.mrf.mxu0
          %v2700 = vadd.f32 0.0, %v2699
          %2701 = vmatmul.f32.gmra.mxu0 %v2543
          %v2702 = vpop.f32.mrf.mxu0
          %v2703 = vadd.f32 0.0, %v2702
          %2704 = vmatmul.f32.gmra.mxu0 %v2544
          %v2705 = vpop.f32.mrf.mxu0
          %v2706 = vadd.f32 0.0, %v2705
          %2707 = vmatmul.f32.gmra.mxu0 %v2545
          %v2708 = vpop.f32.mrf.mxu0
          %v2709 = vadd.f32 0.0, %v2708
          %2710 = vmatmul.f32.gmra.mxu0 %v2546
          %v2711 = vpop.f32.mrf.mxu0
          %v2712 = vadd.f32 0.0, %v2711
          %2713 = vmatmul.f32.gmra.mxu0 %v2547
          %v2714 = vpop.f32.mrf.mxu0
          %v2715 = vadd.f32 0.0, %v2714
          %2716 = vmatmul.f32.gmra.mxu0 %v2548
          %v2717 = vpop.f32.mrf.mxu0
          %v2718 = vadd.f32 0.0, %v2717
          %2719 = vmatmul.f32.gmra.mxu0 %v2549
          %v2720 = vpop.f32.mrf.mxu0
          %v2721 = vadd.f32 0.0, %v2720
          %2722 = vmatmul.f32.gmra.mxu0 %v2550
          %v2723 = vpop.f32.mrf.mxu0
          %v2724 = vadd.f32 0.0, %v2723
          %2725 = vmatmul.f32.gmra.mxu0 %v2551
          %v2726 = vpop.f32.mrf.mxu0
          %v2727 = vadd.f32 0.0, %v2726
          %2728 = vmatmul.f32.gmra.mxu0 %v2552
          %v2729 = vpop.f32.mrf.mxu0
          %v2730 = vadd.f32 0.0, %v2729
          %2731 = vmatmul.f32.gmra.mxu0 %v2553
          %v2732 = vpop.f32.mrf.mxu0
          %v2733 = vadd.f32 0.0, %v2732
          %2734 = vmatmul.f32.gmra.mxu0 %v2554
          %v2735 = vpop.f32.mrf.mxu0
          %v2736 = vadd.f32 0.0, %v2735
          %2737 = vmatmul.f32.gmra.mxu0 %v2555
          %v2738 = vpop.f32.mrf.mxu0
          %v2739 = vadd.f32 0.0, %v2738
          %2740 = vmatmul.f32.gmra.mxu0 %v2556
          %v2741 = vpop.f32.mrf.mxu0
          %v2742 = vadd.f32 0.0, %v2741
          %2743 = vmatmul.f32.gmra.mxu0 %v2557
          %v2744 = vpop.f32.mrf.mxu0
          %v2745 = vadd.f32 0.0, %v2744
          %2746 = vmatmul.f32.gmra.mxu0 %v2558
          %v2747 = vpop.f32.mrf.mxu0
          %v2748 = vadd.f32 0.0, %v2747
          %2749 = vmatmul.f32.gmra.mxu0 %v2559
          %v2750 = vpop.f32.mrf.mxu0
          %v2751 = vadd.f32 0.0, %v2750
          %2752 = vmatmul.f32.gmra.mxu0 %v2560
          %v2753 = vpop.f32.mrf.mxu0
          %v2754 = vadd.f32 0.0, %v2753
          %2755 = vmatmul.f32.gmra.mxu0 %v2561
          %v2756 = vpop.f32.mrf.mxu0
          %v2757 = vadd.f32 0.0, %v2756
          %2758 = vmatmul.f32.gmra.mxu0 %v2562
          %v2759 = vpop.f32.mrf.mxu0
          %v2760 = vadd.f32 0.0, %v2759
          %2761 = vmatmul.f32.gmra.mxu0 %v2563
          %v2762 = vpop.f32.mrf.mxu0
          %v2763 = vadd.f32 0.0, %v2762
          %2764 = vmatmul.f32.gmra.mxu0 %v2564
          %v2765 = vpop.f32.mrf.mxu0
          %v2766 = vadd.f32 0.0, %v2765
          %2767 = vmatmul.f32.gmra.mxu0 %v2565
          %v2768 = vpop.f32.mrf.mxu0
          %v2769 = vadd.f32 0.0, %v2768
          %2770 = vmatmul.f32.gmra.mxu0 %v2566
          %v2771 = vpop.f32.mrf.mxu0
          %v2772 = vadd.f32 0.0, %v2771
          %2773 = vmatmul.f32.gmra.mxu0 %v2567
          %v2774 = vpop.f32.mrf.mxu0
          %v2775 = vadd.f32 0.0, %v2774
          %2776 = vdwg.mxu0
          %v2777 = vld [vmem:[#allocation3] sm:$0xff]
          %v2778 = vld [vmem:[#allocation3 + $0x8] sm:$0xff]
          %v2779 = vld [vmem:[#allocation3 + $0x10] sm:$0xff]
          %v2780 = vld [vmem:[#allocation3 + $0x18] sm:$0xff]
          %v2781 = vld [vmem:[#allocation3 + $0x20] sm:$0xff]
          %v2782 = vld [vmem:[#allocation3 + $0x28] sm:$0xff]
          %v2783 = vld [vmem:[#allocation3 + $0x30] sm:$0xff]
          %v2784 = vld [vmem:[#allocation3 + $0x38] sm:$0xff]
          %v2785 = vld [vmem:[#allocation3 + $0x40] sm:$0xff]
          %v2786 = vld [vmem:[#allocation3 + $0x48] sm:$0xff]
          %v2787 = vld [vmem:[#allocation3 + $0x50] sm:$0xff]
          %v2788 = vld [vmem:[#allocation3 + $0x58] sm:$0xff]
          %v2789 = vld [vmem:[#allocation3 + $0x60] sm:$0xff]
          %v2790 = vld [vmem:[#allocation3 + $0x68] sm:$0xff]
          %v2791 = vld [vmem:[#allocation3 + $0x70] sm:$0xff]
          %v2792 = vld [vmem:[#allocation3 + $0x78] sm:$0xff]
          %v2793 = vmul.f32 %v2777, 0.0006377551
          %v2794 = vmul.f32 %v2778, 0.0006377551
          %v2795 = vmul.f32 %v2779, 0.0006377551
          %v2796 = vmul.f32 %v2780, 0.0006377551
          %v2797 = vmul.f32 %v2781, 0.0006377551
          %v2798 = vmul.f32 %v2782, 0.0006377551
          %v2799 = vmul.f32 %v2783, 0.0006377551
          %v2800 = vmul.f32 %v2784, 0.0006377551
          %v2801 = vmul.f32 %v2785, 0.0006377551
          %v2802 = vmul.f32 %v2786, 0.0006377551
          %v2803 = vmul.f32 %v2787, 0.0006377551
          %v2804 = vmul.f32 %v2788, 0.0006377551
          %v2805 = vmul.f32 %v2789, 0.0006377551
          %v2806 = vmul.f32 %v2790, 0.0006377551
          %v2807 = vmul.f32 %v2791, 0.0006377551
          %v2808 = vmul.f32 %v2792, 0.0006377551
          %2809 = vmatpush.msra.mxu0 %v2808
          %2810 = vmatpush.msra.mxu0 %v2807
          %2811 = vmatpush.msra.mxu0 %v2806
          %2812 = vmatpush.msra.mxu0 %v2805
          %2813 = vmatpush.msra.mxu0 %v2804
          %2814 = vmatpush.msra.mxu0 %v2803
          %2815 = vmatpush.msra.mxu0 %v2802
          %2816 = vmatpush.msra.mxu0 %v2801
          %2817 = vmatpush.msra.mxu0 %v2800
          %2818 = vmatpush.msra.mxu0 %v2799
          %2819 = vmatpush.msra.mxu0 %v2798
          %2820 = vmatpush.msra.mxu0 %v2797
          %2821 = vmatpush.msra.mxu0 %v2796
          %2822 = vmatpush.msra.mxu0 %v2795
          %2823 = vmatpush.msra.mxu0 %v2794
          %2824 = vmatpush.msra.mxu0 %v2793
          %2825 = vmatmul.f32.gmra.mxu0 %v2504
          %v2826 = vpop.f32.mrf.mxu0
          %v2827 = vadd.f32 0.0, %v2826
          %2828 = vmatmul.f32.gmra.mxu0 %v2505
          %v2829 = vpop.f32.mrf.mxu0
          %v2830 = vadd.f32 0.0, %v2829
          %2831 = vmatmul.f32.gmra.mxu0 %v2506
          %v2832 = vpop.f32.mrf.mxu0
          %v2833 = vadd.f32 0.0, %v2832
          %2834 = vmatmul.f32.gmra.mxu0 %v2507
          %v2835 = vpop.f32.mrf.mxu0
          %v2836 = vadd.f32 0.0, %v2835
          %2837 = vmatmul.f32.gmra.mxu0 %v2508
          %v2838 = vpop.f32.mrf.mxu0
          %v2839 = vadd.f32 0.0, %v2838
          %2840 = vmatmul.f32.gmra.mxu0 %v2509
          %v2841 = vpop.f32.mrf.mxu0
          %v2842 = vadd.f32 0.0, %v2841
          %2843 = vmatmul.f32.gmra.mxu0 %v2510
          %v2844 = vpop.f32.mrf.mxu0
          %v2845 = vadd.f32 0.0, %v2844
          %2846 = vmatmul.f32.gmra.mxu0 %v2511
          %v2847 = vpop.f32.mrf.mxu0
          %v2848 = vadd.f32 0.0, %v2847
          %2849 = vmatmul.f32.gmra.mxu0 %v2512
          %v2850 = vpop.f32.mrf.mxu0
          %v2851 = vadd.f32 0.0, %v2850
          %2852 = vmatmul.f32.gmra.mxu0 %v2513
          %v2853 = vpop.f32.mrf.mxu0
          %v2854 = vadd.f32 0.0, %v2853
          %2855 = vmatmul.f32.gmra.mxu0 %v2514
          %v2856 = vpop.f32.mrf.mxu0
          %v2857 = vadd.f32 0.0, %v2856
          %2858 = vmatmul.f32.gmra.mxu0 %v2515
          %v2859 = vpop.f32.mrf.mxu0
          %v2860 = vadd.f32 0.0, %v2859
          %2861 = vmatmul.f32.gmra.mxu0 %v2516
          %v2862 = vpop.f32.mrf.mxu0
          %v2863 = vadd.f32 0.0, %v2862
          %2864 = vmatmul.f32.gmra.mxu0 %v2517
          %v2865 = vpop.f32.mrf.mxu0
          %v2866 = vadd.f32 0.0, %v2865
          %2867 = vmatmul.f32.gmra.mxu0 %v2518
          %v2868 = vpop.f32.mrf.mxu0
          %v2869 = vadd.f32 0.0, %v2868
          %2870 = vmatmul.f32.gmra.mxu0 %v2519
          %v2871 = vpop.f32.mrf.mxu0
          %v2872 = vadd.f32 0.0, %v2871
          %2873 = vmatmul.f32.gmra.mxu0 %v2520
          %v2874 = vpop.f32.mrf.mxu0
          %v2875 = vadd.f32 0.0, %v2874
          %2876 = vmatmul.f32.gmra.mxu0 %v2521
          %v2877 = vpop.f32.mrf.mxu0
          %v2878 = vadd.f32 0.0, %v2877
          %2879 = vmatmul.f32.gmra.mxu0 %v2522
          %v2880 = vpop.f32.mrf.mxu0
          %v2881 = vadd.f32 0.0, %v2880
          %2882 = vmatmul.f32.gmra.mxu0 %v2523
          %v2883 = vpop.f32.mrf.mxu0
          %v2884 = vadd.f32 0.0, %v2883
          %2885 = vmatmul.f32.gmra.mxu0 %v2524
          %v2886 = vpop.f32.mrf.mxu0
          %v2887 = vadd.f32 0.0, %v2886
          %2888 = vmatmul.f32.gmra.mxu0 %v2525
          %v2889 = vpop.f32.mrf.mxu0
          %v2890 = vadd.f32 0.0, %v2889
          %2891 = vmatmul.f32.gmra.mxu0 %v2526
          %v2892 = vpop.f32.mrf.mxu0
          %v2893 = vadd.f32 0.0, %v2892
          %2894 = vmatmul.f32.gmra.mxu0 %v2527
          %v2895 = vpop.f32.mrf.mxu0
          %v2896 = vadd.f32 0.0, %v2895
          %2897 = vmatmul.f32.gmra.mxu0 %v2528
          %v2898 = vpop.f32.mrf.mxu0
          %v2899 = vadd.f32 0.0, %v2898
          %2900 = vmatmul.f32.gmra.mxu0 %v2529
          %v2901 = vpop.f32.mrf.mxu0
          %v2902 = vadd.f32 0.0, %v2901
          %2903 = vmatmul.f32.gmra.mxu0 %v2530
          %v2904 = vpop.f32.mrf.mxu0
          %v2905 = vadd.f32 0.0, %v2904
          %2906 = vmatmul.f32.gmra.mxu0 %v2531
          %v2907 = vpop.f32.mrf.mxu0
          %v2908 = vadd.f32 0.0, %v2907
          %2909 = vmatmul.f32.gmra.mxu0 %v2532
          %v2910 = vpop.f32.mrf.mxu0
          %v2911 = vadd.f32 0.0, %v2910
          %2912 = vmatmul.f32.gmra.mxu0 %v2533
          %v2913 = vpop.f32.mrf.mxu0
          %v2914 = vadd.f32 0.0, %v2913
          %2915 = vmatmul.f32.gmra.mxu0 %v2534
          %v2916 = vpop.f32.mrf.mxu0
          %v2917 = vadd.f32 0.0, %v2916
          %2918 = vmatmul.f32.gmra.mxu0 %v2535
          %v2919 = vpop.f32.mrf.mxu0
          %v2920 = vadd.f32 0.0, %v2919
          %2921 = vmatmul.f32.gmra.mxu0 %v2536
          %v2922 = vpop.f32.mrf.mxu0
          %v2923 = vadd.f32 0.0, %v2922
          %2924 = vmatmul.f32.gmra.mxu0 %v2537
          %v2925 = vpop.f32.mrf.mxu0
          %v2926 = vadd.f32 0.0, %v2925
          %2927 = vmatmul.f32.gmra.mxu0 %v2538
          %v2928 = vpop.f32.mrf.mxu0
          %v2929 = vadd.f32 0.0, %v2928
          %2930 = vmatmul.f32.gmra.mxu0 %v2539
          %v2931 = vpop.f32.mrf.mxu0
          %v2932 = vadd.f32 0.0, %v2931
          %2933 = vmatmul.f32.gmra.mxu0 %v2540
          %v2934 = vpop.f32.mrf.mxu0
          %v2935 = vadd.f32 0.0, %v2934
          %2936 = vmatmul.f32.gmra.mxu0 %v2541
          %v2937 = vpop.f32.mrf.mxu0
          %v2938 = vadd.f32 0.0, %v2937
          %2939 = vmatmul.f32.gmra.mxu0 %v2542
          %v2940 = vpop.f32.mrf.mxu0
          %v2941 = vadd.f32 0.0, %v2940
          %2942 = vmatmul.f32.gmra.mxu0 %v2543
          %v2943 = vpop.f32.mrf.mxu0
          %v2944 = vadd.f32 0.0, %v2943
          %2945 = vmatmul.f32.gmra.mxu0 %v2544
          %v2946 = vpop.f32.mrf.mxu0
          %v2947 = vadd.f32 0.0, %v2946
          %2948 = vmatmul.f32.gmra.mxu0 %v2545
          %v2949 = vpop.f32.mrf.mxu0
          %v2950 = vadd.f32 0.0, %v2949
          %2951 = vmatmul.f32.gmra.mxu0 %v2546
          %v2952 = vpop.f32.mrf.mxu0
          %v2953 = vadd.f32 0.0, %v2952
          %2954 = vmatmul.f32.gmra.mxu0 %v2547
          %v2955 = vpop.f32.mrf.mxu0
          %v2956 = vadd.f32 0.0, %v2955
          %2957 = vmatmul.f32.gmra.mxu0 %v2548
          %v2958 = vpop.f32.mrf.mxu0
          %v2959 = vadd.f32 0.0, %v2958
          %2960 = vmatmul.f32.gmra.mxu0 %v2549
          %v2961 = vpop.f32.mrf.mxu0
          %v2962 = vadd.f32 0.0, %v2961
          %2963 = vmatmul.f32.gmra.mxu0 %v2550
          %v2964 = vpop.f32.mrf.mxu0
          %v2965 = vadd.f32 0.0, %v2964
          %2966 = vmatmul.f32.gmra.mxu0 %v2551
          %v2967 = vpop.f32.mrf.mxu0
          %v2968 = vadd.f32 0.0, %v2967
          %2969 = vmatmul.f32.gmra.mxu0 %v2552
          %v2970 = vpop.f32.mrf.mxu0
          %v2971 = vadd.f32 0.0, %v2970
          %2972 = vmatmul.f32.gmra.mxu0 %v2553
          %v2973 = vpop.f32.mrf.mxu0
          %v2974 = vadd.f32 0.0, %v2973
          %2975 = vmatmul.f32.gmra.mxu0 %v2554
          %v2976 = vpop.f32.mrf.mxu0
          %v2977 = vadd.f32 0.0, %v2976
          %2978 = vmatmul.f32.gmra.mxu0 %v2555
          %v2979 = vpop.f32.mrf.mxu0
          %v2980 = vadd.f32 0.0, %v2979
          %2981 = vmatmul.f32.gmra.mxu0 %v2556
          %v2982 = vpop.f32.mrf.mxu0
          %v2983 = vadd.f32 0.0, %v2982
          %2984 = vmatmul.f32.gmra.mxu0 %v2557
          %v2985 = vpop.f32.mrf.mxu0
          %v2986 = vadd.f32 0.0, %v2985
          %2987 = vmatmul.f32.gmra.mxu0 %v2558
          %v2988 = vpop.f32.mrf.mxu0
          %v2989 = vadd.f32 0.0, %v2988
          %2990 = vmatmul.f32.gmra.mxu0 %v2559
          %v2991 = vpop.f32.mrf.mxu0
          %v2992 = vadd.f32 0.0, %v2991
          %2993 = vmatmul.f32.gmra.mxu0 %v2560
          %v2994 = vpop.f32.mrf.mxu0
          %v2995 = vadd.f32 0.0, %v2994
          %2996 = vmatmul.f32.gmra.mxu0 %v2561
          %v2997 = vpop.f32.mrf.mxu0
          %v2998 = vadd.f32 0.0, %v2997
          %2999 = vmatmul.f32.gmra.mxu0 %v2562
          %v3000 = vpop.f32.mrf.mxu0
          %v3001 = vadd.f32 0.0, %v3000
          %3002 = vmatmul.f32.gmra.mxu0 %v2563
          %v3003 = vpop.f32.mrf.mxu0
          %v3004 = vadd.f32 0.0, %v3003
          %3005 = vmatmul.f32.gmra.mxu0 %v2564
          %v3006 = vpop.f32.mrf.mxu0
          %v3007 = vadd.f32 0.0, %v3006
          %3008 = vmatmul.f32.gmra.mxu0 %v2565
          %v3009 = vpop.f32.mrf.mxu0
          %v3010 = vadd.f32 0.0, %v3009
          %3011 = vmatmul.f32.gmra.mxu0 %v2566
          %v3012 = vpop.f32.mrf.mxu0
          %v3013 = vadd.f32 0.0, %v3012
          %3014 = vmatmul.f32.gmra.mxu0 %v2567
          %v3015 = vpop.f32.mrf.mxu0
          %v3016 = vadd.f32 0.0, %v3015
          %3017 = vdwg.mxu0
          %v3018 = vmul.f32 %v2827, %v2504
          %v3019 = vmul.f32 %v2830, %v2505
          %v3020 = vmul.f32 %v2833, %v2506
          %v3021 = vmul.f32 %v2836, %v2507
          %v3022 = vmul.f32 %v2839, %v2508
          %v3023 = vmul.f32 %v2842, %v2509
          %v3024 = vmul.f32 %v2845, %v2510
          %v3025 = vmul.f32 %v2848, %v2511
          %v3026 = vmul.f32 %v2851, %v2512
          %v3027 = vmul.f32 %v2854, %v2513
          %v3028 = vmul.f32 %v2857, %v2514
          %v3029 = vmul.f32 %v2860, %v2515
          %v3030 = vmul.f32 %v2863, %v2516
          %v3031 = vmul.f32 %v2866, %v2517
          %v3032 = vmul.f32 %v2869, %v2518
          %v3033 = vmul.f32 %v2872, %v2519
          %v3034 = vmul.f32 %v2875, %v2520
          %v3035 = vmul.f32 %v2878, %v2521
          %v3036 = vmul.f32 %v2881, %v2522
          %v3037 = vmul.f32 %v2884, %v2523
          %v3038 = vmul.f32 %v2887, %v2524
          %v3039 = vmul.f32 %v2890, %v2525
          %v3040 = vmul.f32 %v2893, %v2526
          %v3041 = vmul.f32 %v2896, %v2527
          %v3042 = vmul.f32 %v2899, %v2528
          %v3043 = vmul.f32 %v2902, %v2529
          %v3044 = vmul.f32 %v2905, %v2530
          %v3045 = vmul.f32 %v2908, %v2531
          %v3046 = vmul.f32 %v2911, %v2532
          %v3047 = vmul.f32 %v2914, %v2533
          %v3048 = vmul.f32 %v2917, %v2534
          %v3049 = vmul.f32 %v2920, %v2535
          %v3050 = vmul.f32 %v2923, %v2536
          %v3051 = vmul.f32 %v2926, %v2537
          %v3052 = vmul.f32 %v2929, %v2538
          %v3053 = vmul.f32 %v2932, %v2539
          %v3054 = vmul.f32 %v2935, %v2540
          %v3055 = vmul.f32 %v2938, %v2541
          %v3056 = vmul.f32 %v2941, %v2542
          %v3057 = vmul.f32 %v2944, %v2543
          %v3058 = vmul.f32 %v2947, %v2544
          %v3059 = vmul.f32 %v2950, %v2545
          %v3060 = vmul.f32 %v2953, %v2546
          %v3061 = vmul.f32 %v2956, %v2547
          %v3062 = vmul.f32 %v2959, %v2548
          %v3063 = vmul.f32 %v2962, %v2549
          %v3064 = vmul.f32 %v2965, %v2550
          %v3065 = vmul.f32 %v2968, %v2551
          %v3066 = vmul.f32 %v2971, %v2552
          %v3067 = vmul.f32 %v2974, %v2553
          %v3068 = vmul.f32 %v2977, %v2554
          %v3069 = vmul.f32 %v2980, %v2555
          %v3070 = vmul.f32 %v2983, %v2556
          %v3071 = vmul.f32 %v2986, %v2557
          %v3072 = vmul.f32 %v2989, %v2558
          %v3073 = vmul.f32 %v2992, %v2559
          %v3074 = vmul.f32 %v2995, %v2560
          %v3075 = vmul.f32 %v2998, %v2561
          %v3076 = vmul.f32 %v3001, %v2562
          %v3077 = vmul.f32 %v3004, %v2563
          %v3078 = vmul.f32 %v3007, %v2564
          %v3079 = vmul.f32 %v3010, %v2565
          %v3080 = vmul.f32 %v3013, %v2566
          %v3081 = vmul.f32 %v3016, %v2567
          %3082 = vadd.xlane.f32.xlu0 %v3018
          %v3083 = vpop.xlane.xlu0 %3082
          %3084 = vadd.xlane.f32.xlu0 %v3019
          %v3085 = vpop.xlane.xlu0 %3084
          %3086 = vadd.xlane.f32.xlu0 %v3020
          %v3087 = vpop.xlane.xlu0 %3086
          %3088 = vadd.xlane.f32.xlu0 %v3021
          %v3089 = vpop.xlane.xlu0 %3088
          %3090 = vadd.xlane.f32.xlu0 %v3022
          %v3091 = vpop.xlane.xlu0 %3090
          %3092 = vadd.xlane.f32.xlu0 %v3023
          %v3093 = vpop.xlane.xlu0 %3092
          %3094 = vadd.xlane.f32.xlu0 %v3024
          %v3095 = vpop.xlane.xlu0 %3094
          %3096 = vadd.xlane.f32.xlu0 %v3025
          %v3097 = vpop.xlane.xlu0 %3096
          %3098 = vadd.xlane.f32.xlu0 %v3026
          %v3099 = vpop.xlane.xlu0 %3098
          %3100 = vadd.xlane.f32.xlu0 %v3027
          %v3101 = vpop.xlane.xlu0 %3100
          %3102 = vadd.xlane.f32.xlu0 %v3028
          %v3103 = vpop.xlane.xlu0 %3102
          %3104 = vadd.xlane.f32.xlu0 %v3029
          %v3105 = vpop.xlane.xlu0 %3104
          %3106 = vadd.xlane.f32.xlu0 %v3030
          %v3107 = vpop.xlane.xlu0 %3106
          %3108 = vadd.xlane.f32.xlu0 %v3031
          %v3109 = vpop.xlane.xlu0 %3108
          %3110 = vadd.xlane.f32.xlu0 %v3032
          %v3111 = vpop.xlane.xlu0 %3110
          %3112 = vadd.xlane.f32.xlu0 %v3033
          %v3113 = vpop.xlane.xlu0 %3112
          %3114 = vadd.xlane.f32.xlu0 %v3034
          %v3115 = vpop.xlane.xlu0 %3114
          %3116 = vadd.xlane.f32.xlu0 %v3035
          %v3117 = vpop.xlane.xlu0 %3116
          %3118 = vadd.xlane.f32.xlu0 %v3036
          %v3119 = vpop.xlane.xlu0 %3118
          %3120 = vadd.xlane.f32.xlu0 %v3037
          %v3121 = vpop.xlane.xlu0 %3120
          %3122 = vadd.xlane.f32.xlu0 %v3038
          %v3123 = vpop.xlane.xlu0 %3122
          %3124 = vadd.xlane.f32.xlu0 %v3039
          %v3125 = vpop.xlane.xlu0 %3124
          %3126 = vadd.xlane.f32.xlu0 %v3040
          %v3127 = vpop.xlane.xlu0 %3126
          %3128 = vadd.xlane.f32.xlu0 %v3041
          %v3129 = vpop.xlane.xlu0 %3128
          %3130 = vadd.xlane.f32.xlu0 %v3042
          %v3131 = vpop.xlane.xlu0 %3130
          %3132 = vadd.xlane.f32.xlu0 %v3043
          %v3133 = vpop.xlane.xlu0 %3132
          %3134 = vadd.xlane.f32.xlu0 %v3044
          %v3135 = vpop.xlane.xlu0 %3134
          %3136 = vadd.xlane.f32.xlu0 %v3045
          %v3137 = vpop.xlane.xlu0 %3136
          %3138 = vadd.xlane.f32.xlu0 %v3046
          %v3139 = vpop.xlane.xlu0 %3138
          %3140 = vadd.xlane.f32.xlu0 %v3047
          %v3141 = vpop.xlane.xlu0 %3140
          %3142 = vadd.xlane.f32.xlu0 %v3048
          %v3143 = vpop.xlane.xlu0 %3142
          %3144 = vadd.xlane.f32.xlu0 %v3049
          %v3145 = vpop.xlane.xlu0 %3144
          %3146 = vadd.xlane.f32.xlu0 %v3050
          %v3147 = vpop.xlane.xlu0 %3146
          %3148 = vadd.xlane.f32.xlu0 %v3051
          %v3149 = vpop.xlane.xlu0 %3148
          %3150 = vadd.xlane.f32.xlu0 %v3052
          %v3151 = vpop.xlane.xlu0 %3150
          %3152 = vadd.xlane.f32.xlu0 %v3053
          %v3153 = vpop.xlane.xlu0 %3152
          %3154 = vadd.xlane.f32.xlu0 %v3054
          %v3155 = vpop.xlane.xlu0 %3154
          %3156 = vadd.xlane.f32.xlu0 %v3055
          %v3157 = vpop.xlane.xlu0 %3156
          %3158 = vadd.xlane.f32.xlu0 %v3056
          %v3159 = vpop.xlane.xlu0 %3158
          %3160 = vadd.xlane.f32.xlu0 %v3057
          %v3161 = vpop.xlane.xlu0 %3160
          %3162 = vadd.xlane.f32.xlu0 %v3058
          %v3163 = vpop.xlane.xlu0 %3162
          %3164 = vadd.xlane.f32.xlu0 %v3059
          %v3165 = vpop.xlane.xlu0 %3164
          %3166 = vadd.xlane.f32.xlu0 %v3060
          %v3167 = vpop.xlane.xlu0 %3166
          %3168 = vadd.xlane.f32.xlu0 %v3061
          %v3169 = vpop.xlane.xlu0 %3168
          %3170 = vadd.xlane.f32.xlu0 %v3062
          %v3171 = vpop.xlane.xlu0 %3170
          %3172 = vadd.xlane.f32.xlu0 %v3063
          %v3173 = vpop.xlane.xlu0 %3172
          %3174 = vadd.xlane.f32.xlu0 %v3064
          %v3175 = vpop.xlane.xlu0 %3174
          %3176 = vadd.xlane.f32.xlu0 %v3065
          %v3177 = vpop.xlane.xlu0 %3176
          %3178 = vadd.xlane.f32.xlu0 %v3066
          %v3179 = vpop.xlane.xlu0 %3178
          %3180 = vadd.xlane.f32.xlu0 %v3067
          %v3181 = vpop.xlane.xlu0 %3180
          %3182 = vadd.xlane.f32.xlu0 %v3068
          %v3183 = vpop.xlane.xlu0 %3182
          %3184 = vadd.xlane.f32.xlu0 %v3069
          %v3185 = vpop.xlane.xlu0 %3184
          %3186 = vadd.xlane.f32.xlu0 %v3070
          %v3187 = vpop.xlane.xlu0 %3186
          %3188 = vadd.xlane.f32.xlu0 %v3071
          %v3189 = vpop.xlane.xlu0 %3188
          %3190 = vadd.xlane.f32.xlu0 %v3072
          %v3191 = vpop.xlane.xlu0 %3190
          %3192 = vadd.xlane.f32.xlu0 %v3073
          %v3193 = vpop.xlane.xlu0 %3192
          %3194 = vadd.xlane.f32.xlu0 %v3074
          %v3195 = vpop.xlane.xlu0 %3194
          %3196 = vadd.xlane.f32.xlu0 %v3075
          %v3197 = vpop.xlane.xlu0 %3196
          %3198 = vadd.xlane.f32.xlu0 %v3076
          %v3199 = vpop.xlane.xlu0 %3198
          %3200 = vadd.xlane.f32.xlu0 %v3077
          %v3201 = vpop.xlane.xlu0 %3200
          %3202 = vadd.xlane.f32.xlu0 %v3078
          %v3203 = vpop.xlane.xlu0 %3202
          %3204 = vadd.xlane.f32.xlu0 %v3079
          %v3205 = vpop.xlane.xlu0 %3204
          %3206 = vadd.xlane.f32.xlu0 %v3080
          %v3207 = vpop.xlane.xlu0 %3206
          %3208 = vadd.xlane.f32.xlu0 %v3081
          %v3209 = vpop.xlane.xlu0 %3208
          %v3210 = vmax.f32 %v3083, 0.0
          %v3211 = vmax.f32 %v3085, 0.0
          %v3212 = vmax.f32 %v3087, 0.0
          %v3213 = vmax.f32 %v3089, 0.0
          %v3214 = vmax.f32 %v3091, 0.0
          %v3215 = vmax.f32 %v3093, 0.0
          %v3216 = vmax.f32 %v3095, 0.0
          %v3217 = vmax.f32 %v3097, 0.0
          %v3218 = vmax.f32 %v3099, 0.0
          %v3219 = vmax.f32 %v3101, 0.0
          %v3220 = vmax.f32 %v3103, 0.0
          %v3221 = vmax.f32 %v3105, 0.0
          %v3222 = vmax.f32 %v3107, 0.0
          %v3223 = vmax.f32 %v3109, 0.0
          %v3224 = vmax.f32 %v3111, 0.0
          %v3225 = vmax.f32 %v3113, 0.0
          %v3226 = vmax.f32 %v3115, 0.0
          %v3227 = vmax.f32 %v3117, 0.0
          %v3228 = vmax.f32 %v3119, 0.0
          %v3229 = vmax.f32 %v3121, 0.0
          %v3230 = vmax.f32 %v3123, 0.0
          %v3231 = vmax.f32 %v3125, 0.0
          %v3232 = vmax.f32 %v3127, 0.0
          %v3233 = vmax.f32 %v3129, 0.0
          %v3234 = vmax.f32 %v3131, 0.0
          %v3235 = vmax.f32 %v3133, 0.0
          %v3236 = vmax.f32 %v3135, 0.0
          %v3237 = vmax.f32 %v3137, 0.0
          %v3238 = vmax.f32 %v3139, 0.0
          %v3239 = vmax.f32 %v3141, 0.0
          %v3240 = vmax.f32 %v3143, 0.0
          %v3241 = vmax.f32 %v3145, 0.0
          %v3242 = vmax.f32 %v3147, 0.0
          %v3243 = vmax.f32 %v3149, 0.0
          %v3244 = vmax.f32 %v3151, 0.0
          %v3245 = vmax.f32 %v3153, 0.0
          %v3246 = vmax.f32 %v3155, 0.0
          %v3247 = vmax.f32 %v3157, 0.0
          %v3248 = vmax.f32 %v3159, 0.0
          %v3249 = vmax.f32 %v3161, 0.0
          %v3250 = vmax.f32 %v3163, 0.0
          %v3251 = vmax.f32 %v3165, 0.0
          %v3252 = vmax.f32 %v3167, 0.0
          %v3253 = vmax.f32 %v3169, 0.0
          %v3254 = vmax.f32 %v3171, 0.0
          %v3255 = vmax.f32 %v3173, 0.0
          %v3256 = vmax.f32 %v3175, 0.0
          %v3257 = vmax.f32 %v3177, 0.0
          %v3258 = vmax.f32 %v3179, 0.0
          %v3259 = vmax.f32 %v3181, 0.0
          %v3260 = vmax.f32 %v3183, 0.0
          %v3261 = vmax.f32 %v3185, 0.0
          %v3262 = vmax.f32 %v3187, 0.0
          %v3263 = vmax.f32 %v3189, 0.0
          %v3264 = vmax.f32 %v3191, 0.0
          %v3265 = vmax.f32 %v3193, 0.0
          %v3266 = vmax.f32 %v3195, 0.0
          %v3267 = vmax.f32 %v3197, 0.0
          %v3268 = vmax.f32 %v3199, 0.0
          %v3269 = vmax.f32 %v3201, 0.0
          %v3270 = vmax.f32 %v3203, 0.0
          %v3271 = vmax.f32 %v3205, 0.0
          %v3272 = vmax.f32 %v3207, 0.0
          %v3273 = vmax.f32 %v3209, 0.0
          %v3274 = vld [vmem:[%s2] sm:$0xff]
          %v3275 = vld [vmem:[%s2 + $0x8] sm:$0xff]
          %v3276 = vld [vmem:[%s2 + $0x10] sm:$0xff]
          %v3277 = vld [vmem:[%s2 + $0x18] sm:$0xff]
          %v3278 = vld [vmem:[%s2 + $0x20] sm:$0xff]
          %v3279 = vld [vmem:[%s2 + $0x28] sm:$0xff]
          %v3280 = vld [vmem:[%s2 + $0x30] sm:$0xff]
          %v3281 = vld [vmem:[%s2 + $0x38] sm:$0xff]
          %v3282 = vld [vmem:[%s2 + $0x40] sm:$0xff]
          %v3283 = vld [vmem:[%s2 + $0x48] sm:$0xff]
          %v3284 = vld [vmem:[%s2 + $0x50] sm:$0xff]
          %v3285 = vld [vmem:[%s2 + $0x58] sm:$0xff]
          %v3286 = vld [vmem:[%s2 + $0x60] sm:$0xff]
          %v3287 = vld [vmem:[%s2 + $0x68] sm:$0xff]
          %v3288 = vld [vmem:[%s2 + $0x70] sm:$0xff]
          %v3289 = vld [vmem:[%s2 + $0x78] sm:$0xff]
          %v3290 = vld [vmem:[%s2 + $0x80] sm:$0xff]
          %v3291 = vld [vmem:[%s2 + $0x88] sm:$0xff]
          %v3292 = vld [vmem:[%s2 + $0x90] sm:$0xff]
          %v3293 = vld [vmem:[%s2 + $0x98] sm:$0xff]
          %v3294 = vld [vmem:[%s2 + $0xa0] sm:$0xff]
          %v3295 = vld [vmem:[%s2 + $0xa8] sm:$0xff]
          %v3296 = vld [vmem:[%s2 + $0xb0] sm:$0xff]
          %v3297 = vld [vmem:[%s2 + $0xb8] sm:$0xff]
          %v3298 = vld [vmem:[%s2 + $0xc0] sm:$0xff]
          %v3299 = vld [vmem:[%s2 + $0xc8] sm:$0xff]
          %v3300 = vld [vmem:[%s2 + $0xd0] sm:$0xff]
          %v3301 = vld [vmem:[%s2 + $0xd8] sm:$0xff]
          %v3302 = vld [vmem:[%s2 + $0xe0] sm:$0xff]
          %v3303 = vld [vmem:[%s2 + $0xe8] sm:$0xff]
          %v3304 = vld [vmem:[%s2 + $0xf0] sm:$0xff]
          %v3305 = vld [vmem:[%s2 + $0xf8] sm:$0xff]
          %v3306 = vld [vmem:[%s2 + $0x100] sm:$0xff]
          %v3307 = vld [vmem:[%s2 + $0x108] sm:$0xff]
          %v3308 = vld [vmem:[%s2 + $0x110] sm:$0xff]
          %v3309 = vld [vmem:[%s2 + $0x118] sm:$0xff]
          %v3310 = vld [vmem:[%s2 + $0x120] sm:$0xff]
          %v3311 = vld [vmem:[%s2 + $0x128] sm:$0xff]
          %v3312 = vld [vmem:[%s2 + $0x130] sm:$0xff]
          %v3313 = vld [vmem:[%s2 + $0x138] sm:$0xff]
          %v3314 = vld [vmem:[%s2 + $0x140] sm:$0xff]
          %v3315 = vld [vmem:[%s2 + $0x148] sm:$0xff]
          %v3316 = vld [vmem:[%s2 + $0x150] sm:$0xff]
          %v3317 = vld [vmem:[%s2 + $0x158] sm:$0xff]
          %v3318 = vld [vmem:[%s2 + $0x160] sm:$0xff]
          %v3319 = vld [vmem:[%s2 + $0x168] sm:$0xff]
          %v3320 = vld [vmem:[%s2 + $0x170] sm:$0xff]
          %v3321 = vld [vmem:[%s2 + $0x178] sm:$0xff]
          %v3322 = vld [vmem:[%s2 + $0x180] sm:$0xff]
          %v3323 = vld [vmem:[%s2 + $0x188] sm:$0xff]
          %v3324 = vld [vmem:[%s2 + $0x190] sm:$0xff]
          %v3325 = vld [vmem:[%s2 + $0x198] sm:$0xff]
          %v3326 = vld [vmem:[%s2 + $0x1a0] sm:$0xff]
          %v3327 = vld [vmem:[%s2 + $0x1a8] sm:$0xff]
          %v3328 = vld [vmem:[%s2 + $0x1b0] sm:$0xff]
          %v3329 = vld [vmem:[%s2 + $0x1b8] sm:$0xff]
          %v3330 = vld [vmem:[%s2 + $0x1c0] sm:$0xff]
          %v3331 = vld [vmem:[%s2 + $0x1c8] sm:$0xff]
          %v3332 = vld [vmem:[%s2 + $0x1d0] sm:$0xff]
          %v3333 = vld [vmem:[%s2 + $0x1d8] sm:$0xff]
          %v3334 = vld [vmem:[%s2 + $0x1e0] sm:$0xff]
          %v3335 = vld [vmem:[%s2 + $0x1e8] sm:$0xff]
          %v3336 = vld [vmem:[%s2 + $0x1f0] sm:$0xff]
          %v3337 = vld [vmem:[%s2 + $0x1f8] sm:$0xff]
          %v3338 = vadd.f32 %v3210, 1e-05
          %v3339 = vadd.f32 %v3211, 1e-05
          %v3340 = vadd.f32 %v3212, 1e-05
          %v3341 = vadd.f32 %v3213, 1e-05
          %v3342 = vadd.f32 %v3214, 1e-05
          %v3343 = vadd.f32 %v3215, 1e-05
          %v3344 = vadd.f32 %v3216, 1e-05
          %v3345 = vadd.f32 %v3217, 1e-05
          %v3346 = vadd.f32 %v3218, 1e-05
          %v3347 = vadd.f32 %v3219, 1e-05
          %v3348 = vadd.f32 %v3220, 1e-05
          %v3349 = vadd.f32 %v3221, 1e-05
          %v3350 = vadd.f32 %v3222, 1e-05
          %v3351 = vadd.f32 %v3223, 1e-05
          %v3352 = vadd.f32 %v3224, 1e-05
          %v3353 = vadd.f32 %v3225, 1e-05
          %v3354 = vadd.f32 %v3226, 1e-05
          %v3355 = vadd.f32 %v3227, 1e-05
          %v3356 = vadd.f32 %v3228, 1e-05
          %v3357 = vadd.f32 %v3229, 1e-05
          %v3358 = vadd.f32 %v3230, 1e-05
          %v3359 = vadd.f32 %v3231, 1e-05
          %v3360 = vadd.f32 %v3232, 1e-05
          %v3361 = vadd.f32 %v3233, 1e-05
          %v3362 = vadd.f32 %v3234, 1e-05
          %v3363 = vadd.f32 %v3235, 1e-05
          %v3364 = vadd.f32 %v3236, 1e-05
          %v3365 = vadd.f32 %v3237, 1e-05
          %v3366 = vadd.f32 %v3238, 1e-05
          %v3367 = vadd.f32 %v3239, 1e-05
          %v3368 = vadd.f32 %v3240, 1e-05
          %v3369 = vadd.f32 %v3241, 1e-05
          %v3370 = vadd.f32 %v3242, 1e-05
          %v3371 = vadd.f32 %v3243, 1e-05
          %v3372 = vadd.f32 %v3244, 1e-05
          %v3373 = vadd.f32 %v3245, 1e-05
          %v3374 = vadd.f32 %v3246, 1e-05
          %v3375 = vadd.f32 %v3247, 1e-05
          %v3376 = vadd.f32 %v3248, 1e-05
          %v3377 = vadd.f32 %v3249, 1e-05
          %v3378 = vadd.f32 %v3250, 1e-05
          %v3379 = vadd.f32 %v3251, 1e-05
          %v3380 = vadd.f32 %v3252, 1e-05
          %v3381 = vadd.f32 %v3253, 1e-05
          %v3382 = vadd.f32 %v3254, 1e-05
          %v3383 = vadd.f32 %v3255, 1e-05
          %v3384 = vadd.f32 %v3256, 1e-05
          %v3385 = vadd.f32 %v3257, 1e-05
          %v3386 = vadd.f32 %v3258, 1e-05
          %v3387 = vadd.f32 %v3259, 1e-05
          %v3388 = vadd.f32 %v3260, 1e-05
          %v3389 = vadd.f32 %v3261, 1e-05
          %v3390 = vadd.f32 %v3262, 1e-05
          %v3391 = vadd.f32 %v3263, 1e-05
          %v3392 = vadd.f32 %v3264, 1e-05
          %v3393 = vadd.f32 %v3265, 1e-05
          %v3394 = vadd.f32 %v3266, 1e-05
          %v3395 = vadd.f32 %v3267, 1e-05
          %v3396 = vadd.f32 %v3268, 1e-05
          %v3397 = vadd.f32 %v3269, 1e-05
          %v3398 = vadd.f32 %v3270, 1e-05
          %v3399 = vadd.f32 %v3271, 1e-05
          %v3400 = vadd.f32 %v3272, 1e-05
          %v3401 = vadd.f32 %v3273, 1e-05
          %v3402 = vrsqrt.pop %v3338
          %v3403 = vmul.f32 %v3402, %v3338
          %v3404 = vmul.f32 %v3403, %v3402
          %v3405 = vmul.f32 0.5, %v3404
          %v3406 = vsub.f32 1.5, %v3405
          %v3407 = vmul.f32 %v3402, %v3406
          %vm3408 = vweird.f32 %v3338
          %vm3409 = vweird.f32 %v3402
          %vm3410 = vmor %vm3408, %vm3409
          %v3411 = vsel %vm3410, %v3402, %v3407
          %v3412 = vrsqrt.pop %v3339
          %v3413 = vmul.f32 %v3412, %v3339
          %v3414 = vmul.f32 %v3413, %v3412
          %v3415 = vmul.f32 0.5, %v3414
          %v3416 = vsub.f32 1.5, %v3415
          %v3417 = vmul.f32 %v3412, %v3416
          %vm3418 = vweird.f32 %v3339
          %vm3419 = vweird.f32 %v3412
          %vm3420 = vmor %vm3418, %vm3419
          %v3421 = vsel %vm3420, %v3412, %v3417
          %v3422 = vrsqrt.pop %v3340
          %v3423 = vmul.f32 %v3422, %v3340
          %v3424 = vmul.f32 %v3423, %v3422
          %v3425 = vmul.f32 0.5, %v3424
          %v3426 = vsub.f32 1.5, %v3425
          %v3427 = vmul.f32 %v3422, %v3426
          %vm3428 = vweird.f32 %v3340
          %vm3429 = vweird.f32 %v3422
          %vm3430 = vmor %vm3428, %vm3429
          %v3431 = vsel %vm3430, %v3422, %v3427
          %v3432 = vrsqrt.pop %v3341
          %v3433 = vmul.f32 %v3432, %v3341
          %v3434 = vmul.f32 %v3433, %v3432
          %v3435 = vmul.f32 0.5, %v3434
          %v3436 = vsub.f32 1.5, %v3435
          %v3437 = vmul.f32 %v3432, %v3436
          %vm3438 = vweird.f32 %v3341
          %vm3439 = vweird.f32 %v3432
          %vm3440 = vmor %vm3438, %vm3439
          %v3441 = vsel %vm3440, %v3432, %v3437
          %v3442 = vrsqrt.pop %v3342
          %v3443 = vmul.f32 %v3442, %v3342
          %v3444 = vmul.f32 %v3443, %v3442
          %v3445 = vmul.f32 0.5, %v3444
          %v3446 = vsub.f32 1.5, %v3445
          %v3447 = vmul.f32 %v3442, %v3446
          %vm3448 = vweird.f32 %v3342
          %vm3449 = vweird.f32 %v3442
          %vm3450 = vmor %vm3448, %vm3449
          %v3451 = vsel %vm3450, %v3442, %v3447
          %v3452 = vrsqrt.pop %v3343
          %v3453 = vmul.f32 %v3452, %v3343
          %v3454 = vmul.f32 %v3453, %v3452
          %v3455 = vmul.f32 0.5, %v3454
          %v3456 = vsub.f32 1.5, %v3455
          %v3457 = vmul.f32 %v3452, %v3456
          %vm3458 = vweird.f32 %v3343
          %vm3459 = vweird.f32 %v3452
          %vm3460 = vmor %vm3458, %vm3459
          %v3461 = vsel %vm3460, %v3452, %v3457
          %v3462 = vrsqrt.pop %v3344
          %v3463 = vmul.f32 %v3462, %v3344
          %v3464 = vmul.f32 %v3463, %v3462
          %v3465 = vmul.f32 0.5, %v3464
          %v3466 = vsub.f32 1.5, %v3465
          %v3467 = vmul.f32 %v3462, %v3466
          %vm3468 = vweird.f32 %v3344
          %vm3469 = vweird.f32 %v3462
          %vm3470 = vmor %vm3468, %vm3469
          %v3471 = vsel %vm3470, %v3462, %v3467
          %v3472 = vrsqrt.pop %v3345
          %v3473 = vmul.f32 %v3472, %v3345
          %v3474 = vmul.f32 %v3473, %v3472
          %v3475 = vmul.f32 0.5, %v3474
          %v3476 = vsub.f32 1.5, %v3475
          %v3477 = vmul.f32 %v3472, %v3476
          %vm3478 = vweird.f32 %v3345
          %vm3479 = vweird.f32 %v3472
          %vm3480 = vmor %vm3478, %vm3479
          %v3481 = vsel %vm3480, %v3472, %v3477
          %v3482 = vrsqrt.pop %v3346
          %v3483 = vmul.f32 %v3482, %v3346
          %v3484 = vmul.f32 %v3483, %v3482
          %v3485 = vmul.f32 0.5, %v3484
          %v3486 = vsub.f32 1.5, %v3485
          %v3487 = vmul.f32 %v3482, %v3486
          %vm3488 = vweird.f32 %v3346
          %vm3489 = vweird.f32 %v3482
          %vm3490 = vmor %vm3488, %vm3489
          %v3491 = vsel %vm3490, %v3482, %v3487
          %v3492 = vrsqrt.pop %v3347
          %v3493 = vmul.f32 %v3492, %v3347
          %v3494 = vmul.f32 %v3493, %v3492
          %v3495 = vmul.f32 0.5, %v3494
          %v3496 = vsub.f32 1.5, %v3495
          %v3497 = vmul.f32 %v3492, %v3496
          %vm3498 = vweird.f32 %v3347
          %vm3499 = vweird.f32 %v3492
          %vm3500 = vmor %vm3498, %vm3499
          %v3501 = vsel %vm3500, %v3492, %v3497
          %v3502 = vrsqrt.pop %v3348
          %v3503 = vmul.f32 %v3502, %v3348
          %v3504 = vmul.f32 %v3503, %v3502
          %v3505 = vmul.f32 0.5, %v3504
          %v3506 = vsub.f32 1.5, %v3505
          %v3507 = vmul.f32 %v3502, %v3506
          %vm3508 = vweird.f32 %v3348
          %vm3509 = vweird.f32 %v3502
          %vm3510 = vmor %vm3508, %vm3509
          %v3511 = vsel %vm3510, %v3502, %v3507
          %v3512 = vrsqrt.pop %v3349
          %v3513 = vmul.f32 %v3512, %v3349
          %v3514 = vmul.f32 %v3513, %v3512
          %v3515 = vmul.f32 0.5, %v3514
          %v3516 = vsub.f32 1.5, %v3515
          %v3517 = vmul.f32 %v3512, %v3516
          %vm3518 = vweird.f32 %v3349
          %vm3519 = vweird.f32 %v3512
          %vm3520 = vmor %vm3518, %vm3519
          %v3521 = vsel %vm3520, %v3512, %v3517
          %v3522 = vrsqrt.pop %v3350
          %v3523 = vmul.f32 %v3522, %v3350
          %v3524 = vmul.f32 %v3523, %v3522
          %v3525 = vmul.f32 0.5, %v3524
          %v3526 = vsub.f32 1.5, %v3525
          %v3527 = vmul.f32 %v3522, %v3526
          %vm3528 = vweird.f32 %v3350
          %vm3529 = vweird.f32 %v3522
          %vm3530 = vmor %vm3528, %vm3529
          %v3531 = vsel %vm3530, %v3522, %v3527
          %v3532 = vrsqrt.pop %v3351
          %v3533 = vmul.f32 %v3532, %v3351
          %v3534 = vmul.f32 %v3533, %v3532
          %v3535 = vmul.f32 0.5, %v3534
          %v3536 = vsub.f32 1.5, %v3535
          %v3537 = vmul.f32 %v3532, %v3536
          %vm3538 = vweird.f32 %v3351
          %vm3539 = vweird.f32 %v3532
          %vm3540 = vmor %vm3538, %vm3539
          %v3541 = vsel %vm3540, %v3532, %v3537
          %v3542 = vrsqrt.pop %v3352
          %v3543 = vmul.f32 %v3542, %v3352
          %v3544 = vmul.f32 %v3543, %v3542
          %v3545 = vmul.f32 0.5, %v3544
          %v3546 = vsub.f32 1.5, %v3545
          %v3547 = vmul.f32 %v3542, %v3546
          %vm3548 = vweird.f32 %v3352
          %vm3549 = vweird.f32 %v3542
          %vm3550 = vmor %vm3548, %vm3549
          %v3551 = vsel %vm3550, %v3542, %v3547
          %v3552 = vrsqrt.pop %v3353
          %v3553 = vmul.f32 %v3552, %v3353
          %v3554 = vmul.f32 %v3553, %v3552
          %v3555 = vmul.f32 0.5, %v3554
          %v3556 = vsub.f32 1.5, %v3555
          %v3557 = vmul.f32 %v3552, %v3556
          %vm3558 = vweird.f32 %v3353
          %vm3559 = vweird.f32 %v3552
          %vm3560 = vmor %vm3558, %vm3559
          %v3561 = vsel %vm3560, %v3552, %v3557
          %v3562 = vrsqrt.pop %v3354
          %v3563 = vmul.f32 %v3562, %v3354
          %v3564 = vmul.f32 %v3563, %v3562
          %v3565 = vmul.f32 0.5, %v3564
          %v3566 = vsub.f32 1.5, %v3565
          %v3567 = vmul.f32 %v3562, %v3566
          %vm3568 = vweird.f32 %v3354
          %vm3569 = vweird.f32 %v3562
          %vm3570 = vmor %vm3568, %vm3569
          %v3571 = vsel %vm3570, %v3562, %v3567
          %v3572 = vrsqrt.pop %v3355
          %v3573 = vmul.f32 %v3572, %v3355
          %v3574 = vmul.f32 %v3573, %v3572
          %v3575 = vmul.f32 0.5, %v3574
          %v3576 = vsub.f32 1.5, %v3575
          %v3577 = vmul.f32 %v3572, %v3576
          %vm3578 = vweird.f32 %v3355
          %vm3579 = vweird.f32 %v3572
          %vm3580 = vmor %vm3578, %vm3579
          %v3581 = vsel %vm3580, %v3572, %v3577
          %v3582 = vrsqrt.pop %v3356
          %v3583 = vmul.f32 %v3582, %v3356
          %v3584 = vmul.f32 %v3583, %v3582
          %v3585 = vmul.f32 0.5, %v3584
          %v3586 = vsub.f32 1.5, %v3585
          %v3587 = vmul.f32 %v3582, %v3586
          %vm3588 = vweird.f32 %v3356
          %vm3589 = vweird.f32 %v3582
          %vm3590 = vmor %vm3588, %vm3589
          %v3591 = vsel %vm3590, %v3582, %v3587
          %v3592 = vrsqrt.pop %v3357
          %v3593 = vmul.f32 %v3592, %v3357
          %v3594 = vmul.f32 %v3593, %v3592
          %v3595 = vmul.f32 0.5, %v3594
          %v3596 = vsub.f32 1.5, %v3595
          %v3597 = vmul.f32 %v3592, %v3596
          %vm3598 = vweird.f32 %v3357
          %vm3599 = vweird.f32 %v3592
          %vm3600 = vmor %vm3598, %vm3599
          %v3601 = vsel %vm3600, %v3592, %v3597
          %v3602 = vrsqrt.pop %v3358
          %v3603 = vmul.f32 %v3602, %v3358
          %v3604 = vmul.f32 %v3603, %v3602
          %v3605 = vmul.f32 0.5, %v3604
          %v3606 = vsub.f32 1.5, %v3605
          %v3607 = vmul.f32 %v3602, %v3606
          %vm3608 = vweird.f32 %v3358
          %vm3609 = vweird.f32 %v3602
          %vm3610 = vmor %vm3608, %vm3609
          %v3611 = vsel %vm3610, %v3602, %v3607
          %v3612 = vrsqrt.pop %v3359
          %v3613 = vmul.f32 %v3612, %v3359
          %v3614 = vmul.f32 %v3613, %v3612
          %v3615 = vmul.f32 0.5, %v3614
          %v3616 = vsub.f32 1.5, %v3615
          %v3617 = vmul.f32 %v3612, %v3616
          %vm3618 = vweird.f32 %v3359
          %vm3619 = vweird.f32 %v3612
          %vm3620 = vmor %vm3618, %vm3619
          %v3621 = vsel %vm3620, %v3612, %v3617
          %v3622 = vrsqrt.pop %v3360
          %v3623 = vmul.f32 %v3622, %v3360
          %v3624 = vmul.f32 %v3623, %v3622
          %v3625 = vmul.f32 0.5, %v3624
          %v3626 = vsub.f32 1.5, %v3625
          %v3627 = vmul.f32 %v3622, %v3626
          %vm3628 = vweird.f32 %v3360
          %vm3629 = vweird.f32 %v3622
          %vm3630 = vmor %vm3628, %vm3629
          %v3631 = vsel %vm3630, %v3622, %v3627
          %v3632 = vrsqrt.pop %v3361
          %v3633 = vmul.f32 %v3632, %v3361
          %v3634 = vmul.f32 %v3633, %v3632
          %v3635 = vmul.f32 0.5, %v3634
          %v3636 = vsub.f32 1.5, %v3635
          %v3637 = vmul.f32 %v3632, %v3636
          %vm3638 = vweird.f32 %v3361
          %vm3639 = vweird.f32 %v3632
          %vm3640 = vmor %vm3638, %vm3639
          %v3641 = vsel %vm3640, %v3632, %v3637
          %v3642 = vrsqrt.pop %v3362
          %v3643 = vmul.f32 %v3642, %v3362
          %v3644 = vmul.f32 %v3643, %v3642
          %v3645 = vmul.f32 0.5, %v3644
          %v3646 = vsub.f32 1.5, %v3645
          %v3647 = vmul.f32 %v3642, %v3646
          %vm3648 = vweird.f32 %v3362
          %vm3649 = vweird.f32 %v3642
          %vm3650 = vmor %vm3648, %vm3649
          %v3651 = vsel %vm3650, %v3642, %v3647
          %v3652 = vrsqrt.pop %v3363
          %v3653 = vmul.f32 %v3652, %v3363
          %v3654 = vmul.f32 %v3653, %v3652
          %v3655 = vmul.f32 0.5, %v3654
          %v3656 = vsub.f32 1.5, %v3655
          %v3657 = vmul.f32 %v3652, %v3656
          %vm3658 = vweird.f32 %v3363
          %vm3659 = vweird.f32 %v3652
          %vm3660 = vmor %vm3658, %vm3659
          %v3661 = vsel %vm3660, %v3652, %v3657
          %v3662 = vrsqrt.pop %v3364
          %v3663 = vmul.f32 %v3662, %v3364
          %v3664 = vmul.f32 %v3663, %v3662
          %v3665 = vmul.f32 0.5, %v3664
          %v3666 = vsub.f32 1.5, %v3665
          %v3667 = vmul.f32 %v3662, %v3666
          %vm3668 = vweird.f32 %v3364
          %vm3669 = vweird.f32 %v3662
          %vm3670 = vmor %vm3668, %vm3669
          %v3671 = vsel %vm3670, %v3662, %v3667
          %v3672 = vrsqrt.pop %v3365
          %v3673 = vmul.f32 %v3672, %v3365
          %v3674 = vmul.f32 %v3673, %v3672
          %v3675 = vmul.f32 0.5, %v3674
          %v3676 = vsub.f32 1.5, %v3675
          %v3677 = vmul.f32 %v3672, %v3676
          %vm3678 = vweird.f32 %v3365
          %vm3679 = vweird.f32 %v3672
          %vm3680 = vmor %vm3678, %vm3679
          %v3681 = vsel %vm3680, %v3672, %v3677
          %v3682 = vrsqrt.pop %v3366
          %v3683 = vmul.f32 %v3682, %v3366
          %v3684 = vmul.f32 %v3683, %v3682
          %v3685 = vmul.f32 0.5, %v3684
          %v3686 = vsub.f32 1.5, %v3685
          %v3687 = vmul.f32 %v3682, %v3686
          %vm3688 = vweird.f32 %v3366
          %vm3689 = vweird.f32 %v3682
          %vm3690 = vmor %vm3688, %vm3689
          %v3691 = vsel %vm3690, %v3682, %v3687
          %v3692 = vrsqrt.pop %v3367
          %v3693 = vmul.f32 %v3692, %v3367
          %v3694 = vmul.f32 %v3693, %v3692
          %v3695 = vmul.f32 0.5, %v3694
          %v3696 = vsub.f32 1.5, %v3695
          %v3697 = vmul.f32 %v3692, %v3696
          %vm3698 = vweird.f32 %v3367
          %vm3699 = vweird.f32 %v3692
          %vm3700 = vmor %vm3698, %vm3699
          %v3701 = vsel %vm3700, %v3692, %v3697
          %v3702 = vrsqrt.pop %v3368
          %v3703 = vmul.f32 %v3702, %v3368
          %v3704 = vmul.f32 %v3703, %v3702
          %v3705 = vmul.f32 0.5, %v3704
          %v3706 = vsub.f32 1.5, %v3705
          %v3707 = vmul.f32 %v3702, %v3706
          %vm3708 = vweird.f32 %v3368
          %vm3709 = vweird.f32 %v3702
          %vm3710 = vmor %vm3708, %vm3709
          %v3711 = vsel %vm3710, %v3702, %v3707
          %v3712 = vrsqrt.pop %v3369
          %v3713 = vmul.f32 %v3712, %v3369
          %v3714 = vmul.f32 %v3713, %v3712
          %v3715 = vmul.f32 0.5, %v3714
          %v3716 = vsub.f32 1.5, %v3715
          %v3717 = vmul.f32 %v3712, %v3716
          %vm3718 = vweird.f32 %v3369
          %vm3719 = vweird.f32 %v3712
          %vm3720 = vmor %vm3718, %vm3719
          %v3721 = vsel %vm3720, %v3712, %v3717
          %v3722 = vrsqrt.pop %v3370
          %v3723 = vmul.f32 %v3722, %v3370
          %v3724 = vmul.f32 %v3723, %v3722
          %v3725 = vmul.f32 0.5, %v3724
          %v3726 = vsub.f32 1.5, %v3725
          %v3727 = vmul.f32 %v3722, %v3726
          %vm3728 = vweird.f32 %v3370
          %vm3729 = vweird.f32 %v3722
          %vm3730 = vmor %vm3728, %vm3729
          %v3731 = vsel %vm3730, %v3722, %v3727
          %v3732 = vrsqrt.pop %v3371
          %v3733 = vmul.f32 %v3732, %v3371
          %v3734 = vmul.f32 %v3733, %v3732
          %v3735 = vmul.f32 0.5, %v3734
          %v3736 = vsub.f32 1.5, %v3735
          %v3737 = vmul.f32 %v3732, %v3736
          %vm3738 = vweird.f32 %v3371
          %vm3739 = vweird.f32 %v3732
          %vm3740 = vmor %vm3738, %vm3739
          %v3741 = vsel %vm3740, %v3732, %v3737
          %v3742 = vrsqrt.pop %v3372
          %v3743 = vmul.f32 %v3742, %v3372
          %v3744 = vmul.f32 %v3743, %v3742
          %v3745 = vmul.f32 0.5, %v3744
          %v3746 = vsub.f32 1.5, %v3745
          %v3747 = vmul.f32 %v3742, %v3746
          %vm3748 = vweird.f32 %v3372
          %vm3749 = vweird.f32 %v3742
          %vm3750 = vmor %vm3748, %vm3749
          %v3751 = vsel %vm3750, %v3742, %v3747
          %v3752 = vrsqrt.pop %v3373
          %v3753 = vmul.f32 %v3752, %v3373
          %v3754 = vmul.f32 %v3753, %v3752
          %v3755 = vmul.f32 0.5, %v3754
          %v3756 = vsub.f32 1.5, %v3755
          %v3757 = vmul.f32 %v3752, %v3756
          %vm3758 = vweird.f32 %v3373
          %vm3759 = vweird.f32 %v3752
          %vm3760 = vmor %vm3758, %vm3759
          %v3761 = vsel %vm3760, %v3752, %v3757
          %v3762 = vrsqrt.pop %v3374
          %v3763 = vmul.f32 %v3762, %v3374
          %v3764 = vmul.f32 %v3763, %v3762
          %v3765 = vmul.f32 0.5, %v3764
          %v3766 = vsub.f32 1.5, %v3765
          %v3767 = vmul.f32 %v3762, %v3766
          %vm3768 = vweird.f32 %v3374
          %vm3769 = vweird.f32 %v3762
          %vm3770 = vmor %vm3768, %vm3769
          %v3771 = vsel %vm3770, %v3762, %v3767
          %v3772 = vrsqrt.pop %v3375
          %v3773 = vmul.f32 %v3772, %v3375
          %v3774 = vmul.f32 %v3773, %v3772
          %v3775 = vmul.f32 0.5, %v3774
          %v3776 = vsub.f32 1.5, %v3775
          %v3777 = vmul.f32 %v3772, %v3776
          %vm3778 = vweird.f32 %v3375
          %vm3779 = vweird.f32 %v3772
          %vm3780 = vmor %vm3778, %vm3779
          %v3781 = vsel %vm3780, %v3772, %v3777
          %v3782 = vrsqrt.pop %v3376
          %v3783 = vmul.f32 %v3782, %v3376
          %v3784 = vmul.f32 %v3783, %v3782
          %v3785 = vmul.f32 0.5, %v3784
          %v3786 = vsub.f32 1.5, %v3785
          %v3787 = vmul.f32 %v3782, %v3786
          %vm3788 = vweird.f32 %v3376
          %vm3789 = vweird.f32 %v3782
          %vm3790 = vmor %vm3788, %vm3789
          %v3791 = vsel %vm3790, %v3782, %v3787
          %v3792 = vrsqrt.pop %v3377
          %v3793 = vmul.f32 %v3792, %v3377
          %v3794 = vmul.f32 %v3793, %v3792
          %v3795 = vmul.f32 0.5, %v3794
          %v3796 = vsub.f32 1.5, %v3795
          %v3797 = vmul.f32 %v3792, %v3796
          %vm3798 = vweird.f32 %v3377
          %vm3799 = vweird.f32 %v3792
          %vm3800 = vmor %vm3798, %vm3799
          %v3801 = vsel %vm3800, %v3792, %v3797
          %v3802 = vrsqrt.pop %v3378
          %v3803 = vmul.f32 %v3802, %v3378
          %v3804 = vmul.f32 %v3803, %v3802
          %v3805 = vmul.f32 0.5, %v3804
          %v3806 = vsub.f32 1.5, %v3805
          %v3807 = vmul.f32 %v3802, %v3806
          %vm3808 = vweird.f32 %v3378
          %vm3809 = vweird.f32 %v3802
          %vm3810 = vmor %vm3808, %vm3809
          %v3811 = vsel %vm3810, %v3802, %v3807
          %v3812 = vrsqrt.pop %v3379
          %v3813 = vmul.f32 %v3812, %v3379
          %v3814 = vmul.f32 %v3813, %v3812
          %v3815 = vmul.f32 0.5, %v3814
          %v3816 = vsub.f32 1.5, %v3815
          %v3817 = vmul.f32 %v3812, %v3816
          %vm3818 = vweird.f32 %v3379
          %vm3819 = vweird.f32 %v3812
          %vm3820 = vmor %vm3818, %vm3819
          %v3821 = vsel %vm3820, %v3812, %v3817
          %v3822 = vrsqrt.pop %v3380
          %v3823 = vmul.f32 %v3822, %v3380
          %v3824 = vmul.f32 %v3823, %v3822
          %v3825 = vmul.f32 0.5, %v3824
          %v3826 = vsub.f32 1.5, %v3825
          %v3827 = vmul.f32 %v3822, %v3826
          %vm3828 = vweird.f32 %v3380
          %vm3829 = vweird.f32 %v3822
          %vm3830 = vmor %vm3828, %vm3829
          %v3831 = vsel %vm3830, %v3822, %v3827
          %v3832 = vrsqrt.pop %v3381
          %v3833 = vmul.f32 %v3832, %v3381
          %v3834 = vmul.f32 %v3833, %v3832
          %v3835 = vmul.f32 0.5, %v3834
          %v3836 = vsub.f32 1.5, %v3835
          %v3837 = vmul.f32 %v3832, %v3836
          %vm3838 = vweird.f32 %v3381
          %vm3839 = vweird.f32 %v3832
          %vm3840 = vmor %vm3838, %vm3839
          %v3841 = vsel %vm3840, %v3832, %v3837
          %v3842 = vrsqrt.pop %v3382
          %v3843 = vmul.f32 %v3842, %v3382
          %v3844 = vmul.f32 %v3843, %v3842
          %v3845 = vmul.f32 0.5, %v3844
          %v3846 = vsub.f32 1.5, %v3845
          %v3847 = vmul.f32 %v3842, %v3846
          %vm3848 = vweird.f32 %v3382
          %vm3849 = vweird.f32 %v3842
          %vm3850 = vmor %vm3848, %vm3849
          %v3851 = vsel %vm3850, %v3842, %v3847
          %v3852 = vrsqrt.pop %v3383
          %v3853 = vmul.f32 %v3852, %v3383
          %v3854 = vmul.f32 %v3853, %v3852
          %v3855 = vmul.f32 0.5, %v3854
          %v3856 = vsub.f32 1.5, %v3855
          %v3857 = vmul.f32 %v3852, %v3856
          %vm3858 = vweird.f32 %v3383
          %vm3859 = vweird.f32 %v3852
          %vm3860 = vmor %vm3858, %vm3859
          %v3861 = vsel %vm3860, %v3852, %v3857
          %v3862 = vrsqrt.pop %v3384
          %v3863 = vmul.f32 %v3862, %v3384
          %v3864 = vmul.f32 %v3863, %v3862
          %v3865 = vmul.f32 0.5, %v3864
          %v3866 = vsub.f32 1.5, %v3865
          %v3867 = vmul.f32 %v3862, %v3866
          %vm3868 = vweird.f32 %v3384
          %vm3869 = vweird.f32 %v3862
          %vm3870 = vmor %vm3868, %vm3869
          %v3871 = vsel %vm3870, %v3862, %v3867
          %v3872 = vrsqrt.pop %v3385
          %v3873 = vmul.f32 %v3872, %v3385
          %v3874 = vmul.f32 %v3873, %v3872
          %v3875 = vmul.f32 0.5, %v3874
          %v3876 = vsub.f32 1.5, %v3875
          %v3877 = vmul.f32 %v3872, %v3876
          %vm3878 = vweird.f32 %v3385
          %vm3879 = vweird.f32 %v3872
          %vm3880 = vmor %vm3878, %vm3879
          %v3881 = vsel %vm3880, %v3872, %v3877
          %v3882 = vrsqrt.pop %v3386
          %v3883 = vmul.f32 %v3882, %v3386
          %v3884 = vmul.f32 %v3883, %v3882
          %v3885 = vmul.f32 0.5, %v3884
          %v3886 = vsub.f32 1.5, %v3885
          %v3887 = vmul.f32 %v3882, %v3886
          %vm3888 = vweird.f32 %v3386
          %vm3889 = vweird.f32 %v3882
          %vm3890 = vmor %vm3888, %vm3889
          %v3891 = vsel %vm3890, %v3882, %v3887
          %v3892 = vrsqrt.pop %v3387
          %v3893 = vmul.f32 %v3892, %v3387
          %v3894 = vmul.f32 %v3893, %v3892
          %v3895 = vmul.f32 0.5, %v3894
          %v3896 = vsub.f32 1.5, %v3895
          %v3897 = vmul.f32 %v3892, %v3896
          %vm3898 = vweird.f32 %v3387
          %vm3899 = vweird.f32 %v3892
          %vm3900 = vmor %vm3898, %vm3899
          %v3901 = vsel %vm3900, %v3892, %v3897
          %v3902 = vrsqrt.pop %v3388
          %v3903 = vmul.f32 %v3902, %v3388
          %v3904 = vmul.f32 %v3903, %v3902
          %v3905 = vmul.f32 0.5, %v3904
          %v3906 = vsub.f32 1.5, %v3905
          %v3907 = vmul.f32 %v3902, %v3906
          %vm3908 = vweird.f32 %v3388
          %vm3909 = vweird.f32 %v3902
          %vm3910 = vmor %vm3908, %vm3909
          %v3911 = vsel %vm3910, %v3902, %v3907
          %v3912 = vrsqrt.pop %v3389
          %v3913 = vmul.f32 %v3912, %v3389
          %v3914 = vmul.f32 %v3913, %v3912
          %v3915 = vmul.f32 0.5, %v3914
          %v3916 = vsub.f32 1.5, %v3915
          %v3917 = vmul.f32 %v3912, %v3916
          %vm3918 = vweird.f32 %v3389
          %vm3919 = vweird.f32 %v3912
          %vm3920 = vmor %vm3918, %vm3919
          %v3921 = vsel %vm3920, %v3912, %v3917
          %v3922 = vrsqrt.pop %v3390
          %v3923 = vmul.f32 %v3922, %v3390
          %v3924 = vmul.f32 %v3923, %v3922
          %v3925 = vmul.f32 0.5, %v3924
          %v3926 = vsub.f32 1.5, %v3925
          %v3927 = vmul.f32 %v3922, %v3926
          %vm3928 = vweird.f32 %v3390
          %vm3929 = vweird.f32 %v3922
          %vm3930 = vmor %vm3928, %vm3929
          %v3931 = vsel %vm3930, %v3922, %v3927
          %v3932 = vrsqrt.pop %v3391
          %v3933 = vmul.f32 %v3932, %v3391
          %v3934 = vmul.f32 %v3933, %v3932
          %v3935 = vmul.f32 0.5, %v3934
          %v3936 = vsub.f32 1.5, %v3935
          %v3937 = vmul.f32 %v3932, %v3936
          %vm3938 = vweird.f32 %v3391
          %vm3939 = vweird.f32 %v3932
          %vm3940 = vmor %vm3938, %vm3939
          %v3941 = vsel %vm3940, %v3932, %v3937
          %v3942 = vrsqrt.pop %v3392
          %v3943 = vmul.f32 %v3942, %v3392
          %v3944 = vmul.f32 %v3943, %v3942
          %v3945 = vmul.f32 0.5, %v3944
          %v3946 = vsub.f32 1.5, %v3945
          %v3947 = vmul.f32 %v3942, %v3946
          %vm3948 = vweird.f32 %v3392
          %vm3949 = vweird.f32 %v3942
          %vm3950 = vmor %vm3948, %vm3949
          %v3951 = vsel %vm3950, %v3942, %v3947
          %v3952 = vrsqrt.pop %v3393
          %v3953 = vmul.f32 %v3952, %v3393
          %v3954 = vmul.f32 %v3953, %v3952
          %v3955 = vmul.f32 0.5, %v3954
          %v3956 = vsub.f32 1.5, %v3955
          %v3957 = vmul.f32 %v3952, %v3956
          %vm3958 = vweird.f32 %v3393
          %vm3959 = vweird.f32 %v3952
          %vm3960 = vmor %vm3958, %vm3959
          %v3961 = vsel %vm3960, %v3952, %v3957
          %v3962 = vrsqrt.pop %v3394
          %v3963 = vmul.f32 %v3962, %v3394
          %v3964 = vmul.f32 %v3963, %v3962
          %v3965 = vmul.f32 0.5, %v3964
          %v3966 = vsub.f32 1.5, %v3965
          %v3967 = vmul.f32 %v3962, %v3966
          %vm3968 = vweird.f32 %v3394
          %vm3969 = vweird.f32 %v3962
          %vm3970 = vmor %vm3968, %vm3969
          %v3971 = vsel %vm3970, %v3962, %v3967
          %v3972 = vrsqrt.pop %v3395
          %v3973 = vmul.f32 %v3972, %v3395
          %v3974 = vmul.f32 %v3973, %v3972
          %v3975 = vmul.f32 0.5, %v3974
          %v3976 = vsub.f32 1.5, %v3975
          %v3977 = vmul.f32 %v3972, %v3976
          %vm3978 = vweird.f32 %v3395
          %vm3979 = vweird.f32 %v3972
          %vm3980 = vmor %vm3978, %vm3979
          %v3981 = vsel %vm3980, %v3972, %v3977
          %v3982 = vrsqrt.pop %v3396
          %v3983 = vmul.f32 %v3982, %v3396
          %v3984 = vmul.f32 %v3983, %v3982
          %v3985 = vmul.f32 0.5, %v3984
          %v3986 = vsub.f32 1.5, %v3985
          %v3987 = vmul.f32 %v3982, %v3986
          %vm3988 = vweird.f32 %v3396
          %vm3989 = vweird.f32 %v3982
          %vm3990 = vmor %vm3988, %vm3989
          %v3991 = vsel %vm3990, %v3982, %v3987
          %v3992 = vrsqrt.pop %v3397
          %v3993 = vmul.f32 %v3992, %v3397
          %v3994 = vmul.f32 %v3993, %v3992
          %v3995 = vmul.f32 0.5, %v3994
          %v3996 = vsub.f32 1.5, %v3995
          %v3997 = vmul.f32 %v3992, %v3996
          %vm3998 = vweird.f32 %v3397
          %vm3999 = vweird.f32 %v3992
          %vm4000 = vmor %vm3998, %vm3999
          %v4001 = vsel %vm4000, %v3992, %v3997
          %v4002 = vrsqrt.pop %v3398
          %v4003 = vmul.f32 %v4002, %v3398
          %v4004 = vmul.f32 %v4003, %v4002
          %v4005 = vmul.f32 0.5, %v4004
          %v4006 = vsub.f32 1.5, %v4005
          %v4007 = vmul.f32 %v4002, %v4006
          %vm4008 = vweird.f32 %v3398
          %vm4009 = vweird.f32 %v4002
          %vm4010 = vmor %vm4008, %vm4009
          %v4011 = vsel %vm4010, %v4002, %v4007
          %v4012 = vrsqrt.pop %v3399
          %v4013 = vmul.f32 %v4012, %v3399
          %v4014 = vmul.f32 %v4013, %v4012
          %v4015 = vmul.f32 0.5, %v4014
          %v4016 = vsub.f32 1.5, %v4015
          %v4017 = vmul.f32 %v4012, %v4016
          %vm4018 = vweird.f32 %v3399
          %vm4019 = vweird.f32 %v4012
          %vm4020 = vmor %vm4018, %vm4019
          %v4021 = vsel %vm4020, %v4012, %v4017
          %v4022 = vrsqrt.pop %v3400
          %v4023 = vmul.f32 %v4022, %v3400
          %v4024 = vmul.f32 %v4023, %v4022
          %v4025 = vmul.f32 0.5, %v4024
          %v4026 = vsub.f32 1.5, %v4025
          %v4027 = vmul.f32 %v4022, %v4026
          %vm4028 = vweird.f32 %v3400
          %vm4029 = vweird.f32 %v4022
          %vm4030 = vmor %vm4028, %vm4029
          %v4031 = vsel %vm4030, %v4022, %v4027
          %v4032 = vrsqrt.pop %v3401
          %v4033 = vmul.f32 %v4032, %v3401
          %v4034 = vmul.f32 %v4033, %v4032
          %v4035 = vmul.f32 0.5, %v4034
          %v4036 = vsub.f32 1.5, %v4035
          %v4037 = vmul.f32 %v4032, %v4036
          %vm4038 = vweird.f32 %v3401
          %vm4039 = vweird.f32 %v4032
          %vm4040 = vmor %vm4038, %vm4039
          %v4041 = vsel %vm4040, %v4032, %v4037
          %v4042 = vmul.f32 %v3274, %v3411
          %v4043 = vmul.f32 %v3275, %v3421
          %v4044 = vmul.f32 %v3276, %v3431
          %v4045 = vmul.f32 %v3277, %v3441
          %v4046 = vmul.f32 %v3278, %v3451
          %v4047 = vmul.f32 %v3279, %v3461
          %v4048 = vmul.f32 %v3280, %v3471
          %v4049 = vmul.f32 %v3281, %v3481
          %v4050 = vmul.f32 %v3282, %v3491
          %v4051 = vmul.f32 %v3283, %v3501
          %v4052 = vmul.f32 %v3284, %v3511
          %v4053 = vmul.f32 %v3285, %v3521
          %v4054 = vmul.f32 %v3286, %v3531
          %v4055 = vmul.f32 %v3287, %v3541
          %v4056 = vmul.f32 %v3288, %v3551
          %v4057 = vmul.f32 %v3289, %v3561
          %v4058 = vmul.f32 %v3290, %v3571
          %v4059 = vmul.f32 %v3291, %v3581
          %v4060 = vmul.f32 %v3292, %v3591
          %v4061 = vmul.f32 %v3293, %v3601
          %v4062 = vmul.f32 %v3294, %v3611
          %v4063 = vmul.f32 %v3295, %v3621
          %v4064 = vmul.f32 %v3296, %v3631
          %v4065 = vmul.f32 %v3297, %v3641
          %v4066 = vmul.f32 %v3298, %v3651
          %v4067 = vmul.f32 %v3299, %v3661
          %v4068 = vmul.f32 %v3300, %v3671
          %v4069 = vmul.f32 %v3301, %v3681
          %v4070 = vmul.f32 %v3302, %v3691
          %v4071 = vmul.f32 %v3303, %v3701
          %v4072 = vmul.f32 %v3304, %v3711
          %v4073 = vmul.f32 %v3305, %v3721
          %v4074 = vmul.f32 %v3306, %v3731
          %v4075 = vmul.f32 %v3307, %v3741
          %v4076 = vmul.f32 %v3308, %v3751
          %v4077 = vmul.f32 %v3309, %v3761
          %v4078 = vmul.f32 %v3310, %v3771
          %v4079 = vmul.f32 %v3311, %v3781
          %v4080 = vmul.f32 %v3312, %v3791
          %v4081 = vmul.f32 %v3313, %v3801
          %v4082 = vmul.f32 %v3314, %v3811
          %v4083 = vmul.f32 %v3315, %v3821
          %v4084 = vmul.f32 %v3316, %v3831
          %v4085 = vmul.f32 %v3317, %v3841
          %v4086 = vmul.f32 %v3318, %v3851
          %v4087 = vmul.f32 %v3319, %v3861
          %v4088 = vmul.f32 %v3320, %v3871
          %v4089 = vmul.f32 %v3321, %v3881
          %v4090 = vmul.f32 %v3322, %v3891
          %v4091 = vmul.f32 %v3323, %v3901
          %v4092 = vmul.f32 %v3324, %v3911
          %v4093 = vmul.f32 %v3325, %v3921
          %v4094 = vmul.f32 %v3326, %v3931
          %v4095 = vmul.f32 %v3327, %v3941
          %v4096 = vmul.f32 %v3328, %v3951
          %v4097 = vmul.f32 %v3329, %v3961
          %v4098 = vmul.f32 %v3330, %v3971
          %v4099 = vmul.f32 %v3331, %v3981
          %v4100 = vmul.f32 %v3332, %v3991
          %v4101 = vmul.f32 %v3333, %v4001
          %v4102 = vmul.f32 %v3334, %v4011
          %v4103 = vmul.f32 %v3335, %v4021
          %v4104 = vmul.f32 %v3336, %v4031
          %v4105 = vmul.f32 %v3337, %v4041
          %4107 = vset.pattern.permute.xlu0 0
          %4108 = vperm.xlu0 %4107, %v4042
          %v4109 = vpop.permute.xlu0 %4108
          %4112 = vset.pattern.permute.xlu0 0
          %4113 = vperm.xlu0 %4112, %v4043
          %v4114 = vpop.permute.xlu0 %4113
          %4117 = vset.pattern.permute.xlu0 0
          %4118 = vperm.xlu0 %4117, %v4044
          %v4119 = vpop.permute.xlu0 %4118
          %4122 = vset.pattern.permute.xlu0 0
          %4123 = vperm.xlu0 %4122, %v4045
          %v4124 = vpop.permute.xlu0 %4123
          %4127 = vset.pattern.permute.xlu0 0
          %4128 = vperm.xlu0 %4127, %v4046
          %v4129 = vpop.permute.xlu0 %4128
          %4132 = vset.pattern.permute.xlu0 0
          %4133 = vperm.xlu0 %4132, %v4047
          %v4134 = vpop.permute.xlu0 %4133
          %4137 = vset.pattern.permute.xlu0 0
          %4138 = vperm.xlu0 %4137, %v4048
          %v4139 = vpop.permute.xlu0 %4138
          %4142 = vset.pattern.permute.xlu0 0
          %4143 = vperm.xlu0 %4142, %v4049
          %v4144 = vpop.permute.xlu0 %4143
          %4147 = vset.pattern.permute.xlu0 0
          %4148 = vperm.xlu0 %4147, %v4050
          %v4149 = vpop.permute.xlu0 %4148
          %4152 = vset.pattern.permute.xlu0 0
          %4153 = vperm.xlu0 %4152, %v4051
          %v4154 = vpop.permute.xlu0 %4153
          %4157 = vset.pattern.permute.xlu0 0
          %4158 = vperm.xlu0 %4157, %v4052
          %v4159 = vpop.permute.xlu0 %4158
          %4162 = vset.pattern.permute.xlu0 0
          %4163 = vperm.xlu0 %4162, %v4053
          %v4164 = vpop.permute.xlu0 %4163
          %4167 = vset.pattern.permute.xlu0 0
          %4168 = vperm.xlu0 %4167, %v4054
          %v4169 = vpop.permute.xlu0 %4168
          %4172 = vset.pattern.permute.xlu0 0
          %4173 = vperm.xlu0 %4172, %v4055
          %v4174 = vpop.permute.xlu0 %4173
          %4177 = vset.pattern.permute.xlu0 0
          %4178 = vperm.xlu0 %4177, %v4056
          %v4179 = vpop.permute.xlu0 %4178
          %4182 = vset.pattern.permute.xlu0 0
          %4183 = vperm.xlu0 %4182, %v4057
          %v4184 = vpop.permute.xlu0 %4183
          %4187 = vset.pattern.permute.xlu0 0
          %4188 = vperm.xlu0 %4187, %v4058
          %v4189 = vpop.permute.xlu0 %4188
          %4192 = vset.pattern.permute.xlu0 0
          %4193 = vperm.xlu0 %4192, %v4059
          %v4194 = vpop.permute.xlu0 %4193
          %4197 = vset.pattern.permute.xlu0 0
          %4198 = vperm.xlu0 %4197, %v4060
          %v4199 = vpop.permute.xlu0 %4198
          %4202 = vset.pattern.permute.xlu0 0
          %4203 = vperm.xlu0 %4202, %v4061
          %v4204 = vpop.permute.xlu0 %4203
          %4207 = vset.pattern.permute.xlu0 0
          %4208 = vperm.xlu0 %4207, %v4062
          %v4209 = vpop.permute.xlu0 %4208
          %4212 = vset.pattern.permute.xlu0 0
          %4213 = vperm.xlu0 %4212, %v4063
          %v4214 = vpop.permute.xlu0 %4213
          %4217 = vset.pattern.permute.xlu0 0
          %4218 = vperm.xlu0 %4217, %v4064
          %v4219 = vpop.permute.xlu0 %4218
          %4222 = vset.pattern.permute.xlu0 0
          %4223 = vperm.xlu0 %4222, %v4065
          %v4224 = vpop.permute.xlu0 %4223
          %4227 = vset.pattern.permute.xlu0 0
          %4228 = vperm.xlu0 %4227, %v4066
          %v4229 = vpop.permute.xlu0 %4228
          %4232 = vset.pattern.permute.xlu0 0
          %4233 = vperm.xlu0 %4232, %v4067
          %v4234 = vpop.permute.xlu0 %4233
          %4237 = vset.pattern.permute.xlu0 0
          %4238 = vperm.xlu0 %4237, %v4068
          %v4239 = vpop.permute.xlu0 %4238
          %4242 = vset.pattern.permute.xlu0 0
          %4243 = vperm.xlu0 %4242, %v4069
          %v4244 = vpop.permute.xlu0 %4243
          %4247 = vset.pattern.permute.xlu0 0
          %4248 = vperm.xlu0 %4247, %v4070
          %v4249 = vpop.permute.xlu0 %4248
          %4252 = vset.pattern.permute.xlu0 0
          %4253 = vperm.xlu0 %4252, %v4071
          %v4254 = vpop.permute.xlu0 %4253
          %4257 = vset.pattern.permute.xlu0 0
          %4258 = vperm.xlu0 %4257, %v4072
          %v4259 = vpop.permute.xlu0 %4258
          %4262 = vset.pattern.permute.xlu0 0
          %4263 = vperm.xlu0 %4262, %v4073
          %v4264 = vpop.permute.xlu0 %4263
          %4267 = vset.pattern.permute.xlu0 0
          %4268 = vperm.xlu0 %4267, %v4074
          %v4269 = vpop.permute.xlu0 %4268
          %4272 = vset.pattern.permute.xlu0 0
          %4273 = vperm.xlu0 %4272, %v4075
          %v4274 = vpop.permute.xlu0 %4273
          %4277 = vset.pattern.permute.xlu0 0
          %4278 = vperm.xlu0 %4277, %v4076
          %v4279 = vpop.permute.xlu0 %4278
          %4282 = vset.pattern.permute.xlu0 0
          %4283 = vperm.xlu0 %4282, %v4077
          %v4284 = vpop.permute.xlu0 %4283
          %4287 = vset.pattern.permute.xlu0 0
          %4288 = vperm.xlu0 %4287, %v4078
          %v4289 = vpop.permute.xlu0 %4288
          %4292 = vset.pattern.permute.xlu0 0
          %4293 = vperm.xlu0 %4292, %v4079
          %v4294 = vpop.permute.xlu0 %4293
          %4297 = vset.pattern.permute.xlu0 0
          %4298 = vperm.xlu0 %4297, %v4080
          %v4299 = vpop.permute.xlu0 %4298
          %4302 = vset.pattern.permute.xlu0 0
          %4303 = vperm.xlu0 %4302, %v4081
          %v4304 = vpop.permute.xlu0 %4303
          %4307 = vset.pattern.permute.xlu0 0
          %4308 = vperm.xlu0 %4307, %v4082
          %v4309 = vpop.permute.xlu0 %4308
          %4312 = vset.pattern.permute.xlu0 0
          %4313 = vperm.xlu0 %4312, %v4083
          %v4314 = vpop.permute.xlu0 %4313
          %4317 = vset.pattern.permute.xlu0 0
          %4318 = vperm.xlu0 %4317, %v4084
          %v4319 = vpop.permute.xlu0 %4318
          %4322 = vset.pattern.permute.xlu0 0
          %4323 = vperm.xlu0 %4322, %v4085
          %v4324 = vpop.permute.xlu0 %4323
          %4327 = vset.pattern.permute.xlu0 0
          %4328 = vperm.xlu0 %4327, %v4086
          %v4329 = vpop.permute.xlu0 %4328
          %4332 = vset.pattern.permute.xlu0 0
          %4333 = vperm.xlu0 %4332, %v4087
          %v4334 = vpop.permute.xlu0 %4333
          %4337 = vset.pattern.permute.xlu0 0
          %4338 = vperm.xlu0 %4337, %v4088
          %v4339 = vpop.permute.xlu0 %4338
          %4342 = vset.pattern.permute.xlu0 0
          %4343 = vperm.xlu0 %4342, %v4089
          %v4344 = vpop.permute.xlu0 %4343
          %4347 = vset.pattern.permute.xlu0 0
          %4348 = vperm.xlu0 %4347, %v4090
          %v4349 = vpop.permute.xlu0 %4348
          %4352 = vset.pattern.permute.xlu0 0
          %4353 = vperm.xlu0 %4352, %v4091
          %v4354 = vpop.permute.xlu0 %4353
          %4357 = vset.pattern.permute.xlu0 0
          %4358 = vperm.xlu0 %4357, %v4092
          %v4359 = vpop.permute.xlu0 %4358
          %4362 = vset.pattern.permute.xlu0 0
          %4363 = vperm.xlu0 %4362, %v4093
          %v4364 = vpop.permute.xlu0 %4363
          %4367 = vset.pattern.permute.xlu0 0
          %4368 = vperm.xlu0 %4367, %v4094
          %v4369 = vpop.permute.xlu0 %4368
          %4372 = vset.pattern.permute.xlu0 0
          %4373 = vperm.xlu0 %4372, %v4095
          %v4374 = vpop.permute.xlu0 %4373
          %4377 = vset.pattern.permute.xlu0 0
          %4378 = vperm.xlu0 %4377, %v4096
          %v4379 = vpop.permute.xlu0 %4378
          %4382 = vset.pattern.permute.xlu0 0
          %4383 = vperm.xlu0 %4382, %v4097
          %v4384 = vpop.permute.xlu0 %4383
          %4387 = vset.pattern.permute.xlu0 0
          %4388 = vperm.xlu0 %4387, %v4098
          %v4389 = vpop.permute.xlu0 %4388
          %4392 = vset.pattern.permute.xlu0 0
          %4393 = vperm.xlu0 %4392, %v4099
          %v4394 = vpop.permute.xlu0 %4393
          %4397 = vset.pattern.permute.xlu0 0
          %4398 = vperm.xlu0 %4397, %v4100
          %v4399 = vpop.permute.xlu0 %4398
          %4402 = vset.pattern.permute.xlu0 0
          %4403 = vperm.xlu0 %4402, %v4101
          %v4404 = vpop.permute.xlu0 %4403
          %4407 = vset.pattern.permute.xlu0 0
          %4408 = vperm.xlu0 %4407, %v4102
          %v4409 = vpop.permute.xlu0 %4408
          %4412 = vset.pattern.permute.xlu0 0
          %4413 = vperm.xlu0 %4412, %v4103
          %v4414 = vpop.permute.xlu0 %4413
          %4417 = vset.pattern.permute.xlu0 0
          %4418 = vperm.xlu0 %4417, %v4104
          %v4419 = vpop.permute.xlu0 %4418
          %4422 = vset.pattern.permute.xlu0 0
          %4423 = vperm.xlu0 %4422, %v4105
          %v4424 = vpop.permute.xlu0 %4423
          %v4426 = vmul.f32 %v2504, %v4109
          %v4427 = vmul.f32 %v2505, %v4114
          %v4428 = vmul.f32 %v2506, %v4119
          %v4429 = vmul.f32 %v2507, %v4124
          %v4430 = vmul.f32 %v2508, %v4129
          %v4431 = vmul.f32 %v2509, %v4134
          %v4432 = vmul.f32 %v2510, %v4139
          %v4433 = vmul.f32 %v2511, %v4144
          %v4434 = vmul.f32 %v2512, %v4149
          %v4435 = vmul.f32 %v2513, %v4154
          %v4436 = vmul.f32 %v2514, %v4159
          %v4437 = vmul.f32 %v2515, %v4164
          %v4438 = vmul.f32 %v2516, %v4169
          %v4439 = vmul.f32 %v2517, %v4174
          %v4440 = vmul.f32 %v2518, %v4179
          %v4441 = vmul.f32 %v2519, %v4184
          %v4442 = vmul.f32 %v2520, %v4189
          %v4443 = vmul.f32 %v2521, %v4194
          %v4444 = vmul.f32 %v2522, %v4199
          %v4445 = vmul.f32 %v2523, %v4204
          %v4446 = vmul.f32 %v2524, %v4209
          %v4447 = vmul.f32 %v2525, %v4214
          %v4448 = vmul.f32 %v2526, %v4219
          %v4449 = vmul.f32 %v2527, %v4224
          %v4450 = vmul.f32 %v2528, %v4229
          %v4451 = vmul.f32 %v2529, %v4234
          %v4452 = vmul.f32 %v2530, %v4239
          %v4453 = vmul.f32 %v2531, %v4244
          %v4454 = vmul.f32 %v2532, %v4249
          %v4455 = vmul.f32 %v2533, %v4254
          %v4456 = vmul.f32 %v2534, %v4259
          %v4457 = vmul.f32 %v2535, %v4264
          %v4458 = vmul.f32 %v2536, %v4269
          %v4459 = vmul.f32 %v2537, %v4274
          %v4460 = vmul.f32 %v2538, %v4279
          %v4461 = vmul.f32 %v2539, %v4284
          %v4462 = vmul.f32 %v2540, %v4289
          %v4463 = vmul.f32 %v2541, %v4294
          %v4464 = vmul.f32 %v2542, %v4299
          %v4465 = vmul.f32 %v2543, %v4304
          %v4466 = vmul.f32 %v2544, %v4309
          %v4467 = vmul.f32 %v2545, %v4314
          %v4468 = vmul.f32 %v2546, %v4319
          %v4469 = vmul.f32 %v2547, %v4324
          %v4470 = vmul.f32 %v2548, %v4329
          %v4471 = vmul.f32 %v2549, %v4334
          %v4472 = vmul.f32 %v2550, %v4339
          %v4473 = vmul.f32 %v2551, %v4344
          %v4474 = vmul.f32 %v2552, %v4349
          %v4475 = vmul.f32 %v2553, %v4354
          %v4476 = vmul.f32 %v2554, %v4359
          %v4477 = vmul.f32 %v2555, %v4364
          %v4478 = vmul.f32 %v2556, %v4369
          %v4479 = vmul.f32 %v2557, %v4374
          %v4480 = vmul.f32 %v2558, %v4379
          %v4481 = vmul.f32 %v2559, %v4384
          %v4482 = vmul.f32 %v2560, %v4389
          %v4483 = vmul.f32 %v2561, %v4394
          %v4484 = vmul.f32 %v2562, %v4399
          %v4485 = vmul.f32 %v2563, %v4404
          %v4486 = vmul.f32 %v2564, %v4409
          %v4487 = vmul.f32 %v2565, %v4414
          %v4488 = vmul.f32 %v2566, %v4419
          %v4489 = vmul.f32 %v2567, %v4424
          %4490 = vst [vmem:[#allocation4] sm:$0xff] %v4426
          %4491 = vst [vmem:[#allocation4 + $0x8] sm:$0xff] %v4427
          %4492 = vst [vmem:[#allocation4 + $0x10] sm:$0xff] %v4428
          %4493 = vst [vmem:[#allocation4 + $0x18] sm:$0xff] %v4429
          %4494 = vst [vmem:[#allocation4 + $0x20] sm:$0xff] %v4430
          %4495 = vst [vmem:[#allocation4 + $0x28] sm:$0xff] %v4431
          %4496 = vst [vmem:[#allocation4 + $0x30] sm:$0xff] %v4432
          %4497 = vst [vmem:[#allocation4 + $0x38] sm:$0xff] %v4433
          %4498 = vst [vmem:[#allocation4 + $0x40] sm:$0xff] %v4434
          %4499 = vst [vmem:[#allocation4 + $0x48] sm:$0xff] %v4435
          %4500 = vst [vmem:[#allocation4 + $0x50] sm:$0xff] %v4436
          %4501 = vst [vmem:[#allocation4 + $0x58] sm:$0xff] %v4437
          %4502 = vst [vmem:[#allocation4 + $0x60] sm:$0xff] %v4438
          %4503 = vst [vmem:[#allocation4 + $0x68] sm:$0xff] %v4439
          %4504 = vst [vmem:[#allocation4 + $0x70] sm:$0xff] %v4440
          %4505 = vst [vmem:[#allocation4 + $0x78] sm:$0xff] %v4441
          %4506 = vst [vmem:[#allocation4 + $0x80] sm:$0xff] %v4442
          %4507 = vst [vmem:[#allocation4 + $0x88] sm:$0xff] %v4443
          %4508 = vst [vmem:[#allocation4 + $0x90] sm:$0xff] %v4444
          %4509 = vst [vmem:[#allocation4 + $0x98] sm:$0xff] %v4445
          %4510 = vst [vmem:[#allocation4 + $0xa0] sm:$0xff] %v4446
          %4511 = vst [vmem:[#allocation4 + $0xa8] sm:$0xff] %v4447
          %4512 = vst [vmem:[#allocation4 + $0xb0] sm:$0xff] %v4448
          %4513 = vst [vmem:[#allocation4 + $0xb8] sm:$0xff] %v4449
          %4514 = vst [vmem:[#allocation4 + $0xc0] sm:$0xff] %v4450
          %4515 = vst [vmem:[#allocation4 + $0xc8] sm:$0xff] %v4451
          %4516 = vst [vmem:[#allocation4 + $0xd0] sm:$0xff] %v4452
          %4517 = vst [vmem:[#allocation4 + $0xd8] sm:$0xff] %v4453
          %4518 = vst [vmem:[#allocation4 + $0xe0] sm:$0xff] %v4454
          %4519 = vst [vmem:[#allocation4 + $0xe8] sm:$0xff] %v4455
          %4520 = vst [vmem:[#allocation4 + $0xf0] sm:$0xff] %v4456
          %4521 = vst [vmem:[#allocation4 + $0xf8] sm:$0xff] %v4457
          %4522 = vst [vmem:[#allocation4 + $0x100] sm:$0xff] %v4458
          %4523 = vst [vmem:[#allocation4 + $0x108] sm:$0xff] %v4459
          %4524 = vst [vmem:[#allocation4 + $0x110] sm:$0xff] %v4460
          %4525 = vst [vmem:[#allocation4 + $0x118] sm:$0xff] %v4461
          %4526 = vst [vmem:[#allocation4 + $0x120] sm:$0xff] %v4462
          %4527 = vst [vmem:[#allocation4 + $0x128] sm:$0xff] %v4463
          %4528 = vst [vmem:[#allocation4 + $0x130] sm:$0xff] %v4464
          %4529 = vst [vmem:[#allocation4 + $0x138] sm:$0xff] %v4465
          %4530 = vst [vmem:[#allocation4 + $0x140] sm:$0xff] %v4466
          %4531 = vst [vmem:[#allocation4 + $0x148] sm:$0xff] %v4467
          %4532 = vst [vmem:[#allocation4 + $0x150] sm:$0xff] %v4468
          %4533 = vst [vmem:[#allocation4 + $0x158] sm:$0xff] %v4469
          %4534 = vst [vmem:[#allocation4 + $0x160] sm:$0xff] %v4470
          %4535 = vst [vmem:[#allocation4 + $0x168] sm:$0xff] %v4471
          %4536 = vst [vmem:[#allocation4 + $0x170] sm:$0xff] %v4472
          %4537 = vst [vmem:[#allocation4 + $0x178] sm:$0xff] %v4473
          %4538 = vst [vmem:[#allocation4 + $0x180] sm:$0xff] %v4474
          %4539 = vst [vmem:[#allocation4 + $0x188] sm:$0xff] %v4475
          %4540 = vst [vmem:[#allocation4 + $0x190] sm:$0xff] %v4476
          %4541 = vst [vmem:[#allocation4 + $0x198] sm:$0xff] %v4477
          %4542 = vst [vmem:[#allocation4 + $0x1a0] sm:$0xff] %v4478
          %4543 = vst [vmem:[#allocation4 + $0x1a8] sm:$0xff] %v4479
          %4544 = vst [vmem:[#allocation4 + $0x1b0] sm:$0xff] %v4480
          %4545 = vst [vmem:[#allocation4 + $0x1b8] sm:$0xff] %v4481
          %4546 = vst [vmem:[#allocation4 + $0x1c0] sm:$0xff] %v4482
          %4547 = vst [vmem:[#allocation4 + $0x1c8] sm:$0xff] %v4483
          %4548 = vst [vmem:[#allocation4 + $0x1d0] sm:$0xff] %v4484
          %4549 = vst [vmem:[#allocation4 + $0x1d8] sm:$0xff] %v4485
          %4550 = vst [vmem:[#allocation4 + $0x1e0] sm:$0xff] %v4486
          %4551 = vst [vmem:[#allocation4 + $0x1e8] sm:$0xff] %v4487
          %4552 = vst [vmem:[#allocation4 + $0x1f0] sm:$0xff] %v4488
          %4553 = vst [vmem:[#allocation4 + $0x1f8] sm:$0xff] %v4489
          %v4554 = vld [vmem:[%s3] sm:$0xff]
          %v4555 = vld [vmem:[%s3 + $0x8] sm:$0xff]
          %v4556 = vld [vmem:[%s3 + $0x10] sm:$0xff]
          %v4557 = vld [vmem:[%s3 + $0x18] sm:$0xff]
          %v4558 = vld [vmem:[%s3 + $0x20] sm:$0xff]
          %v4559 = vld [vmem:[%s3 + $0x28] sm:$0xff]
          %v4560 = vld [vmem:[%s3 + $0x30] sm:$0xff]
          %v4561 = vld [vmem:[%s3 + $0x38] sm:$0xff]
          %v4562 = vld [vmem:[%s3 + $0x40] sm:$0xff]
          %v4563 = vld [vmem:[%s3 + $0x48] sm:$0xff]
          %v4564 = vld [vmem:[%s3 + $0x50] sm:$0xff]
          %v4565 = vld [vmem:[%s3 + $0x58] sm:$0xff]
          %v4566 = vld [vmem:[%s3 + $0x60] sm:$0xff]
          %v4567 = vld [vmem:[%s3 + $0x68] sm:$0xff]
          %v4568 = vld [vmem:[%s3 + $0x70] sm:$0xff]
          %v4569 = vld [vmem:[%s3 + $0x78] sm:$0xff]
          %v4570 = vld [vmem:[%s3 + $0x80] sm:$0xff]
          %v4571 = vld [vmem:[%s3 + $0x88] sm:$0xff]
          %v4572 = vld [vmem:[%s3 + $0x90] sm:$0xff]
          %v4573 = vld [vmem:[%s3 + $0x98] sm:$0xff]
          %v4574 = vld [vmem:[%s3 + $0xa0] sm:$0xff]
          %v4575 = vld [vmem:[%s3 + $0xa8] sm:$0xff]
          %v4576 = vld [vmem:[%s3 + $0xb0] sm:$0xff]
          %v4577 = vld [vmem:[%s3 + $0xb8] sm:$0xff]
          %v4578 = vld [vmem:[%s3 + $0xc0] sm:$0xff]
          %v4579 = vld [vmem:[%s3 + $0xc8] sm:$0xff]
          %v4580 = vld [vmem:[%s3 + $0xd0] sm:$0xff]
          %v4581 = vld [vmem:[%s3 + $0xd8] sm:$0xff]
          %v4582 = vld [vmem:[%s3 + $0xe0] sm:$0xff]
          %v4583 = vld [vmem:[%s3 + $0xe8] sm:$0xff]
          %v4584 = vld [vmem:[%s3 + $0xf0] sm:$0xff]
          %v4585 = vld [vmem:[%s3 + $0xf8] sm:$0xff]
          %v4586 = vld [vmem:[%s3 + $0x100] sm:$0xff]
          %v4587 = vld [vmem:[%s3 + $0x108] sm:$0xff]
          %v4588 = vld [vmem:[%s3 + $0x110] sm:$0xff]
          %v4589 = vld [vmem:[%s3 + $0x118] sm:$0xff]
          %v4590 = vld [vmem:[%s3 + $0x120] sm:$0xff]
          %v4591 = vld [vmem:[%s3 + $0x128] sm:$0xff]
          %v4592 = vld [vmem:[%s3 + $0x130] sm:$0xff]
          %v4593 = vld [vmem:[%s3 + $0x138] sm:$0xff]
          %v4594 = vld [vmem:[%s3 + $0x140] sm:$0xff]
          %v4595 = vld [vmem:[%s3 + $0x148] sm:$0xff]
          %v4596 = vld [vmem:[%s3 + $0x150] sm:$0xff]
          %v4597 = vld [vmem:[%s3 + $0x158] sm:$0xff]
          %v4598 = vld [vmem:[%s3 + $0x160] sm:$0xff]
          %v4599 = vld [vmem:[%s3 + $0x168] sm:$0xff]
          %v4600 = vld [vmem:[%s3 + $0x170] sm:$0xff]
          %v4601 = vld [vmem:[%s3 + $0x178] sm:$0xff]
          %v4602 = vld [vmem:[%s3 + $0x180] sm:$0xff]
          %v4603 = vld [vmem:[%s3 + $0x188] sm:$0xff]
          %v4604 = vld [vmem:[%s3 + $0x190] sm:$0xff]
          %v4605 = vld [vmem:[%s3 + $0x198] sm:$0xff]
          %v4606 = vld [vmem:[%s3 + $0x1a0] sm:$0xff]
          %v4607 = vld [vmem:[%s3 + $0x1a8] sm:$0xff]
          %v4608 = vld [vmem:[%s3 + $0x1b0] sm:$0xff]
          %v4609 = vld [vmem:[%s3 + $0x1b8] sm:$0xff]
          %v4610 = vld [vmem:[%s3 + $0x1c0] sm:$0xff]
          %v4611 = vld [vmem:[%s3 + $0x1c8] sm:$0xff]
          %v4612 = vld [vmem:[%s3 + $0x1d0] sm:$0xff]
          %v4613 = vld [vmem:[%s3 + $0x1d8] sm:$0xff]
          %v4614 = vld [vmem:[%s3 + $0x1e0] sm:$0xff]
          %v4615 = vld [vmem:[%s3 + $0x1e8] sm:$0xff]
          %v4616 = vld [vmem:[%s3 + $0x1f0] sm:$0xff]
          %v4617 = vld [vmem:[%s3 + $0x1f8] sm:$0xff]
          %v4618 = vmul.f32 %v2586, %v4042
          %v4619 = vmul.f32 %v2589, %v4043
          %v4620 = vmul.f32 %v2592, %v4044
          %v4621 = vmul.f32 %v2595, %v4045
          %v4622 = vmul.f32 %v2598, %v4046
          %v4623 = vmul.f32 %v2601, %v4047
          %v4624 = vmul.f32 %v2604, %v4048
          %v4625 = vmul.f32 %v2607, %v4049
          %v4626 = vmul.f32 %v2610, %v4050
          %v4627 = vmul.f32 %v2613, %v4051
          %v4628 = vmul.f32 %v2616, %v4052
          %v4629 = vmul.f32 %v2619, %v4053
          %v4630 = vmul.f32 %v2622, %v4054
          %v4631 = vmul.f32 %v2625, %v4055
          %v4632 = vmul.f32 %v2628, %v4056
          %v4633 = vmul.f32 %v2631, %v4057
          %v4634 = vmul.f32 %v2634, %v4058
          %v4635 = vmul.f32 %v2637, %v4059
          %v4636 = vmul.f32 %v2640, %v4060
          %v4637 = vmul.f32 %v2643, %v4061
          %v4638 = vmul.f32 %v2646, %v4062
          %v4639 = vmul.f32 %v2649, %v4063
          %v4640 = vmul.f32 %v2652, %v4064
          %v4641 = vmul.f32 %v2655, %v4065
          %v4642 = vmul.f32 %v2658, %v4066
          %v4643 = vmul.f32 %v2661, %v4067
          %v4644 = vmul.f32 %v2664, %v4068
          %v4645 = vmul.f32 %v2667, %v4069
          %v4646 = vmul.f32 %v2670, %v4070
          %v4647 = vmul.f32 %v2673, %v4071
          %v4648 = vmul.f32 %v2676, %v4072
          %v4649 = vmul.f32 %v2679, %v4073
          %v4650 = vmul.f32 %v2682, %v4074
          %v4651 = vmul.f32 %v2685, %v4075
          %v4652 = vmul.f32 %v2688, %v4076
          %v4653 = vmul.f32 %v2691, %v4077
          %v4654 = vmul.f32 %v2694, %v4078
          %v4655 = vmul.f32 %v2697, %v4079
          %v4656 = vmul.f32 %v2700, %v4080
          %v4657 = vmul.f32 %v2703, %v4081
          %v4658 = vmul.f32 %v2706, %v4082
          %v4659 = vmul.f32 %v2709, %v4083
          %v4660 = vmul.f32 %v2712, %v4084
          %v4661 = vmul.f32 %v2715, %v4085
          %v4662 = vmul.f32 %v2718, %v4086
          %v4663 = vmul.f32 %v2721, %v4087
          %v4664 = vmul.f32 %v2724, %v4088
          %v4665 = vmul.f32 %v2727, %v4089
          %v4666 = vmul.f32 %v2730, %v4090
          %v4667 = vmul.f32 %v2733, %v4091
          %v4668 = vmul.f32 %v2736, %v4092
          %v4669 = vmul.f32 %v2739, %v4093
          %v4670 = vmul.f32 %v2742, %v4094
          %v4671 = vmul.f32 %v2745, %v4095
          %v4672 = vmul.f32 %v2748, %v4096
          %v4673 = vmul.f32 %v2751, %v4097
          %v4674 = vmul.f32 %v2754, %v4098
          %v4675 = vmul.f32 %v2757, %v4099
          %v4676 = vmul.f32 %v2760, %v4100
          %v4677 = vmul.f32 %v2763, %v4101
          %v4678 = vmul.f32 %v2766, %v4102
          %v4679 = vmul.f32 %v2769, %v4103
          %v4680 = vmul.f32 %v2772, %v4104
          %v4681 = vmul.f32 %v2775, %v4105
          %v4682 = vsub.f32 %v4554, %v4618
          %v4683 = vsub.f32 %v4555, %v4619
          %v4684 = vsub.f32 %v4556, %v4620
          %v4685 = vsub.f32 %v4557, %v4621
          %v4686 = vsub.f32 %v4558, %v4622
          %v4687 = vsub.f32 %v4559, %v4623
          %v4688 = vsub.f32 %v4560, %v4624
          %v4689 = vsub.f32 %v4561, %v4625
          %v4690 = vsub.f32 %v4562, %v4626
          %v4691 = vsub.f32 %v4563, %v4627
          %v4692 = vsub.f32 %v4564, %v4628
          %v4693 = vsub.f32 %v4565, %v4629
          %v4694 = vsub.f32 %v4566, %v4630
          %v4695 = vsub.f32 %v4567, %v4631
          %v4696 = vsub.f32 %v4568, %v4632
          %v4697 = vsub.f32 %v4569, %v4633
          %v4698 = vsub.f32 %v4570, %v4634
          %v4699 = vsub.f32 %v4571, %v4635
          %v4700 = vsub.f32 %v4572, %v4636
          %v4701 = vsub.f32 %v4573, %v4637
          %v4702 = vsub.f32 %v4574, %v4638
          %v4703 = vsub.f32 %v4575, %v4639
          %v4704 = vsub.f32 %v4576, %v4640
          %v4705 = vsub.f32 %v4577, %v4641
          %v4706 = vsub.f32 %v4578, %v4642
          %v4707 = vsub.f32 %v4579, %v4643
          %v4708 = vsub.f32 %v4580, %v4644
          %v4709 = vsub.f32 %v4581, %v4645
          %v4710 = vsub.f32 %v4582, %v4646
          %v4711 = vsub.f32 %v4583, %v4647
          %v4712 = vsub.f32 %v4584, %v4648
          %v4713 = vsub.f32 %v4585, %v4649
          %v4714 = vsub.f32 %v4586, %v4650
          %v4715 = vsub.f32 %v4587, %v4651
          %v4716 = vsub.f32 %v4588, %v4652
          %v4717 = vsub.f32 %v4589, %v4653
          %v4718 = vsub.f32 %v4590, %v4654
          %v4719 = vsub.f32 %v4591, %v4655
          %v4720 = vsub.f32 %v4592, %v4656
          %v4721 = vsub.f32 %v4593, %v4657
          %v4722 = vsub.f32 %v4594, %v4658
          %v4723 = vsub.f32 %v4595, %v4659
          %v4724 = vsub.f32 %v4596, %v4660
          %v4725 = vsub.f32 %v4597, %v4661
          %v4726 = vsub.f32 %v4598, %v4662
          %v4727 = vsub.f32 %v4599, %v4663
          %v4728 = vsub.f32 %v4600, %v4664
          %v4729 = vsub.f32 %v4601, %v4665
          %v4730 = vsub.f32 %v4602, %v4666
          %v4731 = vsub.f32 %v4603, %v4667
          %v4732 = vsub.f32 %v4604, %v4668
          %v4733 = vsub.f32 %v4605, %v4669
          %v4734 = vsub.f32 %v4606, %v4670
          %v4735 = vsub.f32 %v4607, %v4671
          %v4736 = vsub.f32 %v4608, %v4672
          %v4737 = vsub.f32 %v4609, %v4673
          %v4738 = vsub.f32 %v4610, %v4674
          %v4739 = vsub.f32 %v4611, %v4675
          %v4740 = vsub.f32 %v4612, %v4676
          %v4741 = vsub.f32 %v4613, %v4677
          %v4742 = vsub.f32 %v4614, %v4678
          %v4743 = vsub.f32 %v4615, %v4679
          %v4744 = vsub.f32 %v4616, %v4680
          %v4745 = vsub.f32 %v4617, %v4681
          %4746 = vst.msk [vmem:[#allocation5] sm:$0xff] %vm199, %v4682
          %4747 = vst.msk [vmem:[#allocation5 + $0x8] sm:$0xff] %vm199, %v4683
          %4748 = vst.msk [vmem:[#allocation5 + $0x10] sm:$0xff] %vm199, %v4684
          %4749 = vst.msk [vmem:[#allocation5 + $0x18] sm:$0xff] %vm199, %v4685
          %4750 = vst.msk [vmem:[#allocation5 + $0x20] sm:$0xff] %vm199, %v4686
          %4751 = vst.msk [vmem:[#allocation5 + $0x28] sm:$0xff] %vm199, %v4687
          %4752 = vst.msk [vmem:[#allocation5 + $0x30] sm:$0xff] %vm199, %v4688
          %4753 = vst.msk [vmem:[#allocation5 + $0x38] sm:$0xff] %vm199, %v4689
          %4754 = vst.msk [vmem:[#allocation5 + $0x40] sm:$0xff] %vm199, %v4690
          %4755 = vst.msk [vmem:[#allocation5 + $0x48] sm:$0xff] %vm199, %v4691
          %4756 = vst.msk [vmem:[#allocation5 + $0x50] sm:$0xff] %vm199, %v4692
          %4757 = vst.msk [vmem:[#allocation5 + $0x58] sm:$0xff] %vm199, %v4693
          %4758 = vst.msk [vmem:[#allocation5 + $0x60] sm:$0xff] %vm199, %v4694
          %4759 = vst.msk [vmem:[#allocation5 + $0x68] sm:$0xff] %vm199, %v4695
          %4760 = vst.msk [vmem:[#allocation5 + $0x70] sm:$0xff] %vm199, %v4696
          %4761 = vst.msk [vmem:[#allocation5 + $0x78] sm:$0xff] %vm199, %v4697
          %4762 = vst.msk [vmem:[#allocation5 + $0x80] sm:$0xff] %vm199, %v4698
          %4763 = vst.msk [vmem:[#allocation5 + $0x88] sm:$0xff] %vm199, %v4699
          %4764 = vst.msk [vmem:[#allocation5 + $0x90] sm:$0xff] %vm199, %v4700
          %4765 = vst.msk [vmem:[#allocation5 + $0x98] sm:$0xff] %vm199, %v4701
          %4766 = vst.msk [vmem:[#allocation5 + $0xa0] sm:$0xff] %vm199, %v4702
          %4767 = vst.msk [vmem:[#allocation5 + $0xa8] sm:$0xff] %vm199, %v4703
          %4768 = vst.msk [vmem:[#allocation5 + $0xb0] sm:$0xff] %vm199, %v4704
          %4769 = vst.msk [vmem:[#allocation5 + $0xb8] sm:$0xff] %vm199, %v4705
          %4770 = vst.msk [vmem:[#allocation5 + $0xc0] sm:$0xff] %vm199, %v4706
          %4771 = vst.msk [vmem:[#allocation5 + $0xc8] sm:$0xff] %vm199, %v4707
          %4772 = vst.msk [vmem:[#allocation5 + $0xd0] sm:$0xff] %vm199, %v4708
          %4773 = vst.msk [vmem:[#allocation5 + $0xd8] sm:$0xff] %vm199, %v4709
          %4774 = vst.msk [vmem:[#allocation5 + $0xe0] sm:$0xff] %vm199, %v4710
          %4775 = vst.msk [vmem:[#allocation5 + $0xe8] sm:$0xff] %vm199, %v4711
          %4776 = vst.msk [vmem:[#allocation5 + $0xf0] sm:$0xff] %vm199, %v4712
          %4777 = vst.msk [vmem:[#allocation5 + $0xf8] sm:$0xff] %vm199, %v4713
          %4778 = vst.msk [vmem:[#allocation5 + $0x100] sm:$0xff] %vm199, %v4714
          %4779 = vst.msk [vmem:[#allocation5 + $0x108] sm:$0xff] %vm199, %v4715
          %4780 = vst.msk [vmem:[#allocation5 + $0x110] sm:$0xff] %vm199, %v4716
          %4781 = vst.msk [vmem:[#allocation5 + $0x118] sm:$0xff] %vm199, %v4717
          %4782 = vst.msk [vmem:[#allocation5 + $0x120] sm:$0xff] %vm199, %v4718
          %4783 = vst.msk [vmem:[#allocation5 + $0x128] sm:$0xff] %vm199, %v4719
          %4784 = vst.msk [vmem:[#allocation5 + $0x130] sm:$0xff] %vm199, %v4720
          %4785 = vst.msk [vmem:[#allocation5 + $0x138] sm:$0xff] %vm199, %v4721
          %4786 = vst.msk [vmem:[#allocation5 + $0x140] sm:$0xff] %vm199, %v4722
          %4787 = vst.msk [vmem:[#allocation5 + $0x148] sm:$0xff] %vm199, %v4723
          %4788 = vst.msk [vmem:[#allocation5 + $0x150] sm:$0xff] %vm199, %v4724
          %4789 = vst.msk [vmem:[#allocation5 + $0x158] sm:$0xff] %vm199, %v4725
          %4790 = vst.msk [vmem:[#allocation5 + $0x160] sm:$0xff] %vm199, %v4726
          %4791 = vst.msk [vmem:[#allocation5 + $0x168] sm:$0xff] %vm199, %v4727
          %4792 = vst.msk [vmem:[#allocation5 + $0x170] sm:$0xff] %vm199, %v4728
          %4793 = vst.msk [vmem:[#allocation5 + $0x178] sm:$0xff] %vm199, %v4729
          %4794 = vst.msk [vmem:[#allocation5 + $0x180] sm:$0xff] %vm199, %v4730
          %4795 = vst.msk [vmem:[#allocation5 + $0x188] sm:$0xff] %vm199, %v4731
          %4796 = vst.msk [vmem:[#allocation5 + $0x190] sm:$0xff] %vm199, %v4732
          %4797 = vst.msk [vmem:[#allocation5 + $0x198] sm:$0xff] %vm199, %v4733
          %4798 = vst.msk [vmem:[#allocation5 + $0x1a0] sm:$0xff] %vm199, %v4734
          %4799 = vst.msk [vmem:[#allocation5 + $0x1a8] sm:$0xff] %vm199, %v4735
          %4800 = vst.msk [vmem:[#allocation5 + $0x1b0] sm:$0xff] %vm199, %v4736
          %4801 = vst.msk [vmem:[#allocation5 + $0x1b8] sm:$0xff] %vm199, %v4737
          %4802 = vst.msk [vmem:[#allocation5 + $0x1c0] sm:$0xff] %vm199, %v4738
          %4803 = vst.msk [vmem:[#allocation5 + $0x1c8] sm:$0xff] %vm199, %v4739
          %4804 = vst.msk [vmem:[#allocation5 + $0x1d0] sm:$0xff] %vm199, %v4740
          %4805 = vst.msk [vmem:[#allocation5 + $0x1d8] sm:$0xff] %vm199, %v4741
          %4806 = vst.msk [vmem:[#allocation5 + $0x1e0] sm:$0xff] %vm199, %v4742
          %4807 = vst.msk [vmem:[#allocation5 + $0x1e8] sm:$0xff] %vm199, %v4743
          %4808 = vst.msk [vmem:[#allocation5 + $0x1f0] sm:$0xff] %vm199, %v4744
          %4809 = vst.msk [vmem:[#allocation5 + $0x1f8] sm:$0xff] %vm199, %v4745
        $region44: #{tpu_custom_call.1} parent=35 // pred_fallthru
          _
        %v4810 = vld [vmem:[#allocation4] sm:$0xff]
        %v4811 = vld [vmem:[#allocation4 + $0x8] sm:$0xff]
        %v4812 = vld [vmem:[#allocation4 + $0x10] sm:$0xff]
        %v4813 = vld [vmem:[#allocation4 + $0x18] sm:$0xff]
        %v4814 = vld [vmem:[#allocation4 + $0x20] sm:$0xff]
        %v4815 = vld [vmem:[#allocation4 + $0x28] sm:$0xff]
        %v4816 = vld [vmem:[#allocation4 + $0x30] sm:$0xff]
        %v4817 = vld [vmem:[#allocation4 + $0x38] sm:$0xff]
        %v4818 = vld [vmem:[#allocation4 + $0x40] sm:$0xff]
        %v4819 = vld [vmem:[#allocation4 + $0x48] sm:$0xff]
        %v4820 = vld [vmem:[#allocation4 + $0x50] sm:$0xff]
        %v4821 = vld [vmem:[#allocation4 + $0x58] sm:$0xff]
        %v4822 = vld [vmem:[#allocation4 + $0x60] sm:$0xff]
        %v4823 = vld [vmem:[#allocation4 + $0x68] sm:$0xff]
        %v4824 = vld [vmem:[#allocation4 + $0x70] sm:$0xff]
        %v4825 = vld [vmem:[#allocation4 + $0x78] sm:$0xff]
        %v4826 = vld [vmem:[#allocation4 + $0x80] sm:$0xff]
        %v4827 = vld [vmem:[#allocation4 + $0x88] sm:$0xff]
        %v4828 = vld [vmem:[#allocation4 + $0x90] sm:$0xff]
        %v4829 = vld [vmem:[#allocation4 + $0x98] sm:$0xff]
        %v4830 = vld [vmem:[#allocation4 + $0xa0] sm:$0xff]
        %v4831 = vld [vmem:[#allocation4 + $0xa8] sm:$0xff]
        %v4832 = vld [vmem:[#allocation4 + $0xb0] sm:$0xff]
        %v4833 = vld [vmem:[#allocation4 + $0xb8] sm:$0xff]
        %v4834 = vld [vmem:[#allocation4 + $0xc0] sm:$0xff]
        %v4835 = vld [vmem:[#allocation4 + $0xc8] sm:$0xff]
        %v4836 = vld [vmem:[#allocation4 + $0xd0] sm:$0xff]
        %v4837 = vld [vmem:[#allocation4 + $0xd8] sm:$0xff]
        %v4838 = vld [vmem:[#allocation4 + $0xe0] sm:$0xff]
        %v4839 = vld [vmem:[#allocation4 + $0xe8] sm:$0xff]
        %v4840 = vld [vmem:[#allocation4 + $0xf0] sm:$0xff]
        %v4841 = vld [vmem:[#allocation4 + $0xf8] sm:$0xff]
        %v4842 = vld [vmem:[#allocation4 + $0x100] sm:$0xff]
        %v4843 = vld [vmem:[#allocation4 + $0x108] sm:$0xff]
        %v4844 = vld [vmem:[#allocation4 + $0x110] sm:$0xff]
        %v4845 = vld [vmem:[#allocation4 + $0x118] sm:$0xff]
        %v4846 = vld [vmem:[#allocation4 + $0x120] sm:$0xff]
        %v4847 = vld [vmem:[#allocation4 + $0x128] sm:$0xff]
        %v4848 = vld [vmem:[#allocation4 + $0x130] sm:$0xff]
        %v4849 = vld [vmem:[#allocation4 + $0x138] sm:$0xff]
        %v4850 = vld [vmem:[#allocation4 + $0x140] sm:$0xff]
        %v4851 = vld [vmem:[#allocation4 + $0x148] sm:$0xff]
        %v4852 = vld [vmem:[#allocation4 + $0x150] sm:$0xff]
        %v4853 = vld [vmem:[#allocation4 + $0x158] sm:$0xff]
        %v4854 = vld [vmem:[#allocation4 + $0x160] sm:$0xff]
        %v4855 = vld [vmem:[#allocation4 + $0x168] sm:$0xff]
        %v4856 = vld [vmem:[#allocation4 + $0x170] sm:$0xff]
        %v4857 = vld [vmem:[#allocation4 + $0x178] sm:$0xff]
        %v4858 = vld [vmem:[#allocation4 + $0x180] sm:$0xff]
        %v4859 = vld [vmem:[#allocation4 + $0x188] sm:$0xff]
        %v4860 = vld [vmem:[#allocation4 + $0x190] sm:$0xff]
        %v4861 = vld [vmem:[#allocation4 + $0x198] sm:$0xff]
        %v4862 = vld [vmem:[#allocation4 + $0x1a0] sm:$0xff]
        %v4863 = vld [vmem:[#allocation4 + $0x1a8] sm:$0xff]
        %v4864 = vld [vmem:[#allocation4 + $0x1b0] sm:$0xff]
        %v4865 = vld [vmem:[#allocation4 + $0x1b8] sm:$0xff]
        %v4866 = vld [vmem:[#allocation4 + $0x1c0] sm:$0xff]
        %v4867 = vld [vmem:[#allocation4 + $0x1c8] sm:$0xff]
        %v4868 = vld [vmem:[#allocation4 + $0x1d0] sm:$0xff]
        %v4869 = vld [vmem:[#allocation4 + $0x1d8] sm:$0xff]
        %v4870 = vld [vmem:[#allocation4 + $0x1e0] sm:$0xff]
        %v4871 = vld [vmem:[#allocation4 + $0x1e8] sm:$0xff]
        %v4872 = vld [vmem:[#allocation4 + $0x1f0] sm:$0xff]
        %v4873 = vld [vmem:[#allocation4 + $0x1f8] sm:$0xff]
        %s4874 = smul.u32 %s16, 112
        %s4875 = smul.addr %s4874, 8
        %s4876 = scalar_lea.vmem %s0, %s4875
        %v4877 = vld [vmem:[%s4876] sm:$0xff]
        %v4878 = vld [vmem:[%s4876 + $0x8] sm:$0xff]
        %v4879 = vld [vmem:[%s4876 + $0x10] sm:$0xff]
        %v4880 = vld [vmem:[%s4876 + $0x18] sm:$0xff]
        %v4881 = vld [vmem:[%s4876 + $0x20] sm:$0xff]
        %v4882 = vld [vmem:[%s4876 + $0x28] sm:$0xff]
        %v4883 = vld [vmem:[%s4876 + $0x30] sm:$0xff]
        %v4884 = vld [vmem:[%s4876 + $0x38] sm:$0xff]
        %v4885 = vld [vmem:[%s4876 + $0x40] sm:$0xff]
        %v4886 = vld [vmem:[%s4876 + $0x48] sm:$0xff]
        %v4887 = vld [vmem:[%s4876 + $0x50] sm:$0xff]
        %v4888 = vld [vmem:[%s4876 + $0x58] sm:$0xff]
        %v4889 = vld [vmem:[%s4876 + $0x60] sm:$0xff]
        %v4890 = vld [vmem:[%s4876 + $0x68] sm:$0xff]
        %v4891 = vld [vmem:[%s4876 + $0x70] sm:$0xff]
        %v4892 = vld [vmem:[%s4876 + $0x78] sm:$0xff]
        %v4893 = vld [vmem:[%s4876 + $0x80] sm:$0xff]
        %v4894 = vld [vmem:[%s4876 + $0x88] sm:$0xff]
        %v4895 = vld [vmem:[%s4876 + $0x90] sm:$0xff]
        %v4896 = vld [vmem:[%s4876 + $0x98] sm:$0xff]
        %v4897 = vld [vmem:[%s4876 + $0xa0] sm:$0xff]
        %v4898 = vld [vmem:[%s4876 + $0xa8] sm:$0xff]
        %v4899 = vld [vmem:[%s4876 + $0xb0] sm:$0xff]
        %v4900 = vld [vmem:[%s4876 + $0xb8] sm:$0xff]
        %v4901 = vld [vmem:[%s4876 + $0xc0] sm:$0xff]
        %v4902 = vld [vmem:[%s4876 + $0xc8] sm:$0xff]
        %v4903 = vld [vmem:[%s4876 + $0xd0] sm:$0xff]
        %v4904 = vld [vmem:[%s4876 + $0xd8] sm:$0xff]
        %v4905 = vld [vmem:[%s4876 + $0xe0] sm:$0xff]
        %v4906 = vld [vmem:[%s4876 + $0xe8] sm:$0xff]
        %v4907 = vld [vmem:[%s4876 + $0xf0] sm:$0xff]
        %v4908 = vld [vmem:[%s4876 + $0xf8] sm:$0xff]
        %v4909 = vld [vmem:[%s4876 + $0x100] sm:$0xff]
        %v4910 = vld [vmem:[%s4876 + $0x108] sm:$0xff]
        %v4911 = vld [vmem:[%s4876 + $0x110] sm:$0xff]
        %v4912 = vld [vmem:[%s4876 + $0x118] sm:$0xff]
        %v4913 = vld [vmem:[%s4876 + $0x120] sm:$0xff]
        %v4914 = vld [vmem:[%s4876 + $0x128] sm:$0xff]
        %v4915 = vld [vmem:[%s4876 + $0x130] sm:$0xff]
        %v4916 = vld [vmem:[%s4876 + $0x138] sm:$0xff]
        %v4917 = vld [vmem:[%s4876 + $0x140] sm:$0xff]
        %v4918 = vld [vmem:[%s4876 + $0x148] sm:$0xff]
        %v4919 = vld [vmem:[%s4876 + $0x150] sm:$0xff]
        %v4920 = vld [vmem:[%s4876 + $0x158] sm:$0xff]
        %v4921 = vld [vmem:[%s4876 + $0x160] sm:$0xff]
        %v4922 = vld [vmem:[%s4876 + $0x168] sm:$0xff]
        %v4923 = vld [vmem:[%s4876 + $0x170] sm:$0xff]
        %v4924 = vld [vmem:[%s4876 + $0x178] sm:$0xff]
        %v4925 = vld [vmem:[%s4876 + $0x180] sm:$0xff]
        %v4926 = vld [vmem:[%s4876 + $0x188] sm:$0xff]
        %v4927 = vld [vmem:[%s4876 + $0x190] sm:$0xff]
        %v4928 = vld [vmem:[%s4876 + $0x198] sm:$0xff]
        %v4929 = vld [vmem:[%s4876 + $0x1a0] sm:$0xff]
        %v4930 = vld [vmem:[%s4876 + $0x1a8] sm:$0xff]
        %v4931 = vld [vmem:[%s4876 + $0x1b0] sm:$0xff]
        %v4932 = vld [vmem:[%s4876 + $0x1b8] sm:$0xff]
        %v4933 = vld [vmem:[%s4876 + $0x1c0] sm:$0xff]
        %v4934 = vld [vmem:[%s4876 + $0x1c8] sm:$0xff]
        %v4935 = vld [vmem:[%s4876 + $0x1d0] sm:$0xff]
        %v4936 = vld [vmem:[%s4876 + $0x1d8] sm:$0xff]
        %v4937 = vld [vmem:[%s4876 + $0x1e0] sm:$0xff]
        %v4938 = vld [vmem:[%s4876 + $0x1e8] sm:$0xff]
        %v4939 = vld [vmem:[%s4876 + $0x1f0] sm:$0xff]
        %v4940 = vld [vmem:[%s4876 + $0x1f8] sm:$0xff]
        %v4941 = vld [vmem:[%s4876 + $0x200] sm:$0xff]
        %v4942 = vld [vmem:[%s4876 + $0x208] sm:$0xff]
        %v4943 = vld [vmem:[%s4876 + $0x210] sm:$0xff]
        %v4944 = vld [vmem:[%s4876 + $0x218] sm:$0xff]
        %v4945 = vld [vmem:[%s4876 + $0x220] sm:$0xff]
        %v4946 = vld [vmem:[%s4876 + $0x228] sm:$0xff]
        %v4947 = vld [vmem:[%s4876 + $0x230] sm:$0xff]
        %v4948 = vld [vmem:[%s4876 + $0x238] sm:$0xff]
        %v4949 = vld [vmem:[%s4876 + $0x240] sm:$0xff]
        %v4950 = vld [vmem:[%s4876 + $0x248] sm:$0xff]
        %v4951 = vld [vmem:[%s4876 + $0x250] sm:$0xff]
        %v4952 = vld [vmem:[%s4876 + $0x258] sm:$0xff]
        %v4953 = vld [vmem:[%s4876 + $0x260] sm:$0xff]
        %v4954 = vld [vmem:[%s4876 + $0x268] sm:$0xff]
        %v4955 = vld [vmem:[%s4876 + $0x270] sm:$0xff]
        %v4956 = vld [vmem:[%s4876 + $0x278] sm:$0xff]
        %v4957 = vld [vmem:[%s4876 + $0x280] sm:$0xff]
        %v4958 = vld [vmem:[%s4876 + $0x288] sm:$0xff]
        %v4959 = vld [vmem:[%s4876 + $0x290] sm:$0xff]
        %v4960 = vld [vmem:[%s4876 + $0x298] sm:$0xff]
        %v4961 = vld [vmem:[%s4876 + $0x2a0] sm:$0xff]
        %v4962 = vld [vmem:[%s4876 + $0x2a8] sm:$0xff]
        %v4963 = vld [vmem:[%s4876 + $0x2b0] sm:$0xff]
        %v4964 = vld [vmem:[%s4876 + $0x2b8] sm:$0xff]
        %v4965 = vld [vmem:[%s4876 + $0x2c0] sm:$0xff]
        %v4966 = vld [vmem:[%s4876 + $0x2c8] sm:$0xff]
        %v4967 = vld [vmem:[%s4876 + $0x2d0] sm:$0xff]
        %v4968 = vld [vmem:[%s4876 + $0x2d8] sm:$0xff]
        %v4969 = vld [vmem:[%s4876 + $0x2e0] sm:$0xff]
        %v4970 = vld [vmem:[%s4876 + $0x2e8] sm:$0xff]
        %v4971 = vld [vmem:[%s4876 + $0x2f0] sm:$0xff]
        %v4972 = vld [vmem:[%s4876 + $0x2f8] sm:$0xff]
        %v4973 = vld [vmem:[%s4876 + $0x300] sm:$0xff]
        %v4974 = vld [vmem:[%s4876 + $0x308] sm:$0xff]
        %v4975 = vld [vmem:[%s4876 + $0x310] sm:$0xff]
        %v4976 = vld [vmem:[%s4876 + $0x318] sm:$0xff]
        %v4977 = vld [vmem:[%s4876 + $0x320] sm:$0xff]
        %v4978 = vld [vmem:[%s4876 + $0x328] sm:$0xff]
        %v4979 = vld [vmem:[%s4876 + $0x330] sm:$0xff]
        %v4980 = vld [vmem:[%s4876 + $0x338] sm:$0xff]
        %v4981 = vld [vmem:[%s4876 + $0x340] sm:$0xff]
        %v4982 = vld [vmem:[%s4876 + $0x348] sm:$0xff]
        %v4983 = vld [vmem:[%s4876 + $0x350] sm:$0xff]
        %v4984 = vld [vmem:[%s4876 + $0x358] sm:$0xff]
        %v4985 = vld [vmem:[%s4876 + $0x360] sm:$0xff]
        %v4986 = vld [vmem:[%s4876 + $0x368] sm:$0xff]
        %v4987 = vld [vmem:[%s4876 + $0x370] sm:$0xff]
        %v4988 = vld [vmem:[%s4876 + $0x378] sm:$0xff]
        %v4989 = vld [vmem:[#allocation5] sm:$0xff]
        %v4990 = vld [vmem:[#allocation5 + $0x8] sm:$0xff]
        %v4991 = vld [vmem:[#allocation5 + $0x10] sm:$0xff]
        %v4992 = vld [vmem:[#allocation5 + $0x18] sm:$0xff]
        %v4993 = vld [vmem:[#allocation5 + $0x20] sm:$0xff]
        %v4994 = vld [vmem:[#allocation5 + $0x28] sm:$0xff]
        %v4995 = vld [vmem:[#allocation5 + $0x30] sm:$0xff]
        %v4996 = vld [vmem:[#allocation5 + $0x38] sm:$0xff]
        %v4997 = vld [vmem:[#allocation5 + $0x40] sm:$0xff]
        %v4998 = vld [vmem:[#allocation5 + $0x48] sm:$0xff]
        %v4999 = vld [vmem:[#allocation5 + $0x50] sm:$0xff]
        %v5000 = vld [vmem:[#allocation5 + $0x58] sm:$0xff]
        %v5001 = vld [vmem:[#allocation5 + $0x60] sm:$0xff]
        %v5002 = vld [vmem:[#allocation5 + $0x68] sm:$0xff]
        %v5003 = vld [vmem:[#allocation5 + $0x70] sm:$0xff]
        %v5004 = vld [vmem:[#allocation5 + $0x78] sm:$0xff]
        %v5005 = vld [vmem:[#allocation5 + $0x80] sm:$0xff]
        %v5006 = vld [vmem:[#allocation5 + $0x88] sm:$0xff]
        %v5007 = vld [vmem:[#allocation5 + $0x90] sm:$0xff]
        %v5008 = vld [vmem:[#allocation5 + $0x98] sm:$0xff]
        %v5009 = vld [vmem:[#allocation5 + $0xa0] sm:$0xff]
        %v5010 = vld [vmem:[#allocation5 + $0xa8] sm:$0xff]
        %v5011 = vld [vmem:[#allocation5 + $0xb0] sm:$0xff]
        %v5012 = vld [vmem:[#allocation5 + $0xb8] sm:$0xff]
        %v5013 = vld [vmem:[#allocation5 + $0xc0] sm:$0xff]
        %v5014 = vld [vmem:[#allocation5 + $0xc8] sm:$0xff]
        %v5015 = vld [vmem:[#allocation5 + $0xd0] sm:$0xff]
        %v5016 = vld [vmem:[#allocation5 + $0xd8] sm:$0xff]
        %v5017 = vld [vmem:[#allocation5 + $0xe0] sm:$0xff]
        %v5018 = vld [vmem:[#allocation5 + $0xe8] sm:$0xff]
        %v5019 = vld [vmem:[#allocation5 + $0xf0] sm:$0xff]
        %v5020 = vld [vmem:[#allocation5 + $0xf8] sm:$0xff]
        %v5021 = vld [vmem:[#allocation5 + $0x100] sm:$0xff]
        %v5022 = vld [vmem:[#allocation5 + $0x108] sm:$0xff]
        %v5023 = vld [vmem:[#allocation5 + $0x110] sm:$0xff]
        %v5024 = vld [vmem:[#allocation5 + $0x118] sm:$0xff]
        %v5025 = vld [vmem:[#allocation5 + $0x120] sm:$0xff]
        %v5026 = vld [vmem:[#allocation5 + $0x128] sm:$0xff]
        %v5027 = vld [vmem:[#allocation5 + $0x130] sm:$0xff]
        %v5028 = vld [vmem:[#allocation5 + $0x138] sm:$0xff]
        %v5029 = vld [vmem:[#allocation5 + $0x140] sm:$0xff]
        %v5030 = vld [vmem:[#allocation5 + $0x148] sm:$0xff]
        %v5031 = vld [vmem:[#allocation5 + $0x150] sm:$0xff]
        %v5032 = vld [vmem:[#allocation5 + $0x158] sm:$0xff]
        %v5033 = vld [vmem:[#allocation5 + $0x160] sm:$0xff]
        %v5034 = vld [vmem:[#allocation5 + $0x168] sm:$0xff]
        %v5035 = vld [vmem:[#allocation5 + $0x170] sm:$0xff]
        %v5036 = vld [vmem:[#allocation5 + $0x178] sm:$0xff]
        %v5037 = vld [vmem:[#allocation5 + $0x180] sm:$0xff]
        %v5038 = vld [vmem:[#allocation5 + $0x188] sm:$0xff]
        %v5039 = vld [vmem:[#allocation5 + $0x190] sm:$0xff]
        %v5040 = vld [vmem:[#allocation5 + $0x198] sm:$0xff]
        %v5041 = vld [vmem:[#allocation5 + $0x1a0] sm:$0xff]
        %v5042 = vld [vmem:[#allocation5 + $0x1a8] sm:$0xff]
        %v5043 = vld [vmem:[#allocation5 + $0x1b0] sm:$0xff]
        %v5044 = vld [vmem:[#allocation5 + $0x1b8] sm:$0xff]
        %v5045 = vld [vmem:[#allocation5 + $0x1c0] sm:$0xff]
        %v5046 = vld [vmem:[#allocation5 + $0x1c8] sm:$0xff]
        %v5047 = vld [vmem:[#allocation5 + $0x1d0] sm:$0xff]
        %v5048 = vld [vmem:[#allocation5 + $0x1d8] sm:$0xff]
        %v5049 = vld [vmem:[#allocation5 + $0x1e0] sm:$0xff]
        %v5050 = vld [vmem:[#allocation5 + $0x1e8] sm:$0xff]
        %v5051 = vld [vmem:[#allocation5 + $0x1f0] sm:$0xff]
        %v5052 = vld [vmem:[#allocation5 + $0x1f8] sm:$0xff]
        %5054 = vset.pattern.permute.xlu0 0
        %5055 = vperm.xlu0 %5054, %v4989
        %v5056 = vpop.permute.xlu0 %5055
        %5059 = vset.pattern.permute.xlu0 0
        %5060 = vperm.xlu0 %5059, %v4990
        %v5061 = vpop.permute.xlu0 %5060
        %5064 = vset.pattern.permute.xlu0 0
        %5065 = vperm.xlu0 %5064, %v4991
        %v5066 = vpop.permute.xlu0 %5065
        %5069 = vset.pattern.permute.xlu0 0
        %5070 = vperm.xlu0 %5069, %v4992
        %v5071 = vpop.permute.xlu0 %5070
        %5074 = vset.pattern.permute.xlu0 0
        %5075 = vperm.xlu0 %5074, %v4993
        %v5076 = vpop.permute.xlu0 %5075
        %5079 = vset.pattern.permute.xlu0 0
        %5080 = vperm.xlu0 %5079, %v4994
        %v5081 = vpop.permute.xlu0 %5080
        %5084 = vset.pattern.permute.xlu0 0
        %5085 = vperm.xlu0 %5084, %v4995
        %v5086 = vpop.permute.xlu0 %5085
        %5089 = vset.pattern.permute.xlu0 0
        %5090 = vperm.xlu0 %5089, %v4996
        %v5091 = vpop.permute.xlu0 %5090
        %5094 = vset.pattern.permute.xlu0 0
        %5095 = vperm.xlu0 %5094, %v4997
        %v5096 = vpop.permute.xlu0 %5095
        %5099 = vset.pattern.permute.xlu0 0
        %5100 = vperm.xlu0 %5099, %v4998
        %v5101 = vpop.permute.xlu0 %5100
        %5104 = vset.pattern.permute.xlu0 0
        %5105 = vperm.xlu0 %5104, %v4999
        %v5106 = vpop.permute.xlu0 %5105
        %5109 = vset.pattern.permute.xlu0 0
        %5110 = vperm.xlu0 %5109, %v5000
        %v5111 = vpop.permute.xlu0 %5110
        %5114 = vset.pattern.permute.xlu0 0
        %5115 = vperm.xlu0 %5114, %v5001
        %v5116 = vpop.permute.xlu0 %5115
        %5119 = vset.pattern.permute.xlu0 0
        %5120 = vperm.xlu0 %5119, %v5002
        %v5121 = vpop.permute.xlu0 %5120
        %5124 = vset.pattern.permute.xlu0 0
        %5125 = vperm.xlu0 %5124, %v5003
        %v5126 = vpop.permute.xlu0 %5125
        %5129 = vset.pattern.permute.xlu0 0
        %5130 = vperm.xlu0 %5129, %v5004
        %v5131 = vpop.permute.xlu0 %5130
        %5134 = vset.pattern.permute.xlu0 0
        %5135 = vperm.xlu0 %5134, %v5005
        %v5136 = vpop.permute.xlu0 %5135
        %5139 = vset.pattern.permute.xlu0 0
        %5140 = vperm.xlu0 %5139, %v5006
        %v5141 = vpop.permute.xlu0 %5140
        %5144 = vset.pattern.permute.xlu0 0
        %5145 = vperm.xlu0 %5144, %v5007
        %v5146 = vpop.permute.xlu0 %5145
        %5149 = vset.pattern.permute.xlu0 0
        %5150 = vperm.xlu0 %5149, %v5008
        %v5151 = vpop.permute.xlu0 %5150
        %5154 = vset.pattern.permute.xlu0 0
        %5155 = vperm.xlu0 %5154, %v5009
        %v5156 = vpop.permute.xlu0 %5155
        %5159 = vset.pattern.permute.xlu0 0
        %5160 = vperm.xlu0 %5159, %v5010
        %v5161 = vpop.permute.xlu0 %5160
        %5164 = vset.pattern.permute.xlu0 0
        %5165 = vperm.xlu0 %5164, %v5011
        %v5166 = vpop.permute.xlu0 %5165
        %5169 = vset.pattern.permute.xlu0 0
        %5170 = vperm.xlu0 %5169, %v5012
        %v5171 = vpop.permute.xlu0 %5170
        %5174 = vset.pattern.permute.xlu0 0
        %5175 = vperm.xlu0 %5174, %v5013
        %v5176 = vpop.permute.xlu0 %5175
        %5179 = vset.pattern.permute.xlu0 0
        %5180 = vperm.xlu0 %5179, %v5014
        %v5181 = vpop.permute.xlu0 %5180
        %5184 = vset.pattern.permute.xlu0 0
        %5185 = vperm.xlu0 %5184, %v5015
        %v5186 = vpop.permute.xlu0 %5185
        %5189 = vset.pattern.permute.xlu0 0
        %5190 = vperm.xlu0 %5189, %v5016
        %v5191 = vpop.permute.xlu0 %5190
        %5194 = vset.pattern.permute.xlu0 0
        %5195 = vperm.xlu0 %5194, %v5017
        %v5196 = vpop.permute.xlu0 %5195
        %5199 = vset.pattern.permute.xlu0 0
        %5200 = vperm.xlu0 %5199, %v5018
        %v5201 = vpop.permute.xlu0 %5200
        %5204 = vset.pattern.permute.xlu0 0
        %5205 = vperm.xlu0 %5204, %v5019
        %v5206 = vpop.permute.xlu0 %5205
        %5209 = vset.pattern.permute.xlu0 0
        %5210 = vperm.xlu0 %5209, %v5020
        %v5211 = vpop.permute.xlu0 %5210
        %5214 = vset.pattern.permute.xlu0 0
        %5215 = vperm.xlu0 %5214, %v5021
        %v5216 = vpop.permute.xlu0 %5215
        %5219 = vset.pattern.permute.xlu0 0
        %5220 = vperm.xlu0 %5219, %v5022
        %v5221 = vpop.permute.xlu0 %5220
        %5224 = vset.pattern.permute.xlu0 0
        %5225 = vperm.xlu0 %5224, %v5023
        %v5226 = vpop.permute.xlu0 %5225
        %5229 = vset.pattern.permute.xlu0 0
        %5230 = vperm.xlu0 %5229, %v5024
        %v5231 = vpop.permute.xlu0 %5230
        %5234 = vset.pattern.permute.xlu0 0
        %5235 = vperm.xlu0 %5234, %v5025
        %v5236 = vpop.permute.xlu0 %5235
        %5239 = vset.pattern.permute.xlu0 0
        %5240 = vperm.xlu0 %5239, %v5026
        %v5241 = vpop.permute.xlu0 %5240
        %5244 = vset.pattern.permute.xlu0 0
        %5245 = vperm.xlu0 %5244, %v5027
        %v5246 = vpop.permute.xlu0 %5245
        %5249 = vset.pattern.permute.xlu0 0
        %5250 = vperm.xlu0 %5249, %v5028
        %v5251 = vpop.permute.xlu0 %5250
        %5254 = vset.pattern.permute.xlu0 0
        %5255 = vperm.xlu0 %5254, %v5029
        %v5256 = vpop.permute.xlu0 %5255
        %5259 = vset.pattern.permute.xlu0 0
        %5260 = vperm.xlu0 %5259, %v5030
        %v5261 = vpop.permute.xlu0 %5260
        %5264 = vset.pattern.permute.xlu0 0
        %5265 = vperm.xlu0 %5264, %v5031
        %v5266 = vpop.permute.xlu0 %5265
        %5269 = vset.pattern.permute.xlu0 0
        %5270 = vperm.xlu0 %5269, %v5032
        %v5271 = vpop.permute.xlu0 %5270
        %5274 = vset.pattern.permute.xlu0 0
        %5275 = vperm.xlu0 %5274, %v5033
        %v5276 = vpop.permute.xlu0 %5275
        %5279 = vset.pattern.permute.xlu0 0
        %5280 = vperm.xlu0 %5279, %v5034
        %v5281 = vpop.permute.xlu0 %5280
        %5284 = vset.pattern.permute.xlu0 0
        %5285 = vperm.xlu0 %5284, %v5035
        %v5286 = vpop.permute.xlu0 %5285
        %5289 = vset.pattern.permute.xlu0 0
        %5290 = vperm.xlu0 %5289, %v5036
        %v5291 = vpop.permute.xlu0 %5290
        %5294 = vset.pattern.permute.xlu0 0
        %5295 = vperm.xlu0 %5294, %v5037
        %v5296 = vpop.permute.xlu0 %5295
        %5299 = vset.pattern.permute.xlu0 0
        %5300 = vperm.xlu0 %5299, %v5038
        %v5301 = vpop.permute.xlu0 %5300
        %5304 = vset.pattern.permute.xlu0 0
        %5305 = vperm.xlu0 %5304, %v5039
        %v5306 = vpop.permute.xlu0 %5305
        %5309 = vset.pattern.permute.xlu0 0
        %5310 = vperm.xlu0 %5309, %v5040
        %v5311 = vpop.permute.xlu0 %5310
        %5314 = vset.pattern.permute.xlu0 0
        %5315 = vperm.xlu0 %5314, %v5041
        %v5316 = vpop.permute.xlu0 %5315
        %5319 = vset.pattern.permute.xlu0 0
        %5320 = vperm.xlu0 %5319, %v5042
        %v5321 = vpop.permute.xlu0 %5320
        %5324 = vset.pattern.permute.xlu0 0
        %5325 = vperm.xlu0 %5324, %v5043
        %v5326 = vpop.permute.xlu0 %5325
        %5329 = vset.pattern.permute.xlu0 0
        %5330 = vperm.xlu0 %5329, %v5044
        %v5331 = vpop.permute.xlu0 %5330
        %5334 = vset.pattern.permute.xlu0 0
        %5335 = vperm.xlu0 %5334, %v5045
        %v5336 = vpop.permute.xlu0 %5335
        %5339 = vset.pattern.permute.xlu0 0
        %5340 = vperm.xlu0 %5339, %v5046
        %v5341 = vpop.permute.xlu0 %5340
        %5344 = vset.pattern.permute.xlu0 0
        %5345 = vperm.xlu0 %5344, %v5047
        %v5346 = vpop.permute.xlu0 %5345
        %5349 = vset.pattern.permute.xlu0 0
        %5350 = vperm.xlu0 %5349, %v5048
        %v5351 = vpop.permute.xlu0 %5350
        %5354 = vset.pattern.permute.xlu0 0
        %5355 = vperm.xlu0 %5354, %v5049
        %v5356 = vpop.permute.xlu0 %5355
        %5359 = vset.pattern.permute.xlu0 0
        %5360 = vperm.xlu0 %5359, %v5050
        %v5361 = vpop.permute.xlu0 %5360
        %5364 = vset.pattern.permute.xlu0 0
        %5365 = vperm.xlu0 %5364, %v5051
        %v5366 = vpop.permute.xlu0 %5365
        %5369 = vset.pattern.permute.xlu0 0
        %5370 = vperm.xlu0 %5369, %v5052
        %v5371 = vpop.permute.xlu0 %5370
        %5373 = vmatpush.msra.mxu0 %v4982
        %5374 = vmatpush.msra.mxu0 %v4975
        %5375 = vmatpush.msra.mxu0 %v4968
        %5376 = vmatpush.msra.mxu0 %v4961
        %5377 = vmatpush.msra.mxu0 %v4954
        %5378 = vmatpush.msra.mxu0 %v4947
        %5379 = vmatpush.msra.mxu0 %v4940
        %5380 = vmatpush.msra.mxu0 %v4933
        %5381 = vmatpush.msra.mxu0 %v4926
        %5382 = vmatpush.msra.mxu0 %v4919
        %5383 = vmatpush.msra.mxu0 %v4912
        %5384 = vmatpush.msra.mxu0 %v4905
        %5385 = vmatpush.msra.mxu0 %v4898
        %5386 = vmatpush.msra.mxu0 %v4891
        %5387 = vmatpush.msra.mxu0 %v4884
        %5388 = vmatpush.msra.mxu0 %v4877
        %5389 = vmatmul.f32.gmra.mxu0 %v4810
        %v5390 = vpop.f32.mrf.mxu0
        %v5391 = vadd.f32 %v5056, %v5390
        %5392 = vmatmul.f32.gmra.mxu0 %v4811
        %v5393 = vpop.f32.mrf.mxu0
        %v5394 = vadd.f32 %v5061, %v5393
        %5395 = vmatmul.f32.gmra.mxu0 %v4812
        %v5396 = vpop.f32.mrf.mxu0
        %v5397 = vadd.f32 %v5066, %v5396
        %5398 = vmatmul.f32.gmra.mxu0 %v4813
        %v5399 = vpop.f32.mrf.mxu0
        %v5400 = vadd.f32 %v5071, %v5399
        %5401 = vmatmul.f32.gmra.mxu0 %v4814
        %v5402 = vpop.f32.mrf.mxu0
        %v5403 = vadd.f32 %v5076, %v5402
        %5404 = vmatmul.f32.gmra.mxu0 %v4815
        %v5405 = vpop.f32.mrf.mxu0
        %v5406 = vadd.f32 %v5081, %v5405
        %5407 = vmatmul.f32.gmra.mxu0 %v4816
        %v5408 = vpop.f32.mrf.mxu0
        %v5409 = vadd.f32 %v5086, %v5408
        %5410 = vmatmul.f32.gmra.mxu0 %v4817
        %v5411 = vpop.f32.mrf.mxu0
        %v5412 = vadd.f32 %v5091, %v5411
        %5413 = vmatmul.f32.gmra.mxu0 %v4818
        %v5414 = vpop.f32.mrf.mxu0
        %v5415 = vadd.f32 %v5096, %v5414
        %5416 = vmatmul.f32.gmra.mxu0 %v4819
        %v5417 = vpop.f32.mrf.mxu0
        %v5418 = vadd.f32 %v5101, %v5417
        %5419 = vmatmul.f32.gmra.mxu0 %v4820
        %v5420 = vpop.f32.mrf.mxu0
        %v5421 = vadd.f32 %v5106, %v5420
        %5422 = vmatmul.f32.gmra.mxu0 %v4821
        %v5423 = vpop.f32.mrf.mxu0
        %v5424 = vadd.f32 %v5111, %v5423
        %5425 = vmatmul.f32.gmra.mxu0 %v4822
        %v5426 = vpop.f32.mrf.mxu0
        %v5427 = vadd.f32 %v5116, %v5426
        %5428 = vmatmul.f32.gmra.mxu0 %v4823
        %v5429 = vpop.f32.mrf.mxu0
        %v5430 = vadd.f32 %v5121, %v5429
        %5431 = vmatmul.f32.gmra.mxu0 %v4824
        %v5432 = vpop.f32.mrf.mxu0
        %v5433 = vadd.f32 %v5126, %v5432
        %5434 = vmatmul.f32.gmra.mxu0 %v4825
        %v5435 = vpop.f32.mrf.mxu0
        %v5436 = vadd.f32 %v5131, %v5435
        %5437 = vmatmul.f32.gmra.mxu0 %v4826
        %v5438 = vpop.f32.mrf.mxu0
        %v5439 = vadd.f32 %v5136, %v5438
        %5440 = vmatmul.f32.gmra.mxu0 %v4827
        %v5441 = vpop.f32.mrf.mxu0
        %v5442 = vadd.f32 %v5141, %v5441
        %5443 = vmatmul.f32.gmra.mxu0 %v4828
        %v5444 = vpop.f32.mrf.mxu0
        %v5445 = vadd.f32 %v5146, %v5444
        %5446 = vmatmul.f32.gmra.mxu0 %v4829
        %v5447 = vpop.f32.mrf.mxu0
        %v5448 = vadd.f32 %v5151, %v5447
        %5449 = vmatmul.f32.gmra.mxu0 %v4830
        %v5450 = vpop.f32.mrf.mxu0
        %v5451 = vadd.f32 %v5156, %v5450
        %5452 = vmatmul.f32.gmra.mxu0 %v4831
        %v5453 = vpop.f32.mrf.mxu0
        %v5454 = vadd.f32 %v5161, %v5453
        %5455 = vmatmul.f32.gmra.mxu0 %v4832
        %v5456 = vpop.f32.mrf.mxu0
        %v5457 = vadd.f32 %v5166, %v5456
        %5458 = vmatmul.f32.gmra.mxu0 %v4833
        %v5459 = vpop.f32.mrf.mxu0
        %v5460 = vadd.f32 %v5171, %v5459
        %5461 = vmatmul.f32.gmra.mxu0 %v4834
        %v5462 = vpop.f32.mrf.mxu0
        %v5463 = vadd.f32 %v5176, %v5462
        %5464 = vmatmul.f32.gmra.mxu0 %v4835
        %v5465 = vpop.f32.mrf.mxu0
        %v5466 = vadd.f32 %v5181, %v5465
        %5467 = vmatmul.f32.gmra.mxu0 %v4836
        %v5468 = vpop.f32.mrf.mxu0
        %v5469 = vadd.f32 %v5186, %v5468
        %5470 = vmatmul.f32.gmra.mxu0 %v4837
        %v5471 = vpop.f32.mrf.mxu0
        %v5472 = vadd.f32 %v5191, %v5471
        %5473 = vmatmul.f32.gmra.mxu0 %v4838
        %v5474 = vpop.f32.mrf.mxu0
        %v5475 = vadd.f32 %v5196, %v5474
        %5476 = vmatmul.f32.gmra.mxu0 %v4839
        %v5477 = vpop.f32.mrf.mxu0
        %v5478 = vadd.f32 %v5201, %v5477
        %5479 = vmatmul.f32.gmra.mxu0 %v4840
        %v5480 = vpop.f32.mrf.mxu0
        %v5481 = vadd.f32 %v5206, %v5480
        %5482 = vmatmul.f32.gmra.mxu0 %v4841
        %v5483 = vpop.f32.mrf.mxu0
        %v5484 = vadd.f32 %v5211, %v5483
        %5485 = vmatmul.f32.gmra.mxu0 %v4842
        %v5486 = vpop.f32.mrf.mxu0
        %v5487 = vadd.f32 %v5216, %v5486
        %5488 = vmatmul.f32.gmra.mxu0 %v4843
        %v5489 = vpop.f32.mrf.mxu0
        %v5490 = vadd.f32 %v5221, %v5489
        %5491 = vmatmul.f32.gmra.mxu0 %v4844
        %v5492 = vpop.f32.mrf.mxu0
        %v5493 = vadd.f32 %v5226, %v5492
        %5494 = vmatmul.f32.gmra.mxu0 %v4845
        %v5495 = vpop.f32.mrf.mxu0
        %v5496 = vadd.f32 %v5231, %v5495
        %5497 = vmatmul.f32.gmra.mxu0 %v4846
        %v5498 = vpop.f32.mrf.mxu0
        %v5499 = vadd.f32 %v5236, %v5498
        %5500 = vmatmul.f32.gmra.mxu0 %v4847
        %v5501 = vpop.f32.mrf.mxu0
        %v5502 = vadd.f32 %v5241, %v5501
        %5503 = vmatmul.f32.gmra.mxu0 %v4848
        %v5504 = vpop.f32.mrf.mxu0
        %v5505 = vadd.f32 %v5246, %v5504
        %5506 = vmatmul.f32.gmra.mxu0 %v4849
        %v5507 = vpop.f32.mrf.mxu0
        %v5508 = vadd.f32 %v5251, %v5507
        %5509 = vmatmul.f32.gmra.mxu0 %v4850
        %v5510 = vpop.f32.mrf.mxu0
        %v5511 = vadd.f32 %v5256, %v5510
        %5512 = vmatmul.f32.gmra.mxu0 %v4851
        %v5513 = vpop.f32.mrf.mxu0
        %v5514 = vadd.f32 %v5261, %v5513
        %5515 = vmatmul.f32.gmra.mxu0 %v4852
        %v5516 = vpop.f32.mrf.mxu0
        %v5517 = vadd.f32 %v5266, %v5516
        %5518 = vmatmul.f32.gmra.mxu0 %v4853
        %v5519 = vpop.f32.mrf.mxu0
        %v5520 = vadd.f32 %v5271, %v5519
        %5521 = vmatmul.f32.gmra.mxu0 %v4854
        %v5522 = vpop.f32.mrf.mxu0
        %v5523 = vadd.f32 %v5276, %v5522
        %5524 = vmatmul.f32.gmra.mxu0 %v4855
        %v5525 = vpop.f32.mrf.mxu0
        %v5526 = vadd.f32 %v5281, %v5525
        %5527 = vmatmul.f32.gmra.mxu0 %v4856
        %v5528 = vpop.f32.mrf.mxu0
        %v5529 = vadd.f32 %v5286, %v5528
        %5530 = vmatmul.f32.gmra.mxu0 %v4857
        %v5531 = vpop.f32.mrf.mxu0
        %v5532 = vadd.f32 %v5291, %v5531
        %5533 = vmatmul.f32.gmra.mxu0 %v4858
        %v5534 = vpop.f32.mrf.mxu0
        %v5535 = vadd.f32 %v5296, %v5534
        %5536 = vmatmul.f32.gmra.mxu0 %v4859
        %v5537 = vpop.f32.mrf.mxu0
        %v5538 = vadd.f32 %v5301, %v5537
        %5539 = vmatmul.f32.gmra.mxu0 %v4860
        %v5540 = vpop.f32.mrf.mxu0
        %v5541 = vadd.f32 %v5306, %v5540
        %5542 = vmatmul.f32.gmra.mxu0 %v4861
        %v5543 = vpop.f32.mrf.mxu0
        %v5544 = vadd.f32 %v5311, %v5543
        %5545 = vmatmul.f32.gmra.mxu0 %v4862
        %v5546 = vpop.f32.mrf.mxu0
        %v5547 = vadd.f32 %v5316, %v5546
        %5548 = vmatmul.f32.gmra.mxu0 %v4863
        %v5549 = vpop.f32.mrf.mxu0
        %v5550 = vadd.f32 %v5321, %v5549
        %5551 = vmatmul.f32.gmra.mxu0 %v4864
        %v5552 = vpop.f32.mrf.mxu0
        %v5553 = vadd.f32 %v5326, %v5552
        %5554 = vmatmul.f32.gmra.mxu0 %v4865
        %v5555 = vpop.f32.mrf.mxu0
        %v5556 = vadd.f32 %v5331, %v5555
        %5557 = vmatmul.f32.gmra.mxu0 %v4866
        %v5558 = vpop.f32.mrf.mxu0
        %v5559 = vadd.f32 %v5336, %v5558
        %5560 = vmatmul.f32.gmra.mxu0 %v4867
        %v5561 = vpop.f32.mrf.mxu0
        %v5562 = vadd.f32 %v5341, %v5561
        %5563 = vmatmul.f32.gmra.mxu0 %v4868
        %v5564 = vpop.f32.mrf.mxu0
        %v5565 = vadd.f32 %v5346, %v5564
        %5566 = vmatmul.f32.gmra.mxu0 %v4869
        %v5567 = vpop.f32.mrf.mxu0
        %v5568 = vadd.f32 %v5351, %v5567
        %5569 = vmatmul.f32.gmra.mxu0 %v4870
        %v5570 = vpop.f32.mrf.mxu0
        %v5571 = vadd.f32 %v5356, %v5570
        %5572 = vmatmul.f32.gmra.mxu0 %v4871
        %v5573 = vpop.f32.mrf.mxu0
        %v5574 = vadd.f32 %v5361, %v5573
        %5575 = vmatmul.f32.gmra.mxu0 %v4872
        %v5576 = vpop.f32.mrf.mxu0
        %v5577 = vadd.f32 %v5366, %v5576
        %5578 = vmatmul.f32.gmra.mxu0 %v4873
        %v5579 = vpop.f32.mrf.mxu0
        %v5580 = vadd.f32 %v5371, %v5579
        %5581 = vdwg.mxu0
        %5582 = vmatpush.msra.mxu0 %v4983
        %5583 = vmatpush.msra.mxu0 %v4976
        %5584 = vmatpush.msra.mxu0 %v4969
        %5585 = vmatpush.msra.mxu0 %v4962
        %5586 = vmatpush.msra.mxu0 %v4955
        %5587 = vmatpush.msra.mxu0 %v4948
        %5588 = vmatpush.msra.mxu0 %v4941
        %5589 = vmatpush.msra.mxu0 %v4934
        %5590 = vmatpush.msra.mxu0 %v4927
        %5591 = vmatpush.msra.mxu0 %v4920
        %5592 = vmatpush.msra.mxu0 %v4913
        %5593 = vmatpush.msra.mxu0 %v4906
        %5594 = vmatpush.msra.mxu0 %v4899
        %5595 = vmatpush.msra.mxu0 %v4892
        %5596 = vmatpush.msra.mxu0 %v4885
        %5597 = vmatpush.msra.mxu0 %v4878
        %5598 = vmatmul.f32.gmra.mxu0 %v4810
        %v5599 = vpop.f32.mrf.mxu0
        %v5600 = vadd.f32 %v5056, %v5599
        %5601 = vmatmul.f32.gmra.mxu0 %v4811
        %v5602 = vpop.f32.mrf.mxu0
        %v5603 = vadd.f32 %v5061, %v5602
        %5604 = vmatmul.f32.gmra.mxu0 %v4812
        %v5605 = vpop.f32.mrf.mxu0
        %v5606 = vadd.f32 %v5066, %v5605
        %5607 = vmatmul.f32.gmra.mxu0 %v4813
        %v5608 = vpop.f32.mrf.mxu0
        %v5609 = vadd.f32 %v5071, %v5608
        %5610 = vmatmul.f32.gmra.mxu0 %v4814
        %v5611 = vpop.f32.mrf.mxu0
        %v5612 = vadd.f32 %v5076, %v5611
        %5613 = vmatmul.f32.gmra.mxu0 %v4815
        %v5614 = vpop.f32.mrf.mxu0
        %v5615 = vadd.f32 %v5081, %v5614
        %5616 = vmatmul.f32.gmra.mxu0 %v4816
        %v5617 = vpop.f32.mrf.mxu0
        %v5618 = vadd.f32 %v5086, %v5617
        %5619 = vmatmul.f32.gmra.mxu0 %v4817
        %v5620 = vpop.f32.mrf.mxu0
        %v5621 = vadd.f32 %v5091, %v5620
        %5622 = vmatmul.f32.gmra.mxu0 %v4818
        %v5623 = vpop.f32.mrf.mxu0
        %v5624 = vadd.f32 %v5096, %v5623
        %5625 = vmatmul.f32.gmra.mxu0 %v4819
        %v5626 = vpop.f32.mrf.mxu0
        %v5627 = vadd.f32 %v5101, %v5626
        %5628 = vmatmul.f32.gmra.mxu0 %v4820
        %v5629 = vpop.f32.mrf.mxu0
        %v5630 = vadd.f32 %v5106, %v5629
        %5631 = vmatmul.f32.gmra.mxu0 %v4821
        %v5632 = vpop.f32.mrf.mxu0
        %v5633 = vadd.f32 %v5111, %v5632
        %5634 = vmatmul.f32.gmra.mxu0 %v4822
        %v5635 = vpop.f32.mrf.mxu0
        %v5636 = vadd.f32 %v5116, %v5635
        %5637 = vmatmul.f32.gmra.mxu0 %v4823
        %v5638 = vpop.f32.mrf.mxu0
        %v5639 = vadd.f32 %v5121, %v5638
        %5640 = vmatmul.f32.gmra.mxu0 %v4824
        %v5641 = vpop.f32.mrf.mxu0
        %v5642 = vadd.f32 %v5126, %v5641
        %5643 = vmatmul.f32.gmra.mxu0 %v4825
        %v5644 = vpop.f32.mrf.mxu0
        %v5645 = vadd.f32 %v5131, %v5644
        %5646 = vmatmul.f32.gmra.mxu0 %v4826
        %v5647 = vpop.f32.mrf.mxu0
        %v5648 = vadd.f32 %v5136, %v5647
        %5649 = vmatmul.f32.gmra.mxu0 %v4827
        %v5650 = vpop.f32.mrf.mxu0
        %v5651 = vadd.f32 %v5141, %v5650
        %5652 = vmatmul.f32.gmra.mxu0 %v4828
        %v5653 = vpop.f32.mrf.mxu0
        %v5654 = vadd.f32 %v5146, %v5653
        %5655 = vmatmul.f32.gmra.mxu0 %v4829
        %v5656 = vpop.f32.mrf.mxu0
        %v5657 = vadd.f32 %v5151, %v5656
        %5658 = vmatmul.f32.gmra.mxu0 %v4830
        %v5659 = vpop.f32.mrf.mxu0
        %v5660 = vadd.f32 %v5156, %v5659
        %5661 = vmatmul.f32.gmra.mxu0 %v4831
        %v5662 = vpop.f32.mrf.mxu0
        %v5663 = vadd.f32 %v5161, %v5662
        %5664 = vmatmul.f32.gmra.mxu0 %v4832
        %v5665 = vpop.f32.mrf.mxu0
        %v5666 = vadd.f32 %v5166, %v5665
        %5667 = vmatmul.f32.gmra.mxu0 %v4833
        %v5668 = vpop.f32.mrf.mxu0
        %v5669 = vadd.f32 %v5171, %v5668
        %5670 = vmatmul.f32.gmra.mxu0 %v4834
        %v5671 = vpop.f32.mrf.mxu0
        %v5672 = vadd.f32 %v5176, %v5671
        %5673 = vmatmul.f32.gmra.mxu0 %v4835
        %v5674 = vpop.f32.mrf.mxu0
        %v5675 = vadd.f32 %v5181, %v5674
        %5676 = vmatmul.f32.gmra.mxu0 %v4836
        %v5677 = vpop.f32.mrf.mxu0
        %v5678 = vadd.f32 %v5186, %v5677
        %5679 = vmatmul.f32.gmra.mxu0 %v4837
        %v5680 = vpop.f32.mrf.mxu0
        %v5681 = vadd.f32 %v5191, %v5680
        %5682 = vmatmul.f32.gmra.mxu0 %v4838
        %v5683 = vpop.f32.mrf.mxu0
        %v5684 = vadd.f32 %v5196, %v5683
        %5685 = vmatmul.f32.gmra.mxu0 %v4839
        %v5686 = vpop.f32.mrf.mxu0
        %v5687 = vadd.f32 %v5201, %v5686
        %5688 = vmatmul.f32.gmra.mxu0 %v4840
        %v5689 = vpop.f32.mrf.mxu0
        %v5690 = vadd.f32 %v5206, %v5689
        %5691 = vmatmul.f32.gmra.mxu0 %v4841
        %v5692 = vpop.f32.mrf.mxu0
        %v5693 = vadd.f32 %v5211, %v5692
        %5694 = vmatmul.f32.gmra.mxu0 %v4842
        %v5695 = vpop.f32.mrf.mxu0
        %v5696 = vadd.f32 %v5216, %v5695
        %5697 = vmatmul.f32.gmra.mxu0 %v4843
        %v5698 = vpop.f32.mrf.mxu0
        %v5699 = vadd.f32 %v5221, %v5698
        %5700 = vmatmul.f32.gmra.mxu0 %v4844
        %v5701 = vpop.f32.mrf.mxu0
        %v5702 = vadd.f32 %v5226, %v5701
        %5703 = vmatmul.f32.gmra.mxu0 %v4845
        %v5704 = vpop.f32.mrf.mxu0
        %v5705 = vadd.f32 %v5231, %v5704
        %5706 = vmatmul.f32.gmra.mxu0 %v4846
        %v5707 = vpop.f32.mrf.mxu0
        %v5708 = vadd.f32 %v5236, %v5707
        %5709 = vmatmul.f32.gmra.mxu0 %v4847
        %v5710 = vpop.f32.mrf.mxu0
        %v5711 = vadd.f32 %v5241, %v5710
        %5712 = vmatmul.f32.gmra.mxu0 %v4848
        %v5713 = vpop.f32.mrf.mxu0
        %v5714 = vadd.f32 %v5246, %v5713
        %5715 = vmatmul.f32.gmra.mxu0 %v4849
        %v5716 = vpop.f32.mrf.mxu0
        %v5717 = vadd.f32 %v5251, %v5716
        %5718 = vmatmul.f32.gmra.mxu0 %v4850
        %v5719 = vpop.f32.mrf.mxu0
        %v5720 = vadd.f32 %v5256, %v5719
        %5721 = vmatmul.f32.gmra.mxu0 %v4851
        %v5722 = vpop.f32.mrf.mxu0
        %v5723 = vadd.f32 %v5261, %v5722
        %5724 = vmatmul.f32.gmra.mxu0 %v4852
        %v5725 = vpop.f32.mrf.mxu0
        %v5726 = vadd.f32 %v5266, %v5725
        %5727 = vmatmul.f32.gmra.mxu0 %v4853
        %v5728 = vpop.f32.mrf.mxu0
        %v5729 = vadd.f32 %v5271, %v5728
        %5730 = vmatmul.f32.gmra.mxu0 %v4854
        %v5731 = vpop.f32.mrf.mxu0
        %v5732 = vadd.f32 %v5276, %v5731
        %5733 = vmatmul.f32.gmra.mxu0 %v4855
        %v5734 = vpop.f32.mrf.mxu0
        %v5735 = vadd.f32 %v5281, %v5734
        %5736 = vmatmul.f32.gmra.mxu0 %v4856
        %v5737 = vpop.f32.mrf.mxu0
        %v5738 = vadd.f32 %v5286, %v5737
        %5739 = vmatmul.f32.gmra.mxu0 %v4857
        %v5740 = vpop.f32.mrf.mxu0
        %v5741 = vadd.f32 %v5291, %v5740
        %5742 = vmatmul.f32.gmra.mxu0 %v4858
        %v5743 = vpop.f32.mrf.mxu0
        %v5744 = vadd.f32 %v5296, %v5743
        %5745 = vmatmul.f32.gmra.mxu0 %v4859
        %v5746 = vpop.f32.mrf.mxu0
        %v5747 = vadd.f32 %v5301, %v5746
        %5748 = vmatmul.f32.gmra.mxu0 %v4860
        %v5749 = vpop.f32.mrf.mxu0
        %v5750 = vadd.f32 %v5306, %v5749
        %5751 = vmatmul.f32.gmra.mxu0 %v4861
        %v5752 = vpop.f32.mrf.mxu0
        %v5753 = vadd.f32 %v5311, %v5752
        %5754 = vmatmul.f32.gmra.mxu0 %v4862
        %v5755 = vpop.f32.mrf.mxu0
        %v5756 = vadd.f32 %v5316, %v5755
        %5757 = vmatmul.f32.gmra.mxu0 %v4863
        %v5758 = vpop.f32.mrf.mxu0
        %v5759 = vadd.f32 %v5321, %v5758
        %5760 = vmatmul.f32.gmra.mxu0 %v4864
        %v5761 = vpop.f32.mrf.mxu0
        %v5762 = vadd.f32 %v5326, %v5761
        %5763 = vmatmul.f32.gmra.mxu0 %v4865
        %v5764 = vpop.f32.mrf.mxu0
        %v5765 = vadd.f32 %v5331, %v5764
        %5766 = vmatmul.f32.gmra.mxu0 %v4866
        %v5767 = vpop.f32.mrf.mxu0
        %v5768 = vadd.f32 %v5336, %v5767
        %5769 = vmatmul.f32.gmra.mxu0 %v4867
        %v5770 = vpop.f32.mrf.mxu0
        %v5771 = vadd.f32 %v5341, %v5770
        %5772 = vmatmul.f32.gmra.mxu0 %v4868
        %v5773 = vpop.f32.mrf.mxu0
        %v5774 = vadd.f32 %v5346, %v5773
        %5775 = vmatmul.f32.gmra.mxu0 %v4869
        %v5776 = vpop.f32.mrf.mxu0
        %v5777 = vadd.f32 %v5351, %v5776
        %5778 = vmatmul.f32.gmra.mxu0 %v4870
        %v5779 = vpop.f32.mrf.mxu0
        %v5780 = vadd.f32 %v5356, %v5779
        %5781 = vmatmul.f32.gmra.mxu0 %v4871
        %v5782 = vpop.f32.mrf.mxu0
        %v5783 = vadd.f32 %v5361, %v5782
        %5784 = vmatmul.f32.gmra.mxu0 %v4872
        %v5785 = vpop.f32.mrf.mxu0
        %v5786 = vadd.f32 %v5366, %v5785
        %5787 = vmatmul.f32.gmra.mxu0 %v4873
        %v5788 = vpop.f32.mrf.mxu0
        %v5789 = vadd.f32 %v5371, %v5788
        %5790 = vdwg.mxu0
        %5791 = vmatpush.msra.mxu0 %v4984
        %5792 = vmatpush.msra.mxu0 %v4977
        %5793 = vmatpush.msra.mxu0 %v4970
        %5794 = vmatpush.msra.mxu0 %v4963
        %5795 = vmatpush.msra.mxu0 %v4956
        %5796 = vmatpush.msra.mxu0 %v4949
        %5797 = vmatpush.msra.mxu0 %v4942
        %5798 = vmatpush.msra.mxu0 %v4935
        %5799 = vmatpush.msra.mxu0 %v4928
        %5800 = vmatpush.msra.mxu0 %v4921
        %5801 = vmatpush.msra.mxu0 %v4914
        %5802 = vmatpush.msra.mxu0 %v4907
        %5803 = vmatpush.msra.mxu0 %v4900
        %5804 = vmatpush.msra.mxu0 %v4893
        %5805 = vmatpush.msra.mxu0 %v4886
        %5806 = vmatpush.msra.mxu0 %v4879
        %5807 = vmatmul.f32.gmra.mxu0 %v4810
        %v5808 = vpop.f32.mrf.mxu0
        %v5809 = vadd.f32 %v5056, %v5808
        %5810 = vmatmul.f32.gmra.mxu0 %v4811
        %v5811 = vpop.f32.mrf.mxu0
        %v5812 = vadd.f32 %v5061, %v5811
        %5813 = vmatmul.f32.gmra.mxu0 %v4812
        %v5814 = vpop.f32.mrf.mxu0
        %v5815 = vadd.f32 %v5066, %v5814
        %5816 = vmatmul.f32.gmra.mxu0 %v4813
        %v5817 = vpop.f32.mrf.mxu0
        %v5818 = vadd.f32 %v5071, %v5817
        %5819 = vmatmul.f32.gmra.mxu0 %v4814
        %v5820 = vpop.f32.mrf.mxu0
        %v5821 = vadd.f32 %v5076, %v5820
        %5822 = vmatmul.f32.gmra.mxu0 %v4815
        %v5823 = vpop.f32.mrf.mxu0
        %v5824 = vadd.f32 %v5081, %v5823
        %5825 = vmatmul.f32.gmra.mxu0 %v4816
        %v5826 = vpop.f32.mrf.mxu0
        %v5827 = vadd.f32 %v5086, %v5826
        %5828 = vmatmul.f32.gmra.mxu0 %v4817
        %v5829 = vpop.f32.mrf.mxu0
        %v5830 = vadd.f32 %v5091, %v5829
        %5831 = vmatmul.f32.gmra.mxu0 %v4818
        %v5832 = vpop.f32.mrf.mxu0
        %v5833 = vadd.f32 %v5096, %v5832
        %5834 = vmatmul.f32.gmra.mxu0 %v4819
        %v5835 = vpop.f32.mrf.mxu0
        %v5836 = vadd.f32 %v5101, %v5835
        %5837 = vmatmul.f32.gmra.mxu0 %v4820
        %v5838 = vpop.f32.mrf.mxu0
        %v5839 = vadd.f32 %v5106, %v5838
        %5840 = vmatmul.f32.gmra.mxu0 %v4821
        %v5841 = vpop.f32.mrf.mxu0
        %v5842 = vadd.f32 %v5111, %v5841
        %5843 = vmatmul.f32.gmra.mxu0 %v4822
        %v5844 = vpop.f32.mrf.mxu0
        %v5845 = vadd.f32 %v5116, %v5844
        %5846 = vmatmul.f32.gmra.mxu0 %v4823
        %v5847 = vpop.f32.mrf.mxu0
        %v5848 = vadd.f32 %v5121, %v5847
        %5849 = vmatmul.f32.gmra.mxu0 %v4824
        %v5850 = vpop.f32.mrf.mxu0
        %v5851 = vadd.f32 %v5126, %v5850
        %5852 = vmatmul.f32.gmra.mxu0 %v4825
        %v5853 = vpop.f32.mrf.mxu0
        %v5854 = vadd.f32 %v5131, %v5853
        %5855 = vmatmul.f32.gmra.mxu0 %v4826
        %v5856 = vpop.f32.mrf.mxu0
        %v5857 = vadd.f32 %v5136, %v5856
        %5858 = vmatmul.f32.gmra.mxu0 %v4827
        %v5859 = vpop.f32.mrf.mxu0
        %v5860 = vadd.f32 %v5141, %v5859
        %5861 = vmatmul.f32.gmra.mxu0 %v4828
        %v5862 = vpop.f32.mrf.mxu0
        %v5863 = vadd.f32 %v5146, %v5862
        %5864 = vmatmul.f32.gmra.mxu0 %v4829
        %v5865 = vpop.f32.mrf.mxu0
        %v5866 = vadd.f32 %v5151, %v5865
        %5867 = vmatmul.f32.gmra.mxu0 %v4830
        %v5868 = vpop.f32.mrf.mxu0
        %v5869 = vadd.f32 %v5156, %v5868
        %5870 = vmatmul.f32.gmra.mxu0 %v4831
        %v5871 = vpop.f32.mrf.mxu0
        %v5872 = vadd.f32 %v5161, %v5871
        %5873 = vmatmul.f32.gmra.mxu0 %v4832
        %v5874 = vpop.f32.mrf.mxu0
        %v5875 = vadd.f32 %v5166, %v5874
        %5876 = vmatmul.f32.gmra.mxu0 %v4833
        %v5877 = vpop.f32.mrf.mxu0
        %v5878 = vadd.f32 %v5171, %v5877
        %5879 = vmatmul.f32.gmra.mxu0 %v4834
        %v5880 = vpop.f32.mrf.mxu0
        %v5881 = vadd.f32 %v5176, %v5880
        %5882 = vmatmul.f32.gmra.mxu0 %v4835
        %v5883 = vpop.f32.mrf.mxu0
        %v5884 = vadd.f32 %v5181, %v5883
        %5885 = vmatmul.f32.gmra.mxu0 %v4836
        %v5886 = vpop.f32.mrf.mxu0
        %v5887 = vadd.f32 %v5186, %v5886
        %5888 = vmatmul.f32.gmra.mxu0 %v4837
        %v5889 = vpop.f32.mrf.mxu0
        %v5890 = vadd.f32 %v5191, %v5889
        %5891 = vmatmul.f32.gmra.mxu0 %v4838
        %v5892 = vpop.f32.mrf.mxu0
        %v5893 = vadd.f32 %v5196, %v5892
        %5894 = vmatmul.f32.gmra.mxu0 %v4839
        %v5895 = vpop.f32.mrf.mxu0
        %v5896 = vadd.f32 %v5201, %v5895
        %5897 = vmatmul.f32.gmra.mxu0 %v4840
        %v5898 = vpop.f32.mrf.mxu0
        %v5899 = vadd.f32 %v5206, %v5898
        %5900 = vmatmul.f32.gmra.mxu0 %v4841
        %v5901 = vpop.f32.mrf.mxu0
        %v5902 = vadd.f32 %v5211, %v5901
        %5903 = vmatmul.f32.gmra.mxu0 %v4842
        %v5904 = vpop.f32.mrf.mxu0
        %v5905 = vadd.f32 %v5216, %v5904
        %5906 = vmatmul.f32.gmra.mxu0 %v4843
        %v5907 = vpop.f32.mrf.mxu0
        %v5908 = vadd.f32 %v5221, %v5907
        %5909 = vmatmul.f32.gmra.mxu0 %v4844
        %v5910 = vpop.f32.mrf.mxu0
        %v5911 = vadd.f32 %v5226, %v5910
        %5912 = vmatmul.f32.gmra.mxu0 %v4845
        %v5913 = vpop.f32.mrf.mxu0
        %v5914 = vadd.f32 %v5231, %v5913
        %5915 = vmatmul.f32.gmra.mxu0 %v4846
        %v5916 = vpop.f32.mrf.mxu0
        %v5917 = vadd.f32 %v5236, %v5916
        %5918 = vmatmul.f32.gmra.mxu0 %v4847
        %v5919 = vpop.f32.mrf.mxu0
        %v5920 = vadd.f32 %v5241, %v5919
        %5921 = vmatmul.f32.gmra.mxu0 %v4848
        %v5922 = vpop.f32.mrf.mxu0
        %v5923 = vadd.f32 %v5246, %v5922
        %5924 = vmatmul.f32.gmra.mxu0 %v4849
        %v5925 = vpop.f32.mrf.mxu0
        %v5926 = vadd.f32 %v5251, %v5925
        %5927 = vmatmul.f32.gmra.mxu0 %v4850
        %v5928 = vpop.f32.mrf.mxu0
        %v5929 = vadd.f32 %v5256, %v5928
        %5930 = vmatmul.f32.gmra.mxu0 %v4851
        %v5931 = vpop.f32.mrf.mxu0
        %v5932 = vadd.f32 %v5261, %v5931
        %5933 = vmatmul.f32.gmra.mxu0 %v4852
        %v5934 = vpop.f32.mrf.mxu0
        %v5935 = vadd.f32 %v5266, %v5934
        %5936 = vmatmul.f32.gmra.mxu0 %v4853
        %v5937 = vpop.f32.mrf.mxu0
        %v5938 = vadd.f32 %v5271, %v5937
        %5939 = vmatmul.f32.gmra.mxu0 %v4854
        %v5940 = vpop.f32.mrf.mxu0
        %v5941 = vadd.f32 %v5276, %v5940
        %5942 = vmatmul.f32.gmra.mxu0 %v4855
        %v5943 = vpop.f32.mrf.mxu0
        %v5944 = vadd.f32 %v5281, %v5943
        %5945 = vmatmul.f32.gmra.mxu0 %v4856
        %v5946 = vpop.f32.mrf.mxu0
        %v5947 = vadd.f32 %v5286, %v5946
        %5948 = vmatmul.f32.gmra.mxu0 %v4857
        %v5949 = vpop.f32.mrf.mxu0
        %v5950 = vadd.f32 %v5291, %v5949
        %5951 = vmatmul.f32.gmra.mxu0 %v4858
        %v5952 = vpop.f32.mrf.mxu0
        %v5953 = vadd.f32 %v5296, %v5952
        %5954 = vmatmul.f32.gmra.mxu0 %v4859
        %v5955 = vpop.f32.mrf.mxu0
        %v5956 = vadd.f32 %v5301, %v5955
        %5957 = vmatmul.f32.gmra.mxu0 %v4860
        %v5958 = vpop.f32.mrf.mxu0
        %v5959 = vadd.f32 %v5306, %v5958
        %5960 = vmatmul.f32.gmra.mxu0 %v4861
        %v5961 = vpop.f32.mrf.mxu0
        %v5962 = vadd.f32 %v5311, %v5961
        %5963 = vmatmul.f32.gmra.mxu0 %v4862
        %v5964 = vpop.f32.mrf.mxu0
        %v5965 = vadd.f32 %v5316, %v5964
        %5966 = vmatmul.f32.gmra.mxu0 %v4863
        %v5967 = vpop.f32.mrf.mxu0
        %v5968 = vadd.f32 %v5321, %v5967
        %5969 = vmatmul.f32.gmra.mxu0 %v4864
        %v5970 = vpop.f32.mrf.mxu0
        %v5971 = vadd.f32 %v5326, %v5970
        %5972 = vmatmul.f32.gmra.mxu0 %v4865
        %v5973 = vpop.f32.mrf.mxu0
        %v5974 = vadd.f32 %v5331, %v5973
        %5975 = vmatmul.f32.gmra.mxu0 %v4866
        %v5976 = vpop.f32.mrf.mxu0
        %v5977 = vadd.f32 %v5336, %v5976
        %5978 = vmatmul.f32.gmra.mxu0 %v4867
        %v5979 = vpop.f32.mrf.mxu0
        %v5980 = vadd.f32 %v5341, %v5979
        %5981 = vmatmul.f32.gmra.mxu0 %v4868
        %v5982 = vpop.f32.mrf.mxu0
        %v5983 = vadd.f32 %v5346, %v5982
        %5984 = vmatmul.f32.gmra.mxu0 %v4869
        %v5985 = vpop.f32.mrf.mxu0
        %v5986 = vadd.f32 %v5351, %v5985
        %5987 = vmatmul.f32.gmra.mxu0 %v4870
        %v5988 = vpop.f32.mrf.mxu0
        %v5989 = vadd.f32 %v5356, %v5988
        %5990 = vmatmul.f32.gmra.mxu0 %v4871
        %v5991 = vpop.f32.mrf.mxu0
        %v5992 = vadd.f32 %v5361, %v5991
        %5993 = vmatmul.f32.gmra.mxu0 %v4872
        %v5994 = vpop.f32.mrf.mxu0
        %v5995 = vadd.f32 %v5366, %v5994
        %5996 = vmatmul.f32.gmra.mxu0 %v4873
        %v5997 = vpop.f32.mrf.mxu0
        %v5998 = vadd.f32 %v5371, %v5997
        %5999 = vdwg.mxu0
        %6000 = vmatpush.msra.mxu0 %v4985
        %6001 = vmatpush.msra.mxu0 %v4978
        %6002 = vmatpush.msra.mxu0 %v4971
        %6003 = vmatpush.msra.mxu0 %v4964
        %6004 = vmatpush.msra.mxu0 %v4957
        %6005 = vmatpush.msra.mxu0 %v4950
        %6006 = vmatpush.msra.mxu0 %v4943
        %6007 = vmatpush.msra.mxu0 %v4936
        %6008 = vmatpush.msra.mxu0 %v4929
        %6009 = vmatpush.msra.mxu0 %v4922
        %6010 = vmatpush.msra.mxu0 %v4915
        %6011 = vmatpush.msra.mxu0 %v4908
        %6012 = vmatpush.msra.mxu0 %v4901
        %6013 = vmatpush.msra.mxu0 %v4894
        %6014 = vmatpush.msra.mxu0 %v4887
        %6015 = vmatpush.msra.mxu0 %v4880
        %6016 = vmatmul.f32.gmra.mxu0 %v4810
        %v6017 = vpop.f32.mrf.mxu0
        %v6018 = vadd.f32 %v5056, %v6017
        %6019 = vmatmul.f32.gmra.mxu0 %v4811
        %v6020 = vpop.f32.mrf.mxu0
        %v6021 = vadd.f32 %v5061, %v6020
        %6022 = vmatmul.f32.gmra.mxu0 %v4812
        %v6023 = vpop.f32.mrf.mxu0
        %v6024 = vadd.f32 %v5066, %v6023
        %6025 = vmatmul.f32.gmra.mxu0 %v4813
        %v6026 = vpop.f32.mrf.mxu0
        %v6027 = vadd.f32 %v5071, %v6026
        %6028 = vmatmul.f32.gmra.mxu0 %v4814
        %v6029 = vpop.f32.mrf.mxu0
        %v6030 = vadd.f32 %v5076, %v6029
        %6031 = vmatmul.f32.gmra.mxu0 %v4815
        %v6032 = vpop.f32.mrf.mxu0
        %v6033 = vadd.f32 %v5081, %v6032
        %6034 = vmatmul.f32.gmra.mxu0 %v4816
        %v6035 = vpop.f32.mrf.mxu0
        %v6036 = vadd.f32 %v5086, %v6035
        %6037 = vmatmul.f32.gmra.mxu0 %v4817
        %v6038 = vpop.f32.mrf.mxu0
        %v6039 = vadd.f32 %v5091, %v6038
        %6040 = vmatmul.f32.gmra.mxu0 %v4818
        %v6041 = vpop.f32.mrf.mxu0
        %v6042 = vadd.f32 %v5096, %v6041
        %6043 = vmatmul.f32.gmra.mxu0 %v4819
        %v6044 = vpop.f32.mrf.mxu0
        %v6045 = vadd.f32 %v5101, %v6044
        %6046 = vmatmul.f32.gmra.mxu0 %v4820
        %v6047 = vpop.f32.mrf.mxu0
        %v6048 = vadd.f32 %v5106, %v6047
        %6049 = vmatmul.f32.gmra.mxu0 %v4821
        %v6050 = vpop.f32.mrf.mxu0
        %v6051 = vadd.f32 %v5111, %v6050
        %6052 = vmatmul.f32.gmra.mxu0 %v4822
        %v6053 = vpop.f32.mrf.mxu0
        %v6054 = vadd.f32 %v5116, %v6053
        %6055 = vmatmul.f32.gmra.mxu0 %v4823
        %v6056 = vpop.f32.mrf.mxu0
        %v6057 = vadd.f32 %v5121, %v6056
        %6058 = vmatmul.f32.gmra.mxu0 %v4824
        %v6059 = vpop.f32.mrf.mxu0
        %v6060 = vadd.f32 %v5126, %v6059
        %6061 = vmatmul.f32.gmra.mxu0 %v4825
        %v6062 = vpop.f32.mrf.mxu0
        %v6063 = vadd.f32 %v5131, %v6062
        %6064 = vmatmul.f32.gmra.mxu0 %v4826
        %v6065 = vpop.f32.mrf.mxu0
        %v6066 = vadd.f32 %v5136, %v6065
        %6067 = vmatmul.f32.gmra.mxu0 %v4827
        %v6068 = vpop.f32.mrf.mxu0
        %v6069 = vadd.f32 %v5141, %v6068
        %6070 = vmatmul.f32.gmra.mxu0 %v4828
        %v6071 = vpop.f32.mrf.mxu0
        %v6072 = vadd.f32 %v5146, %v6071
        %6073 = vmatmul.f32.gmra.mxu0 %v4829
        %v6074 = vpop.f32.mrf.mxu0
        %v6075 = vadd.f32 %v5151, %v6074
        %6076 = vmatmul.f32.gmra.mxu0 %v4830
        %v6077 = vpop.f32.mrf.mxu0
        %v6078 = vadd.f32 %v5156, %v6077
        %6079 = vmatmul.f32.gmra.mxu0 %v4831
        %v6080 = vpop.f32.mrf.mxu0
        %v6081 = vadd.f32 %v5161, %v6080
        %6082 = vmatmul.f32.gmra.mxu0 %v4832
        %v6083 = vpop.f32.mrf.mxu0
        %v6084 = vadd.f32 %v5166, %v6083
        %6085 = vmatmul.f32.gmra.mxu0 %v4833
        %v6086 = vpop.f32.mrf.mxu0
        %v6087 = vadd.f32 %v5171, %v6086
        %6088 = vmatmul.f32.gmra.mxu0 %v4834
        %v6089 = vpop.f32.mrf.mxu0
        %v6090 = vadd.f32 %v5176, %v6089
        %6091 = vmatmul.f32.gmra.mxu0 %v4835
        %v6092 = vpop.f32.mrf.mxu0
        %v6093 = vadd.f32 %v5181, %v6092
        %6094 = vmatmul.f32.gmra.mxu0 %v4836
        %v6095 = vpop.f32.mrf.mxu0
        %v6096 = vadd.f32 %v5186, %v6095
        %6097 = vmatmul.f32.gmra.mxu0 %v4837
        %v6098 = vpop.f32.mrf.mxu0
        %v6099 = vadd.f32 %v5191, %v6098
        %6100 = vmatmul.f32.gmra.mxu0 %v4838
        %v6101 = vpop.f32.mrf.mxu0
        %v6102 = vadd.f32 %v5196, %v6101
        %6103 = vmatmul.f32.gmra.mxu0 %v4839
        %v6104 = vpop.f32.mrf.mxu0
        %v6105 = vadd.f32 %v5201, %v6104
        %6106 = vmatmul.f32.gmra.mxu0 %v4840
        %v6107 = vpop.f32.mrf.mxu0
        %v6108 = vadd.f32 %v5206, %v6107
        %6109 = vmatmul.f32.gmra.mxu0 %v4841
        %v6110 = vpop.f32.mrf.mxu0
        %v6111 = vadd.f32 %v5211, %v6110
        %6112 = vmatmul.f32.gmra.mxu0 %v4842
        %v6113 = vpop.f32.mrf.mxu0
        %v6114 = vadd.f32 %v5216, %v6113
        %6115 = vmatmul.f32.gmra.mxu0 %v4843
        %v6116 = vpop.f32.mrf.mxu0
        %v6117 = vadd.f32 %v5221, %v6116
        %6118 = vmatmul.f32.gmra.mxu0 %v4844
        %v6119 = vpop.f32.mrf.mxu0
        %v6120 = vadd.f32 %v5226, %v6119
        %6121 = vmatmul.f32.gmra.mxu0 %v4845
        %v6122 = vpop.f32.mrf.mxu0
        %v6123 = vadd.f32 %v5231, %v6122
        %6124 = vmatmul.f32.gmra.mxu0 %v4846
        %v6125 = vpop.f32.mrf.mxu0
        %v6126 = vadd.f32 %v5236, %v6125
        %6127 = vmatmul.f32.gmra.mxu0 %v4847
        %v6128 = vpop.f32.mrf.mxu0
        %v6129 = vadd.f32 %v5241, %v6128
        %6130 = vmatmul.f32.gmra.mxu0 %v4848
        %v6131 = vpop.f32.mrf.mxu0
        %v6132 = vadd.f32 %v5246, %v6131
        %6133 = vmatmul.f32.gmra.mxu0 %v4849
        %v6134 = vpop.f32.mrf.mxu0
        %v6135 = vadd.f32 %v5251, %v6134
        %6136 = vmatmul.f32.gmra.mxu0 %v4850
        %v6137 = vpop.f32.mrf.mxu0
        %v6138 = vadd.f32 %v5256, %v6137
        %6139 = vmatmul.f32.gmra.mxu0 %v4851
        %v6140 = vpop.f32.mrf.mxu0
        %v6141 = vadd.f32 %v5261, %v6140
        %6142 = vmatmul.f32.gmra.mxu0 %v4852
        %v6143 = vpop.f32.mrf.mxu0
        %v6144 = vadd.f32 %v5266, %v6143
        %6145 = vmatmul.f32.gmra.mxu0 %v4853
        %v6146 = vpop.f32.mrf.mxu0
        %v6147 = vadd.f32 %v5271, %v6146
        %6148 = vmatmul.f32.gmra.mxu0 %v4854
        %v6149 = vpop.f32.mrf.mxu0
        %v6150 = vadd.f32 %v5276, %v6149
        %6151 = vmatmul.f32.gmra.mxu0 %v4855
        %v6152 = vpop.f32.mrf.mxu0
        %v6153 = vadd.f32 %v5281, %v6152
        %6154 = vmatmul.f32.gmra.mxu0 %v4856
        %v6155 = vpop.f32.mrf.mxu0
        %v6156 = vadd.f32 %v5286, %v6155
        %6157 = vmatmul.f32.gmra.mxu0 %v4857
        %v6158 = vpop.f32.mrf.mxu0
        %v6159 = vadd.f32 %v5291, %v6158
        %6160 = vmatmul.f32.gmra.mxu0 %v4858
        %v6161 = vpop.f32.mrf.mxu0
        %v6162 = vadd.f32 %v5296, %v6161
        %6163 = vmatmul.f32.gmra.mxu0 %v4859
        %v6164 = vpop.f32.mrf.mxu0
        %v6165 = vadd.f32 %v5301, %v6164
        %6166 = vmatmul.f32.gmra.mxu0 %v4860
        %v6167 = vpop.f32.mrf.mxu0
        %v6168 = vadd.f32 %v5306, %v6167
        %6169 = vmatmul.f32.gmra.mxu0 %v4861
        %v6170 = vpop.f32.mrf.mxu0
        %v6171 = vadd.f32 %v5311, %v6170
        %6172 = vmatmul.f32.gmra.mxu0 %v4862
        %v6173 = vpop.f32.mrf.mxu0
        %v6174 = vadd.f32 %v5316, %v6173
        %6175 = vmatmul.f32.gmra.mxu0 %v4863
        %v6176 = vpop.f32.mrf.mxu0
        %v6177 = vadd.f32 %v5321, %v6176
        %6178 = vmatmul.f32.gmra.mxu0 %v4864
        %v6179 = vpop.f32.mrf.mxu0
        %v6180 = vadd.f32 %v5326, %v6179
        %6181 = vmatmul.f32.gmra.mxu0 %v4865
        %v6182 = vpop.f32.mrf.mxu0
        %v6183 = vadd.f32 %v5331, %v6182
        %6184 = vmatmul.f32.gmra.mxu0 %v4866
        %v6185 = vpop.f32.mrf.mxu0
        %v6186 = vadd.f32 %v5336, %v6185
        %6187 = vmatmul.f32.gmra.mxu0 %v4867
        %v6188 = vpop.f32.mrf.mxu0
        %v6189 = vadd.f32 %v5341, %v6188
        %6190 = vmatmul.f32.gmra.mxu0 %v4868
        %v6191 = vpop.f32.mrf.mxu0
        %v6192 = vadd.f32 %v5346, %v6191
        %6193 = vmatmul.f32.gmra.mxu0 %v4869
        %v6194 = vpop.f32.mrf.mxu0
        %v6195 = vadd.f32 %v5351, %v6194
        %6196 = vmatmul.f32.gmra.mxu0 %v4870
        %v6197 = vpop.f32.mrf.mxu0
        %v6198 = vadd.f32 %v5356, %v6197
        %6199 = vmatmul.f32.gmra.mxu0 %v4871
        %v6200 = vpop.f32.mrf.mxu0
        %v6201 = vadd.f32 %v5361, %v6200
        %6202 = vmatmul.f32.gmra.mxu0 %v4872
        %v6203 = vpop.f32.mrf.mxu0
        %v6204 = vadd.f32 %v5366, %v6203
        %6205 = vmatmul.f32.gmra.mxu0 %v4873
        %v6206 = vpop.f32.mrf.mxu0
        %v6207 = vadd.f32 %v5371, %v6206
        %6208 = vdwg.mxu0
        %6209 = vmatpush.msra.mxu0 %v4986
        %6210 = vmatpush.msra.mxu0 %v4979
        %6211 = vmatpush.msra.mxu0 %v4972
        %6212 = vmatpush.msra.mxu0 %v4965
        %6213 = vmatpush.msra.mxu0 %v4958
        %6214 = vmatpush.msra.mxu0 %v4951
        %6215 = vmatpush.msra.mxu0 %v4944
        %6216 = vmatpush.msra.mxu0 %v4937
        %6217 = vmatpush.msra.mxu0 %v4930
        %6218 = vmatpush.msra.mxu0 %v4923
        %6219 = vmatpush.msra.mxu0 %v4916
        %6220 = vmatpush.msra.mxu0 %v4909
        %6221 = vmatpush.msra.mxu0 %v4902
        %6222 = vmatpush.msra.mxu0 %v4895
        %6223 = vmatpush.msra.mxu0 %v4888
        %6224 = vmatpush.msra.mxu0 %v4881
        %6225 = vmatmul.f32.gmra.mxu0 %v4810
        %v6226 = vpop.f32.mrf.mxu0
        %v6227 = vadd.f32 %v5056, %v6226
        %6228 = vmatmul.f32.gmra.mxu0 %v4811
        %v6229 = vpop.f32.mrf.mxu0
        %v6230 = vadd.f32 %v5061, %v6229
        %6231 = vmatmul.f32.gmra.mxu0 %v4812
        %v6232 = vpop.f32.mrf.mxu0
        %v6233 = vadd.f32 %v5066, %v6232
        %6234 = vmatmul.f32.gmra.mxu0 %v4813
        %v6235 = vpop.f32.mrf.mxu0
        %v6236 = vadd.f32 %v5071, %v6235
        %6237 = vmatmul.f32.gmra.mxu0 %v4814
        %v6238 = vpop.f32.mrf.mxu0
        %v6239 = vadd.f32 %v5076, %v6238
        %6240 = vmatmul.f32.gmra.mxu0 %v4815
        %v6241 = vpop.f32.mrf.mxu0
        %v6242 = vadd.f32 %v5081, %v6241
        %6243 = vmatmul.f32.gmra.mxu0 %v4816
        %v6244 = vpop.f32.mrf.mxu0
        %v6245 = vadd.f32 %v5086, %v6244
        %6246 = vmatmul.f32.gmra.mxu0 %v4817
        %v6247 = vpop.f32.mrf.mxu0
        %v6248 = vadd.f32 %v5091, %v6247
        %6249 = vmatmul.f32.gmra.mxu0 %v4818
        %v6250 = vpop.f32.mrf.mxu0
        %v6251 = vadd.f32 %v5096, %v6250
        %6252 = vmatmul.f32.gmra.mxu0 %v4819
        %v6253 = vpop.f32.mrf.mxu0
        %v6254 = vadd.f32 %v5101, %v6253
        %6255 = vmatmul.f32.gmra.mxu0 %v4820
        %v6256 = vpop.f32.mrf.mxu0
        %v6257 = vadd.f32 %v5106, %v6256
        %6258 = vmatmul.f32.gmra.mxu0 %v4821
        %v6259 = vpop.f32.mrf.mxu0
        %v6260 = vadd.f32 %v5111, %v6259
        %6261 = vmatmul.f32.gmra.mxu0 %v4822
        %v6262 = vpop.f32.mrf.mxu0
        %v6263 = vadd.f32 %v5116, %v6262
        %6264 = vmatmul.f32.gmra.mxu0 %v4823
        %v6265 = vpop.f32.mrf.mxu0
        %v6266 = vadd.f32 %v5121, %v6265
        %6267 = vmatmul.f32.gmra.mxu0 %v4824
        %v6268 = vpop.f32.mrf.mxu0
        %v6269 = vadd.f32 %v5126, %v6268
        %6270 = vmatmul.f32.gmra.mxu0 %v4825
        %v6271 = vpop.f32.mrf.mxu0
        %v6272 = vadd.f32 %v5131, %v6271
        %6273 = vmatmul.f32.gmra.mxu0 %v4826
        %v6274 = vpop.f32.mrf.mxu0
        %v6275 = vadd.f32 %v5136, %v6274
        %6276 = vmatmul.f32.gmra.mxu0 %v4827
        %v6277 = vpop.f32.mrf.mxu0
        %v6278 = vadd.f32 %v5141, %v6277
        %6279 = vmatmul.f32.gmra.mxu0 %v4828
        %v6280 = vpop.f32.mrf.mxu0
        %v6281 = vadd.f32 %v5146, %v6280
        %6282 = vmatmul.f32.gmra.mxu0 %v4829
        %v6283 = vpop.f32.mrf.mxu0
        %v6284 = vadd.f32 %v5151, %v6283
        %6285 = vmatmul.f32.gmra.mxu0 %v4830
        %v6286 = vpop.f32.mrf.mxu0
        %v6287 = vadd.f32 %v5156, %v6286
        %6288 = vmatmul.f32.gmra.mxu0 %v4831
        %v6289 = vpop.f32.mrf.mxu0
        %v6290 = vadd.f32 %v5161, %v6289
        %6291 = vmatmul.f32.gmra.mxu0 %v4832
        %v6292 = vpop.f32.mrf.mxu0
        %v6293 = vadd.f32 %v5166, %v6292
        %6294 = vmatmul.f32.gmra.mxu0 %v4833
        %v6295 = vpop.f32.mrf.mxu0
        %v6296 = vadd.f32 %v5171, %v6295
        %6297 = vmatmul.f32.gmra.mxu0 %v4834
        %v6298 = vpop.f32.mrf.mxu0
        %v6299 = vadd.f32 %v5176, %v6298
        %6300 = vmatmul.f32.gmra.mxu0 %v4835
        %v6301 = vpop.f32.mrf.mxu0
        %v6302 = vadd.f32 %v5181, %v6301
        %6303 = vmatmul.f32.gmra.mxu0 %v4836
        %v6304 = vpop.f32.mrf.mxu0
        %v6305 = vadd.f32 %v5186, %v6304
        %6306 = vmatmul.f32.gmra.mxu0 %v4837
        %v6307 = vpop.f32.mrf.mxu0
        %v6308 = vadd.f32 %v5191, %v6307
        %6309 = vmatmul.f32.gmra.mxu0 %v4838
        %v6310 = vpop.f32.mrf.mxu0
        %v6311 = vadd.f32 %v5196, %v6310
        %6312 = vmatmul.f32.gmra.mxu0 %v4839
        %v6313 = vpop.f32.mrf.mxu0
        %v6314 = vadd.f32 %v5201, %v6313
        %6315 = vmatmul.f32.gmra.mxu0 %v4840
        %v6316 = vpop.f32.mrf.mxu0
        %v6317 = vadd.f32 %v5206, %v6316
        %6318 = vmatmul.f32.gmra.mxu0 %v4841
        %v6319 = vpop.f32.mrf.mxu0
        %v6320 = vadd.f32 %v5211, %v6319
        %6321 = vmatmul.f32.gmra.mxu0 %v4842
        %v6322 = vpop.f32.mrf.mxu0
        %v6323 = vadd.f32 %v5216, %v6322
        %6324 = vmatmul.f32.gmra.mxu0 %v4843
        %v6325 = vpop.f32.mrf.mxu0
        %v6326 = vadd.f32 %v5221, %v6325
        %6327 = vmatmul.f32.gmra.mxu0 %v4844
        %v6328 = vpop.f32.mrf.mxu0
        %v6329 = vadd.f32 %v5226, %v6328
        %6330 = vmatmul.f32.gmra.mxu0 %v4845
        %v6331 = vpop.f32.mrf.mxu0
        %v6332 = vadd.f32 %v5231, %v6331
        %6333 = vmatmul.f32.gmra.mxu0 %v4846
        %v6334 = vpop.f32.mrf.mxu0
        %v6335 = vadd.f32 %v5236, %v6334
        %6336 = vmatmul.f32.gmra.mxu0 %v4847
        %v6337 = vpop.f32.mrf.mxu0
        %v6338 = vadd.f32 %v5241, %v6337
        %6339 = vmatmul.f32.gmra.mxu0 %v4848
        %v6340 = vpop.f32.mrf.mxu0
        %v6341 = vadd.f32 %v5246, %v6340
        %6342 = vmatmul.f32.gmra.mxu0 %v4849
        %v6343 = vpop.f32.mrf.mxu0
        %v6344 = vadd.f32 %v5251, %v6343
        %6345 = vmatmul.f32.gmra.mxu0 %v4850
        %v6346 = vpop.f32.mrf.mxu0
        %v6347 = vadd.f32 %v5256, %v6346
        %6348 = vmatmul.f32.gmra.mxu0 %v4851
        %v6349 = vpop.f32.mrf.mxu0
        %v6350 = vadd.f32 %v5261, %v6349
        %6351 = vmatmul.f32.gmra.mxu0 %v4852
        %v6352 = vpop.f32.mrf.mxu0
        %v6353 = vadd.f32 %v5266, %v6352
        %6354 = vmatmul.f32.gmra.mxu0 %v4853
        %v6355 = vpop.f32.mrf.mxu0
        %v6356 = vadd.f32 %v5271, %v6355
        %6357 = vmatmul.f32.gmra.mxu0 %v4854
        %v6358 = vpop.f32.mrf.mxu0
        %v6359 = vadd.f32 %v5276, %v6358
        %6360 = vmatmul.f32.gmra.mxu0 %v4855
        %v6361 = vpop.f32.mrf.mxu0
        %v6362 = vadd.f32 %v5281, %v6361
        %6363 = vmatmul.f32.gmra.mxu0 %v4856
        %v6364 = vpop.f32.mrf.mxu0
        %v6365 = vadd.f32 %v5286, %v6364
        %6366 = vmatmul.f32.gmra.mxu0 %v4857
        %v6367 = vpop.f32.mrf.mxu0
        %v6368 = vadd.f32 %v5291, %v6367
        %6369 = vmatmul.f32.gmra.mxu0 %v4858
        %v6370 = vpop.f32.mrf.mxu0
        %v6371 = vadd.f32 %v5296, %v6370
        %6372 = vmatmul.f32.gmra.mxu0 %v4859
        %v6373 = vpop.f32.mrf.mxu0
        %v6374 = vadd.f32 %v5301, %v6373
        %6375 = vmatmul.f32.gmra.mxu0 %v4860
        %v6376 = vpop.f32.mrf.mxu0
        %v6377 = vadd.f32 %v5306, %v6376
        %6378 = vmatmul.f32.gmra.mxu0 %v4861
        %v6379 = vpop.f32.mrf.mxu0
        %v6380 = vadd.f32 %v5311, %v6379
        %6381 = vmatmul.f32.gmra.mxu0 %v4862
        %v6382 = vpop.f32.mrf.mxu0
        %v6383 = vadd.f32 %v5316, %v6382
        %6384 = vmatmul.f32.gmra.mxu0 %v4863
        %v6385 = vpop.f32.mrf.mxu0
        %v6386 = vadd.f32 %v5321, %v6385
        %6387 = vmatmul.f32.gmra.mxu0 %v4864
        %v6388 = vpop.f32.mrf.mxu0
        %v6389 = vadd.f32 %v5326, %v6388
        %6390 = vmatmul.f32.gmra.mxu0 %v4865
        %v6391 = vpop.f32.mrf.mxu0
        %v6392 = vadd.f32 %v5331, %v6391
        %6393 = vmatmul.f32.gmra.mxu0 %v4866
        %v6394 = vpop.f32.mrf.mxu0
        %v6395 = vadd.f32 %v5336, %v6394
        %6396 = vmatmul.f32.gmra.mxu0 %v4867
        %v6397 = vpop.f32.mrf.mxu0
        %v6398 = vadd.f32 %v5341, %v6397
        %6399 = vmatmul.f32.gmra.mxu0 %v4868
        %v6400 = vpop.f32.mrf.mxu0
        %v6401 = vadd.f32 %v5346, %v6400
        %6402 = vmatmul.f32.gmra.mxu0 %v4869
        %v6403 = vpop.f32.mrf.mxu0
        %v6404 = vadd.f32 %v5351, %v6403
        %6405 = vmatmul.f32.gmra.mxu0 %v4870
        %v6406 = vpop.f32.mrf.mxu0
        %v6407 = vadd.f32 %v5356, %v6406
        %6408 = vmatmul.f32.gmra.mxu0 %v4871
        %v6409 = vpop.f32.mrf.mxu0
        %v6410 = vadd.f32 %v5361, %v6409
        %6411 = vmatmul.f32.gmra.mxu0 %v4872
        %v6412 = vpop.f32.mrf.mxu0
        %v6413 = vadd.f32 %v5366, %v6412
        %6414 = vmatmul.f32.gmra.mxu0 %v4873
        %v6415 = vpop.f32.mrf.mxu0
        %v6416 = vadd.f32 %v5371, %v6415
        %6417 = vdwg.mxu0
        %6418 = vmatpush.msra.mxu0 %v4987
        %6419 = vmatpush.msra.mxu0 %v4980
        %6420 = vmatpush.msra.mxu0 %v4973
        %6421 = vmatpush.msra.mxu0 %v4966
        %6422 = vmatpush.msra.mxu0 %v4959
        %6423 = vmatpush.msra.mxu0 %v4952
        %6424 = vmatpush.msra.mxu0 %v4945
        %6425 = vmatpush.msra.mxu0 %v4938
        %6426 = vmatpush.msra.mxu0 %v4931
        %6427 = vmatpush.msra.mxu0 %v4924
        %6428 = vmatpush.msra.mxu0 %v4917
        %6429 = vmatpush.msra.mxu0 %v4910
        %6430 = vmatpush.msra.mxu0 %v4903
        %6431 = vmatpush.msra.mxu0 %v4896
        %6432 = vmatpush.msra.mxu0 %v4889
        %6433 = vmatpush.msra.mxu0 %v4882
        %6434 = vmatmul.f32.gmra.mxu0 %v4810
        %v6435 = vpop.f32.mrf.mxu0
        %v6436 = vadd.f32 %v5056, %v6435
        %6437 = vmatmul.f32.gmra.mxu0 %v4811
        %v6438 = vpop.f32.mrf.mxu0
        %v6439 = vadd.f32 %v5061, %v6438
        %6440 = vmatmul.f32.gmra.mxu0 %v4812
        %v6441 = vpop.f32.mrf.mxu0
        %v6442 = vadd.f32 %v5066, %v6441
        %6443 = vmatmul.f32.gmra.mxu0 %v4813
        %v6444 = vpop.f32.mrf.mxu0
        %v6445 = vadd.f32 %v5071, %v6444
        %6446 = vmatmul.f32.gmra.mxu0 %v4814
        %v6447 = vpop.f32.mrf.mxu0
        %v6448 = vadd.f32 %v5076, %v6447
        %6449 = vmatmul.f32.gmra.mxu0 %v4815
        %v6450 = vpop.f32.mrf.mxu0
        %v6451 = vadd.f32 %v5081, %v6450
        %6452 = vmatmul.f32.gmra.mxu0 %v4816
        %v6453 = vpop.f32.mrf.mxu0
        %v6454 = vadd.f32 %v5086, %v6453
        %6455 = vmatmul.f32.gmra.mxu0 %v4817
        %v6456 = vpop.f32.mrf.mxu0
        %v6457 = vadd.f32 %v5091, %v6456
        %6458 = vmatmul.f32.gmra.mxu0 %v4818
        %v6459 = vpop.f32.mrf.mxu0
        %v6460 = vadd.f32 %v5096, %v6459
        %6461 = vmatmul.f32.gmra.mxu0 %v4819
        %v6462 = vpop.f32.mrf.mxu0
        %v6463 = vadd.f32 %v5101, %v6462
        %6464 = vmatmul.f32.gmra.mxu0 %v4820
        %v6465 = vpop.f32.mrf.mxu0
        %v6466 = vadd.f32 %v5106, %v6465
        %6467 = vmatmul.f32.gmra.mxu0 %v4821
        %v6468 = vpop.f32.mrf.mxu0
        %v6469 = vadd.f32 %v5111, %v6468
        %6470 = vmatmul.f32.gmra.mxu0 %v4822
        %v6471 = vpop.f32.mrf.mxu0
        %v6472 = vadd.f32 %v5116, %v6471
        %6473 = vmatmul.f32.gmra.mxu0 %v4823
        %v6474 = vpop.f32.mrf.mxu0
        %v6475 = vadd.f32 %v5121, %v6474
        %6476 = vmatmul.f32.gmra.mxu0 %v4824
        %v6477 = vpop.f32.mrf.mxu0
        %v6478 = vadd.f32 %v5126, %v6477
        %6479 = vmatmul.f32.gmra.mxu0 %v4825
        %v6480 = vpop.f32.mrf.mxu0
        %v6481 = vadd.f32 %v5131, %v6480
        %6482 = vmatmul.f32.gmra.mxu0 %v4826
        %v6483 = vpop.f32.mrf.mxu0
        %v6484 = vadd.f32 %v5136, %v6483
        %6485 = vmatmul.f32.gmra.mxu0 %v4827
        %v6486 = vpop.f32.mrf.mxu0
        %v6487 = vadd.f32 %v5141, %v6486
        %6488 = vmatmul.f32.gmra.mxu0 %v4828
        %v6489 = vpop.f32.mrf.mxu0
        %v6490 = vadd.f32 %v5146, %v6489
        %6491 = vmatmul.f32.gmra.mxu0 %v4829
        %v6492 = vpop.f32.mrf.mxu0
        %v6493 = vadd.f32 %v5151, %v6492
        %6494 = vmatmul.f32.gmra.mxu0 %v4830
        %v6495 = vpop.f32.mrf.mxu0
        %v6496 = vadd.f32 %v5156, %v6495
        %6497 = vmatmul.f32.gmra.mxu0 %v4831
        %v6498 = vpop.f32.mrf.mxu0
        %v6499 = vadd.f32 %v5161, %v6498
        %6500 = vmatmul.f32.gmra.mxu0 %v4832
        %v6501 = vpop.f32.mrf.mxu0
        %v6502 = vadd.f32 %v5166, %v6501
        %6503 = vmatmul.f32.gmra.mxu0 %v4833
        %v6504 = vpop.f32.mrf.mxu0
        %v6505 = vadd.f32 %v5171, %v6504
        %6506 = vmatmul.f32.gmra.mxu0 %v4834
        %v6507 = vpop.f32.mrf.mxu0
        %v6508 = vadd.f32 %v5176, %v6507
        %6509 = vmatmul.f32.gmra.mxu0 %v4835
        %v6510 = vpop.f32.mrf.mxu0
        %v6511 = vadd.f32 %v5181, %v6510
        %6512 = vmatmul.f32.gmra.mxu0 %v4836
        %v6513 = vpop.f32.mrf.mxu0
        %v6514 = vadd.f32 %v5186, %v6513
        %6515 = vmatmul.f32.gmra.mxu0 %v4837
        %v6516 = vpop.f32.mrf.mxu0
        %v6517 = vadd.f32 %v5191, %v6516
        %6518 = vmatmul.f32.gmra.mxu0 %v4838
        %v6519 = vpop.f32.mrf.mxu0
        %v6520 = vadd.f32 %v5196, %v6519
        %6521 = vmatmul.f32.gmra.mxu0 %v4839
        %v6522 = vpop.f32.mrf.mxu0
        %v6523 = vadd.f32 %v5201, %v6522
        %6524 = vmatmul.f32.gmra.mxu0 %v4840
        %v6525 = vpop.f32.mrf.mxu0
        %v6526 = vadd.f32 %v5206, %v6525
        %6527 = vmatmul.f32.gmra.mxu0 %v4841
        %v6528 = vpop.f32.mrf.mxu0
        %v6529 = vadd.f32 %v5211, %v6528
        %6530 = vmatmul.f32.gmra.mxu0 %v4842
        %v6531 = vpop.f32.mrf.mxu0
        %v6532 = vadd.f32 %v5216, %v6531
        %6533 = vmatmul.f32.gmra.mxu0 %v4843
        %v6534 = vpop.f32.mrf.mxu0
        %v6535 = vadd.f32 %v5221, %v6534
        %6536 = vmatmul.f32.gmra.mxu0 %v4844
        %v6537 = vpop.f32.mrf.mxu0
        %v6538 = vadd.f32 %v5226, %v6537
        %6539 = vmatmul.f32.gmra.mxu0 %v4845
        %v6540 = vpop.f32.mrf.mxu0
        %v6541 = vadd.f32 %v5231, %v6540
        %6542 = vmatmul.f32.gmra.mxu0 %v4846
        %v6543 = vpop.f32.mrf.mxu0
        %v6544 = vadd.f32 %v5236, %v6543
        %6545 = vmatmul.f32.gmra.mxu0 %v4847
        %v6546 = vpop.f32.mrf.mxu0
        %v6547 = vadd.f32 %v5241, %v6546
        %6548 = vmatmul.f32.gmra.mxu0 %v4848
        %v6549 = vpop.f32.mrf.mxu0
        %v6550 = vadd.f32 %v5246, %v6549
        %6551 = vmatmul.f32.gmra.mxu0 %v4849
        %v6552 = vpop.f32.mrf.mxu0
        %v6553 = vadd.f32 %v5251, %v6552
        %6554 = vmatmul.f32.gmra.mxu0 %v4850
        %v6555 = vpop.f32.mrf.mxu0
        %v6556 = vadd.f32 %v5256, %v6555
        %6557 = vmatmul.f32.gmra.mxu0 %v4851
        %v6558 = vpop.f32.mrf.mxu0
        %v6559 = vadd.f32 %v5261, %v6558
        %6560 = vmatmul.f32.gmra.mxu0 %v4852
        %v6561 = vpop.f32.mrf.mxu0
        %v6562 = vadd.f32 %v5266, %v6561
        %6563 = vmatmul.f32.gmra.mxu0 %v4853
        %v6564 = vpop.f32.mrf.mxu0
        %v6565 = vadd.f32 %v5271, %v6564
        %6566 = vmatmul.f32.gmra.mxu0 %v4854
        %v6567 = vpop.f32.mrf.mxu0
        %v6568 = vadd.f32 %v5276, %v6567
        %6569 = vmatmul.f32.gmra.mxu0 %v4855
        %v6570 = vpop.f32.mrf.mxu0
        %v6571 = vadd.f32 %v5281, %v6570
        %6572 = vmatmul.f32.gmra.mxu0 %v4856
        %v6573 = vpop.f32.mrf.mxu0
        %v6574 = vadd.f32 %v5286, %v6573
        %6575 = vmatmul.f32.gmra.mxu0 %v4857
        %v6576 = vpop.f32.mrf.mxu0
        %v6577 = vadd.f32 %v5291, %v6576
        %6578 = vmatmul.f32.gmra.mxu0 %v4858
        %v6579 = vpop.f32.mrf.mxu0
        %v6580 = vadd.f32 %v5296, %v6579
        %6581 = vmatmul.f32.gmra.mxu0 %v4859
        %v6582 = vpop.f32.mrf.mxu0
        %v6583 = vadd.f32 %v5301, %v6582
        %6584 = vmatmul.f32.gmra.mxu0 %v4860
        %v6585 = vpop.f32.mrf.mxu0
        %v6586 = vadd.f32 %v5306, %v6585
        %6587 = vmatmul.f32.gmra.mxu0 %v4861
        %v6588 = vpop.f32.mrf.mxu0
        %v6589 = vadd.f32 %v5311, %v6588
        %6590 = vmatmul.f32.gmra.mxu0 %v4862
        %v6591 = vpop.f32.mrf.mxu0
        %v6592 = vadd.f32 %v5316, %v6591
        %6593 = vmatmul.f32.gmra.mxu0 %v4863
        %v6594 = vpop.f32.mrf.mxu0
        %v6595 = vadd.f32 %v5321, %v6594
        %6596 = vmatmul.f32.gmra.mxu0 %v4864
        %v6597 = vpop.f32.mrf.mxu0
        %v6598 = vadd.f32 %v5326, %v6597
        %6599 = vmatmul.f32.gmra.mxu0 %v4865
        %v6600 = vpop.f32.mrf.mxu0
        %v6601 = vadd.f32 %v5331, %v6600
        %6602 = vmatmul.f32.gmra.mxu0 %v4866
        %v6603 = vpop.f32.mrf.mxu0
        %v6604 = vadd.f32 %v5336, %v6603
        %6605 = vmatmul.f32.gmra.mxu0 %v4867
        %v6606 = vpop.f32.mrf.mxu0
        %v6607 = vadd.f32 %v5341, %v6606
        %6608 = vmatmul.f32.gmra.mxu0 %v4868
        %v6609 = vpop.f32.mrf.mxu0
        %v6610 = vadd.f32 %v5346, %v6609
        %6611 = vmatmul.f32.gmra.mxu0 %v4869
        %v6612 = vpop.f32.mrf.mxu0
        %v6613 = vadd.f32 %v5351, %v6612
        %6614 = vmatmul.f32.gmra.mxu0 %v4870
        %v6615 = vpop.f32.mrf.mxu0
        %v6616 = vadd.f32 %v5356, %v6615
        %6617 = vmatmul.f32.gmra.mxu0 %v4871
        %v6618 = vpop.f32.mrf.mxu0
        %v6619 = vadd.f32 %v5361, %v6618
        %6620 = vmatmul.f32.gmra.mxu0 %v4872
        %v6621 = vpop.f32.mrf.mxu0
        %v6622 = vadd.f32 %v5366, %v6621
        %6623 = vmatmul.f32.gmra.mxu0 %v4873
        %v6624 = vpop.f32.mrf.mxu0
        %v6625 = vadd.f32 %v5371, %v6624
        %6626 = vdwg.mxu0
        %6627 = vmatpush.msra.mxu0 %v4988
        %6628 = vmatpush.msra.mxu0 %v4981
        %6629 = vmatpush.msra.mxu0 %v4974
        %6630 = vmatpush.msra.mxu0 %v4967
        %6631 = vmatpush.msra.mxu0 %v4960
        %6632 = vmatpush.msra.mxu0 %v4953
        %6633 = vmatpush.msra.mxu0 %v4946
        %6634 = vmatpush.msra.mxu0 %v4939
        %6635 = vmatpush.msra.mxu0 %v4932
        %6636 = vmatpush.msra.mxu0 %v4925
        %6637 = vmatpush.msra.mxu0 %v4918
        %6638 = vmatpush.msra.mxu0 %v4911
        %6639 = vmatpush.msra.mxu0 %v4904
        %6640 = vmatpush.msra.mxu0 %v4897
        %6641 = vmatpush.msra.mxu0 %v4890
        %6642 = vmatpush.msra.mxu0 %v4883
        %6643 = vmatmul.f32.gmra.mxu0 %v4810
        %v6644 = vpop.f32.mrf.mxu0
        %v6645 = vadd.f32 %v5056, %v6644
        %6646 = vmatmul.f32.gmra.mxu0 %v4811
        %v6647 = vpop.f32.mrf.mxu0
        %v6648 = vadd.f32 %v5061, %v6647
        %6649 = vmatmul.f32.gmra.mxu0 %v4812
        %v6650 = vpop.f32.mrf.mxu0
        %v6651 = vadd.f32 %v5066, %v6650
        %6652 = vmatmul.f32.gmra.mxu0 %v4813
        %v6653 = vpop.f32.mrf.mxu0
        %v6654 = vadd.f32 %v5071, %v6653
        %6655 = vmatmul.f32.gmra.mxu0 %v4814
        %v6656 = vpop.f32.mrf.mxu0
        %v6657 = vadd.f32 %v5076, %v6656
        %6658 = vmatmul.f32.gmra.mxu0 %v4815
        %v6659 = vpop.f32.mrf.mxu0
        %v6660 = vadd.f32 %v5081, %v6659
        %6661 = vmatmul.f32.gmra.mxu0 %v4816
        %v6662 = vpop.f32.mrf.mxu0
        %v6663 = vadd.f32 %v5086, %v6662
        %6664 = vmatmul.f32.gmra.mxu0 %v4817
        %v6665 = vpop.f32.mrf.mxu0
        %v6666 = vadd.f32 %v5091, %v6665
        %6667 = vmatmul.f32.gmra.mxu0 %v4818
        %v6668 = vpop.f32.mrf.mxu0
        %v6669 = vadd.f32 %v5096, %v6668
        %6670 = vmatmul.f32.gmra.mxu0 %v4819
        %v6671 = vpop.f32.mrf.mxu0
        %v6672 = vadd.f32 %v5101, %v6671
        %6673 = vmatmul.f32.gmra.mxu0 %v4820
        %v6674 = vpop.f32.mrf.mxu0
        %v6675 = vadd.f32 %v5106, %v6674
        %6676 = vmatmul.f32.gmra.mxu0 %v4821
        %v6677 = vpop.f32.mrf.mxu0
        %v6678 = vadd.f32 %v5111, %v6677
        %6679 = vmatmul.f32.gmra.mxu0 %v4822
        %v6680 = vpop.f32.mrf.mxu0
        %v6681 = vadd.f32 %v5116, %v6680
        %6682 = vmatmul.f32.gmra.mxu0 %v4823
        %v6683 = vpop.f32.mrf.mxu0
        %v6684 = vadd.f32 %v5121, %v6683
        %6685 = vmatmul.f32.gmra.mxu0 %v4824
        %v6686 = vpop.f32.mrf.mxu0
        %v6687 = vadd.f32 %v5126, %v6686
        %6688 = vmatmul.f32.gmra.mxu0 %v4825
        %v6689 = vpop.f32.mrf.mxu0
        %v6690 = vadd.f32 %v5131, %v6689
        %6691 = vmatmul.f32.gmra.mxu0 %v4826
        %v6692 = vpop.f32.mrf.mxu0
        %v6693 = vadd.f32 %v5136, %v6692
        %6694 = vmatmul.f32.gmra.mxu0 %v4827
        %v6695 = vpop.f32.mrf.mxu0
        %v6696 = vadd.f32 %v5141, %v6695
        %6697 = vmatmul.f32.gmra.mxu0 %v4828
        %v6698 = vpop.f32.mrf.mxu0
        %v6699 = vadd.f32 %v5146, %v6698
        %6700 = vmatmul.f32.gmra.mxu0 %v4829
        %v6701 = vpop.f32.mrf.mxu0
        %v6702 = vadd.f32 %v5151, %v6701
        %6703 = vmatmul.f32.gmra.mxu0 %v4830
        %v6704 = vpop.f32.mrf.mxu0
        %v6705 = vadd.f32 %v5156, %v6704
        %6706 = vmatmul.f32.gmra.mxu0 %v4831
        %v6707 = vpop.f32.mrf.mxu0
        %v6708 = vadd.f32 %v5161, %v6707
        %6709 = vmatmul.f32.gmra.mxu0 %v4832
        %v6710 = vpop.f32.mrf.mxu0
        %v6711 = vadd.f32 %v5166, %v6710
        %6712 = vmatmul.f32.gmra.mxu0 %v4833
        %v6713 = vpop.f32.mrf.mxu0
        %v6714 = vadd.f32 %v5171, %v6713
        %6715 = vmatmul.f32.gmra.mxu0 %v4834
        %v6716 = vpop.f32.mrf.mxu0
        %v6717 = vadd.f32 %v5176, %v6716
        %6718 = vmatmul.f32.gmra.mxu0 %v4835
        %v6719 = vpop.f32.mrf.mxu0
        %v6720 = vadd.f32 %v5181, %v6719
        %6721 = vmatmul.f32.gmra.mxu0 %v4836
        %v6722 = vpop.f32.mrf.mxu0
        %v6723 = vadd.f32 %v5186, %v6722
        %6724 = vmatmul.f32.gmra.mxu0 %v4837
        %v6725 = vpop.f32.mrf.mxu0
        %v6726 = vadd.f32 %v5191, %v6725
        %6727 = vmatmul.f32.gmra.mxu0 %v4838
        %v6728 = vpop.f32.mrf.mxu0
        %v6729 = vadd.f32 %v5196, %v6728
        %6730 = vmatmul.f32.gmra.mxu0 %v4839
        %v6731 = vpop.f32.mrf.mxu0
        %v6732 = vadd.f32 %v5201, %v6731
        %6733 = vmatmul.f32.gmra.mxu0 %v4840
        %v6734 = vpop.f32.mrf.mxu0
        %v6735 = vadd.f32 %v5206, %v6734
        %6736 = vmatmul.f32.gmra.mxu0 %v4841
        %v6737 = vpop.f32.mrf.mxu0
        %v6738 = vadd.f32 %v5211, %v6737
        %6739 = vmatmul.f32.gmra.mxu0 %v4842
        %v6740 = vpop.f32.mrf.mxu0
        %v6741 = vadd.f32 %v5216, %v6740
        %6742 = vmatmul.f32.gmra.mxu0 %v4843
        %v6743 = vpop.f32.mrf.mxu0
        %v6744 = vadd.f32 %v5221, %v6743
        %6745 = vmatmul.f32.gmra.mxu0 %v4844
        %v6746 = vpop.f32.mrf.mxu0
        %v6747 = vadd.f32 %v5226, %v6746
        %6748 = vmatmul.f32.gmra.mxu0 %v4845
        %v6749 = vpop.f32.mrf.mxu0
        %v6750 = vadd.f32 %v5231, %v6749
        %6751 = vmatmul.f32.gmra.mxu0 %v4846
        %v6752 = vpop.f32.mrf.mxu0
        %v6753 = vadd.f32 %v5236, %v6752
        %6754 = vmatmul.f32.gmra.mxu0 %v4847
        %v6755 = vpop.f32.mrf.mxu0
        %v6756 = vadd.f32 %v5241, %v6755
        %6757 = vmatmul.f32.gmra.mxu0 %v4848
        %v6758 = vpop.f32.mrf.mxu0
        %v6759 = vadd.f32 %v5246, %v6758
        %6760 = vmatmul.f32.gmra.mxu0 %v4849
        %v6761 = vpop.f32.mrf.mxu0
        %v6762 = vadd.f32 %v5251, %v6761
        %6763 = vmatmul.f32.gmra.mxu0 %v4850
        %v6764 = vpop.f32.mrf.mxu0
        %v6765 = vadd.f32 %v5256, %v6764
        %6766 = vmatmul.f32.gmra.mxu0 %v4851
        %v6767 = vpop.f32.mrf.mxu0
        %v6768 = vadd.f32 %v5261, %v6767
        %6769 = vmatmul.f32.gmra.mxu0 %v4852
        %v6770 = vpop.f32.mrf.mxu0
        %v6771 = vadd.f32 %v5266, %v6770
        %6772 = vmatmul.f32.gmra.mxu0 %v4853
        %v6773 = vpop.f32.mrf.mxu0
        %v6774 = vadd.f32 %v5271, %v6773
        %6775 = vmatmul.f32.gmra.mxu0 %v4854
        %v6776 = vpop.f32.mrf.mxu0
        %v6777 = vadd.f32 %v5276, %v6776
        %6778 = vmatmul.f32.gmra.mxu0 %v4855
        %v6779 = vpop.f32.mrf.mxu0
        %v6780 = vadd.f32 %v5281, %v6779
        %6781 = vmatmul.f32.gmra.mxu0 %v4856
        %v6782 = vpop.f32.mrf.mxu0
        %v6783 = vadd.f32 %v5286, %v6782
        %6784 = vmatmul.f32.gmra.mxu0 %v4857
        %v6785 = vpop.f32.mrf.mxu0
        %v6786 = vadd.f32 %v5291, %v6785
        %6787 = vmatmul.f32.gmra.mxu0 %v4858
        %v6788 = vpop.f32.mrf.mxu0
        %v6789 = vadd.f32 %v5296, %v6788
        %6790 = vmatmul.f32.gmra.mxu0 %v4859
        %v6791 = vpop.f32.mrf.mxu0
        %v6792 = vadd.f32 %v5301, %v6791
        %6793 = vmatmul.f32.gmra.mxu0 %v4860
        %v6794 = vpop.f32.mrf.mxu0
        %v6795 = vadd.f32 %v5306, %v6794
        %6796 = vmatmul.f32.gmra.mxu0 %v4861
        %v6797 = vpop.f32.mrf.mxu0
        %v6798 = vadd.f32 %v5311, %v6797
        %6799 = vmatmul.f32.gmra.mxu0 %v4862
        %v6800 = vpop.f32.mrf.mxu0
        %v6801 = vadd.f32 %v5316, %v6800
        %6802 = vmatmul.f32.gmra.mxu0 %v4863
        %v6803 = vpop.f32.mrf.mxu0
        %v6804 = vadd.f32 %v5321, %v6803
        %6805 = vmatmul.f32.gmra.mxu0 %v4864
        %v6806 = vpop.f32.mrf.mxu0
        %v6807 = vadd.f32 %v5326, %v6806
        %6808 = vmatmul.f32.gmra.mxu0 %v4865
        %v6809 = vpop.f32.mrf.mxu0
        %v6810 = vadd.f32 %v5331, %v6809
        %6811 = vmatmul.f32.gmra.mxu0 %v4866
        %v6812 = vpop.f32.mrf.mxu0
        %v6813 = vadd.f32 %v5336, %v6812
        %6814 = vmatmul.f32.gmra.mxu0 %v4867
        %v6815 = vpop.f32.mrf.mxu0
        %v6816 = vadd.f32 %v5341, %v6815
        %6817 = vmatmul.f32.gmra.mxu0 %v4868
        %v6818 = vpop.f32.mrf.mxu0
        %v6819 = vadd.f32 %v5346, %v6818
        %6820 = vmatmul.f32.gmra.mxu0 %v4869
        %v6821 = vpop.f32.mrf.mxu0
        %v6822 = vadd.f32 %v5351, %v6821
        %6823 = vmatmul.f32.gmra.mxu0 %v4870
        %v6824 = vpop.f32.mrf.mxu0
        %v6825 = vadd.f32 %v5356, %v6824
        %6826 = vmatmul.f32.gmra.mxu0 %v4871
        %v6827 = vpop.f32.mrf.mxu0
        %v6828 = vadd.f32 %v5361, %v6827
        %6829 = vmatmul.f32.gmra.mxu0 %v4872
        %v6830 = vpop.f32.mrf.mxu0
        %v6831 = vadd.f32 %v5366, %v6830
        %6832 = vmatmul.f32.gmra.mxu0 %v4873
        %v6833 = vpop.f32.mrf.mxu0
        %v6834 = vadd.f32 %v5371, %v6833
        %6835 = vdwg.mxu0
        %6836 = vst [vmem:[%s194] sm:$0xff] %v5391
        %6837 = vst [vmem:[%s194 + $0x8] sm:$0xff] %v5600
        %6838 = vst [vmem:[%s194 + $0x10] sm:$0xff] %v5809
        %6839 = vst [vmem:[%s194 + $0x18] sm:$0xff] %v6018
        %6840 = vst [vmem:[%s194 + $0x20] sm:$0xff] %v6227
        %6841 = vst [vmem:[%s194 + $0x28] sm:$0xff] %v6436
        %vm6842 = vcmask 130048
        %6843 = vst.msk [vmem:[%s194 + $0x30] sm:$0xff] %vm6842, %v6645
        %6844 = vst [vmem:[%s194 + $0x38] sm:$0xff] %v5394
        %6845 = vst [vmem:[%s194 + $0x40] sm:$0xff] %v5603
        %6846 = vst [vmem:[%s194 + $0x48] sm:$0xff] %v5812
        %6847 = vst [vmem:[%s194 + $0x50] sm:$0xff] %v6021
        %6848 = vst [vmem:[%s194 + $0x58] sm:$0xff] %v6230
        %6849 = vst [vmem:[%s194 + $0x60] sm:$0xff] %v6439
        %6850 = vst.msk [vmem:[%s194 + $0x68] sm:$0xff] %vm6842, %v6648
        %6851 = vst [vmem:[%s194 + $0x70] sm:$0xff] %v5397
        %6852 = vst [vmem:[%s194 + $0x78] sm:$0xff] %v5606
        %6853 = vst [vmem:[%s194 + $0x80] sm:$0xff] %v5815
        %6854 = vst [vmem:[%s194 + $0x88] sm:$0xff] %v6024
        %6855 = vst [vmem:[%s194 + $0x90] sm:$0xff] %v6233
        %6856 = vst [vmem:[%s194 + $0x98] sm:$0xff] %v6442
        %6857 = vst.msk [vmem:[%s194 + $0xa0] sm:$0xff] %vm6842, %v6651
        %6858 = vst [vmem:[%s194 + $0xa8] sm:$0xff] %v5400
        %6859 = vst [vmem:[%s194 + $0xb0] sm:$0xff] %v5609
        %6860 = vst [vmem:[%s194 + $0xb8] sm:$0xff] %v5818
        %6861 = vst [vmem:[%s194 + $0xc0] sm:$0xff] %v6027
        %6862 = vst [vmem:[%s194 + $0xc8] sm:$0xff] %v6236
        %6863 = vst [vmem:[%s194 + $0xd0] sm:$0xff] %v6445
        %6864 = vst.msk [vmem:[%s194 + $0xd8] sm:$0xff] %vm6842, %v6654
        %6865 = vst [vmem:[%s194 + $0xe0] sm:$0xff] %v5403
        %6866 = vst [vmem:[%s194 + $0xe8] sm:$0xff] %v5612
        %6867 = vst [vmem:[%s194 + $0xf0] sm:$0xff] %v5821
        %6868 = vst [vmem:[%s194 + $0xf8] sm:$0xff] %v6030
        %6869 = vst [vmem:[%s194 + $0x100] sm:$0xff] %v6239
        %6870 = vst [vmem:[%s194 + $0x108] sm:$0xff] %v6448
        %6871 = vst.msk [vmem:[%s194 + $0x110] sm:$0xff] %vm6842, %v6657
        %6872 = vst [vmem:[%s194 + $0x118] sm:$0xff] %v5406
        %6873 = vst [vmem:[%s194 + $0x120] sm:$0xff] %v5615
        %6874 = vst [vmem:[%s194 + $0x128] sm:$0xff] %v5824
        %6875 = vst [vmem:[%s194 + $0x130] sm:$0xff] %v6033
        %6876 = vst [vmem:[%s194 + $0x138] sm:$0xff] %v6242
        %6877 = vst [vmem:[%s194 + $0x140] sm:$0xff] %v6451
        %6878 = vst.msk [vmem:[%s194 + $0x148] sm:$0xff] %vm6842, %v6660
        %6879 = vst [vmem:[%s194 + $0x150] sm:$0xff] %v5409
        %6880 = vst [vmem:[%s194 + $0x158] sm:$0xff] %v5618
        %6881 = vst [vmem:[%s194 + $0x160] sm:$0xff] %v5827
        %6882 = vst [vmem:[%s194 + $0x168] sm:$0xff] %v6036
        %6883 = vst [vmem:[%s194 + $0x170] sm:$0xff] %v6245
        %6884 = vst [vmem:[%s194 + $0x178] sm:$0xff] %v6454
        %6885 = vst.msk [vmem:[%s194 + $0x180] sm:$0xff] %vm6842, %v6663
        %6886 = vst [vmem:[%s194 + $0x188] sm:$0xff] %v5412
        %6887 = vst [vmem:[%s194 + $0x190] sm:$0xff] %v5621
        %6888 = vst [vmem:[%s194 + $0x198] sm:$0xff] %v5830
        %6889 = vst [vmem:[%s194 + $0x1a0] sm:$0xff] %v6039
        %6890 = vst [vmem:[%s194 + $0x1a8] sm:$0xff] %v6248
        %6891 = vst [vmem:[%s194 + $0x1b0] sm:$0xff] %v6457
        %6892 = vst.msk [vmem:[%s194 + $0x1b8] sm:$0xff] %vm6842, %v6666
        %6893 = vst [vmem:[%s194 + $0x1c0] sm:$0xff] %v5415
        %6894 = vst [vmem:[%s194 + $0x1c8] sm:$0xff] %v5624
        %6895 = vst [vmem:[%s194 + $0x1d0] sm:$0xff] %v5833
        %6896 = vst [vmem:[%s194 + $0x1d8] sm:$0xff] %v6042
        %6897 = vst [vmem:[%s194 + $0x1e0] sm:$0xff] %v6251
        %6898 = vst [vmem:[%s194 + $0x1e8] sm:$0xff] %v6460
        %6899 = vst.msk [vmem:[%s194 + $0x1f0] sm:$0xff] %vm6842, %v6669
        %6900 = vst [vmem:[%s194 + $0x1f8] sm:$0xff] %v5418
        %6901 = vst [vmem:[%s194 + $0x200] sm:$0xff] %v5627
        %6902 = vst [vmem:[%s194 + $0x208] sm:$0xff] %v5836
        %6903 = vst [vmem:[%s194 + $0x210] sm:$0xff] %v6045
        %6904 = vst [vmem:[%s194 + $0x218] sm:$0xff] %v6254
        %6905 = vst [vmem:[%s194 + $0x220] sm:$0xff] %v6463
        %6906 = vst.msk [vmem:[%s194 + $0x228] sm:$0xff] %vm6842, %v6672
        %6907 = vst [vmem:[%s194 + $0x230] sm:$0xff] %v5421
        %6908 = vst [vmem:[%s194 + $0x238] sm:$0xff] %v5630
        %6909 = vst [vmem:[%s194 + $0x240] sm:$0xff] %v5839
        %6910 = vst [vmem:[%s194 + $0x248] sm:$0xff] %v6048
        %6911 = vst [vmem:[%s194 + $0x250] sm:$0xff] %v6257
        %6912 = vst [vmem:[%s194 + $0x258] sm:$0xff] %v6466
        %6913 = vst.msk [vmem:[%s194 + $0x260] sm:$0xff] %vm6842, %v6675
        %6914 = vst [vmem:[%s194 + $0x268] sm:$0xff] %v5424
        %6915 = vst [vmem:[%s194 + $0x270] sm:$0xff] %v5633
        %6916 = vst [vmem:[%s194 + $0x278] sm:$0xff] %v5842
        %6917 = vst [vmem:[%s194 + $0x280] sm:$0xff] %v6051
        %6918 = vst [vmem:[%s194 + $0x288] sm:$0xff] %v6260
        %6919 = vst [vmem:[%s194 + $0x290] sm:$0xff] %v6469
        %6920 = vst.msk [vmem:[%s194 + $0x298] sm:$0xff] %vm6842, %v6678
        %6921 = vst [vmem:[%s194 + $0x2a0] sm:$0xff] %v5427
        %6922 = vst [vmem:[%s194 + $0x2a8] sm:$0xff] %v5636
        %6923 = vst [vmem:[%s194 + $0x2b0] sm:$0xff] %v5845
        %6924 = vst [vmem:[%s194 + $0x2b8] sm:$0xff] %v6054
        %6925 = vst [vmem:[%s194 + $0x2c0] sm:$0xff] %v6263
        %6926 = vst [vmem:[%s194 + $0x2c8] sm:$0xff] %v6472
        %6927 = vst.msk [vmem:[%s194 + $0x2d0] sm:$0xff] %vm6842, %v6681
        %6928 = vst [vmem:[%s194 + $0x2d8] sm:$0xff] %v5430
        %6929 = vst [vmem:[%s194 + $0x2e0] sm:$0xff] %v5639
        %6930 = vst [vmem:[%s194 + $0x2e8] sm:$0xff] %v5848
        %6931 = vst [vmem:[%s194 + $0x2f0] sm:$0xff] %v6057
        %6932 = vst [vmem:[%s194 + $0x2f8] sm:$0xff] %v6266
        %6933 = vst [vmem:[%s194 + $0x300] sm:$0xff] %v6475
        %6934 = vst.msk [vmem:[%s194 + $0x308] sm:$0xff] %vm6842, %v6684
        %6935 = vst [vmem:[%s194 + $0x310] sm:$0xff] %v5433
        %6936 = vst [vmem:[%s194 + $0x318] sm:$0xff] %v5642
        %6937 = vst [vmem:[%s194 + $0x320] sm:$0xff] %v5851
        %6938 = vst [vmem:[%s194 + $0x328] sm:$0xff] %v6060
        %6939 = vst [vmem:[%s194 + $0x330] sm:$0xff] %v6269
        %6940 = vst [vmem:[%s194 + $0x338] sm:$0xff] %v6478
        %6941 = vst.msk [vmem:[%s194 + $0x340] sm:$0xff] %vm6842, %v6687
        %6942 = vst [vmem:[%s194 + $0x348] sm:$0xff] %v5436
        %6943 = vst [vmem:[%s194 + $0x350] sm:$0xff] %v5645
        %6944 = vst [vmem:[%s194 + $0x358] sm:$0xff] %v5854
        %6945 = vst [vmem:[%s194 + $0x360] sm:$0xff] %v6063
        %6946 = vst [vmem:[%s194 + $0x368] sm:$0xff] %v6272
        %6947 = vst [vmem:[%s194 + $0x370] sm:$0xff] %v6481
        %6948 = vst.msk [vmem:[%s194 + $0x378] sm:$0xff] %vm6842, %v6690
        %6949 = vst [vmem:[%s194 + $0x380] sm:$0xff] %v5439
        %6950 = vst [vmem:[%s194 + $0x388] sm:$0xff] %v5648
        %6951 = vst [vmem:[%s194 + $0x390] sm:$0xff] %v5857
        %6952 = vst [vmem:[%s194 + $0x398] sm:$0xff] %v6066
        %6953 = vst [vmem:[%s194 + $0x3a0] sm:$0xff] %v6275
        %6954 = vst [vmem:[%s194 + $0x3a8] sm:$0xff] %v6484
        %6955 = vst.msk [vmem:[%s194 + $0x3b0] sm:$0xff] %vm6842, %v6693
        %6956 = vst [vmem:[%s194 + $0x3b8] sm:$0xff] %v5442
        %6957 = vst [vmem:[%s194 + $0x3c0] sm:$0xff] %v5651
        %6958 = vst [vmem:[%s194 + $0x3c8] sm:$0xff] %v5860
        %6959 = vst [vmem:[%s194 + $0x3d0] sm:$0xff] %v6069
        %6960 = vst [vmem:[%s194 + $0x3d8] sm:$0xff] %v6278
        %6961 = vst [vmem:[%s194 + $0x3e0] sm:$0xff] %v6487
        %6962 = vst.msk [vmem:[%s194 + $0x3e8] sm:$0xff] %vm6842, %v6696
        %6963 = vst [vmem:[%s194 + $0x3f0] sm:$0xff] %v5445
        %6964 = vst [vmem:[%s194 + $0x3f8] sm:$0xff] %v5654
        %6965 = vst [vmem:[%s194 + $0x400] sm:$0xff] %v5863
        %6966 = vst [vmem:[%s194 + $0x408] sm:$0xff] %v6072
        %6967 = vst [vmem:[%s194 + $0x410] sm:$0xff] %v6281
        %6968 = vst [vmem:[%s194 + $0x418] sm:$0xff] %v6490
        %6969 = vst.msk [vmem:[%s194 + $0x420] sm:$0xff] %vm6842, %v6699
        %6970 = vst [vmem:[%s194 + $0x428] sm:$0xff] %v5448
        %6971 = vst [vmem:[%s194 + $0x430] sm:$0xff] %v5657
        %6972 = vst [vmem:[%s194 + $0x438] sm:$0xff] %v5866
        %6973 = vst [vmem:[%s194 + $0x440] sm:$0xff] %v6075
        %6974 = vst [vmem:[%s194 + $0x448] sm:$0xff] %v6284
        %6975 = vst [vmem:[%s194 + $0x450] sm:$0xff] %v6493
        %6976 = vst.msk [vmem:[%s194 + $0x458] sm:$0xff] %vm6842, %v6702
        %6977 = vst [vmem:[%s194 + $0x460] sm:$0xff] %v5451
        %6978 = vst [vmem:[%s194 + $0x468] sm:$0xff] %v5660
        %6979 = vst [vmem:[%s194 + $0x470] sm:$0xff] %v5869
        %6980 = vst [vmem:[%s194 + $0x478] sm:$0xff] %v6078
        %6981 = vst [vmem:[%s194 + $0x480] sm:$0xff] %v6287
        %6982 = vst [vmem:[%s194 + $0x488] sm:$0xff] %v6496
        %6983 = vst.msk [vmem:[%s194 + $0x490] sm:$0xff] %vm6842, %v6705
        %6984 = vst [vmem:[%s194 + $0x498] sm:$0xff] %v5454
        %6985 = vst [vmem:[%s194 + $0x4a0] sm:$0xff] %v5663
        %6986 = vst [vmem:[%s194 + $0x4a8] sm:$0xff] %v5872
        %6987 = vst [vmem:[%s194 + $0x4b0] sm:$0xff] %v6081
        %6988 = vst [vmem:[%s194 + $0x4b8] sm:$0xff] %v6290
        %6989 = vst [vmem:[%s194 + $0x4c0] sm:$0xff] %v6499
        %6990 = vst.msk [vmem:[%s194 + $0x4c8] sm:$0xff] %vm6842, %v6708
        %6991 = vst [vmem:[%s194 + $0x4d0] sm:$0xff] %v5457
        %6992 = vst [vmem:[%s194 + $0x4d8] sm:$0xff] %v5666
        %6993 = vst [vmem:[%s194 + $0x4e0] sm:$0xff] %v5875
        %6994 = vst [vmem:[%s194 + $0x4e8] sm:$0xff] %v6084
        %6995 = vst [vmem:[%s194 + $0x4f0] sm:$0xff] %v6293
        %6996 = vst [vmem:[%s194 + $0x4f8] sm:$0xff] %v6502
        %6997 = vst.msk [vmem:[%s194 + $0x500] sm:$0xff] %vm6842, %v6711
        %6998 = vst [vmem:[%s194 + $0x508] sm:$0xff] %v5460
        %6999 = vst [vmem:[%s194 + $0x510] sm:$0xff] %v5669
        %7000 = vst [vmem:[%s194 + $0x518] sm:$0xff] %v5878
        %7001 = vst [vmem:[%s194 + $0x520] sm:$0xff] %v6087
        %7002 = vst [vmem:[%s194 + $0x528] sm:$0xff] %v6296
        %7003 = vst [vmem:[%s194 + $0x530] sm:$0xff] %v6505
        %7004 = vst.msk [vmem:[%s194 + $0x538] sm:$0xff] %vm6842, %v6714
        %7005 = vst [vmem:[%s194 + $0x540] sm:$0xff] %v5463
        %7006 = vst [vmem:[%s194 + $0x548] sm:$0xff] %v5672
        %7007 = vst [vmem:[%s194 + $0x550] sm:$0xff] %v5881
        %7008 = vst [vmem:[%s194 + $0x558] sm:$0xff] %v6090
        %7009 = vst [vmem:[%s194 + $0x560] sm:$0xff] %v6299
        %7010 = vst [vmem:[%s194 + $0x568] sm:$0xff] %v6508
        %7011 = vst.msk [vmem:[%s194 + $0x570] sm:$0xff] %vm6842, %v6717
        %7012 = vst [vmem:[%s194 + $0x578] sm:$0xff] %v5466
        %7013 = vst [vmem:[%s194 + $0x580] sm:$0xff] %v5675
        %7014 = vst [vmem:[%s194 + $0x588] sm:$0xff] %v5884
        %7015 = vst [vmem:[%s194 + $0x590] sm:$0xff] %v6093
        %7016 = vst [vmem:[%s194 + $0x598] sm:$0xff] %v6302
        %7017 = vst [vmem:[%s194 + $0x5a0] sm:$0xff] %v6511
        %7018 = vst.msk [vmem:[%s194 + $0x5a8] sm:$0xff] %vm6842, %v6720
        %7019 = vst [vmem:[%s194 + $0x5b0] sm:$0xff] %v5469
        %7020 = vst [vmem:[%s194 + $0x5b8] sm:$0xff] %v5678
        %7021 = vst [vmem:[%s194 + $0x5c0] sm:$0xff] %v5887
        %7022 = vst [vmem:[%s194 + $0x5c8] sm:$0xff] %v6096
        %7023 = vst [vmem:[%s194 + $0x5d0] sm:$0xff] %v6305
        %7024 = vst [vmem:[%s194 + $0x5d8] sm:$0xff] %v6514
        %7025 = vst.msk [vmem:[%s194 + $0x5e0] sm:$0xff] %vm6842, %v6723
        %7026 = vst [vmem:[%s194 + $0x5e8] sm:$0xff] %v5472
        %7027 = vst [vmem:[%s194 + $0x5f0] sm:$0xff] %v5681
        %7028 = vst [vmem:[%s194 + $0x5f8] sm:$0xff] %v5890
        %7029 = vst [vmem:[%s194 + $0x600] sm:$0xff] %v6099
        %7030 = vst [vmem:[%s194 + $0x608] sm:$0xff] %v6308
        %7031 = vst [vmem:[%s194 + $0x610] sm:$0xff] %v6517
        %7032 = vst.msk [vmem:[%s194 + $0x618] sm:$0xff] %vm6842, %v6726
        %7033 = vst [vmem:[%s194 + $0x620] sm:$0xff] %v5475
        %7034 = vst [vmem:[%s194 + $0x628] sm:$0xff] %v5684
        %7035 = vst [vmem:[%s194 + $0x630] sm:$0xff] %v5893
        %7036 = vst [vmem:[%s194 + $0x638] sm:$0xff] %v6102
        %7037 = vst [vmem:[%s194 + $0x640] sm:$0xff] %v6311
        %7038 = vst [vmem:[%s194 + $0x648] sm:$0xff] %v6520
        %7039 = vst.msk [vmem:[%s194 + $0x650] sm:$0xff] %vm6842, %v6729
        %7040 = vst [vmem:[%s194 + $0x658] sm:$0xff] %v5478
        %7041 = vst [vmem:[%s194 + $0x660] sm:$0xff] %v5687
        %7042 = vst [vmem:[%s194 + $0x668] sm:$0xff] %v5896
        %7043 = vst [vmem:[%s194 + $0x670] sm:$0xff] %v6105
        %7044 = vst [vmem:[%s194 + $0x678] sm:$0xff] %v6314
        %7045 = vst [vmem:[%s194 + $0x680] sm:$0xff] %v6523
        %7046 = vst.msk [vmem:[%s194 + $0x688] sm:$0xff] %vm6842, %v6732
        %7047 = vst [vmem:[%s194 + $0x690] sm:$0xff] %v5481
        %7048 = vst [vmem:[%s194 + $0x698] sm:$0xff] %v5690
        %7049 = vst [vmem:[%s194 + $0x6a0] sm:$0xff] %v5899
        %7050 = vst [vmem:[%s194 + $0x6a8] sm:$0xff] %v6108
        %7051 = vst [vmem:[%s194 + $0x6b0] sm:$0xff] %v6317
        %7052 = vst [vmem:[%s194 + $0x6b8] sm:$0xff] %v6526
        %7053 = vst.msk [vmem:[%s194 + $0x6c0] sm:$0xff] %vm6842, %v6735
        %7054 = vst [vmem:[%s194 + $0x6c8] sm:$0xff] %v5484
        %7055 = vst [vmem:[%s194 + $0x6d0] sm:$0xff] %v5693
        %7056 = vst [vmem:[%s194 + $0x6d8] sm:$0xff] %v5902
        %7057 = vst [vmem:[%s194 + $0x6e0] sm:$0xff] %v6111
        %7058 = vst [vmem:[%s194 + $0x6e8] sm:$0xff] %v6320
        %7059 = vst [vmem:[%s194 + $0x6f0] sm:$0xff] %v6529
        %7060 = vst.msk [vmem:[%s194 + $0x6f8] sm:$0xff] %vm6842, %v6738
        %7061 = vst [vmem:[%s194 + $0x700] sm:$0xff] %v5487
        %7062 = vst [vmem:[%s194 + $0x708] sm:$0xff] %v5696
        %7063 = vst [vmem:[%s194 + $0x710] sm:$0xff] %v5905
        %7064 = vst [vmem:[%s194 + $0x718] sm:$0xff] %v6114
        %7065 = vst [vmem:[%s194 + $0x720] sm:$0xff] %v6323
        %7066 = vst [vmem:[%s194 + $0x728] sm:$0xff] %v6532
        %7067 = vst.msk [vmem:[%s194 + $0x730] sm:$0xff] %vm6842, %v6741
        %7068 = vst [vmem:[%s194 + $0x738] sm:$0xff] %v5490
        %7069 = vst [vmem:[%s194 + $0x740] sm:$0xff] %v5699
        %7070 = vst [vmem:[%s194 + $0x748] sm:$0xff] %v5908
        %7071 = vst [vmem:[%s194 + $0x750] sm:$0xff] %v6117
        %7072 = vst [vmem:[%s194 + $0x758] sm:$0xff] %v6326
        %7073 = vst [vmem:[%s194 + $0x760] sm:$0xff] %v6535
        %7074 = vst.msk [vmem:[%s194 + $0x768] sm:$0xff] %vm6842, %v6744
        %7075 = vst [vmem:[%s194 + $0x770] sm:$0xff] %v5493
        %7076 = vst [vmem:[%s194 + $0x778] sm:$0xff] %v5702
        %7077 = vst [vmem:[%s194 + $0x780] sm:$0xff] %v5911
        %7078 = vst [vmem:[%s194 + $0x788] sm:$0xff] %v6120
        %7079 = vst [vmem:[%s194 + $0x790] sm:$0xff] %v6329
        %7080 = vst [vmem:[%s194 + $0x798] sm:$0xff] %v6538
        %7081 = vst.msk [vmem:[%s194 + $0x7a0] sm:$0xff] %vm6842, %v6747
        %7082 = vst [vmem:[%s194 + $0x7a8] sm:$0xff] %v5496
        %7083 = vst [vmem:[%s194 + $0x7b0] sm:$0xff] %v5705
        %7084 = vst [vmem:[%s194 + $0x7b8] sm:$0xff] %v5914
        %7085 = vst [vmem:[%s194 + $0x7c0] sm:$0xff] %v6123
        %7086 = vst [vmem:[%s194 + $0x7c8] sm:$0xff] %v6332
        %7087 = vst [vmem:[%s194 + $0x7d0] sm:$0xff] %v6541
        %7088 = vst.msk [vmem:[%s194 + $0x7d8] sm:$0xff] %vm6842, %v6750
        %7089 = vst [vmem:[%s194 + $0x7e0] sm:$0xff] %v5499
        %7090 = vst [vmem:[%s194 + $0x7e8] sm:$0xff] %v5708
        %7091 = vst [vmem:[%s194 + $0x7f0] sm:$0xff] %v5917
        %7092 = vst [vmem:[%s194 + $0x7f8] sm:$0xff] %v6126
        %7093 = vst [vmem:[%s194 + $0x800] sm:$0xff] %v6335
        %7094 = vst [vmem:[%s194 + $0x808] sm:$0xff] %v6544
        %7095 = vst.msk [vmem:[%s194 + $0x810] sm:$0xff] %vm6842, %v6753
        %7096 = vst [vmem:[%s194 + $0x818] sm:$0xff] %v5502
        %7097 = vst [vmem:[%s194 + $0x820] sm:$0xff] %v5711
        %7098 = vst [vmem:[%s194 + $0x828] sm:$0xff] %v5920
        %7099 = vst [vmem:[%s194 + $0x830] sm:$0xff] %v6129
        %7100 = vst [vmem:[%s194 + $0x838] sm:$0xff] %v6338
        %7101 = vst [vmem:[%s194 + $0x840] sm:$0xff] %v6547
        %7102 = vst.msk [vmem:[%s194 + $0x848] sm:$0xff] %vm6842, %v6756
        %7103 = vst [vmem:[%s194 + $0x850] sm:$0xff] %v5505
        %7104 = vst [vmem:[%s194 + $0x858] sm:$0xff] %v5714
        %7105 = vst [vmem:[%s194 + $0x860] sm:$0xff] %v5923
        %7106 = vst [vmem:[%s194 + $0x868] sm:$0xff] %v6132
        %7107 = vst [vmem:[%s194 + $0x870] sm:$0xff] %v6341
        %7108 = vst [vmem:[%s194 + $0x878] sm:$0xff] %v6550
        %7109 = vst.msk [vmem:[%s194 + $0x880] sm:$0xff] %vm6842, %v6759
        %7110 = vst [vmem:[%s194 + $0x888] sm:$0xff] %v5508
        %7111 = vst [vmem:[%s194 + $0x890] sm:$0xff] %v5717
        %7112 = vst [vmem:[%s194 + $0x898] sm:$0xff] %v5926
        %7113 = vst [vmem:[%s194 + $0x8a0] sm:$0xff] %v6135
        %7114 = vst [vmem:[%s194 + $0x8a8] sm:$0xff] %v6344
        %7115 = vst [vmem:[%s194 + $0x8b0] sm:$0xff] %v6553
        %7116 = vst.msk [vmem:[%s194 + $0x8b8] sm:$0xff] %vm6842, %v6762
        %7117 = vst [vmem:[%s194 + $0x8c0] sm:$0xff] %v5511
        %7118 = vst [vmem:[%s194 + $0x8c8] sm:$0xff] %v5720
        %7119 = vst [vmem:[%s194 + $0x8d0] sm:$0xff] %v5929
        %7120 = vst [vmem:[%s194 + $0x8d8] sm:$0xff] %v6138
        %7121 = vst [vmem:[%s194 + $0x8e0] sm:$0xff] %v6347
        %7122 = vst [vmem:[%s194 + $0x8e8] sm:$0xff] %v6556
        %7123 = vst.msk [vmem:[%s194 + $0x8f0] sm:$0xff] %vm6842, %v6765
        %7124 = vst [vmem:[%s194 + $0x8f8] sm:$0xff] %v5514
        %7125 = vst [vmem:[%s194 + $0x900] sm:$0xff] %v5723
        %7126 = vst [vmem:[%s194 + $0x908] sm:$0xff] %v5932
        %7127 = vst [vmem:[%s194 + $0x910] sm:$0xff] %v6141
        %7128 = vst [vmem:[%s194 + $0x918] sm:$0xff] %v6350
        %7129 = vst [vmem:[%s194 + $0x920] sm:$0xff] %v6559
        %7130 = vst.msk [vmem:[%s194 + $0x928] sm:$0xff] %vm6842, %v6768
        %7131 = vst [vmem:[%s194 + $0x930] sm:$0xff] %v5517
        %7132 = vst [vmem:[%s194 + $0x938] sm:$0xff] %v5726
        %7133 = vst [vmem:[%s194 + $0x940] sm:$0xff] %v5935
        %7134 = vst [vmem:[%s194 + $0x948] sm:$0xff] %v6144
        %7135 = vst [vmem:[%s194 + $0x950] sm:$0xff] %v6353
        %7136 = vst [vmem:[%s194 + $0x958] sm:$0xff] %v6562
        %7137 = vst.msk [vmem:[%s194 + $0x960] sm:$0xff] %vm6842, %v6771
        %7138 = vst [vmem:[%s194 + $0x968] sm:$0xff] %v5520
        %7139 = vst [vmem:[%s194 + $0x970] sm:$0xff] %v5729
        %7140 = vst [vmem:[%s194 + $0x978] sm:$0xff] %v5938
        %7141 = vst [vmem:[%s194 + $0x980] sm:$0xff] %v6147
        %7142 = vst [vmem:[%s194 + $0x988] sm:$0xff] %v6356
        %7143 = vst [vmem:[%s194 + $0x990] sm:$0xff] %v6565
        %7144 = vst.msk [vmem:[%s194 + $0x998] sm:$0xff] %vm6842, %v6774
        %7145 = vst [vmem:[%s194 + $0x9a0] sm:$0xff] %v5523
        %7146 = vst [vmem:[%s194 + $0x9a8] sm:$0xff] %v5732
        %7147 = vst [vmem:[%s194 + $0x9b0] sm:$0xff] %v5941
        %7148 = vst [vmem:[%s194 + $0x9b8] sm:$0xff] %v6150
        %7149 = vst [vmem:[%s194 + $0x9c0] sm:$0xff] %v6359
        %7150 = vst [vmem:[%s194 + $0x9c8] sm:$0xff] %v6568
        %7151 = vst.msk [vmem:[%s194 + $0x9d0] sm:$0xff] %vm6842, %v6777
        %7152 = vst [vmem:[%s194 + $0x9d8] sm:$0xff] %v5526
        %7153 = vst [vmem:[%s194 + $0x9e0] sm:$0xff] %v5735
        %7154 = vst [vmem:[%s194 + $0x9e8] sm:$0xff] %v5944
        %7155 = vst [vmem:[%s194 + $0x9f0] sm:$0xff] %v6153
        %7156 = vst [vmem:[%s194 + $0x9f8] sm:$0xff] %v6362
        %7157 = vst [vmem:[%s194 + $0xa00] sm:$0xff] %v6571
        %7158 = vst.msk [vmem:[%s194 + $0xa08] sm:$0xff] %vm6842, %v6780
        %7159 = vst [vmem:[%s194 + $0xa10] sm:$0xff] %v5529
        %7160 = vst [vmem:[%s194 + $0xa18] sm:$0xff] %v5738
        %7161 = vst [vmem:[%s194 + $0xa20] sm:$0xff] %v5947
        %7162 = vst [vmem:[%s194 + $0xa28] sm:$0xff] %v6156
        %7163 = vst [vmem:[%s194 + $0xa30] sm:$0xff] %v6365
        %7164 = vst [vmem:[%s194 + $0xa38] sm:$0xff] %v6574
        %7165 = vst.msk [vmem:[%s194 + $0xa40] sm:$0xff] %vm6842, %v6783
        %7166 = vst [vmem:[%s194 + $0xa48] sm:$0xff] %v5532
        %7167 = vst [vmem:[%s194 + $0xa50] sm:$0xff] %v5741
        %7168 = vst [vmem:[%s194 + $0xa58] sm:$0xff] %v5950
        %7169 = vst [vmem:[%s194 + $0xa60] sm:$0xff] %v6159
        %7170 = vst [vmem:[%s194 + $0xa68] sm:$0xff] %v6368
        %7171 = vst [vmem:[%s194 + $0xa70] sm:$0xff] %v6577
        %7172 = vst.msk [vmem:[%s194 + $0xa78] sm:$0xff] %vm6842, %v6786
        %7173 = vst [vmem:[%s194 + $0xa80] sm:$0xff] %v5535
        %7174 = vst [vmem:[%s194 + $0xa88] sm:$0xff] %v5744
        %7175 = vst [vmem:[%s194 + $0xa90] sm:$0xff] %v5953
        %7176 = vst [vmem:[%s194 + $0xa98] sm:$0xff] %v6162
        %7177 = vst [vmem:[%s194 + $0xaa0] sm:$0xff] %v6371
        %7178 = vst [vmem:[%s194 + $0xaa8] sm:$0xff] %v6580
        %7179 = vst.msk [vmem:[%s194 + $0xab0] sm:$0xff] %vm6842, %v6789
        %7180 = vst [vmem:[%s194 + $0xab8] sm:$0xff] %v5538
        %7181 = vst [vmem:[%s194 + $0xac0] sm:$0xff] %v5747
        %7182 = vst [vmem:[%s194 + $0xac8] sm:$0xff] %v5956
        %7183 = vst [vmem:[%s194 + $0xad0] sm:$0xff] %v6165
        %7184 = vst [vmem:[%s194 + $0xad8] sm:$0xff] %v6374
        %7185 = vst [vmem:[%s194 + $0xae0] sm:$0xff] %v6583
        %7186 = vst.msk [vmem:[%s194 + $0xae8] sm:$0xff] %vm6842, %v6792
        %7187 = vst [vmem:[%s194 + $0xaf0] sm:$0xff] %v5541
        %7188 = vst [vmem:[%s194 + $0xaf8] sm:$0xff] %v5750
        %7189 = vst [vmem:[%s194 + $0xb00] sm:$0xff] %v5959
        %7190 = vst [vmem:[%s194 + $0xb08] sm:$0xff] %v6168
        %7191 = vst [vmem:[%s194 + $0xb10] sm:$0xff] %v6377
        %7192 = vst [vmem:[%s194 + $0xb18] sm:$0xff] %v6586
        %7193 = vst.msk [vmem:[%s194 + $0xb20] sm:$0xff] %vm6842, %v6795
        %7194 = vst [vmem:[%s194 + $0xb28] sm:$0xff] %v5544
        %7195 = vst [vmem:[%s194 + $0xb30] sm:$0xff] %v5753
        %7196 = vst [vmem:[%s194 + $0xb38] sm:$0xff] %v5962
        %7197 = vst [vmem:[%s194 + $0xb40] sm:$0xff] %v6171
        %7198 = vst [vmem:[%s194 + $0xb48] sm:$0xff] %v6380
        %7199 = vst [vmem:[%s194 + $0xb50] sm:$0xff] %v6589
        %7200 = vst.msk [vmem:[%s194 + $0xb58] sm:$0xff] %vm6842, %v6798
        %7201 = vst [vmem:[%s194 + $0xb60] sm:$0xff] %v5547
        %7202 = vst [vmem:[%s194 + $0xb68] sm:$0xff] %v5756
        %7203 = vst [vmem:[%s194 + $0xb70] sm:$0xff] %v5965
        %7204 = vst [vmem:[%s194 + $0xb78] sm:$0xff] %v6174
        %7205 = vst [vmem:[%s194 + $0xb80] sm:$0xff] %v6383
        %7206 = vst [vmem:[%s194 + $0xb88] sm:$0xff] %v6592
        %7207 = vst.msk [vmem:[%s194 + $0xb90] sm:$0xff] %vm6842, %v6801
        %7208 = vst [vmem:[%s194 + $0xb98] sm:$0xff] %v5550
        %7209 = vst [vmem:[%s194 + $0xba0] sm:$0xff] %v5759
        %7210 = vst [vmem:[%s194 + $0xba8] sm:$0xff] %v5968
        %7211 = vst [vmem:[%s194 + $0xbb0] sm:$0xff] %v6177
        %7212 = vst [vmem:[%s194 + $0xbb8] sm:$0xff] %v6386
        %7213 = vst [vmem:[%s194 + $0xbc0] sm:$0xff] %v6595
        %7214 = vst.msk [vmem:[%s194 + $0xbc8] sm:$0xff] %vm6842, %v6804
        %7215 = vst [vmem:[%s194 + $0xbd0] sm:$0xff] %v5553
        %7216 = vst [vmem:[%s194 + $0xbd8] sm:$0xff] %v5762
        %7217 = vst [vmem:[%s194 + $0xbe0] sm:$0xff] %v5971
        %7218 = vst [vmem:[%s194 + $0xbe8] sm:$0xff] %v6180
        %7219 = vst [vmem:[%s194 + $0xbf0] sm:$0xff] %v6389
        %7220 = vst [vmem:[%s194 + $0xbf8] sm:$0xff] %v6598
        %7221 = vst.msk [vmem:[%s194 + $0xc00] sm:$0xff] %vm6842, %v6807
        %7222 = vst [vmem:[%s194 + $0xc08] sm:$0xff] %v5556
        %7223 = vst [vmem:[%s194 + $0xc10] sm:$0xff] %v5765
        %7224 = vst [vmem:[%s194 + $0xc18] sm:$0xff] %v5974
        %7225 = vst [vmem:[%s194 + $0xc20] sm:$0xff] %v6183
        %7226 = vst [vmem:[%s194 + $0xc28] sm:$0xff] %v6392
        %7227 = vst [vmem:[%s194 + $0xc30] sm:$0xff] %v6601
        %7228 = vst.msk [vmem:[%s194 + $0xc38] sm:$0xff] %vm6842, %v6810
        %7229 = vst [vmem:[%s194 + $0xc40] sm:$0xff] %v5559
        %7230 = vst [vmem:[%s194 + $0xc48] sm:$0xff] %v5768
        %7231 = vst [vmem:[%s194 + $0xc50] sm:$0xff] %v5977
        %7232 = vst [vmem:[%s194 + $0xc58] sm:$0xff] %v6186
        %7233 = vst [vmem:[%s194 + $0xc60] sm:$0xff] %v6395
        %7234 = vst [vmem:[%s194 + $0xc68] sm:$0xff] %v6604
        %7235 = vst.msk [vmem:[%s194 + $0xc70] sm:$0xff] %vm6842, %v6813
        %7236 = vst [vmem:[%s194 + $0xc78] sm:$0xff] %v5562
        %7237 = vst [vmem:[%s194 + $0xc80] sm:$0xff] %v5771
        %7238 = vst [vmem:[%s194 + $0xc88] sm:$0xff] %v5980
        %7239 = vst [vmem:[%s194 + $0xc90] sm:$0xff] %v6189
        %7240 = vst [vmem:[%s194 + $0xc98] sm:$0xff] %v6398
        %7241 = vst [vmem:[%s194 + $0xca0] sm:$0xff] %v6607
        %7242 = vst.msk [vmem:[%s194 + $0xca8] sm:$0xff] %vm6842, %v6816
        %7243 = vst [vmem:[%s194 + $0xcb0] sm:$0xff] %v5565
        %7244 = vst [vmem:[%s194 + $0xcb8] sm:$0xff] %v5774
        %7245 = vst [vmem:[%s194 + $0xcc0] sm:$0xff] %v5983
        %7246 = vst [vmem:[%s194 + $0xcc8] sm:$0xff] %v6192
        %7247 = vst [vmem:[%s194 + $0xcd0] sm:$0xff] %v6401
        %7248 = vst [vmem:[%s194 + $0xcd8] sm:$0xff] %v6610
        %7249 = vst.msk [vmem:[%s194 + $0xce0] sm:$0xff] %vm6842, %v6819
        %7250 = vst [vmem:[%s194 + $0xce8] sm:$0xff] %v5568
        %7251 = vst [vmem:[%s194 + $0xcf0] sm:$0xff] %v5777
        %7252 = vst [vmem:[%s194 + $0xcf8] sm:$0xff] %v5986
        %7253 = vst [vmem:[%s194 + $0xd00] sm:$0xff] %v6195
        %7254 = vst [vmem:[%s194 + $0xd08] sm:$0xff] %v6404
        %7255 = vst [vmem:[%s194 + $0xd10] sm:$0xff] %v6613
        %7256 = vst.msk [vmem:[%s194 + $0xd18] sm:$0xff] %vm6842, %v6822
        %7257 = vst [vmem:[%s194 + $0xd20] sm:$0xff] %v5571
        %7258 = vst [vmem:[%s194 + $0xd28] sm:$0xff] %v5780
        %7259 = vst [vmem:[%s194 + $0xd30] sm:$0xff] %v5989
        %7260 = vst [vmem:[%s194 + $0xd38] sm:$0xff] %v6198
        %7261 = vst [vmem:[%s194 + $0xd40] sm:$0xff] %v6407
        %7262 = vst [vmem:[%s194 + $0xd48] sm:$0xff] %v6616
        %7263 = vst.msk [vmem:[%s194 + $0xd50] sm:$0xff] %vm6842, %v6825
        %7264 = vst [vmem:[%s194 + $0xd58] sm:$0xff] %v5574
        %7265 = vst [vmem:[%s194 + $0xd60] sm:$0xff] %v5783
        %7266 = vst [vmem:[%s194 + $0xd68] sm:$0xff] %v5992
        %7267 = vst [vmem:[%s194 + $0xd70] sm:$0xff] %v6201
        %7268 = vst [vmem:[%s194 + $0xd78] sm:$0xff] %v6410
        %7269 = vst [vmem:[%s194 + $0xd80] sm:$0xff] %v6619
        %7270 = vst.msk [vmem:[%s194 + $0xd88] sm:$0xff] %vm6842, %v6828
        %7271 = vst [vmem:[%s194 + $0xd90] sm:$0xff] %v5577
        %7272 = vst [vmem:[%s194 + $0xd98] sm:$0xff] %v5786
        %7273 = vst [vmem:[%s194 + $0xda0] sm:$0xff] %v5995
        %7274 = vst [vmem:[%s194 + $0xda8] sm:$0xff] %v6204
        %7275 = vst [vmem:[%s194 + $0xdb0] sm:$0xff] %v6413
        %7276 = vst [vmem:[%s194 + $0xdb8] sm:$0xff] %v6622
        %7277 = vst.msk [vmem:[%s194 + $0xdc0] sm:$0xff] %vm6842, %v6831
        %7278 = vst [vmem:[%s194 + $0xdc8] sm:$0xff] %v5580
        %7279 = vst [vmem:[%s194 + $0xdd0] sm:$0xff] %v5789
        %7280 = vst [vmem:[%s194 + $0xdd8] sm:$0xff] %v5998
        %7281 = vst [vmem:[%s194 + $0xde0] sm:$0xff] %v6207
        %7282 = vst [vmem:[%s194 + $0xde8] sm:$0xff] %v6416
        %7283 = vst [vmem:[%s194 + $0xdf0] sm:$0xff] %v6625
        %7284 = vst.msk [vmem:[%s194 + $0xdf8] sm:$0xff] %vm6842, %v6834
        %p7285 = scmp.lt.s32.totalorder %s16, 1
        %s7286 = scalar_select %p7285, %s16, 1
        %s7287 = smul.addr %s7286, 448
        %s7288 = smul.addr %s7287, 8
        %s7289 = scalar_lea.vmem %s4, %s7288
        // Predicated region
        $region45: #{tpu_custom_call.1} parent=35 // pred_check
          %p7290 = pneg %p118
        $region46: #{tpu_custom_call.1} parent=35 // pred_check_branch
          %7292 = sbr.rel (%p7290) target = $region48
        $region47: #{tpu_custom_call.1} parent=35 // pred_region
          _
        $region48: #{tpu_custom_call.1} parent=35 // pred_fallthru
          _
      $region36: #{tpu_custom_call.1} parent=5 // pred_fallthru
        _
      %p7293 = scmp.le.s32.totalorder 2, %s11
      // Predicated region
      $region49: #{tpu_custom_call.1} parent=5 // pred_check
        %p7294 = pneg %p7293
      $region50: #{tpu_custom_call.1} parent=5 // pred_check_branch
        %7296 = sbr.rel (%p7294) target = $region52
      $region51: #{tpu_custom_call.1} parent=5 // pred_region
        %s7297 = ssub.s32 %s11, 2
        // Predicated region
        $region53: #{tpu_custom_call.1} parent=51 // pred_check
          %p7298 = pneg %p124
        $region54: #{tpu_custom_call.1} parent=51 // pred_check_branch
          %7300 = sbr.rel (%p7298) target = $region56
        $region55: #{tpu_custom_call.1} parent=51 // pred_region
          %p7301 = scmp.lt.s32.totalorder %s17, 1
          %s7302 = scalar_select %p7301, %s17, 1
          %s7303 = smul.addr %s7302, 448
          %s7304 = smul.addr %s7303, 8
          %s7305 = scalar_lea.vmem %s4, %s7304
        $region56: #{tpu_custom_call.1} parent=51 // pred_fallthru
          _
      $region52: #{tpu_custom_call.1} parent=5 // pred_fallthru
        _
    $region6: #{tpu_custom_call.1} parent=1 // loop_footer
      %s15 = sadd.s32 1, %s11
    $region7: #{tpu_custom_call.1} parent=1 // loop_footer_branch
      %10 = sbr.rel target = $region3
    $region8: #{tpu_custom_call.1} parent=1 // loop_exit
      _
    %7306 = vsyncpa [#allocation7], 1
    %s7307 = scalar_lea.sflag [#allocation7], 1
    %7308 = vsyncpa %s7307, 1

</llo_original>
